<compile_context>
chip_gen: v7x
topology: tpu7x:2x2x1
jax: 0.10.0
libtpu: 0.0.40
codegen_flags: <defaults>
</compile_context>

<pallas_src>
import jax
import jax.numpy as jnp
from jax.experimental import pallas as pl
from jax.experimental.pallas import tpu as pltpu

H = 128            # LSTM hidden size
H1 = 64            # linear1 / linear2 width
TB = 128           # batch tile: fills the MXU on all generations; VMEM use
                   # per tile is ~4 MiB, far under the 32 MiB scoped default
                   # (so also safe on v7x's 64 MiB VMEM).


def lstm_mlp_kernel(x_ref, wih_ref, whh_ref, bg_ref,
                    w1_ref, b1_ref, w2_ref, b2_ref, w3_ref, b3_ref,
                    bias_ref, out_ref, xg_ref):
    tb, T = x_ref.shape

    # ---- hoisted pre-pass (off the recurrent critical path) ----------------
    # xg[t] = x[:, t] * W_ih^T + (b_ih + b_hh), stored time-major so each
    # recurrent step does a cheap leading-axis load instead of a lane-width-1
    # dynamic slice + lane broadcast.
    wih = wih_ref[...]                                   # (1, 4H)
    bg = bg_ref[...]                                     # (1, 4H)
    for t in range(T):                                   # static, vectorized VPU work
        xg_ref[t] = x_ref[:, t:t + 1] * wih + bg         # (TB, 4H) f32

    whh_bf = whh_ref[...].astype(jnp.bfloat16)           # (H, 4H) bf16 MXU input

    # ---- recurrent loop (fully unrolled; T is small and static) ------------
    def step(t, carry):
        h, c = carry
        gates = xg_ref[t] + jnp.dot(h.astype(jnp.bfloat16), whh_bf,
                                    preferred_element_type=jnp.float32)
        i_g = jax.nn.sigmoid(gates[:, 0 * H:1 * H])
        f_g = jax.nn.sigmoid(gates[:, 1 * H:2 * H])
        g_g = jnp.tanh(gates[:, 2 * H:3 * H])
        o_g = jax.nn.sigmoid(gates[:, 3 * H:4 * H])
        c_new = f_g * c + i_g * g_g
        h_new = o_g * jnp.tanh(c_new)
        return (h_new, c_new)

    h0 = jnp.zeros((tb, H), jnp.float32)
    c0 = jnp.zeros((tb, H), jnp.float32)
    h_last, _ = jax.lax.fori_loop(0, T, step, (h0, c0), unroll=True)

    # ---- MLP head -----------------------------------------------------------
    a = jnp.dot(h_last.astype(jnp.bfloat16), w1_ref[...].astype(jnp.bfloat16),
                preferred_element_type=jnp.float32) + b1_ref[...]
    a = jnp.maximum(a, 0.0)
    a = jnp.dot(a.astype(jnp.bfloat16), w2_ref[...].astype(jnp.bfloat16),
                preferred_element_type=jnp.float32) + b2_ref[...]
    a = jnp.maximum(a, 0.0)
    # Linear(64, 1): lane reduce on the VPU/XLU instead of an N=1 MXU matmul.
    y = jnp.sum(a * w3_ref[...], axis=-1, keepdims=True)    # (TB, 1)
    out_ref[...] = y + b3_ref[...] + bias_ref[...]


def lstm_forward(x, params, tb=TB):
    """x: (B, T) float32 -> (B, 1) float32."""
    B, T = x.shape
    n_tiles = pl.cdiv(B, tb)
    B_pad = n_tiles * tb
    if B_pad != B:
        # Padded rows compute garbage that is sliced off below.
        x = jnp.pad(x, ((0, B_pad - B), (0, 0)))

    def full_spec(shape):
        # Whole (small) weight array resident in VMEM; same block every step.
        return pl.BlockSpec(shape, lambda i: (0, 0))

    out = pl.pallas_call(
        lstm_mlp_kernel,
        out_shape=jax.ShapeDtypeStruct((B_pad, 1), jnp.float32),
        grid=(n_tiles,),
        in_specs=[
            pl.BlockSpec((tb, T), lambda i: (i, 0)),       # x  (batch-tiled)
            full_spec((1, 4 * H)),                         # W_ih^T
            full_spec((H, 4 * H)),                         # W_hh^T
            full_spec((1, 4 * H)),                         # b_ih + b_hh
            full_spec((H, H1)),                            # W1^T
            full_spec((1, H1)),                            # b1
            full_spec((H1, H1)),                           # W2^T
            full_spec((1, H1)),                            # b2
            full_spec((1, H1)),                            # W3 (row)
            full_spec((1, 1)),                             # b3
            full_spec((1, 1)),                             # bias
        ],
        out_specs=pl.BlockSpec((tb, 1), lambda i: (i, 0)),
        scratch_shapes=[pltpu.VMEM((T, tb, 4 * H), jnp.float32)],
        compiler_params=pltpu.CompilerParams(
            dimension_semantics=("parallel",),             # megacore / 2-TC sharding
        ),
    )(x, params["wih_t"], params["whh_t"], params["b_gates"],
      params["w1_t"], params["b1"], params["w2_t"], params["b2"],
      params["w3_row"], params["b3"], params["bias"])
    return out[:B]


def init_params(key):
    """Deterministic synthetic params matching the PyTorch module's shapes."""
    ks = jax.random.split(key, 12)
    k_lstm = 1.0 / jnp.sqrt(jnp.float32(H))
    k_l1 = 1.0 / jnp.sqrt(jnp.float32(H))
    k_l2 = 1.0 / jnp.sqrt(jnp.float32(H1))
    k_l3 = 1.0 / jnp.sqrt(jnp.float32(H1))

    def u(k, shape, scale):
        return jax.random.uniform(k, shape, jnp.float32, -scale, scale)

    # nn.LSTM(1, 128): weight_ih (4H,1), weight_hh (4H,H), bias_ih/bias_hh (4H,)
    w_ih = u(ks[0], (4 * H, 1), k_lstm)
    w_hh = u(ks[1], (4 * H, H), k_lstm)
    b_ih = u(ks[2], (4 * H,), k_lstm)
    b_hh = u(ks[3], (4 * H,), k_lstm)
    # nn.Linear weights are (out, in); store transposed (in, out) for the kernel.
    w1 = u(ks[4], (H1, H), k_l1)
    b1 = u(ks[5], (H1,), k_l1)
    w2 = u(ks[6], (H1, H1), k_l2)
    b2 = u(ks[7], (H1,), k_l2)
    w3 = u(ks[8], (1, H1), k_l3)          # already a (1, 64) row
    b3 = u(ks[9], (1,), k_l3)
    bias = jnp.zeros((1,), jnp.float32)   # self.bias = nn.Parameter(torch.zeros(1))

    return {
        "wih_t": w_ih.T,                          # (1, 4H)
        "whh_t": w_hh.T,                          # (H, 4H)
        "b_gates": (b_ih + b_hh).reshape(1, -1),  # (1, 4H)
        "w1_t": w1.T, "b1": b1.reshape(1, -1),
        "w2_t": w2.T, "b2": b2.reshape(1, -1),
        "w3_row": w3,                             # (1, H1)
        "b3": b3.reshape(1, 1),
        "bias": bias.reshape(1, 1),
    }


def reference_forward(x, p):
    """Pure-JAX f32 reference of the same forward pass."""
    B, T = x.shape
    h = jnp.zeros((B, H), jnp.float32)
    c = jnp.zeros((B, H), jnp.float32)
    for t in range(T):
        x_t = x[:, t:t + 1]
        gates = x_t * p["wih_t"] + h @ p["whh_t"] + p["b_gates"]
        i_g = jax.nn.sigmoid(gates[:, 0 * H:1 * H])
        f_g = jax.nn.sigmoid(gates[:, 1 * H:2 * H])
        g_g = jnp.tanh(gates[:, 2 * H:3 * H])
        o_g = jax.nn.sigmoid(gates[:, 3 * H:4 * H])
        c = f_g * c + i_g * g_g
        h = o_g * jnp.tanh(c)
    a = jnp.maximum(h @ p["w1_t"] + p["b1"], 0.0)
    a = jnp.maximum(a @ p["w2_t"] + p["b2"], 0.0)
    return a @ p["w3_row"].T + p["b3"] + p["bias"]


if __name__ == "__main__":
    key = jax.random.PRNGKey(0)
    k_param, k_x = jax.random.split(key)
    B, T = 4, 8
    x = jax.random.normal(k_x, (B, T), jnp.float32)   # (batch, seq) before unsqueeze(-1)
    params = init_params(k_param)

    out = jax.block_until_ready(lstm_forward(x, params))
    ref = jax.block_until_ready(reference_forward(x, params))

    assert out.shape == (B, 1), out.shape
    # Kernel feeds bf16 inputs to the MXU (f32 accumulation); tolerance is
    # loosened accordingly vs the pure-f32 reference.
    assert jnp.allclose(out, ref, rtol=1e-2, atol=1e-2), (out, ref)
    print("KERNEL_OK")
</pallas_src>

<mosaic_0001>
module attributes {stable_mosaic.version = 11 : i64} {
  func.func @lstm_mlp_kernel(%arg0: i32, %arg1: memref<128x8xf32, #tpu.memory_space<vmem>>, %arg2: memref<1x512xf32, #tpu.memory_space<vmem>>, %arg3: memref<128x512xf32, #tpu.memory_space<vmem>>, %arg4: memref<1x512xf32, #tpu.memory_space<vmem>>, %arg5: memref<128x64xf32, #tpu.memory_space<vmem>>, %arg6: memref<1x64xf32, #tpu.memory_space<vmem>>, %arg7: memref<64x64xf32, #tpu.memory_space<vmem>>, %arg8: memref<1x64xf32, #tpu.memory_space<vmem>>, %arg9: memref<1x64xf32, #tpu.memory_space<vmem>>, %arg10: memref<1x1xf32, #tpu.memory_space<vmem>>, %arg11: memref<1x1xf32, #tpu.memory_space<vmem>>, %arg12: memref<128x1xf32, #tpu.memory_space<vmem>>, %arg13: memref<8x128x512xf32, #tpu.memory_space<vmem>>) attributes {dimension_semantics = [#tpu.dimension_semantics<parallel>], iteration_bounds = array<i64: 1>, scalar_prefetch = 0 : i64, scratch_operands = 1 : i64, tpu.core_type = #tpu.core_type<tc>, window_params = [{transform_indices = @transform_0, window_bounds = array<i64: 128, 8>}, {pipeline_mode = #tpu.pipeline_mode<synchronous>, transform_indices = @transform_1, window_bounds = array<i64: 1, 512>}, {pipeline_mode = #tpu.pipeline_mode<synchronous>, transform_indices = @transform_2, window_bounds = array<i64: 128, 512>}, {pipeline_mode = #tpu.pipeline_mode<synchronous>, transform_indices = @transform_3, window_bounds = array<i64: 1, 512>}, {pipeline_mode = #tpu.pipeline_mode<synchronous>, transform_indices = @transform_4, window_bounds = array<i64: 128, 64>}, {pipeline_mode = #tpu.pipeline_mode<synchronous>, transform_indices = @transform_5, window_bounds = array<i64: 1, 64>}, {pipeline_mode = #tpu.pipeline_mode<synchronous>, transform_indices = @transform_6, window_bounds = array<i64: 64, 64>}, {pipeline_mode = #tpu.pipeline_mode<synchronous>, transform_indices = @transform_7, window_bounds = array<i64: 1, 64>}, {pipeline_mode = #tpu.pipeline_mode<synchronous>, transform_indices = @transform_8, window_bounds = array<i64: 1, 64>}, {pipeline_mode = #tpu.pipeline_mode<synchronous>, transform_indices = @transform_9, window_bounds = array<i64: 1, 1>}, {pipeline_mode = #tpu.pipeline_mode<synchronous>, transform_indices = @transform_10, window_bounds = array<i64: 1, 1>}, {transform_indices = @transform_11, window_bounds = array<i64: 128, 1>}]} {
    %c0 = arith.constant 0 : index
    %c0_0 = arith.constant 0 : index
    %0 = vector.load %arg2[%c0, %c0_0] : memref<1x512xf32, #tpu.memory_space<vmem>>, vector<1x512xf32>
    %c0_1 = arith.constant 0 : index
    %c0_2 = arith.constant 0 : index
    %1 = vector.load %arg4[%c0_1, %c0_2] : memref<1x512xf32, #tpu.memory_space<vmem>>, vector<1x512xf32>
    %c0_3 = arith.constant 0 : index
    %c0_4 = arith.constant 0 : index
    %2 = vector.load %arg1[%c0_3, %c0_4] : memref<128x8xf32, #tpu.memory_space<vmem>>, vector<128x1xf32>
    %3 = vector.broadcast %2 : vector<128x1xf32> to vector<128x512xf32>
    %4 = vector.broadcast %0 : vector<1x512xf32> to vector<128x512xf32>
    %5 = arith.mulf %3, %4 : vector<128x512xf32>
    %6 = vector.broadcast %1 : vector<1x512xf32> to vector<128x512xf32>
    %7 = arith.addf %5, %6 : vector<128x512xf32>
    %c0_5 = arith.constant 0 : index
    %c0_6 = arith.constant 0 : index
    %c0_7 = arith.constant 0 : index
    %8 = vector.load %arg13[%c0_5, %c0_6, %c0_7] : memref<8x128x512xf32, #tpu.memory_space<vmem>>, vector<1x128x512xf32>
    %9 = vector.shape_cast %8 : vector<1x128x512xf32> to vector<128x512xf32>
    %10 = vector.shape_cast %7 : vector<128x512xf32> to vector<1x128x512xf32>
    tpu.vector_store %arg13[%c0_5, %c0_6, %c0_7], %10 {strides = array<i32>} : memref<8x128x512xf32, #tpu.memory_space<vmem>>, vector<1x128x512xf32>,
    %c0_8 = arith.constant 0 : index
    %c1 = arith.constant 1 : index
    %11 = vector.load %arg1[%c0_8, %c1] : memref<128x8xf32, #tpu.memory_space<vmem>>, vector<128x1xf32>
    %12 = vector.broadcast %11 : vector<128x1xf32> to vector<128x512xf32>
    %13 = vector.broadcast %0 : vector<1x512xf32> to vector<128x512xf32>
    %14 = arith.mulf %12, %13 : vector<128x512xf32>
    %15 = vector.broadcast %1 : vector<1x512xf32> to vector<128x512xf32>
    %16 = arith.addf %14, %15 : vector<128x512xf32>
    %c1_9 = arith.constant 1 : index
    %c0_10 = arith.constant 0 : index
    %c0_11 = arith.constant 0 : index
    %17 = vector.load %arg13[%c1_9, %c0_10, %c0_11] : memref<8x128x512xf32, #tpu.memory_space<vmem>>, vector<1x128x512xf32>
    %18 = vector.shape_cast %17 : vector<1x128x512xf32> to vector<128x512xf32>
    %19 = vector.shape_cast %16 : vector<128x512xf32> to vector<1x128x512xf32>
    tpu.vector_store %arg13[%c1_9, %c0_10, %c0_11], %19 {strides = array<i32>} : memref<8x128x512xf32, #tpu.memory_space<vmem>>, vector<1x128x512xf32>,
    %c0_12 = arith.constant 0 : index
    %c2 = arith.constant 2 : index
    %20 = vector.load %arg1[%c0_12, %c2] : memref<128x8xf32, #tpu.memory_space<vmem>>, vector<128x1xf32>
    %21 = vector.broadcast %20 : vector<128x1xf32> to vector<128x512xf32>
    %22 = vector.broadcast %0 : vector<1x512xf32> to vector<128x512xf32>
    %23 = arith.mulf %21, %22 : vector<128x512xf32>
    %24 = vector.broadcast %1 : vector<1x512xf32> to vector<128x512xf32>
    %25 = arith.addf %23, %24 : vector<128x512xf32>
    %c2_13 = arith.constant 2 : index
    %c0_14 = arith.constant 0 : index
    %c0_15 = arith.constant 0 : index
    %26 = vector.load %arg13[%c2_13, %c0_14, %c0_15] : memref<8x128x512xf32, #tpu.memory_space<vmem>>, vector<1x128x512xf32>
    %27 = vector.shape_cast %26 : vector<1x128x512xf32> to vector<128x512xf32>
    %28 = vector.shape_cast %25 : vector<128x512xf32> to vector<1x128x512xf32>
    tpu.vector_store %arg13[%c2_13, %c0_14, %c0_15], %28 {strides = array<i32>} : memref<8x128x512xf32, #tpu.memory_space<vmem>>, vector<1x128x512xf32>,
    %c0_16 = arith.constant 0 : index
    %c3 = arith.constant 3 : index
    %29 = vector.load %arg1[%c0_16, %c3] : memref<128x8xf32, #tpu.memory_space<vmem>>, vector<128x1xf32>
    %30 = vector.broadcast %29 : vector<128x1xf32> to vector<128x512xf32>
    %31 = vector.broadcast %0 : vector<1x512xf32> to vector<128x512xf32>
    %32 = arith.mulf %30, %31 : vector<128x512xf32>
    %33 = vector.broadcast %1 : vector<1x512xf32> to vector<128x512xf32>
    %34 = arith.addf %32, %33 : vector<128x512xf32>
    %c3_17 = arith.constant 3 : index
    %c0_18 = arith.constant 0 : index
    %c0_19 = arith.constant 0 : index
    %35 = vector.load %arg13[%c3_17, %c0_18, %c0_19] : memref<8x128x512xf32, #tpu.memory_space<vmem>>, vector<1x128x512xf32>
    %36 = vector.shape_cast %35 : vector<1x128x512xf32> to vector<128x512xf32>
    %37 = vector.shape_cast %34 : vector<128x512xf32> to vector<1x128x512xf32>
    tpu.vector_store %arg13[%c3_17, %c0_18, %c0_19], %37 {strides = array<i32>} : memref<8x128x512xf32, #tpu.memory_space<vmem>>, vector<1x128x512xf32>,
    %c0_20 = arith.constant 0 : index
    %c4 = arith.constant 4 : index
    %38 = vector.load %arg1[%c0_20, %c4] : memref<128x8xf32, #tpu.memory_space<vmem>>, vector<128x1xf32>
    %39 = vector.broadcast %38 : vector<128x1xf32> to vector<128x512xf32>
    %40 = vector.broadcast %0 : vector<1x512xf32> to vector<128x512xf32>
    %41 = arith.mulf %39, %40 : vector<128x512xf32>
    %42 = vector.broadcast %1 : vector<1x512xf32> to vector<128x512xf32>
    %43 = arith.addf %41, %42 : vector<128x512xf32>
    %c4_21 = arith.constant 4 : index
    %c0_22 = arith.constant 0 : index
    %c0_23 = arith.constant 0 : index
    %44 = vector.load %arg13[%c4_21, %c0_22, %c0_23] : memref<8x128x512xf32, #tpu.memory_space<vmem>>, vector<1x128x512xf32>
    %45 = vector.shape_cast %44 : vector<1x128x512xf32> to vector<128x512xf32>
    %46 = vector.shape_cast %43 : vector<128x512xf32> to vector<1x128x512xf32>
    tpu.vector_store %arg13[%c4_21, %c0_22, %c0_23], %46 {strides = array<i32>} : memref<8x128x512xf32, #tpu.memory_space<vmem>>, vector<1x128x512xf32>,
    %c0_24 = arith.constant 0 : index
    %c5 = arith.constant 5 : index
    %47 = vector.load %arg1[%c0_24, %c5] : memref<128x8xf32, #tpu.memory_space<vmem>>, vector<128x1xf32>
    %48 = vector.broadcast %47 : vector<128x1xf32> to vector<128x512xf32>
    %49 = vector.broadcast %0 : vector<1x512xf32> to vector<128x512xf32>
    %50 = arith.mulf %48, %49 : vector<128x512xf32>
    %51 = vector.broadcast %1 : vector<1x512xf32> to vector<128x512xf32>
    %52 = arith.addf %50, %51 : vector<128x512xf32>
    %c5_25 = arith.constant 5 : index
    %c0_26 = arith.constant 0 : index
    %c0_27 = arith.constant 0 : index
    %53 = vector.load %arg13[%c5_25, %c0_26, %c0_27] : memref<8x128x512xf32, #tpu.memory_space<vmem>>, vector<1x128x512xf32>
    %54 = vector.shape_cast %53 : vector<1x128x512xf32> to vector<128x512xf32>
    %55 = vector.shape_cast %52 : vector<128x512xf32> to vector<1x128x512xf32>
    tpu.vector_store %arg13[%c5_25, %c0_26, %c0_27], %55 {strides = array<i32>} : memref<8x128x512xf32, #tpu.memory_space<vmem>>, vector<1x128x512xf32>,
    %c0_28 = arith.constant 0 : index
    %c6 = arith.constant 6 : index
    %56 = vector.load %arg1[%c0_28, %c6] : memref<128x8xf32, #tpu.memory_space<vmem>>, vector<128x1xf32>
    %57 = vector.broadcast %56 : vector<128x1xf32> to vector<128x512xf32>
    %58 = vector.broadcast %0 : vector<1x512xf32> to vector<128x512xf32>
    %59 = arith.mulf %57, %58 : vector<128x512xf32>
    %60 = vector.broadcast %1 : vector<1x512xf32> to vector<128x512xf32>
    %61 = arith.addf %59, %60 : vector<128x512xf32>
    %c6_29 = arith.constant 6 : index
    %c0_30 = arith.constant 0 : index
    %c0_31 = arith.constant 0 : index
    %62 = vector.load %arg13[%c6_29, %c0_30, %c0_31] : memref<8x128x512xf32, #tpu.memory_space<vmem>>, vector<1x128x512xf32>
    %63 = vector.shape_cast %62 : vector<1x128x512xf32> to vector<128x512xf32>
    %64 = vector.shape_cast %61 : vector<128x512xf32> to vector<1x128x512xf32>
    tpu.vector_store %arg13[%c6_29, %c0_30, %c0_31], %64 {strides = array<i32>} : memref<8x128x512xf32, #tpu.memory_space<vmem>>, vector<1x128x512xf32>,
    %c0_32 = arith.constant 0 : index
    %c7 = arith.constant 7 : index
    %65 = vector.load %arg1[%c0_32, %c7] : memref<128x8xf32, #tpu.memory_space<vmem>>, vector<128x1xf32>
    %66 = vector.broadcast %65 : vector<128x1xf32> to vector<128x512xf32>
    %67 = vector.broadcast %0 : vector<1x512xf32> to vector<128x512xf32>
    %68 = arith.mulf %66, %67 : vector<128x512xf32>
    %69 = vector.broadcast %1 : vector<1x512xf32> to vector<128x512xf32>
    %70 = arith.addf %68, %69 : vector<128x512xf32>
    %c7_33 = arith.constant 7 : index
    %c0_34 = arith.constant 0 : index
    %c0_35 = arith.constant 0 : index
    %71 = vector.load %arg13[%c7_33, %c0_34, %c0_35] : memref<8x128x512xf32, #tpu.memory_space<vmem>>, vector<1x128x512xf32>
    %72 = vector.shape_cast %71 : vector<1x128x512xf32> to vector<128x512xf32>
    %73 = vector.shape_cast %70 : vector<128x512xf32> to vector<1x128x512xf32>
    tpu.vector_store %arg13[%c7_33, %c0_34, %c0_35], %73 {strides = array<i32>} : memref<8x128x512xf32, #tpu.memory_space<vmem>>, vector<1x128x512xf32>,
    %c0_36 = arith.constant 0 : index
    %c0_37 = arith.constant 0 : index
    %74 = vector.load %arg3[%c0_36, %c0_37] : memref<128x512xf32, #tpu.memory_space<vmem>>, vector<128x512xf32>
    %75 = arith.truncf %74 : vector<128x512xf32> to vector<128x512xbf16>
    %cst = arith.constant 0.000000e+00 : f32
    %76 = vector.broadcast %cst : f32 to vector<128x128xf32>
    %cst_38 = arith.constant 0.000000e+00 : f32
    %77 = vector.broadcast %cst_38 : f32 to vector<128x128xf32>
    %c0_i32 = arith.constant 0 : i32
    %78 = arith.index_cast %c0_i32 : i32 to index
    %c0_39 = arith.constant 0 : index
    %c0_40 = arith.constant 0 : index
    %79 = vector.load %arg13[%78, %c0_39, %c0_40] : memref<8x128x512xf32, #tpu.memory_space<vmem>>, vector<1x128x512xf32>
    %80 = vector.shape_cast %79 : vector<1x128x512xf32> to vector<128x512xf32>
    %81 = arith.truncf %76 : vector<128x128xf32> to vector<128x128xbf16>
    %cst_41 = arith.constant dense<0.000000e+00> : vector<128x512xf32>
    %82 = tpu.matmul %81, %75, %cst_41 {dimension_numbers = #tpu.dot_dimension_numbers<[1], [0], [0], [1], [0, 0, 1, 1], [], []>} : vector<128x128xbf16>, vector<128x512xbf16>, vector<128x512xf32> -> vector<128x512xf32>
    %83 = arith.addf %80, %82 : vector<128x512xf32>
    %84 = vector.extract_strided_slice %83 {offsets = [0, 0], sizes = [128, 128], strides = [1, 1]} : vector<128x512xf32> to vector<128x128xf32>
    %85 = arith.negf %84 : vector<128x128xf32>
    %86 = math.exp %85 : vector<128x128xf32>
    %cst_42 = arith.constant 1.000000e+00 : f32
    %87 = vector.broadcast %cst_42 : f32 to vector<128x128xf32>
    %88 = arith.addf %87, %86 : vector<128x128xf32>
    %89 = arith.divf %87, %88 : vector<128x128xf32>
    %90 = vector.extract_strided_slice %83 {offsets = [0, 128], sizes = [128, 128], strides = [1, 1]} : vector<128x512xf32> to vector<128x128xf32>
    %91 = arith.negf %90 : vector<128x128xf32>
    %92 = math.exp %91 : vector<128x128xf32>
    %cst_43 = arith.constant 1.000000e+00 : f32
    %93 = vector.broadcast %cst_43 : f32 to vector<128x128xf32>
    %94 = arith.addf %93, %92 : vector<128x128xf32>
    %95 = arith.divf %93, %94 : vector<128x128xf32>
    %96 = vector.extract_strided_slice %83 {offsets = [0, 256], sizes = [128, 128], strides = [1, 1]} : vector<128x512xf32> to vector<128x128xf32>
    %97 = math.tanh %96 : vector<128x128xf32>
    %98 = vector.extract_strided_slice %83 {offsets = [0, 384], sizes = [128, 128], strides = [1, 1]} : vector<128x512xf32> to vector<128x128xf32>
    %99 = arith.negf %98 : vector<128x128xf32>
    %100 = math.exp %99 : vector<128x128xf32>
    %cst_44 = arith.constant 1.000000e+00 : f32
    %101 = vector.broadcast %cst_44 : f32 to vector<128x128xf32>
    %102 = arith.addf %101, %100 : vector<128x128xf32>
    %103 = arith.divf %101, %102 : vector<128x128xf32>
    %104 = arith.mulf %95, %77 : vector<128x128xf32>
    %105 = arith.mulf %89, %97 : vector<128x128xf32>
    %106 = arith.addf %104, %105 : vector<128x128xf32>
    %107 = math.tanh %106 : vector<128x128xf32>
    %108 = arith.mulf %103, %107 : vector<128x128xf32>
    %c1_i32 = arith.constant 1 : i32
    %109 = arith.index_cast %c1_i32 : i32 to index
    %c0_45 = arith.constant 0 : index
    %c0_46 = arith.constant 0 : index
    %110 = vector.load %arg13[%109, %c0_45, %c0_46] : memref<8x128x512xf32, #tpu.memory_space<vmem>>, vector<1x128x512xf32>
    %111 = vector.shape_cast %110 : vector<1x128x512xf32> to vector<128x512xf32>
    %112 = arith.truncf %108 : vector<128x128xf32> to vector<128x128xbf16>
    %cst_47 = arith.constant dense<0.000000e+00> : vector<128x512xf32>
    %113 = tpu.matmul %112, %75, %cst_47 {dimension_numbers = #tpu.dot_dimension_numbers<[1], [0], [0], [1], [0, 0, 1, 1], [], []>} : vector<128x128xbf16>, vector<128x512xbf16>, vector<128x512xf32> -> vector<128x512xf32>
    %114 = arith.addf %111, %113 : vector<128x512xf32>
    %115 = vector.extract_strided_slice %114 {offsets = [0, 0], sizes = [128, 128], strides = [1, 1]} : vector<128x512xf32> to vector<128x128xf32>
    %116 = arith.negf %115 : vector<128x128xf32>
    %117 = math.exp %116 : vector<128x128xf32>
    %cst_48 = arith.constant 1.000000e+00 : f32
    %118 = vector.broadcast %cst_48 : f32 to vector<128x128xf32>
    %119 = arith.addf %118, %117 : vector<128x128xf32>
    %120 = arith.divf %118, %119 : vector<128x128xf32>
    %121 = vector.extract_strided_slice %114 {offsets = [0, 128], sizes = [128, 128], strides = [1, 1]} : vector<128x512xf32> to vector<128x128xf32>
    %122 = arith.negf %121 : vector<128x128xf32>
    %123 = math.exp %122 : vector<128x128xf32>
    %cst_49 = arith.constant 1.000000e+00 : f32
    %124 = vector.broadcast %cst_49 : f32 to vector<128x128xf32>
    %125 = arith.addf %124, %123 : vector<128x128xf32>
    %126 = arith.divf %124, %125 : vector<128x128xf32>
    %127 = vector.extract_strided_slice %114 {offsets = [0, 256], sizes = [128, 128], strides = [1, 1]} : vector<128x512xf32> to vector<128x128xf32>
    %128 = math.tanh %127 : vector<128x128xf32>
    %129 = vector.extract_strided_slice %114 {offsets = [0, 384], sizes = [128, 128], strides = [1, 1]} : vector<128x512xf32> to vector<128x128xf32>
    %130 = arith.negf %129 : vector<128x128xf32>
    %131 = math.exp %130 : vector<128x128xf32>
    %cst_50 = arith.constant 1.000000e+00 : f32
    %132 = vector.broadcast %cst_50 : f32 to vector<128x128xf32>
    %133 = arith.addf %132, %131 : vector<128x128xf32>
    %134 = arith.divf %132, %133 : vector<128x128xf32>
    %135 = arith.mulf %126, %106 : vector<128x128xf32>
    %136 = arith.mulf %120, %128 : vector<128x128xf32>
    %137 = arith.addf %135, %136 : vector<128x128xf32>
    %138 = math.tanh %137 : vector<128x128xf32>
    %139 = arith.mulf %134, %138 : vector<128x128xf32>
    %c2_i32 = arith.constant 2 : i32
    %140 = arith.index_cast %c2_i32 : i32 to index
    %c0_51 = arith.constant 0 : index
    %c0_52 = arith.constant 0 : index
    %141 = vector.load %arg13[%140, %c0_51, %c0_52] : memref<8x128x512xf32, #tpu.memory_space<vmem>>, vector<1x128x512xf32>
    %142 = vector.shape_cast %141 : vector<1x128x512xf32> to vector<128x512xf32>
    %143 = arith.truncf %139 : vector<128x128xf32> to vector<128x128xbf16>
    %cst_53 = arith.constant dense<0.000000e+00> : vector<128x512xf32>
    %144 = tpu.matmul %143, %75, %cst_53 {dimension_numbers = #tpu.dot_dimension_numbers<[1], [0], [0], [1], [0, 0, 1, 1], [], []>} : vector<128x128xbf16>, vector<128x512xbf16>, vector<128x512xf32> -> vector<128x512xf32>
    %145 = arith.addf %142, %144 : vector<128x512xf32>
    %146 = vector.extract_strided_slice %145 {offsets = [0, 0], sizes = [128, 128], strides = [1, 1]} : vector<128x512xf32> to vector<128x128xf32>
    %147 = arith.negf %146 : vector<128x128xf32>
    %148 = math.exp %147 : vector<128x128xf32>
    %cst_54 = arith.constant 1.000000e+00 : f32
    %149 = vector.broadcast %cst_54 : f32 to vector<128x128xf32>
    %150 = arith.addf %149, %148 : vector<128x128xf32>
    %151 = arith.divf %149, %150 : vector<128x128xf32>
    %152 = vector.extract_strided_slice %145 {offsets = [0, 128], sizes = [128, 128], strides = [1, 1]} : vector<128x512xf32> to vector<128x128xf32>
    %153 = arith.negf %152 : vector<128x128xf32>
    %154 = math.exp %153 : vector<128x128xf32>
    %cst_55 = arith.constant 1.000000e+00 : f32
    %155 = vector.broadcast %cst_55 : f32 to vector<128x128xf32>
    %156 = arith.addf %155, %154 : vector<128x128xf32>
    %157 = arith.divf %155, %156 : vector<128x128xf32>
    %158 = vector.extract_strided_slice %145 {offsets = [0, 256], sizes = [128, 128], strides = [1, 1]} : vector<128x512xf32> to vector<128x128xf32>
    %159 = math.tanh %158 : vector<128x128xf32>
    %160 = vector.extract_strided_slice %145 {offsets = [0, 384], sizes = [128, 128], strides = [1, 1]} : vector<128x512xf32> to vector<128x128xf32>
    %161 = arith.negf %160 : vector<128x128xf32>
    %162 = math.exp %161 : vector<128x128xf32>
    %cst_56 = arith.constant 1.000000e+00 : f32
    %163 = vector.broadcast %cst_56 : f32 to vector<128x128xf32>
    %164 = arith.addf %163, %162 : vector<128x128xf32>
    %165 = arith.divf %163, %164 : vector<128x128xf32>
    %166 = arith.mulf %157, %137 : vector<128x128xf32>
    %167 = arith.mulf %151, %159 : vector<128x128xf32>
    %168 = arith.addf %166, %167 : vector<128x128xf32>
    %169 = math.tanh %168 : vector<128x128xf32>
    %170 = arith.mulf %165, %169 : vector<128x128xf32>
    %c3_i32 = arith.constant 3 : i32
    %171 = arith.index_cast %c3_i32 : i32 to index
    %c0_57 = arith.constant 0 : index
    %c0_58 = arith.constant 0 : index
    %172 = vector.load %arg13[%171, %c0_57, %c0_58] : memref<8x128x512xf32, #tpu.memory_space<vmem>>, vector<1x128x512xf32>
    %173 = vector.shape_cast %172 : vector<1x128x512xf32> to vector<128x512xf32>
    %174 = arith.truncf %170 : vector<128x128xf32> to vector<128x128xbf16>
    %cst_59 = arith.constant dense<0.000000e+00> : vector<128x512xf32>
    %175 = tpu.matmul %174, %75, %cst_59 {dimension_numbers = #tpu.dot_dimension_numbers<[1], [0], [0], [1], [0, 0, 1, 1], [], []>} : vector<128x128xbf16>, vector<128x512xbf16>, vector<128x512xf32> -> vector<128x512xf32>
    %176 = arith.addf %173, %175 : vector<128x512xf32>
    %177 = vector.extract_strided_slice %176 {offsets = [0, 0], sizes = [128, 128], strides = [1, 1]} : vector<128x512xf32> to vector<128x128xf32>
    %178 = arith.negf %177 : vector<128x128xf32>
    %179 = math.exp %178 : vector<128x128xf32>
    %cst_60 = arith.constant 1.000000e+00 : f32
    %180 = vector.broadcast %cst_60 : f32 to vector<128x128xf32>
    %181 = arith.addf %180, %179 : vector<128x128xf32>
    %182 = arith.divf %180, %181 : vector<128x128xf32>
    %183 = vector.extract_strided_slice %176 {offsets = [0, 128], sizes = [128, 128], strides = [1, 1]} : vector<128x512xf32> to vector<128x128xf32>
    %184 = arith.negf %183 : vector<128x128xf32>
    %185 = math.exp %184 : vector<128x128xf32>
    %cst_61 = arith.constant 1.000000e+00 : f32
    %186 = vector.broadcast %cst_61 : f32 to vector<128x128xf32>
    %187 = arith.addf %186, %185 : vector<128x128xf32>
    %188 = arith.divf %186, %187 : vector<128x128xf32>
    %189 = vector.extract_strided_slice %176 {offsets = [0, 256], sizes = [128, 128], strides = [1, 1]} : vector<128x512xf32> to vector<128x128xf32>
    %190 = math.tanh %189 : vector<128x128xf32>
    %191 = vector.extract_strided_slice %176 {offsets = [0, 384], sizes = [128, 128], strides = [1, 1]} : vector<128x512xf32> to vector<128x128xf32>
    %192 = arith.negf %191 : vector<128x128xf32>
    %193 = math.exp %192 : vector<128x128xf32>
    %cst_62 = arith.constant 1.000000e+00 : f32
    %194 = vector.broadcast %cst_62 : f32 to vector<128x128xf32>
    %195 = arith.addf %194, %193 : vector<128x128xf32>
    %196 = arith.divf %194, %195 : vector<128x128xf32>
    %197 = arith.mulf %188, %168 : vector<128x128xf32>
    %198 = arith.mulf %182, %190 : vector<128x128xf32>
    %199 = arith.addf %197, %198 : vector<128x128xf32>
    %200 = math.tanh %199 : vector<128x128xf32>
    %201 = arith.mulf %196, %200 : vector<128x128xf32>
    %c4_i32 = arith.constant 4 : i32
    %202 = arith.index_cast %c4_i32 : i32 to index
    %c0_63 = arith.constant 0 : index
    %c0_64 = arith.constant 0 : index
    %203 = vector.load %arg13[%202, %c0_63, %c0_64] : memref<8x128x512xf32, #tpu.memory_space<vmem>>, vector<1x128x512xf32>
    %204 = vector.shape_cast %203 : vector<1x128x512xf32> to vector<128x512xf32>
    %205 = arith.truncf %201 : vector<128x128xf32> to vector<128x128xbf16>
    %cst_65 = arith.constant dense<0.000000e+00> : vector<128x512xf32>
    %206 = tpu.matmul %205, %75, %cst_65 {dimension_numbers = #tpu.dot_dimension_numbers<[1], [0], [0], [1], [0, 0, 1, 1], [], []>} : vector<128x128xbf16>, vector<128x512xbf16>, vector<128x512xf32> -> vector<128x512xf32>
    %207 = arith.addf %204, %206 : vector<128x512xf32>
    %208 = vector.extract_strided_slice %207 {offsets = [0, 0], sizes = [128, 128], strides = [1, 1]} : vector<128x512xf32> to vector<128x128xf32>
    %209 = arith.negf %208 : vector<128x128xf32>
    %210 = math.exp %209 : vector<128x128xf32>
    %cst_66 = arith.constant 1.000000e+00 : f32
    %211 = vector.broadcast %cst_66 : f32 to vector<128x128xf32>
    %212 = arith.addf %211, %210 : vector<128x128xf32>
    %213 = arith.divf %211, %212 : vector<128x128xf32>
    %214 = vector.extract_strided_slice %207 {offsets = [0, 128], sizes = [128, 128], strides = [1, 1]} : vector<128x512xf32> to vector<128x128xf32>
    %215 = arith.negf %214 : vector<128x128xf32>
    %216 = math.exp %215 : vector<128x128xf32>
    %cst_67 = arith.constant 1.000000e+00 : f32
    %217 = vector.broadcast %cst_67 : f32 to vector<128x128xf32>
    %218 = arith.addf %217, %216 : vector<128x128xf32>
    %219 = arith.divf %217, %218 : vector<128x128xf32>
    %220 = vector.extract_strided_slice %207 {offsets = [0, 256], sizes = [128, 128], strides = [1, 1]} : vector<128x512xf32> to vector<128x128xf32>
    %221 = math.tanh %220 : vector<128x128xf32>
    %222 = vector.extract_strided_slice %207 {offsets = [0, 384], sizes = [128, 128], strides = [1, 1]} : vector<128x512xf32> to vector<128x128xf32>
    %223 = arith.negf %222 : vector<128x128xf32>
    %224 = math.exp %223 : vector<128x128xf32>
    %cst_68 = arith.constant 1.000000e+00 : f32
    %225 = vector.broadcast %cst_68 : f32 to vector<128x128xf32>
    %226 = arith.addf %225, %224 : vector<128x128xf32>
    %227 = arith.divf %225, %226 : vector<128x128xf32>
    %228 = arith.mulf %219, %199 : vector<128x128xf32>
    %229 = arith.mulf %213, %221 : vector<128x128xf32>
    %230 = arith.addf %228, %229 : vector<128x128xf32>
    %231 = math.tanh %230 : vector<128x128xf32>
    %232 = arith.mulf %227, %231 : vector<128x128xf32>
    %c5_i32 = arith.constant 5 : i32
    %233 = arith.index_cast %c5_i32 : i32 to index
    %c0_69 = arith.constant 0 : index
    %c0_70 = arith.constant 0 : index
    %234 = vector.load %arg13[%233, %c0_69, %c0_70] : memref<8x128x512xf32, #tpu.memory_space<vmem>>, vector<1x128x512xf32>
    %235 = vector.shape_cast %234 : vector<1x128x512xf32> to vector<128x512xf32>
    %236 = arith.truncf %232 : vector<128x128xf32> to vector<128x128xbf16>
    %cst_71 = arith.constant dense<0.000000e+00> : vector<128x512xf32>
    %237 = tpu.matmul %236, %75, %cst_71 {dimension_numbers = #tpu.dot_dimension_numbers<[1], [0], [0], [1], [0, 0, 1, 1], [], []>} : vector<128x128xbf16>, vector<128x512xbf16>, vector<128x512xf32> -> vector<128x512xf32>
    %238 = arith.addf %235, %237 : vector<128x512xf32>
    %239 = vector.extract_strided_slice %238 {offsets = [0, 0], sizes = [128, 128], strides = [1, 1]} : vector<128x512xf32> to vector<128x128xf32>
    %240 = arith.negf %239 : vector<128x128xf32>
    %241 = math.exp %240 : vector<128x128xf32>
    %cst_72 = arith.constant 1.000000e+00 : f32
    %242 = vector.broadcast %cst_72 : f32 to vector<128x128xf32>
    %243 = arith.addf %242, %241 : vector<128x128xf32>
    %244 = arith.divf %242, %243 : vector<128x128xf32>
    %245 = vector.extract_strided_slice %238 {offsets = [0, 128], sizes = [128, 128], strides = [1, 1]} : vector<128x512xf32> to vector<128x128xf32>
    %246 = arith.negf %245 : vector<128x128xf32>
    %247 = math.exp %246 : vector<128x128xf32>
    %cst_73 = arith.constant 1.000000e+00 : f32
    %248 = vector.broadcast %cst_73 : f32 to vector<128x128xf32>
    %249 = arith.addf %248, %247 : vector<128x128xf32>
    %250 = arith.divf %248, %249 : vector<128x128xf32>
    %251 = vector.extract_strided_slice %238 {offsets = [0, 256], sizes = [128, 128], strides = [1, 1]} : vector<128x512xf32> to vector<128x128xf32>
    %252 = math.tanh %251 : vector<128x128xf32>
    %253 = vector.extract_strided_slice %238 {offsets = [0, 384], sizes = [128, 128], strides = [1, 1]} : vector<128x512xf32> to vector<128x128xf32>
    %254 = arith.negf %253 : vector<128x128xf32>
    %255 = math.exp %254 : vector<128x128xf32>
    %cst_74 = arith.constant 1.000000e+00 : f32
    %256 = vector.broadcast %cst_74 : f32 to vector<128x128xf32>
    %257 = arith.addf %256, %255 : vector<128x128xf32>
    %258 = arith.divf %256, %257 : vector<128x128xf32>
    %259 = arith.mulf %250, %230 : vector<128x128xf32>
    %260 = arith.mulf %244, %252 : vector<128x128xf32>
    %261 = arith.addf %259, %260 : vector<128x128xf32>
    %262 = math.tanh %261 : vector<128x128xf32>
    %263 = arith.mulf %258, %262 : vector<128x128xf32>
    %c6_i32 = arith.constant 6 : i32
    %264 = arith.index_cast %c6_i32 : i32 to index
    %c0_75 = arith.constant 0 : index
    %c0_76 = arith.constant 0 : index
    %265 = vector.load %arg13[%264, %c0_75, %c0_76] : memref<8x128x512xf32, #tpu.memory_space<vmem>>, vector<1x128x512xf32>
    %266 = vector.shape_cast %265 : vector<1x128x512xf32> to vector<128x512xf32>
    %267 = arith.truncf %263 : vector<128x128xf32> to vector<128x128xbf16>
    %cst_77 = arith.constant dense<0.000000e+00> : vector<128x512xf32>
    %268 = tpu.matmul %267, %75, %cst_77 {dimension_numbers = #tpu.dot_dimension_numbers<[1], [0], [0], [1], [0, 0, 1, 1], [], []>} : vector<128x128xbf16>, vector<128x512xbf16>, vector<128x512xf32> -> vector<128x512xf32>
    %269 = arith.addf %266, %268 : vector<128x512xf32>
    %270 = vector.extract_strided_slice %269 {offsets = [0, 0], sizes = [128, 128], strides = [1, 1]} : vector<128x512xf32> to vector<128x128xf32>
    %271 = arith.negf %270 : vector<128x128xf32>
    %272 = math.exp %271 : vector<128x128xf32>
    %cst_78 = arith.constant 1.000000e+00 : f32
    %273 = vector.broadcast %cst_78 : f32 to vector<128x128xf32>
    %274 = arith.addf %273, %272 : vector<128x128xf32>
    %275 = arith.divf %273, %274 : vector<128x128xf32>
    %276 = vector.extract_strided_slice %269 {offsets = [0, 128], sizes = [128, 128], strides = [1, 1]} : vector<128x512xf32> to vector<128x128xf32>
    %277 = arith.negf %276 : vector<128x128xf32>
    %278 = math.exp %277 : vector<128x128xf32>
    %cst_79 = arith.constant 1.000000e+00 : f32
    %279 = vector.broadcast %cst_79 : f32 to vector<128x128xf32>
    %280 = arith.addf %279, %278 : vector<128x128xf32>
    %281 = arith.divf %279, %280 : vector<128x128xf32>
    %282 = vector.extract_strided_slice %269 {offsets = [0, 256], sizes = [128, 128], strides = [1, 1]} : vector<128x512xf32> to vector<128x128xf32>
    %283 = math.tanh %282 : vector<128x128xf32>
    %284 = vector.extract_strided_slice %269 {offsets = [0, 384], sizes = [128, 128], strides = [1, 1]} : vector<128x512xf32> to vector<128x128xf32>
    %285 = arith.negf %284 : vector<128x128xf32>
    %286 = math.exp %285 : vector<128x128xf32>
    %cst_80 = arith.constant 1.000000e+00 : f32
    %287 = vector.broadcast %cst_80 : f32 to vector<128x128xf32>
    %288 = arith.addf %287, %286 : vector<128x128xf32>
    %289 = arith.divf %287, %288 : vector<128x128xf32>
    %290 = arith.mulf %281, %261 : vector<128x128xf32>
    %291 = arith.mulf %275, %283 : vector<128x128xf32>
    %292 = arith.addf %290, %291 : vector<128x128xf32>
    %293 = math.tanh %292 : vector<128x128xf32>
    %294 = arith.mulf %289, %293 : vector<128x128xf32>
    %c7_i32 = arith.constant 7 : i32
    %295 = arith.index_cast %c7_i32 : i32 to index
    %c0_81 = arith.constant 0 : index
    %c0_82 = arith.constant 0 : index
    %296 = vector.load %arg13[%295, %c0_81, %c0_82] : memref<8x128x512xf32, #tpu.memory_space<vmem>>, vector<1x128x512xf32>
    %297 = vector.shape_cast %296 : vector<1x128x512xf32> to vector<128x512xf32>
    %298 = arith.truncf %294 : vector<128x128xf32> to vector<128x128xbf16>
    %cst_83 = arith.constant dense<0.000000e+00> : vector<128x512xf32>
    %299 = tpu.matmul %298, %75, %cst_83 {dimension_numbers = #tpu.dot_dimension_numbers<[1], [0], [0], [1], [0, 0, 1, 1], [], []>} : vector<128x128xbf16>, vector<128x512xbf16>, vector<128x512xf32> -> vector<128x512xf32>
    %300 = arith.addf %297, %299 : vector<128x512xf32>
    %301 = vector.extract_strided_slice %300 {offsets = [0, 0], sizes = [128, 128], strides = [1, 1]} : vector<128x512xf32> to vector<128x128xf32>
    %302 = arith.negf %301 : vector<128x128xf32>
    %303 = math.exp %302 : vector<128x128xf32>
    %cst_84 = arith.constant 1.000000e+00 : f32
    %304 = vector.broadcast %cst_84 : f32 to vector<128x128xf32>
    %305 = arith.addf %304, %303 : vector<128x128xf32>
    %306 = arith.divf %304, %305 : vector<128x128xf32>
    %307 = vector.extract_strided_slice %300 {offsets = [0, 128], sizes = [128, 128], strides = [1, 1]} : vector<128x512xf32> to vector<128x128xf32>
    %308 = arith.negf %307 : vector<128x128xf32>
    %309 = math.exp %308 : vector<128x128xf32>
    %cst_85 = arith.constant 1.000000e+00 : f32
    %310 = vector.broadcast %cst_85 : f32 to vector<128x128xf32>
    %311 = arith.addf %310, %309 : vector<128x128xf32>
    %312 = arith.divf %310, %311 : vector<128x128xf32>
    %313 = vector.extract_strided_slice %300 {offsets = [0, 256], sizes = [128, 128], strides = [1, 1]} : vector<128x512xf32> to vector<128x128xf32>
    %314 = math.tanh %313 : vector<128x128xf32>
    %315 = vector.extract_strided_slice %300 {offsets = [0, 384], sizes = [128, 128], strides = [1, 1]} : vector<128x512xf32> to vector<128x128xf32>
    %316 = arith.negf %315 : vector<128x128xf32>
    %317 = math.exp %316 : vector<128x128xf32>
    %cst_86 = arith.constant 1.000000e+00 : f32
    %318 = vector.broadcast %cst_86 : f32 to vector<128x128xf32>
    %319 = arith.addf %318, %317 : vector<128x128xf32>
    %320 = arith.divf %318, %319 : vector<128x128xf32>
    %321 = arith.mulf %312, %292 : vector<128x128xf32>
    %322 = arith.mulf %306, %314 : vector<128x128xf32>
    %323 = arith.addf %321, %322 : vector<128x128xf32>
    %324 = math.tanh %323 : vector<128x128xf32>
    %325 = arith.mulf %320, %324 : vector<128x128xf32>
    %c8_i32 = arith.constant 8 : i32
    %326 = arith.truncf %325 : vector<128x128xf32> to vector<128x128xbf16>
    %c0_87 = arith.constant 0 : index
    %c0_88 = arith.constant 0 : index
    %327 = vector.load %arg5[%c0_87, %c0_88] : memref<128x64xf32, #tpu.memory_space<vmem>>, vector<128x64xf32>
    %328 = arith.truncf %327 : vector<128x64xf32> to vector<128x64xbf16>
    %cst_89 = arith.constant dense<0.000000e+00> : vector<128x64xf32>
    %329 = tpu.matmul %326, %328, %cst_89 {dimension_numbers = #tpu.dot_dimension_numbers<[1], [0], [0], [1], [0, 0, 1, 1], [], []>} : vector<128x128xbf16>, vector<128x64xbf16>, vector<128x64xf32> -> vector<128x64xf32>
    %c0_90 = arith.constant 0 : index
    %c0_91 = arith.constant 0 : index
    %330 = vector.load %arg6[%c0_90, %c0_91] : memref<1x64xf32, #tpu.memory_space<vmem>>, vector<1x64xf32>
    %331 = vector.broadcast %330 : vector<1x64xf32> to vector<128x64xf32>
    %332 = arith.addf %329, %331 : vector<128x64xf32>
    %cst_92 = arith.constant 0.000000e+00 : f32
    %333 = vector.broadcast %cst_92 : f32 to vector<128x64xf32>
    %334 = arith.maximumf %332, %333 : vector<128x64xf32>
    %335 = arith.truncf %334 : vector<128x64xf32> to vector<128x64xbf16>
    %c0_93 = arith.constant 0 : index
    %c0_94 = arith.constant 0 : index
    %336 = vector.load %arg7[%c0_93, %c0_94] : memref<64x64xf32, #tpu.memory_space<vmem>>, vector<64x64xf32>
    %337 = arith.truncf %336 : vector<64x64xf32> to vector<64x64xbf16>
    %cst_95 = arith.constant dense<0.000000e+00> : vector<128x64xf32>
    %338 = tpu.matmul %335, %337, %cst_95 {dimension_numbers = #tpu.dot_dimension_numbers<[1], [0], [0], [1], [0, 0, 1, 1], [], []>} : vector<128x64xbf16>, vector<64x64xbf16>, vector<128x64xf32> -> vector<128x64xf32>
    %c0_96 = arith.constant 0 : index
    %c0_97 = arith.constant 0 : index
    %339 = vector.load %arg8[%c0_96, %c0_97] : memref<1x64xf32, #tpu.memory_space<vmem>>, vector<1x64xf32>
    %340 = vector.broadcast %339 : vector<1x64xf32> to vector<128x64xf32>
    %341 = arith.addf %338, %340 : vector<128x64xf32>
    %cst_98 = arith.constant 0.000000e+00 : f32
    %342 = vector.broadcast %cst_98 : f32 to vector<128x64xf32>
    %343 = arith.maximumf %341, %342 : vector<128x64xf32>
    %c0_99 = arith.constant 0 : index
    %c0_100 = arith.constant 0 : index
    %344 = vector.load %arg9[%c0_99, %c0_100] : memref<1x64xf32, #tpu.memory_space<vmem>>, vector<1x64xf32>
    %345 = vector.broadcast %344 : vector<1x64xf32> to vector<128x64xf32>
    %346 = arith.mulf %343, %345 : vector<128x64xf32>
    %cst_101 = arith.constant dense<0.000000e+00> : vector<128xf32>
    %347 = vector.multi_reduction <add>, %346, %cst_101 [1] : vector<128x64xf32> to vector<128xf32>
    %348 = vector.shape_cast %347 : vector<128xf32> to vector<128x1xf32>
    %c0_102 = arith.constant 0 : index
    %c0_103 = arith.constant 0 : index
    %349 = vector.load %arg10[%c0_102, %c0_103] : memref<1x1xf32, #tpu.memory_space<vmem>>, vector<1x1xf32>
    %350 = vector.broadcast %349 : vector<1x1xf32> to vector<128x1xf32>
    %351 = arith.addf %348, %350 : vector<128x1xf32>
    %c0_104 = arith.constant 0 : index
    %c0_105 = arith.constant 0 : index
    %352 = vector.load %arg11[%c0_104, %c0_105] : memref<1x1xf32, #tpu.memory_space<vmem>>, vector<1x1xf32>
    %353 = vector.broadcast %352 : vector<1x1xf32> to vector<128x1xf32>
    %354 = arith.addf %351, %353 : vector<128x1xf32>
    %c0_106 = arith.constant 0 : index
    %c0_107 = arith.constant 0 : index
    %355 = vector.load %arg12[%c0_106, %c0_107] : memref<128x1xf32, #tpu.memory_space<vmem>>, vector<128x1xf32>
    tpu.vector_store %arg12[%c0_106, %c0_107], %354 {strides = array<i32>} : memref<128x1xf32, #tpu.memory_space<vmem>>, vector<128x1xf32>,
    return
  }
  func.func @transform_0(%arg0: i32) -> (i32, i32) {
    %c0_i32 = arith.constant 0 : i32
    %c0_i32_0 = arith.constant 0 : i32
    return %arg0, %c0_i32 : i32, i32
  }
  func.func @transform_1(%arg0: i32) -> (i32, i32) {
    %c0_i32 = arith.constant 0 : i32
    %c0_i32_0 = arith.constant 0 : i32
    %c0_i32_1 = arith.constant 0 : i32
    return %c0_i32, %c0_i32_0 : i32, i32
  }
  func.func @transform_2(%arg0: i32) -> (i32, i32) {
    %c0_i32 = arith.constant 0 : i32
    %c0_i32_0 = arith.constant 0 : i32
    %c0_i32_1 = arith.constant 0 : i32
    return %c0_i32, %c0_i32_0 : i32, i32
  }
  func.func @transform_3(%arg0: i32) -> (i32, i32) {
    %c0_i32 = arith.constant 0 : i32
    %c0_i32_0 = arith.constant 0 : i32
    %c0_i32_1 = arith.constant 0 : i32
    return %c0_i32, %c0_i32_0 : i32, i32
  }
  func.func @transform_4(%arg0: i32) -> (i32, i32) {
    %c0_i32 = arith.constant 0 : i32
    %c0_i32_0 = arith.constant 0 : i32
    %c0_i32_1 = arith.constant 0 : i32
    return %c0_i32, %c0_i32_0 : i32, i32
  }
  func.func @transform_5(%arg0: i32) -> (i32, i32) {
    %c0_i32 = arith.constant 0 : i32
    %c0_i32_0 = arith.constant 0 : i32
    %c0_i32_1 = arith.constant 0 : i32
    return %c0_i32, %c0_i32_0 : i32, i32
  }
  func.func @transform_6(%arg0: i32) -> (i32, i32) {
    %c0_i32 = arith.constant 0 : i32
    %c0_i32_0 = arith.constant 0 : i32
    %c0_i32_1 = arith.constant 0 : i32
    return %c0_i32, %c0_i32_0 : i32, i32
  }
  func.func @transform_7(%arg0: i32) -> (i32, i32) {
    %c0_i32 = arith.constant 0 : i32
    %c0_i32_0 = arith.constant 0 : i32
    %c0_i32_1 = arith.constant 0 : i32
    return %c0_i32, %c0_i32_0 : i32, i32
  }
  func.func @transform_8(%arg0: i32) -> (i32, i32) {
    %c0_i32 = arith.constant 0 : i32
    %c0_i32_0 = arith.constant 0 : i32
    %c0_i32_1 = arith.constant 0 : i32
    return %c0_i32, %c0_i32_0 : i32, i32
  }
  func.func @transform_9(%arg0: i32) -> (i32, i32) {
    %c0_i32 = arith.constant 0 : i32
    %c0_i32_0 = arith.constant 0 : i32
    %c0_i32_1 = arith.constant 0 : i32
    return %c0_i32, %c0_i32_0 : i32, i32
  }
  func.func @transform_10(%arg0: i32) -> (i32, i32) {
    %c0_i32 = arith.constant 0 : i32
    %c0_i32_0 = arith.constant 0 : i32
    %c0_i32_1 = arith.constant 0 : i32
    return %c0_i32, %c0_i32_0 : i32, i32
  }
  func.func @transform_11(%arg0: i32) -> (i32, i32) {
    %c0_i32 = arith.constant 0 : i32
    %c0_i32_0 = arith.constant 0 : i32
    return %arg0, %c0_i32 : i32, i32
  }
}

</mosaic_0001>

<llo_original>
// kernel: tpu_custom_call.1
$region0: #{tpu_custom_call.1}
  #allocation0 [shape = 'u32[]', space=smem, size = 0x4, offset = 0x4, fixed_abs, tag = 'smem constant byte address 0x4 - core index']
  #allocation1 [shape = 'u32[144,128]{1,0:T(1,128)}', space=vmem, size = 0x12000, scoped, tag = 'internal scratch']
  #allocation2 [shape = 'f32[8,128,512]{2,1,0:T(8,128)}', space=vmem, size = 0x200000, scoped, tag = 'scratch operand']
  #allocation3 [shape = 'f32[1,1]{1,0:T(1,128)S(1)}', space=vmem, size = 0x200, scoped, tag = 'scoped memory for tpu_custom_call.1']
  #allocation4 [shape = 'f32[1,1]{1,0:T(1,128)S(1)}', space=vmem, size = 0x200, scoped, tag = 'scoped memory for tpu_custom_call.1']
  %s0 = inlined_call_operand.vmem [shape: f32[128,8], index: 0, kind: input, shape index: {}]
  %s1 = inlined_call_operand.vmem [shape: f32[1,512], index: 1, kind: input, shape index: {}]
  %s2 = inlined_call_operand.hbm [shape: f32[128,512], index: 2, kind: input, shape index: {}]
  %s3 = inlined_call_operand.vmem [shape: f32[1,512], index: 3, kind: input, shape index: {}]
  %s4 = inlined_call_operand.vmem [shape: f32[128,64], index: 4, kind: input, shape index: {}]
  %s5 = inlined_call_operand.vmem [shape: f32[1,64], index: 5, kind: input, shape index: {}]
  %s6 = inlined_call_operand.vmem [shape: f32[64,64], index: 6, kind: input, shape index: {}]
  %s7 = inlined_call_operand.vmem [shape: f32[1,64], index: 7, kind: input, shape index: {}]
  %s8 = inlined_call_operand.vmem [shape: f32[1,64], index: 8, kind: input, shape index: {}]
  %s9 = inlined_call_operand.<no memory space> [shape: f32[1,1], index: 9, kind: input, shape index: {}]
  %s10 = inlined_call_operand.<no memory space> [shape: f32[1,1], index: 10, kind: input, shape index: {}]
  %s11 = inlined_call_operand.vmem [shape: f32[128,1], index: 11, kind: output, shape index: {}]
  %s12 = sld [smem:[#allocation0]]
  $region58: #{tpu_custom_call.1} parent=0
    _
  %s14 = ssub.s32 1, %s12
  %s15 = scalar_select 0, %s14, %s12
  %v16 = vstv %s9
  %17 = vst [vmem:[#allocation3] sm:$0x1] %v16
  %v18 = vstv %s10
  %19 = vst [vmem:[#allocation4] sm:$0x1] %v18
  $region1: #{tpu_custom_call.1} parent=0
    #allocation5 [shape = 'u8[262144]{0}', space=vmem, size = 0x40000, scoped, tag = 'input window, operand 2, single buffered']
    #allocation6 [shape = 's32[1]{0}', space=sflag, size = 0x4, scoped, tag = 'scoped memory for tpu_custom_call.1']
    %20 = vsyncpa [#allocation6], 0
    // Predicated region
    $region2: #{tpu_custom_call.1} parent=1 // pred_check
      _
    $region3: #{tpu_custom_call.1} parent=1 // pred_check_branch
      %22 = sbr.rel (0) target = $region5
    $region4: #{tpu_custom_call.1} parent=1 // pred_region
      _
    $region5: #{tpu_custom_call.1} parent=1 // pred_fallthru
      _
    // Predicated region
    $region6: #{tpu_custom_call.1} parent=1 // pred_check
      _
    $region7: #{tpu_custom_call.1} parent=1 // pred_check_branch
      %24 = sbr.rel (0) target = $region9
    $region8: #{tpu_custom_call.1} parent=1 // pred_region
      _
    $region9: #{tpu_custom_call.1} parent=1 // pred_fallthru
      _
    // Predicated region
    $region10: #{tpu_custom_call.1} parent=1 // pred_check
      _
    $region11: #{tpu_custom_call.1} parent=1 // pred_check_branch
      %26 = sbr.rel (0) target = $region13
    $region12: #{tpu_custom_call.1} parent=1 // pred_region
      %s28 = ssub.s32 8192, 8192
      %29 = vsyncadd [#allocation6], %s28
      %s30 = sshll.u32 [#allocation5], 4
      %s31 = int_to_ptr.vmem [resolvable:$true] %s30
      %36 = dma.hbm_to_vmem [thread:$0]  %s2, 8192, %s31, [#allocation6], 512, 512, 32
    $region13: #{tpu_custom_call.1} parent=1 // pred_fallthru
      _
    // Predicated region
    $region14: #{tpu_custom_call.1} parent=1 // pred_check
      _
    $region15: #{tpu_custom_call.1} parent=1 // pred_check_branch
      %38 = sbr.rel (0) target = $region17
    $region16: #{tpu_custom_call.1} parent=1 // pred_region
      _
    $region17: #{tpu_custom_call.1} parent=1 // pred_fallthru
      _
    // Predicated region
    $region18: #{tpu_custom_call.1} parent=1 // pred_check
      _
    $region19: #{tpu_custom_call.1} parent=1 // pred_check_branch
      %40 = sbr.rel (0) target = $region21
    $region20: #{tpu_custom_call.1} parent=1 // pred_region
      _
    $region21: #{tpu_custom_call.1} parent=1 // pred_fallthru
      _
    // Predicated region
    $region22: #{tpu_custom_call.1} parent=1 // pred_check
      _
    $region23: #{tpu_custom_call.1} parent=1 // pred_check_branch
      %42 = sbr.rel (0) target = $region25
    $region24: #{tpu_custom_call.1} parent=1 // pred_region
      _
    $region25: #{tpu_custom_call.1} parent=1 // pred_fallthru
      _
    // Predicated region
    $region26: #{tpu_custom_call.1} parent=1 // pred_check
      _
    $region27: #{tpu_custom_call.1} parent=1 // pred_check_branch
      %44 = sbr.rel (0) target = $region29
    $region28: #{tpu_custom_call.1} parent=1 // pred_region
      _
    $region29: #{tpu_custom_call.1} parent=1 // pred_fallthru
      _
    // Predicated region
    $region30: #{tpu_custom_call.1} parent=1 // pred_check
      _
    $region31: #{tpu_custom_call.1} parent=1 // pred_check_branch
      %46 = sbr.rel (0) target = $region33
    $region32: #{tpu_custom_call.1} parent=1 // pred_region
      _
    $region33: #{tpu_custom_call.1} parent=1 // pred_fallthru
      _
    // Predicated region
    $region34: #{tpu_custom_call.1} parent=1 // pred_check
      _
    $region35: #{tpu_custom_call.1} parent=1 // pred_check_branch
      %48 = sbr.rel (0) target = $region37
    $region36: #{tpu_custom_call.1} parent=1 // pred_region
      _
    $region37: #{tpu_custom_call.1} parent=1 // pred_fallthru
      _
    // Predicated region
    $region38: #{tpu_custom_call.1} parent=1 // pred_check
      _
    $region39: #{tpu_custom_call.1} parent=1 // pred_check_branch
      %50 = sbr.rel (0) target = $region41
    $region40: #{tpu_custom_call.1} parent=1 // pred_region
      _
    $region41: #{tpu_custom_call.1} parent=1 // pred_fallthru
      _
    // Predicated region
    $region42: #{tpu_custom_call.1} parent=1 // pred_check
      _
    $region43: #{tpu_custom_call.1} parent=1 // pred_check_branch
      %52 = sbr.rel (0) target = $region45
    $region44: #{tpu_custom_call.1} parent=1 // pred_region
      _
    $region45: #{tpu_custom_call.1} parent=1 // pred_fallthru
      _
    // Predicated region
    $region46: #{tpu_custom_call.1} parent=1 // pred_check
      _
    $region47: #{tpu_custom_call.1} parent=1 // pred_check_branch
      %54 = sbr.rel (0) target = $region49
    $region48: #{tpu_custom_call.1} parent=1 // pred_region
      %55 = dma.done [#allocation6], 8192
    $region49: #{tpu_custom_call.1} parent=1 // pred_fallthru
      _
    %v57 = vld [vmem:[%s1] sm:$0xf]
    %v58 = vld [vmem:[%s3] sm:$0xf]
    %v59 = vld [vmem:[%s0] sm:$0xff]
    %v60 = vld [vmem:[%s0 + $0x8] sm:$0xff]
    %v61 = vld [vmem:[%s0 + $0x10] sm:$0xff]
    %v62 = vld [vmem:[%s0 + $0x18] sm:$0xff]
    %v63 = vld [vmem:[%s0 + $0x20] sm:$0xff]
    %v64 = vld [vmem:[%s0 + $0x28] sm:$0xff]
    %v65 = vld [vmem:[%s0 + $0x30] sm:$0xff]
    %v66 = vld [vmem:[%s0 + $0x38] sm:$0xff]
    %v67 = vld [vmem:[%s0 + $0x40] sm:$0xff]
    %v68 = vld [vmem:[%s0 + $0x48] sm:$0xff]
    %v69 = vld [vmem:[%s0 + $0x50] sm:$0xff]
    %v70 = vld [vmem:[%s0 + $0x58] sm:$0xff]
    %v71 = vld [vmem:[%s0 + $0x60] sm:$0xff]
    %v72 = vld [vmem:[%s0 + $0x68] sm:$0xff]
    %v73 = vld [vmem:[%s0 + $0x70] sm:$0xff]
    %v74 = vld [vmem:[%s0 + $0x78] sm:$0xff]
    %76 = vset.pattern.permute.xlu0 0
    %77 = vperm.xlu0 %76, %v59
    %v78 = vpop.permute.xlu0 %77
    %81 = vset.pattern.permute.xlu0 0
    %82 = vperm.xlu0 %81, %v60
    %v83 = vpop.permute.xlu0 %82
    %86 = vset.pattern.permute.xlu0 0
    %87 = vperm.xlu0 %86, %v61
    %v88 = vpop.permute.xlu0 %87
    %91 = vset.pattern.permute.xlu0 0
    %92 = vperm.xlu0 %91, %v62
    %v93 = vpop.permute.xlu0 %92
    %96 = vset.pattern.permute.xlu0 0
    %97 = vperm.xlu0 %96, %v63
    %v98 = vpop.permute.xlu0 %97
    %101 = vset.pattern.permute.xlu0 0
    %102 = vperm.xlu0 %101, %v64
    %v103 = vpop.permute.xlu0 %102
    %106 = vset.pattern.permute.xlu0 0
    %107 = vperm.xlu0 %106, %v65
    %v108 = vpop.permute.xlu0 %107
    %111 = vset.pattern.permute.xlu0 0
    %112 = vperm.xlu0 %111, %v66
    %v113 = vpop.permute.xlu0 %112
    %116 = vset.pattern.permute.xlu0 0
    %117 = vperm.xlu0 %116, %v67
    %v118 = vpop.permute.xlu0 %117
    %121 = vset.pattern.permute.xlu0 0
    %122 = vperm.xlu0 %121, %v68
    %v123 = vpop.permute.xlu0 %122
    %126 = vset.pattern.permute.xlu0 0
    %127 = vperm.xlu0 %126, %v69
    %v128 = vpop.permute.xlu0 %127
    %131 = vset.pattern.permute.xlu0 0
    %132 = vperm.xlu0 %131, %v70
    %v133 = vpop.permute.xlu0 %132
    %136 = vset.pattern.permute.xlu0 0
    %137 = vperm.xlu0 %136, %v71
    %v138 = vpop.permute.xlu0 %137
    %141 = vset.pattern.permute.xlu0 0
    %142 = vperm.xlu0 %141, %v72
    %v143 = vpop.permute.xlu0 %142
    %146 = vset.pattern.permute.xlu0 0
    %147 = vperm.xlu0 %146, %v73
    %v148 = vpop.permute.xlu0 %147
    %151 = vset.pattern.permute.xlu0 0
    %152 = vperm.xlu0 %151, %v74
    %v153 = vpop.permute.xlu0 %152
    %v156 = vlaneseq
    %v157 = vshrl.u32 %v156, 7
    %v158 = vsub.s32 0, %v157
    %v159 = vrot.slane %v57, %v158
    %v160 = vlaneseq
    %v161 = vshrl.u32 %v160, 7
    %v162 = vsub.s32 1, %v161
    %v163 = vrot.slane %v57, %v162
    %v164 = vlaneseq
    %v165 = vshrl.u32 %v164, 7
    %v166 = vsub.s32 2, %v165
    %v167 = vrot.slane %v57, %v166
    %v168 = vlaneseq
    %v169 = vshrl.u32 %v168, 7
    %v170 = vsub.s32 3, %v169
    %v171 = vrot.slane %v57, %v170
    %v176 = vmul.f32 %v78, %v159
    %v177 = vmul.f32 %v78, %v163
    %v178 = vmul.f32 %v78, %v167
    %v179 = vmul.f32 %v78, %v171
    %v180 = vmul.f32 %v83, %v159
    %v181 = vmul.f32 %v83, %v163
    %v182 = vmul.f32 %v83, %v167
    %v183 = vmul.f32 %v83, %v171
    %v184 = vmul.f32 %v88, %v159
    %v185 = vmul.f32 %v88, %v163
    %v186 = vmul.f32 %v88, %v167
    %v187 = vmul.f32 %v88, %v171
    %v188 = vmul.f32 %v93, %v159
    %v189 = vmul.f32 %v93, %v163
    %v190 = vmul.f32 %v93, %v167
    %v191 = vmul.f32 %v93, %v171
    %v192 = vmul.f32 %v98, %v159
    %v193 = vmul.f32 %v98, %v163
    %v194 = vmul.f32 %v98, %v167
    %v195 = vmul.f32 %v98, %v171
    %v196 = vmul.f32 %v103, %v159
    %v197 = vmul.f32 %v103, %v163
    %v198 = vmul.f32 %v103, %v167
    %v199 = vmul.f32 %v103, %v171
    %v200 = vmul.f32 %v108, %v159
    %v201 = vmul.f32 %v108, %v163
    %v202 = vmul.f32 %v108, %v167
    %v203 = vmul.f32 %v108, %v171
    %v204 = vmul.f32 %v113, %v159
    %v205 = vmul.f32 %v113, %v163
    %v206 = vmul.f32 %v113, %v167
    %v207 = vmul.f32 %v113, %v171
    %v208 = vmul.f32 %v118, %v159
    %v209 = vmul.f32 %v118, %v163
    %v210 = vmul.f32 %v118, %v167
    %v211 = vmul.f32 %v118, %v171
    %v212 = vmul.f32 %v123, %v159
    %v213 = vmul.f32 %v123, %v163
    %v214 = vmul.f32 %v123, %v167
    %v215 = vmul.f32 %v123, %v171
    %v216 = vmul.f32 %v128, %v159
    %v217 = vmul.f32 %v128, %v163
    %v218 = vmul.f32 %v128, %v167
    %v219 = vmul.f32 %v128, %v171
    %v220 = vmul.f32 %v133, %v159
    %v221 = vmul.f32 %v133, %v163
    %v222 = vmul.f32 %v133, %v167
    %v223 = vmul.f32 %v133, %v171
    %v224 = vmul.f32 %v138, %v159
    %v225 = vmul.f32 %v138, %v163
    %v226 = vmul.f32 %v138, %v167
    %v227 = vmul.f32 %v138, %v171
    %v228 = vmul.f32 %v143, %v159
    %v229 = vmul.f32 %v143, %v163
    %v230 = vmul.f32 %v143, %v167
    %v231 = vmul.f32 %v143, %v171
    %v232 = vmul.f32 %v148, %v159
    %v233 = vmul.f32 %v148, %v163
    %v234 = vmul.f32 %v148, %v167
    %v235 = vmul.f32 %v148, %v171
    %v236 = vmul.f32 %v153, %v159
    %v237 = vmul.f32 %v153, %v163
    %v238 = vmul.f32 %v153, %v167
    %v239 = vmul.f32 %v153, %v171
    %v241 = vlaneseq
    %v242 = vshrl.u32 %v241, 7
    %v243 = vsub.s32 0, %v242
    %v244 = vrot.slane %v58, %v243
    %v245 = vlaneseq
    %v246 = vshrl.u32 %v245, 7
    %v247 = vsub.s32 1, %v246
    %v248 = vrot.slane %v58, %v247
    %v249 = vlaneseq
    %v250 = vshrl.u32 %v249, 7
    %v251 = vsub.s32 2, %v250
    %v252 = vrot.slane %v58, %v251
    %v253 = vlaneseq
    %v254 = vshrl.u32 %v253, 7
    %v255 = vsub.s32 3, %v254
    %v256 = vrot.slane %v58, %v255
    %v261 = vadd.f32 %v176, %v244
    %v262 = vadd.f32 %v177, %v248
    %v263 = vadd.f32 %v178, %v252
    %v264 = vadd.f32 %v179, %v256
    %v265 = vadd.f32 %v180, %v244
    %v266 = vadd.f32 %v181, %v248
    %v267 = vadd.f32 %v182, %v252
    %v268 = vadd.f32 %v183, %v256
    %v269 = vadd.f32 %v184, %v244
    %v270 = vadd.f32 %v185, %v248
    %v271 = vadd.f32 %v186, %v252
    %v272 = vadd.f32 %v187, %v256
    %v273 = vadd.f32 %v188, %v244
    %v274 = vadd.f32 %v189, %v248
    %v275 = vadd.f32 %v190, %v252
    %v276 = vadd.f32 %v191, %v256
    %v277 = vadd.f32 %v192, %v244
    %v278 = vadd.f32 %v193, %v248
    %v279 = vadd.f32 %v194, %v252
    %v280 = vadd.f32 %v195, %v256
    %v281 = vadd.f32 %v196, %v244
    %v282 = vadd.f32 %v197, %v248
    %v283 = vadd.f32 %v198, %v252
    %v284 = vadd.f32 %v199, %v256
    %v285 = vadd.f32 %v200, %v244
    %v286 = vadd.f32 %v201, %v248
    %v287 = vadd.f32 %v202, %v252
    %v288 = vadd.f32 %v203, %v256
    %v289 = vadd.f32 %v204, %v244
    %v290 = vadd.f32 %v205, %v248
    %v291 = vadd.f32 %v206, %v252
    %v292 = vadd.f32 %v207, %v256
    %v293 = vadd.f32 %v208, %v244
    %v294 = vadd.f32 %v209, %v248
    %v295 = vadd.f32 %v210, %v252
    %v296 = vadd.f32 %v211, %v256
    %v297 = vadd.f32 %v212, %v244
    %v298 = vadd.f32 %v213, %v248
    %v299 = vadd.f32 %v214, %v252
    %v300 = vadd.f32 %v215, %v256
    %v301 = vadd.f32 %v216, %v244
    %v302 = vadd.f32 %v217, %v248
    %v303 = vadd.f32 %v218, %v252
    %v304 = vadd.f32 %v219, %v256
    %v305 = vadd.f32 %v220, %v244
    %v306 = vadd.f32 %v221, %v248
    %v307 = vadd.f32 %v222, %v252
    %v308 = vadd.f32 %v223, %v256
    %v309 = vadd.f32 %v224, %v244
    %v310 = vadd.f32 %v225, %v248
    %v311 = vadd.f32 %v226, %v252
    %v312 = vadd.f32 %v227, %v256
    %v313 = vadd.f32 %v228, %v244
    %v314 = vadd.f32 %v229, %v248
    %v315 = vadd.f32 %v230, %v252
    %v316 = vadd.f32 %v231, %v256
    %v317 = vadd.f32 %v232, %v244
    %v318 = vadd.f32 %v233, %v248
    %v319 = vadd.f32 %v234, %v252
    %v320 = vadd.f32 %v235, %v256
    %v321 = vadd.f32 %v236, %v244
    %v322 = vadd.f32 %v237, %v248
    %v323 = vadd.f32 %v238, %v252
    %v324 = vadd.f32 %v239, %v256
    %325 = vst [vmem:[#allocation2] sm:$0xff] %v261
    %326 = vst [vmem:[#allocation2 + $0x8] sm:$0xff] %v262
    %327 = vst [vmem:[#allocation2 + $0x10] sm:$0xff] %v263
    %328 = vst [vmem:[#allocation2 + $0x18] sm:$0xff] %v264
    %329 = vst [vmem:[#allocation2 + $0x20] sm:$0xff] %v265
    %330 = vst [vmem:[#allocation2 + $0x28] sm:$0xff] %v266
    %331 = vst [vmem:[#allocation2 + $0x30] sm:$0xff] %v267
    %332 = vst [vmem:[#allocation2 + $0x38] sm:$0xff] %v268
    %333 = vst [vmem:[#allocation2 + $0x40] sm:$0xff] %v269
    %334 = vst [vmem:[#allocation2 + $0x48] sm:$0xff] %v270
    %335 = vst [vmem:[#allocation2 + $0x50] sm:$0xff] %v271
    %336 = vst [vmem:[#allocation2 + $0x58] sm:$0xff] %v272
    %337 = vst [vmem:[#allocation2 + $0x60] sm:$0xff] %v273
    %338 = vst [vmem:[#allocation2 + $0x68] sm:$0xff] %v274
    %339 = vst [vmem:[#allocation2 + $0x70] sm:$0xff] %v275
    %340 = vst [vmem:[#allocation2 + $0x78] sm:$0xff] %v276
    %341 = vst [vmem:[#allocation2 + $0x80] sm:$0xff] %v277
    %342 = vst [vmem:[#allocation2 + $0x88] sm:$0xff] %v278
    %343 = vst [vmem:[#allocation2 + $0x90] sm:$0xff] %v279
    %344 = vst [vmem:[#allocation2 + $0x98] sm:$0xff] %v280
    %345 = vst [vmem:[#allocation2 + $0xa0] sm:$0xff] %v281
    %346 = vst [vmem:[#allocation2 + $0xa8] sm:$0xff] %v282
    %347 = vst [vmem:[#allocation2 + $0xb0] sm:$0xff] %v283
    %348 = vst [vmem:[#allocation2 + $0xb8] sm:$0xff] %v284
    %349 = vst [vmem:[#allocation2 + $0xc0] sm:$0xff] %v285
    %350 = vst [vmem:[#allocation2 + $0xc8] sm:$0xff] %v286
    %351 = vst [vmem:[#allocation2 + $0xd0] sm:$0xff] %v287
    %352 = vst [vmem:[#allocation2 + $0xd8] sm:$0xff] %v288
    %353 = vst [vmem:[#allocation2 + $0xe0] sm:$0xff] %v289
    %354 = vst [vmem:[#allocation2 + $0xe8] sm:$0xff] %v290
    %355 = vst [vmem:[#allocation2 + $0xf0] sm:$0xff] %v291
    %356 = vst [vmem:[#allocation2 + $0xf8] sm:$0xff] %v292
    %357 = vst [vmem:[#allocation2 + $0x100] sm:$0xff] %v293
    %358 = vst [vmem:[#allocation2 + $0x108] sm:$0xff] %v294
    %359 = vst [vmem:[#allocation2 + $0x110] sm:$0xff] %v295
    %360 = vst [vmem:[#allocation2 + $0x118] sm:$0xff] %v296
    %361 = vst [vmem:[#allocation2 + $0x120] sm:$0xff] %v297
    %362 = vst [vmem:[#allocation2 + $0x128] sm:$0xff] %v298
    %363 = vst [vmem:[#allocation2 + $0x130] sm:$0xff] %v299
    %364 = vst [vmem:[#allocation2 + $0x138] sm:$0xff] %v300
    %365 = vst [vmem:[#allocation2 + $0x140] sm:$0xff] %v301
    %366 = vst [vmem:[#allocation2 + $0x148] sm:$0xff] %v302
    %367 = vst [vmem:[#allocation2 + $0x150] sm:$0xff] %v303
    %368 = vst [vmem:[#allocation2 + $0x158] sm:$0xff] %v304
    %369 = vst [vmem:[#allocation2 + $0x160] sm:$0xff] %v305
    %370 = vst [vmem:[#allocation2 + $0x168] sm:$0xff] %v306
    %371 = vst [vmem:[#allocation2 + $0x170] sm:$0xff] %v307
    %372 = vst [vmem:[#allocation2 + $0x178] sm:$0xff] %v308
    %373 = vst [vmem:[#allocation2 + $0x180] sm:$0xff] %v309
    %374 = vst [vmem:[#allocation2 + $0x188] sm:$0xff] %v310
    %375 = vst [vmem:[#allocation2 + $0x190] sm:$0xff] %v311
    %376 = vst [vmem:[#allocation2 + $0x198] sm:$0xff] %v312
    %377 = vst [vmem:[#allocation2 + $0x1a0] sm:$0xff] %v313
    %378 = vst [vmem:[#allocation2 + $0x1a8] sm:$0xff] %v314
    %379 = vst [vmem:[#allocation2 + $0x1b0] sm:$0xff] %v315
    %380 = vst [vmem:[#allocation2 + $0x1b8] sm:$0xff] %v316
    %381 = vst [vmem:[#allocation2 + $0x1c0] sm:$0xff] %v317
    %382 = vst [vmem:[#allocation2 + $0x1c8] sm:$0xff] %v318
    %383 = vst [vmem:[#allocation2 + $0x1d0] sm:$0xff] %v319
    %384 = vst [vmem:[#allocation2 + $0x1d8] sm:$0xff] %v320
    %385 = vst [vmem:[#allocation2 + $0x1e0] sm:$0xff] %v321
    %386 = vst [vmem:[#allocation2 + $0x1e8] sm:$0xff] %v322
    %387 = vst [vmem:[#allocation2 + $0x1f0] sm:$0xff] %v323
    %388 = vst [vmem:[#allocation2 + $0x1f8] sm:$0xff] %v324
    %v389 = vld [vmem:[%s0] sm:$0xff]
    %v390 = vld [vmem:[%s0 + $0x8] sm:$0xff]
    %v391 = vld [vmem:[%s0 + $0x10] sm:$0xff]
    %v392 = vld [vmem:[%s0 + $0x18] sm:$0xff]
    %v393 = vld [vmem:[%s0 + $0x20] sm:$0xff]
    %v394 = vld [vmem:[%s0 + $0x28] sm:$0xff]
    %v395 = vld [vmem:[%s0 + $0x30] sm:$0xff]
    %v396 = vld [vmem:[%s0 + $0x38] sm:$0xff]
    %v397 = vld [vmem:[%s0 + $0x40] sm:$0xff]
    %v398 = vld [vmem:[%s0 + $0x48] sm:$0xff]
    %v399 = vld [vmem:[%s0 + $0x50] sm:$0xff]
    %v400 = vld [vmem:[%s0 + $0x58] sm:$0xff]
    %v401 = vld [vmem:[%s0 + $0x60] sm:$0xff]
    %v402 = vld [vmem:[%s0 + $0x68] sm:$0xff]
    %v403 = vld [vmem:[%s0 + $0x70] sm:$0xff]
    %v404 = vld [vmem:[%s0 + $0x78] sm:$0xff]
    %406 = vset.pattern.permute.xlu0 1
    %407 = vperm.xlu0 %406, %v389
    %v408 = vpop.permute.xlu0 %407
    %411 = vset.pattern.permute.xlu0 1
    %412 = vperm.xlu0 %411, %v390
    %v413 = vpop.permute.xlu0 %412
    %416 = vset.pattern.permute.xlu0 1
    %417 = vperm.xlu0 %416, %v391
    %v418 = vpop.permute.xlu0 %417
    %421 = vset.pattern.permute.xlu0 1
    %422 = vperm.xlu0 %421, %v392
    %v423 = vpop.permute.xlu0 %422
    %426 = vset.pattern.permute.xlu0 1
    %427 = vperm.xlu0 %426, %v393
    %v428 = vpop.permute.xlu0 %427
    %431 = vset.pattern.permute.xlu0 1
    %432 = vperm.xlu0 %431, %v394
    %v433 = vpop.permute.xlu0 %432
    %436 = vset.pattern.permute.xlu0 1
    %437 = vperm.xlu0 %436, %v395
    %v438 = vpop.permute.xlu0 %437
    %441 = vset.pattern.permute.xlu0 1
    %442 = vperm.xlu0 %441, %v396
    %v443 = vpop.permute.xlu0 %442
    %446 = vset.pattern.permute.xlu0 1
    %447 = vperm.xlu0 %446, %v397
    %v448 = vpop.permute.xlu0 %447
    %451 = vset.pattern.permute.xlu0 1
    %452 = vperm.xlu0 %451, %v398
    %v453 = vpop.permute.xlu0 %452
    %456 = vset.pattern.permute.xlu0 1
    %457 = vperm.xlu0 %456, %v399
    %v458 = vpop.permute.xlu0 %457
    %461 = vset.pattern.permute.xlu0 1
    %462 = vperm.xlu0 %461, %v400
    %v463 = vpop.permute.xlu0 %462
    %466 = vset.pattern.permute.xlu0 1
    %467 = vperm.xlu0 %466, %v401
    %v468 = vpop.permute.xlu0 %467
    %471 = vset.pattern.permute.xlu0 1
    %472 = vperm.xlu0 %471, %v402
    %v473 = vpop.permute.xlu0 %472
    %476 = vset.pattern.permute.xlu0 1
    %477 = vperm.xlu0 %476, %v403
    %v478 = vpop.permute.xlu0 %477
    %481 = vset.pattern.permute.xlu0 1
    %482 = vperm.xlu0 %481, %v404
    %v483 = vpop.permute.xlu0 %482
    %v485 = vmul.f32 %v408, %v159
    %v486 = vmul.f32 %v408, %v163
    %v487 = vmul.f32 %v408, %v167
    %v488 = vmul.f32 %v408, %v171
    %v489 = vmul.f32 %v413, %v159
    %v490 = vmul.f32 %v413, %v163
    %v491 = vmul.f32 %v413, %v167
    %v492 = vmul.f32 %v413, %v171
    %v493 = vmul.f32 %v418, %v159
    %v494 = vmul.f32 %v418, %v163
    %v495 = vmul.f32 %v418, %v167
    %v496 = vmul.f32 %v418, %v171
    %v497 = vmul.f32 %v423, %v159
    %v498 = vmul.f32 %v423, %v163
    %v499 = vmul.f32 %v423, %v167
    %v500 = vmul.f32 %v423, %v171
    %v501 = vmul.f32 %v428, %v159
    %v502 = vmul.f32 %v428, %v163
    %v503 = vmul.f32 %v428, %v167
    %v504 = vmul.f32 %v428, %v171
    %v505 = vmul.f32 %v433, %v159
    %v506 = vmul.f32 %v433, %v163
    %v507 = vmul.f32 %v433, %v167
    %v508 = vmul.f32 %v433, %v171
    %v509 = vmul.f32 %v438, %v159
    %v510 = vmul.f32 %v438, %v163
    %v511 = vmul.f32 %v438, %v167
    %v512 = vmul.f32 %v438, %v171
    %v513 = vmul.f32 %v443, %v159
    %v514 = vmul.f32 %v443, %v163
    %v515 = vmul.f32 %v443, %v167
    %v516 = vmul.f32 %v443, %v171
    %v517 = vmul.f32 %v448, %v159
    %v518 = vmul.f32 %v448, %v163
    %v519 = vmul.f32 %v448, %v167
    %v520 = vmul.f32 %v448, %v171
    %v521 = vmul.f32 %v453, %v159
    %v522 = vmul.f32 %v453, %v163
    %v523 = vmul.f32 %v453, %v167
    %v524 = vmul.f32 %v453, %v171
    %v525 = vmul.f32 %v458, %v159
    %v526 = vmul.f32 %v458, %v163
    %v527 = vmul.f32 %v458, %v167
    %v528 = vmul.f32 %v458, %v171
    %v529 = vmul.f32 %v463, %v159
    %v530 = vmul.f32 %v463, %v163
    %v531 = vmul.f32 %v463, %v167
    %v532 = vmul.f32 %v463, %v171
    %v533 = vmul.f32 %v468, %v159
    %v534 = vmul.f32 %v468, %v163
    %v535 = vmul.f32 %v468, %v167
    %v536 = vmul.f32 %v468, %v171
    %v537 = vmul.f32 %v473, %v159
    %v538 = vmul.f32 %v473, %v163
    %v539 = vmul.f32 %v473, %v167
    %v540 = vmul.f32 %v473, %v171
    %v541 = vmul.f32 %v478, %v159
    %v542 = vmul.f32 %v478, %v163
    %v543 = vmul.f32 %v478, %v167
    %v544 = vmul.f32 %v478, %v171
    %v545 = vmul.f32 %v483, %v159
    %v546 = vmul.f32 %v483, %v163
    %v547 = vmul.f32 %v483, %v167
    %v548 = vmul.f32 %v483, %v171
    %v549 = vadd.f32 %v485, %v244
    %v550 = vadd.f32 %v486, %v248
    %v551 = vadd.f32 %v487, %v252
    %v552 = vadd.f32 %v488, %v256
    %v553 = vadd.f32 %v489, %v244
    %v554 = vadd.f32 %v490, %v248
    %v555 = vadd.f32 %v491, %v252
    %v556 = vadd.f32 %v492, %v256
    %v557 = vadd.f32 %v493, %v244
    %v558 = vadd.f32 %v494, %v248
    %v559 = vadd.f32 %v495, %v252
    %v560 = vadd.f32 %v496, %v256
    %v561 = vadd.f32 %v497, %v244
    %v562 = vadd.f32 %v498, %v248
    %v563 = vadd.f32 %v499, %v252
    %v564 = vadd.f32 %v500, %v256
    %v565 = vadd.f32 %v501, %v244
    %v566 = vadd.f32 %v502, %v248
    %v567 = vadd.f32 %v503, %v252
    %v568 = vadd.f32 %v504, %v256
    %v569 = vadd.f32 %v505, %v244
    %v570 = vadd.f32 %v506, %v248
    %v571 = vadd.f32 %v507, %v252
    %v572 = vadd.f32 %v508, %v256
    %v573 = vadd.f32 %v509, %v244
    %v574 = vadd.f32 %v510, %v248
    %v575 = vadd.f32 %v511, %v252
    %v576 = vadd.f32 %v512, %v256
    %v577 = vadd.f32 %v513, %v244
    %v578 = vadd.f32 %v514, %v248
    %v579 = vadd.f32 %v515, %v252
    %v580 = vadd.f32 %v516, %v256
    %v581 = vadd.f32 %v517, %v244
    %v582 = vadd.f32 %v518, %v248
    %v583 = vadd.f32 %v519, %v252
    %v584 = vadd.f32 %v520, %v256
    %v585 = vadd.f32 %v521, %v244
    %v586 = vadd.f32 %v522, %v248
    %v587 = vadd.f32 %v523, %v252
    %v588 = vadd.f32 %v524, %v256
    %v589 = vadd.f32 %v525, %v244
    %v590 = vadd.f32 %v526, %v248
    %v591 = vadd.f32 %v527, %v252
    %v592 = vadd.f32 %v528, %v256
    %v593 = vadd.f32 %v529, %v244
    %v594 = vadd.f32 %v530, %v248
    %v595 = vadd.f32 %v531, %v252
    %v596 = vadd.f32 %v532, %v256
    %v597 = vadd.f32 %v533, %v244
    %v598 = vadd.f32 %v534, %v248
    %v599 = vadd.f32 %v535, %v252
    %v600 = vadd.f32 %v536, %v256
    %v601 = vadd.f32 %v537, %v244
    %v602 = vadd.f32 %v538, %v248
    %v603 = vadd.f32 %v539, %v252
    %v604 = vadd.f32 %v540, %v256
    %v605 = vadd.f32 %v541, %v244
    %v606 = vadd.f32 %v542, %v248
    %v607 = vadd.f32 %v543, %v252
    %v608 = vadd.f32 %v544, %v256
    %v609 = vadd.f32 %v545, %v244
    %v610 = vadd.f32 %v546, %v248
    %v611 = vadd.f32 %v547, %v252
    %v612 = vadd.f32 %v548, %v256
    %s613 = scalar_lea.vmem [#allocation2], 512
    %614 = vst [vmem:[%s613] sm:$0xff] %v549
    %615 = vst [vmem:[%s613 + $0x8] sm:$0xff] %v550
    %616 = vst [vmem:[%s613 + $0x10] sm:$0xff] %v551
    %617 = vst [vmem:[%s613 + $0x18] sm:$0xff] %v552
    %618 = vst [vmem:[%s613 + $0x20] sm:$0xff] %v553
    %619 = vst [vmem:[%s613 + $0x28] sm:$0xff] %v554
    %620 = vst [vmem:[%s613 + $0x30] sm:$0xff] %v555
    %621 = vst [vmem:[%s613 + $0x38] sm:$0xff] %v556
    %622 = vst [vmem:[%s613 + $0x40] sm:$0xff] %v557
    %623 = vst [vmem:[%s613 + $0x48] sm:$0xff] %v558
    %624 = vst [vmem:[%s613 + $0x50] sm:$0xff] %v559
    %625 = vst [vmem:[%s613 + $0x58] sm:$0xff] %v560
    %626 = vst [vmem:[%s613 + $0x60] sm:$0xff] %v561
    %627 = vst [vmem:[%s613 + $0x68] sm:$0xff] %v562
    %628 = vst [vmem:[%s613 + $0x70] sm:$0xff] %v563
    %629 = vst [vmem:[%s613 + $0x78] sm:$0xff] %v564
    %630 = vst [vmem:[%s613 + $0x80] sm:$0xff] %v565
    %631 = vst [vmem:[%s613 + $0x88] sm:$0xff] %v566
    %632 = vst [vmem:[%s613 + $0x90] sm:$0xff] %v567
    %633 = vst [vmem:[%s613 + $0x98] sm:$0xff] %v568
    %634 = vst [vmem:[%s613 + $0xa0] sm:$0xff] %v569
    %635 = vst [vmem:[%s613 + $0xa8] sm:$0xff] %v570
    %636 = vst [vmem:[%s613 + $0xb0] sm:$0xff] %v571
    %637 = vst [vmem:[%s613 + $0xb8] sm:$0xff] %v572
    %638 = vst [vmem:[%s613 + $0xc0] sm:$0xff] %v573
    %639 = vst [vmem:[%s613 + $0xc8] sm:$0xff] %v574
    %640 = vst [vmem:[%s613 + $0xd0] sm:$0xff] %v575
    %641 = vst [vmem:[%s613 + $0xd8] sm:$0xff] %v576
    %642 = vst [vmem:[%s613 + $0xe0] sm:$0xff] %v577
    %643 = vst [vmem:[%s613 + $0xe8] sm:$0xff] %v578
    %644 = vst [vmem:[%s613 + $0xf0] sm:$0xff] %v579
    %645 = vst [vmem:[%s613 + $0xf8] sm:$0xff] %v580
    %646 = vst [vmem:[%s613 + $0x100] sm:$0xff] %v581
    %647 = vst [vmem:[%s613 + $0x108] sm:$0xff] %v582
    %648 = vst [vmem:[%s613 + $0x110] sm:$0xff] %v583
    %649 = vst [vmem:[%s613 + $0x118] sm:$0xff] %v584
    %650 = vst [vmem:[%s613 + $0x120] sm:$0xff] %v585
    %651 = vst [vmem:[%s613 + $0x128] sm:$0xff] %v586
    %652 = vst [vmem:[%s613 + $0x130] sm:$0xff] %v587
    %653 = vst [vmem:[%s613 + $0x138] sm:$0xff] %v588
    %654 = vst [vmem:[%s613 + $0x140] sm:$0xff] %v589
    %655 = vst [vmem:[%s613 + $0x148] sm:$0xff] %v590
    %656 = vst [vmem:[%s613 + $0x150] sm:$0xff] %v591
    %657 = vst [vmem:[%s613 + $0x158] sm:$0xff] %v592
    %658 = vst [vmem:[%s613 + $0x160] sm:$0xff] %v593
    %659 = vst [vmem:[%s613 + $0x168] sm:$0xff] %v594
    %660 = vst [vmem:[%s613 + $0x170] sm:$0xff] %v595
    %661 = vst [vmem:[%s613 + $0x178] sm:$0xff] %v596
    %662 = vst [vmem:[%s613 + $0x180] sm:$0xff] %v597
    %663 = vst [vmem:[%s613 + $0x188] sm:$0xff] %v598
    %664 = vst [vmem:[%s613 + $0x190] sm:$0xff] %v599
    %665 = vst [vmem:[%s613 + $0x198] sm:$0xff] %v600
    %666 = vst [vmem:[%s613 + $0x1a0] sm:$0xff] %v601
    %667 = vst [vmem:[%s613 + $0x1a8] sm:$0xff] %v602
    %668 = vst [vmem:[%s613 + $0x1b0] sm:$0xff] %v603
    %669 = vst [vmem:[%s613 + $0x1b8] sm:$0xff] %v604
    %670 = vst [vmem:[%s613 + $0x1c0] sm:$0xff] %v605
    %671 = vst [vmem:[%s613 + $0x1c8] sm:$0xff] %v606
    %672 = vst [vmem:[%s613 + $0x1d0] sm:$0xff] %v607
    %673 = vst [vmem:[%s613 + $0x1d8] sm:$0xff] %v608
    %674 = vst [vmem:[%s613 + $0x1e0] sm:$0xff] %v609
    %675 = vst [vmem:[%s613 + $0x1e8] sm:$0xff] %v610
    %676 = vst [vmem:[%s613 + $0x1f0] sm:$0xff] %v611
    %677 = vst [vmem:[%s613 + $0x1f8] sm:$0xff] %v612
    %v678 = vld [vmem:[%s0] sm:$0xff]
    %v679 = vld [vmem:[%s0 + $0x8] sm:$0xff]
    %v680 = vld [vmem:[%s0 + $0x10] sm:$0xff]
    %v681 = vld [vmem:[%s0 + $0x18] sm:$0xff]
    %v682 = vld [vmem:[%s0 + $0x20] sm:$0xff]
    %v683 = vld [vmem:[%s0 + $0x28] sm:$0xff]
    %v684 = vld [vmem:[%s0 + $0x30] sm:$0xff]
    %v685 = vld [vmem:[%s0 + $0x38] sm:$0xff]
    %v686 = vld [vmem:[%s0 + $0x40] sm:$0xff]
    %v687 = vld [vmem:[%s0 + $0x48] sm:$0xff]
    %v688 = vld [vmem:[%s0 + $0x50] sm:$0xff]
    %v689 = vld [vmem:[%s0 + $0x58] sm:$0xff]
    %v690 = vld [vmem:[%s0 + $0x60] sm:$0xff]
    %v691 = vld [vmem:[%s0 + $0x68] sm:$0xff]
    %v692 = vld [vmem:[%s0 + $0x70] sm:$0xff]
    %v693 = vld [vmem:[%s0 + $0x78] sm:$0xff]
    %695 = vset.pattern.permute.xlu0 2
    %696 = vperm.xlu0 %695, %v678
    %v697 = vpop.permute.xlu0 %696
    %700 = vset.pattern.permute.xlu0 2
    %701 = vperm.xlu0 %700, %v679
    %v702 = vpop.permute.xlu0 %701
    %705 = vset.pattern.permute.xlu0 2
    %706 = vperm.xlu0 %705, %v680
    %v707 = vpop.permute.xlu0 %706
    %710 = vset.pattern.permute.xlu0 2
    %711 = vperm.xlu0 %710, %v681
    %v712 = vpop.permute.xlu0 %711
    %715 = vset.pattern.permute.xlu0 2
    %716 = vperm.xlu0 %715, %v682
    %v717 = vpop.permute.xlu0 %716
    %720 = vset.pattern.permute.xlu0 2
    %721 = vperm.xlu0 %720, %v683
    %v722 = vpop.permute.xlu0 %721
    %725 = vset.pattern.permute.xlu0 2
    %726 = vperm.xlu0 %725, %v684
    %v727 = vpop.permute.xlu0 %726
    %730 = vset.pattern.permute.xlu0 2
    %731 = vperm.xlu0 %730, %v685
    %v732 = vpop.permute.xlu0 %731
    %735 = vset.pattern.permute.xlu0 2
    %736 = vperm.xlu0 %735, %v686
    %v737 = vpop.permute.xlu0 %736
    %740 = vset.pattern.permute.xlu0 2
    %741 = vperm.xlu0 %740, %v687
    %v742 = vpop.permute.xlu0 %741
    %745 = vset.pattern.permute.xlu0 2
    %746 = vperm.xlu0 %745, %v688
    %v747 = vpop.permute.xlu0 %746
    %750 = vset.pattern.permute.xlu0 2
    %751 = vperm.xlu0 %750, %v689
    %v752 = vpop.permute.xlu0 %751
    %755 = vset.pattern.permute.xlu0 2
    %756 = vperm.xlu0 %755, %v690
    %v757 = vpop.permute.xlu0 %756
    %760 = vset.pattern.permute.xlu0 2
    %761 = vperm.xlu0 %760, %v691
    %v762 = vpop.permute.xlu0 %761
    %765 = vset.pattern.permute.xlu0 2
    %766 = vperm.xlu0 %765, %v692
    %v767 = vpop.permute.xlu0 %766
    %770 = vset.pattern.permute.xlu0 2
    %771 = vperm.xlu0 %770, %v693
    %v772 = vpop.permute.xlu0 %771
    %v774 = vmul.f32 %v697, %v159
    %v775 = vmul.f32 %v697, %v163
    %v776 = vmul.f32 %v697, %v167
    %v777 = vmul.f32 %v697, %v171
    %v778 = vmul.f32 %v702, %v159
    %v779 = vmul.f32 %v702, %v163
    %v780 = vmul.f32 %v702, %v167
    %v781 = vmul.f32 %v702, %v171
    %v782 = vmul.f32 %v707, %v159
    %v783 = vmul.f32 %v707, %v163
    %v784 = vmul.f32 %v707, %v167
    %v785 = vmul.f32 %v707, %v171
    %v786 = vmul.f32 %v712, %v159
    %v787 = vmul.f32 %v712, %v163
    %v788 = vmul.f32 %v712, %v167
    %v789 = vmul.f32 %v712, %v171
    %v790 = vmul.f32 %v717, %v159
    %v791 = vmul.f32 %v717, %v163
    %v792 = vmul.f32 %v717, %v167
    %v793 = vmul.f32 %v717, %v171
    %v794 = vmul.f32 %v722, %v159
    %v795 = vmul.f32 %v722, %v163
    %v796 = vmul.f32 %v722, %v167
    %v797 = vmul.f32 %v722, %v171
    %v798 = vmul.f32 %v727, %v159
    %v799 = vmul.f32 %v727, %v163
    %v800 = vmul.f32 %v727, %v167
    %v801 = vmul.f32 %v727, %v171
    %v802 = vmul.f32 %v732, %v159
    %v803 = vmul.f32 %v732, %v163
    %v804 = vmul.f32 %v732, %v167
    %v805 = vmul.f32 %v732, %v171
    %v806 = vmul.f32 %v737, %v159
    %v807 = vmul.f32 %v737, %v163
    %v808 = vmul.f32 %v737, %v167
    %v809 = vmul.f32 %v737, %v171
    %v810 = vmul.f32 %v742, %v159
    %v811 = vmul.f32 %v742, %v163
    %v812 = vmul.f32 %v742, %v167
    %v813 = vmul.f32 %v742, %v171
    %v814 = vmul.f32 %v747, %v159
    %v815 = vmul.f32 %v747, %v163
    %v816 = vmul.f32 %v747, %v167
    %v817 = vmul.f32 %v747, %v171
    %v818 = vmul.f32 %v752, %v159
    %v819 = vmul.f32 %v752, %v163
    %v820 = vmul.f32 %v752, %v167
    %v821 = vmul.f32 %v752, %v171
    %v822 = vmul.f32 %v757, %v159
    %v823 = vmul.f32 %v757, %v163
    %v824 = vmul.f32 %v757, %v167
    %v825 = vmul.f32 %v757, %v171
    %v826 = vmul.f32 %v762, %v159
    %v827 = vmul.f32 %v762, %v163
    %v828 = vmul.f32 %v762, %v167
    %v829 = vmul.f32 %v762, %v171
    %v830 = vmul.f32 %v767, %v159
    %v831 = vmul.f32 %v767, %v163
    %v832 = vmul.f32 %v767, %v167
    %v833 = vmul.f32 %v767, %v171
    %v834 = vmul.f32 %v772, %v159
    %v835 = vmul.f32 %v772, %v163
    %v836 = vmul.f32 %v772, %v167
    %v837 = vmul.f32 %v772, %v171
    %v838 = vadd.f32 %v774, %v244
    %v839 = vadd.f32 %v775, %v248
    %v840 = vadd.f32 %v776, %v252
    %v841 = vadd.f32 %v777, %v256
    %v842 = vadd.f32 %v778, %v244
    %v843 = vadd.f32 %v779, %v248
    %v844 = vadd.f32 %v780, %v252
    %v845 = vadd.f32 %v781, %v256
    %v846 = vadd.f32 %v782, %v244
    %v847 = vadd.f32 %v783, %v248
    %v848 = vadd.f32 %v784, %v252
    %v849 = vadd.f32 %v785, %v256
    %v850 = vadd.f32 %v786, %v244
    %v851 = vadd.f32 %v787, %v248
    %v852 = vadd.f32 %v788, %v252
    %v853 = vadd.f32 %v789, %v256
    %v854 = vadd.f32 %v790, %v244
    %v855 = vadd.f32 %v791, %v248
    %v856 = vadd.f32 %v792, %v252
    %v857 = vadd.f32 %v793, %v256
    %v858 = vadd.f32 %v794, %v244
    %v859 = vadd.f32 %v795, %v248
    %v860 = vadd.f32 %v796, %v252
    %v861 = vadd.f32 %v797, %v256
    %v862 = vadd.f32 %v798, %v244
    %v863 = vadd.f32 %v799, %v248
    %v864 = vadd.f32 %v800, %v252
    %v865 = vadd.f32 %v801, %v256
    %v866 = vadd.f32 %v802, %v244
    %v867 = vadd.f32 %v803, %v248
    %v868 = vadd.f32 %v804, %v252
    %v869 = vadd.f32 %v805, %v256
    %v870 = vadd.f32 %v806, %v244
    %v871 = vadd.f32 %v807, %v248
    %v872 = vadd.f32 %v808, %v252
    %v873 = vadd.f32 %v809, %v256
    %v874 = vadd.f32 %v810, %v244
    %v875 = vadd.f32 %v811, %v248
    %v876 = vadd.f32 %v812, %v252
    %v877 = vadd.f32 %v813, %v256
    %v878 = vadd.f32 %v814, %v244
    %v879 = vadd.f32 %v815, %v248
    %v880 = vadd.f32 %v816, %v252
    %v881 = vadd.f32 %v817, %v256
    %v882 = vadd.f32 %v818, %v244
    %v883 = vadd.f32 %v819, %v248
    %v884 = vadd.f32 %v820, %v252
    %v885 = vadd.f32 %v821, %v256
    %v886 = vadd.f32 %v822, %v244
    %v887 = vadd.f32 %v823, %v248
    %v888 = vadd.f32 %v824, %v252
    %v889 = vadd.f32 %v825, %v256
    %v890 = vadd.f32 %v826, %v244
    %v891 = vadd.f32 %v827, %v248
    %v892 = vadd.f32 %v828, %v252
    %v893 = vadd.f32 %v829, %v256
    %v894 = vadd.f32 %v830, %v244
    %v895 = vadd.f32 %v831, %v248
    %v896 = vadd.f32 %v832, %v252
    %v897 = vadd.f32 %v833, %v256
    %v898 = vadd.f32 %v834, %v244
    %v899 = vadd.f32 %v835, %v248
    %v900 = vadd.f32 %v836, %v252
    %v901 = vadd.f32 %v837, %v256
    %s902 = scalar_lea.vmem [#allocation2], 1024
    %903 = vst [vmem:[%s902] sm:$0xff] %v838
    %904 = vst [vmem:[%s902 + $0x8] sm:$0xff] %v839
    %905 = vst [vmem:[%s902 + $0x10] sm:$0xff] %v840
    %906 = vst [vmem:[%s902 + $0x18] sm:$0xff] %v841
    %907 = vst [vmem:[%s902 + $0x20] sm:$0xff] %v842
    %908 = vst [vmem:[%s902 + $0x28] sm:$0xff] %v843
    %909 = vst [vmem:[%s902 + $0x30] sm:$0xff] %v844
    %910 = vst [vmem:[%s902 + $0x38] sm:$0xff] %v845
    %911 = vst [vmem:[%s902 + $0x40] sm:$0xff] %v846
    %912 = vst [vmem:[%s902 + $0x48] sm:$0xff] %v847
    %913 = vst [vmem:[%s902 + $0x50] sm:$0xff] %v848
    %914 = vst [vmem:[%s902 + $0x58] sm:$0xff] %v849
    %915 = vst [vmem:[%s902 + $0x60] sm:$0xff] %v850
    %916 = vst [vmem:[%s902 + $0x68] sm:$0xff] %v851
    %917 = vst [vmem:[%s902 + $0x70] sm:$0xff] %v852
    %918 = vst [vmem:[%s902 + $0x78] sm:$0xff] %v853
    %919 = vst [vmem:[%s902 + $0x80] sm:$0xff] %v854
    %920 = vst [vmem:[%s902 + $0x88] sm:$0xff] %v855
    %921 = vst [vmem:[%s902 + $0x90] sm:$0xff] %v856
    %922 = vst [vmem:[%s902 + $0x98] sm:$0xff] %v857
    %923 = vst [vmem:[%s902 + $0xa0] sm:$0xff] %v858
    %924 = vst [vmem:[%s902 + $0xa8] sm:$0xff] %v859
    %925 = vst [vmem:[%s902 + $0xb0] sm:$0xff] %v860
    %926 = vst [vmem:[%s902 + $0xb8] sm:$0xff] %v861
    %927 = vst [vmem:[%s902 + $0xc0] sm:$0xff] %v862
    %928 = vst [vmem:[%s902 + $0xc8] sm:$0xff] %v863
    %929 = vst [vmem:[%s902 + $0xd0] sm:$0xff] %v864
    %930 = vst [vmem:[%s902 + $0xd8] sm:$0xff] %v865
    %931 = vst [vmem:[%s902 + $0xe0] sm:$0xff] %v866
    %932 = vst [vmem:[%s902 + $0xe8] sm:$0xff] %v867
    %933 = vst [vmem:[%s902 + $0xf0] sm:$0xff] %v868
    %934 = vst [vmem:[%s902 + $0xf8] sm:$0xff] %v869
    %935 = vst [vmem:[%s902 + $0x100] sm:$0xff] %v870
    %936 = vst [vmem:[%s902 + $0x108] sm:$0xff] %v871
    %937 = vst [vmem:[%s902 + $0x110] sm:$0xff] %v872
    %938 = vst [vmem:[%s902 + $0x118] sm:$0xff] %v873
    %939 = vst [vmem:[%s902 + $0x120] sm:$0xff] %v874
    %940 = vst [vmem:[%s902 + $0x128] sm:$0xff] %v875
    %941 = vst [vmem:[%s902 + $0x130] sm:$0xff] %v876
    %942 = vst [vmem:[%s902 + $0x138] sm:$0xff] %v877
    %943 = vst [vmem:[%s902 + $0x140] sm:$0xff] %v878
    %944 = vst [vmem:[%s902 + $0x148] sm:$0xff] %v879
    %945 = vst [vmem:[%s902 + $0x150] sm:$0xff] %v880
    %946 = vst [vmem:[%s902 + $0x158] sm:$0xff] %v881
    %947 = vst [vmem:[%s902 + $0x160] sm:$0xff] %v882
    %948 = vst [vmem:[%s902 + $0x168] sm:$0xff] %v883
    %949 = vst [vmem:[%s902 + $0x170] sm:$0xff] %v884
    %950 = vst [vmem:[%s902 + $0x178] sm:$0xff] %v885
    %951 = vst [vmem:[%s902 + $0x180] sm:$0xff] %v886
    %952 = vst [vmem:[%s902 + $0x188] sm:$0xff] %v887
    %953 = vst [vmem:[%s902 + $0x190] sm:$0xff] %v888
    %954 = vst [vmem:[%s902 + $0x198] sm:$0xff] %v889
    %955 = vst [vmem:[%s902 + $0x1a0] sm:$0xff] %v890
    %956 = vst [vmem:[%s902 + $0x1a8] sm:$0xff] %v891
    %957 = vst [vmem:[%s902 + $0x1b0] sm:$0xff] %v892
    %958 = vst [vmem:[%s902 + $0x1b8] sm:$0xff] %v893
    %959 = vst [vmem:[%s902 + $0x1c0] sm:$0xff] %v894
    %960 = vst [vmem:[%s902 + $0x1c8] sm:$0xff] %v895
    %961 = vst [vmem:[%s902 + $0x1d0] sm:$0xff] %v896
    %962 = vst [vmem:[%s902 + $0x1d8] sm:$0xff] %v897
    %963 = vst [vmem:[%s902 + $0x1e0] sm:$0xff] %v898
    %964 = vst [vmem:[%s902 + $0x1e8] sm:$0xff] %v899
    %965 = vst [vmem:[%s902 + $0x1f0] sm:$0xff] %v900
    %966 = vst [vmem:[%s902 + $0x1f8] sm:$0xff] %v901
    %v967 = vld [vmem:[%s0] sm:$0xff]
    %v968 = vld [vmem:[%s0 + $0x8] sm:$0xff]
    %v969 = vld [vmem:[%s0 + $0x10] sm:$0xff]
    %v970 = vld [vmem:[%s0 + $0x18] sm:$0xff]
    %v971 = vld [vmem:[%s0 + $0x20] sm:$0xff]
    %v972 = vld [vmem:[%s0 + $0x28] sm:$0xff]
    %v973 = vld [vmem:[%s0 + $0x30] sm:$0xff]
    %v974 = vld [vmem:[%s0 + $0x38] sm:$0xff]
    %v975 = vld [vmem:[%s0 + $0x40] sm:$0xff]
    %v976 = vld [vmem:[%s0 + $0x48] sm:$0xff]
    %v977 = vld [vmem:[%s0 + $0x50] sm:$0xff]
    %v978 = vld [vmem:[%s0 + $0x58] sm:$0xff]
    %v979 = vld [vmem:[%s0 + $0x60] sm:$0xff]
    %v980 = vld [vmem:[%s0 + $0x68] sm:$0xff]
    %v981 = vld [vmem:[%s0 + $0x70] sm:$0xff]
    %v982 = vld [vmem:[%s0 + $0x78] sm:$0xff]
    %984 = vset.pattern.permute.xlu0 3
    %985 = vperm.xlu0 %984, %v967
    %v986 = vpop.permute.xlu0 %985
    %989 = vset.pattern.permute.xlu0 3
    %990 = vperm.xlu0 %989, %v968
    %v991 = vpop.permute.xlu0 %990
    %994 = vset.pattern.permute.xlu0 3
    %995 = vperm.xlu0 %994, %v969
    %v996 = vpop.permute.xlu0 %995
    %999 = vset.pattern.permute.xlu0 3
    %1000 = vperm.xlu0 %999, %v970
    %v1001 = vpop.permute.xlu0 %1000
    %1004 = vset.pattern.permute.xlu0 3
    %1005 = vperm.xlu0 %1004, %v971
    %v1006 = vpop.permute.xlu0 %1005
    %1009 = vset.pattern.permute.xlu0 3
    %1010 = vperm.xlu0 %1009, %v972
    %v1011 = vpop.permute.xlu0 %1010
    %1014 = vset.pattern.permute.xlu0 3
    %1015 = vperm.xlu0 %1014, %v973
    %v1016 = vpop.permute.xlu0 %1015
    %1019 = vset.pattern.permute.xlu0 3
    %1020 = vperm.xlu0 %1019, %v974
    %v1021 = vpop.permute.xlu0 %1020
    %1024 = vset.pattern.permute.xlu0 3
    %1025 = vperm.xlu0 %1024, %v975
    %v1026 = vpop.permute.xlu0 %1025
    %1029 = vset.pattern.permute.xlu0 3
    %1030 = vperm.xlu0 %1029, %v976
    %v1031 = vpop.permute.xlu0 %1030
    %1034 = vset.pattern.permute.xlu0 3
    %1035 = vperm.xlu0 %1034, %v977
    %v1036 = vpop.permute.xlu0 %1035
    %1039 = vset.pattern.permute.xlu0 3
    %1040 = vperm.xlu0 %1039, %v978
    %v1041 = vpop.permute.xlu0 %1040
    %1044 = vset.pattern.permute.xlu0 3
    %1045 = vperm.xlu0 %1044, %v979
    %v1046 = vpop.permute.xlu0 %1045
    %1049 = vset.pattern.permute.xlu0 3
    %1050 = vperm.xlu0 %1049, %v980
    %v1051 = vpop.permute.xlu0 %1050
    %1054 = vset.pattern.permute.xlu0 3
    %1055 = vperm.xlu0 %1054, %v981
    %v1056 = vpop.permute.xlu0 %1055
    %1059 = vset.pattern.permute.xlu0 3
    %1060 = vperm.xlu0 %1059, %v982
    %v1061 = vpop.permute.xlu0 %1060
    %v1063 = vmul.f32 %v986, %v159
    %v1064 = vmul.f32 %v986, %v163
    %v1065 = vmul.f32 %v986, %v167
    %v1066 = vmul.f32 %v986, %v171
    %v1067 = vmul.f32 %v991, %v159
    %v1068 = vmul.f32 %v991, %v163
    %v1069 = vmul.f32 %v991, %v167
    %v1070 = vmul.f32 %v991, %v171
    %v1071 = vmul.f32 %v996, %v159
    %v1072 = vmul.f32 %v996, %v163
    %v1073 = vmul.f32 %v996, %v167
    %v1074 = vmul.f32 %v996, %v171
    %v1075 = vmul.f32 %v1001, %v159
    %v1076 = vmul.f32 %v1001, %v163
    %v1077 = vmul.f32 %v1001, %v167
    %v1078 = vmul.f32 %v1001, %v171
    %v1079 = vmul.f32 %v1006, %v159
    %v1080 = vmul.f32 %v1006, %v163
    %v1081 = vmul.f32 %v1006, %v167
    %v1082 = vmul.f32 %v1006, %v171
    %v1083 = vmul.f32 %v1011, %v159
    %v1084 = vmul.f32 %v1011, %v163
    %v1085 = vmul.f32 %v1011, %v167
    %v1086 = vmul.f32 %v1011, %v171
    %v1087 = vmul.f32 %v1016, %v159
    %v1088 = vmul.f32 %v1016, %v163
    %v1089 = vmul.f32 %v1016, %v167
    %v1090 = vmul.f32 %v1016, %v171
    %v1091 = vmul.f32 %v1021, %v159
    %v1092 = vmul.f32 %v1021, %v163
    %v1093 = vmul.f32 %v1021, %v167
    %v1094 = vmul.f32 %v1021, %v171
    %v1095 = vmul.f32 %v1026, %v159
    %v1096 = vmul.f32 %v1026, %v163
    %v1097 = vmul.f32 %v1026, %v167
    %v1098 = vmul.f32 %v1026, %v171
    %v1099 = vmul.f32 %v1031, %v159
    %v1100 = vmul.f32 %v1031, %v163
    %v1101 = vmul.f32 %v1031, %v167
    %v1102 = vmul.f32 %v1031, %v171
    %v1103 = vmul.f32 %v1036, %v159
    %v1104 = vmul.f32 %v1036, %v163
    %v1105 = vmul.f32 %v1036, %v167
    %v1106 = vmul.f32 %v1036, %v171
    %v1107 = vmul.f32 %v1041, %v159
    %v1108 = vmul.f32 %v1041, %v163
    %v1109 = vmul.f32 %v1041, %v167
    %v1110 = vmul.f32 %v1041, %v171
    %v1111 = vmul.f32 %v1046, %v159
    %v1112 = vmul.f32 %v1046, %v163
    %v1113 = vmul.f32 %v1046, %v167
    %v1114 = vmul.f32 %v1046, %v171
    %v1115 = vmul.f32 %v1051, %v159
    %v1116 = vmul.f32 %v1051, %v163
    %v1117 = vmul.f32 %v1051, %v167
    %v1118 = vmul.f32 %v1051, %v171
    %v1119 = vmul.f32 %v1056, %v159
    %v1120 = vmul.f32 %v1056, %v163
    %v1121 = vmul.f32 %v1056, %v167
    %v1122 = vmul.f32 %v1056, %v171
    %v1123 = vmul.f32 %v1061, %v159
    %v1124 = vmul.f32 %v1061, %v163
    %v1125 = vmul.f32 %v1061, %v167
    %v1126 = vmul.f32 %v1061, %v171
    %v1127 = vadd.f32 %v1063, %v244
    %v1128 = vadd.f32 %v1064, %v248
    %v1129 = vadd.f32 %v1065, %v252
    %v1130 = vadd.f32 %v1066, %v256
    %v1131 = vadd.f32 %v1067, %v244
    %v1132 = vadd.f32 %v1068, %v248
    %v1133 = vadd.f32 %v1069, %v252
    %v1134 = vadd.f32 %v1070, %v256
    %v1135 = vadd.f32 %v1071, %v244
    %v1136 = vadd.f32 %v1072, %v248
    %v1137 = vadd.f32 %v1073, %v252
    %v1138 = vadd.f32 %v1074, %v256
    %v1139 = vadd.f32 %v1075, %v244
    %v1140 = vadd.f32 %v1076, %v248
    %v1141 = vadd.f32 %v1077, %v252
    %v1142 = vadd.f32 %v1078, %v256
    %v1143 = vadd.f32 %v1079, %v244
    %v1144 = vadd.f32 %v1080, %v248
    %v1145 = vadd.f32 %v1081, %v252
    %v1146 = vadd.f32 %v1082, %v256
    %v1147 = vadd.f32 %v1083, %v244
    %v1148 = vadd.f32 %v1084, %v248
    %v1149 = vadd.f32 %v1085, %v252
    %v1150 = vadd.f32 %v1086, %v256
    %v1151 = vadd.f32 %v1087, %v244
    %v1152 = vadd.f32 %v1088, %v248
    %v1153 = vadd.f32 %v1089, %v252
    %v1154 = vadd.f32 %v1090, %v256
    %v1155 = vadd.f32 %v1091, %v244
    %v1156 = vadd.f32 %v1092, %v248
    %v1157 = vadd.f32 %v1093, %v252
    %v1158 = vadd.f32 %v1094, %v256
    %v1159 = vadd.f32 %v1095, %v244
    %v1160 = vadd.f32 %v1096, %v248
    %v1161 = vadd.f32 %v1097, %v252
    %v1162 = vadd.f32 %v1098, %v256
    %v1163 = vadd.f32 %v1099, %v244
    %v1164 = vadd.f32 %v1100, %v248
    %v1165 = vadd.f32 %v1101, %v252
    %v1166 = vadd.f32 %v1102, %v256
    %v1167 = vadd.f32 %v1103, %v244
    %v1168 = vadd.f32 %v1104, %v248
    %v1169 = vadd.f32 %v1105, %v252
    %v1170 = vadd.f32 %v1106, %v256
    %v1171 = vadd.f32 %v1107, %v244
    %v1172 = vadd.f32 %v1108, %v248
    %v1173 = vadd.f32 %v1109, %v252
    %v1174 = vadd.f32 %v1110, %v256
    %v1175 = vadd.f32 %v1111, %v244
    %v1176 = vadd.f32 %v1112, %v248
    %v1177 = vadd.f32 %v1113, %v252
    %v1178 = vadd.f32 %v1114, %v256
    %v1179 = vadd.f32 %v1115, %v244
    %v1180 = vadd.f32 %v1116, %v248
    %v1181 = vadd.f32 %v1117, %v252
    %v1182 = vadd.f32 %v1118, %v256
    %v1183 = vadd.f32 %v1119, %v244
    %v1184 = vadd.f32 %v1120, %v248
    %v1185 = vadd.f32 %v1121, %v252
    %v1186 = vadd.f32 %v1122, %v256
    %v1187 = vadd.f32 %v1123, %v244
    %v1188 = vadd.f32 %v1124, %v248
    %v1189 = vadd.f32 %v1125, %v252
    %v1190 = vadd.f32 %v1126, %v256
    %s1191 = scalar_lea.vmem [#allocation2], 1536
    %1192 = vst [vmem:[%s1191] sm:$0xff] %v1127
    %1193 = vst [vmem:[%s1191 + $0x8] sm:$0xff] %v1128
    %1194 = vst [vmem:[%s1191 + $0x10] sm:$0xff] %v1129
    %1195 = vst [vmem:[%s1191 + $0x18] sm:$0xff] %v1130
    %1196 = vst [vmem:[%s1191 + $0x20] sm:$0xff] %v1131
    %1197 = vst [vmem:[%s1191 + $0x28] sm:$0xff] %v1132
    %1198 = vst [vmem:[%s1191 + $0x30] sm:$0xff] %v1133
    %1199 = vst [vmem:[%s1191 + $0x38] sm:$0xff] %v1134
    %1200 = vst [vmem:[%s1191 + $0x40] sm:$0xff] %v1135
    %1201 = vst [vmem:[%s1191 + $0x48] sm:$0xff] %v1136
    %1202 = vst [vmem:[%s1191 + $0x50] sm:$0xff] %v1137
    %1203 = vst [vmem:[%s1191 + $0x58] sm:$0xff] %v1138
    %1204 = vst [vmem:[%s1191 + $0x60] sm:$0xff] %v1139
    %1205 = vst [vmem:[%s1191 + $0x68] sm:$0xff] %v1140
    %1206 = vst [vmem:[%s1191 + $0x70] sm:$0xff] %v1141
    %1207 = vst [vmem:[%s1191 + $0x78] sm:$0xff] %v1142
    %1208 = vst [vmem:[%s1191 + $0x80] sm:$0xff] %v1143
    %1209 = vst [vmem:[%s1191 + $0x88] sm:$0xff] %v1144
    %1210 = vst [vmem:[%s1191 + $0x90] sm:$0xff] %v1145
    %1211 = vst [vmem:[%s1191 + $0x98] sm:$0xff] %v1146
    %1212 = vst [vmem:[%s1191 + $0xa0] sm:$0xff] %v1147
    %1213 = vst [vmem:[%s1191 + $0xa8] sm:$0xff] %v1148
    %1214 = vst [vmem:[%s1191 + $0xb0] sm:$0xff] %v1149
    %1215 = vst [vmem:[%s1191 + $0xb8] sm:$0xff] %v1150
    %1216 = vst [vmem:[%s1191 + $0xc0] sm:$0xff] %v1151
    %1217 = vst [vmem:[%s1191 + $0xc8] sm:$0xff] %v1152
    %1218 = vst [vmem:[%s1191 + $0xd0] sm:$0xff] %v1153
    %1219 = vst [vmem:[%s1191 + $0xd8] sm:$0xff] %v1154
    %1220 = vst [vmem:[%s1191 + $0xe0] sm:$0xff] %v1155
    %1221 = vst [vmem:[%s1191 + $0xe8] sm:$0xff] %v1156
    %1222 = vst [vmem:[%s1191 + $0xf0] sm:$0xff] %v1157
    %1223 = vst [vmem:[%s1191 + $0xf8] sm:$0xff] %v1158
    %1224 = vst [vmem:[%s1191 + $0x100] sm:$0xff] %v1159
    %1225 = vst [vmem:[%s1191 + $0x108] sm:$0xff] %v1160
    %1226 = vst [vmem:[%s1191 + $0x110] sm:$0xff] %v1161
    %1227 = vst [vmem:[%s1191 + $0x118] sm:$0xff] %v1162
    %1228 = vst [vmem:[%s1191 + $0x120] sm:$0xff] %v1163
    %1229 = vst [vmem:[%s1191 + $0x128] sm:$0xff] %v1164
    %1230 = vst [vmem:[%s1191 + $0x130] sm:$0xff] %v1165
    %1231 = vst [vmem:[%s1191 + $0x138] sm:$0xff] %v1166
    %1232 = vst [vmem:[%s1191 + $0x140] sm:$0xff] %v1167
    %1233 = vst [vmem:[%s1191 + $0x148] sm:$0xff] %v1168
    %1234 = vst [vmem:[%s1191 + $0x150] sm:$0xff] %v1169
    %1235 = vst [vmem:[%s1191 + $0x158] sm:$0xff] %v1170
    %1236 = vst [vmem:[%s1191 + $0x160] sm:$0xff] %v1171
    %1237 = vst [vmem:[%s1191 + $0x168] sm:$0xff] %v1172
    %1238 = vst [vmem:[%s1191 + $0x170] sm:$0xff] %v1173
    %1239 = vst [vmem:[%s1191 + $0x178] sm:$0xff] %v1174
    %1240 = vst [vmem:[%s1191 + $0x180] sm:$0xff] %v1175
    %1241 = vst [vmem:[%s1191 + $0x188] sm:$0xff] %v1176
    %1242 = vst [vmem:[%s1191 + $0x190] sm:$0xff] %v1177
    %1243 = vst [vmem:[%s1191 + $0x198] sm:$0xff] %v1178
    %1244 = vst [vmem:[%s1191 + $0x1a0] sm:$0xff] %v1179
    %1245 = vst [vmem:[%s1191 + $0x1a8] sm:$0xff] %v1180
    %1246 = vst [vmem:[%s1191 + $0x1b0] sm:$0xff] %v1181
    %1247 = vst [vmem:[%s1191 + $0x1b8] sm:$0xff] %v1182
    %1248 = vst [vmem:[%s1191 + $0x1c0] sm:$0xff] %v1183
    %1249 = vst [vmem:[%s1191 + $0x1c8] sm:$0xff] %v1184
    %1250 = vst [vmem:[%s1191 + $0x1d0] sm:$0xff] %v1185
    %1251 = vst [vmem:[%s1191 + $0x1d8] sm:$0xff] %v1186
    %1252 = vst [vmem:[%s1191 + $0x1e0] sm:$0xff] %v1187
    %1253 = vst [vmem:[%s1191 + $0x1e8] sm:$0xff] %v1188
    %1254 = vst [vmem:[%s1191 + $0x1f0] sm:$0xff] %v1189
    %1255 = vst [vmem:[%s1191 + $0x1f8] sm:$0xff] %v1190
    %v1256 = vld [vmem:[%s0] sm:$0xff]
    %v1257 = vld [vmem:[%s0 + $0x8] sm:$0xff]
    %v1258 = vld [vmem:[%s0 + $0x10] sm:$0xff]
    %v1259 = vld [vmem:[%s0 + $0x18] sm:$0xff]
    %v1260 = vld [vmem:[%s0 + $0x20] sm:$0xff]
    %v1261 = vld [vmem:[%s0 + $0x28] sm:$0xff]
    %v1262 = vld [vmem:[%s0 + $0x30] sm:$0xff]
    %v1263 = vld [vmem:[%s0 + $0x38] sm:$0xff]
    %v1264 = vld [vmem:[%s0 + $0x40] sm:$0xff]
    %v1265 = vld [vmem:[%s0 + $0x48] sm:$0xff]
    %v1266 = vld [vmem:[%s0 + $0x50] sm:$0xff]
    %v1267 = vld [vmem:[%s0 + $0x58] sm:$0xff]
    %v1268 = vld [vmem:[%s0 + $0x60] sm:$0xff]
    %v1269 = vld [vmem:[%s0 + $0x68] sm:$0xff]
    %v1270 = vld [vmem:[%s0 + $0x70] sm:$0xff]
    %v1271 = vld [vmem:[%s0 + $0x78] sm:$0xff]
    %1273 = vset.pattern.permute.xlu0 4
    %1274 = vperm.xlu0 %1273, %v1256
    %v1275 = vpop.permute.xlu0 %1274
    %1278 = vset.pattern.permute.xlu0 4
    %1279 = vperm.xlu0 %1278, %v1257
    %v1280 = vpop.permute.xlu0 %1279
    %1283 = vset.pattern.permute.xlu0 4
    %1284 = vperm.xlu0 %1283, %v1258
    %v1285 = vpop.permute.xlu0 %1284
    %1288 = vset.pattern.permute.xlu0 4
    %1289 = vperm.xlu0 %1288, %v1259
    %v1290 = vpop.permute.xlu0 %1289
    %1293 = vset.pattern.permute.xlu0 4
    %1294 = vperm.xlu0 %1293, %v1260
    %v1295 = vpop.permute.xlu0 %1294
    %1298 = vset.pattern.permute.xlu0 4
    %1299 = vperm.xlu0 %1298, %v1261
    %v1300 = vpop.permute.xlu0 %1299
    %1303 = vset.pattern.permute.xlu0 4
    %1304 = vperm.xlu0 %1303, %v1262
    %v1305 = vpop.permute.xlu0 %1304
    %1308 = vset.pattern.permute.xlu0 4
    %1309 = vperm.xlu0 %1308, %v1263
    %v1310 = vpop.permute.xlu0 %1309
    %1313 = vset.pattern.permute.xlu0 4
    %1314 = vperm.xlu0 %1313, %v1264
    %v1315 = vpop.permute.xlu0 %1314
    %1318 = vset.pattern.permute.xlu0 4
    %1319 = vperm.xlu0 %1318, %v1265
    %v1320 = vpop.permute.xlu0 %1319
    %1323 = vset.pattern.permute.xlu0 4
    %1324 = vperm.xlu0 %1323, %v1266
    %v1325 = vpop.permute.xlu0 %1324
    %1328 = vset.pattern.permute.xlu0 4
    %1329 = vperm.xlu0 %1328, %v1267
    %v1330 = vpop.permute.xlu0 %1329
    %1333 = vset.pattern.permute.xlu0 4
    %1334 = vperm.xlu0 %1333, %v1268
    %v1335 = vpop.permute.xlu0 %1334
    %1338 = vset.pattern.permute.xlu0 4
    %1339 = vperm.xlu0 %1338, %v1269
    %v1340 = vpop.permute.xlu0 %1339
    %1343 = vset.pattern.permute.xlu0 4
    %1344 = vperm.xlu0 %1343, %v1270
    %v1345 = vpop.permute.xlu0 %1344
    %1348 = vset.pattern.permute.xlu0 4
    %1349 = vperm.xlu0 %1348, %v1271
    %v1350 = vpop.permute.xlu0 %1349
    %v1352 = vmul.f32 %v1275, %v159
    %v1353 = vmul.f32 %v1275, %v163
    %v1354 = vmul.f32 %v1275, %v167
    %v1355 = vmul.f32 %v1275, %v171
    %v1356 = vmul.f32 %v1280, %v159
    %v1357 = vmul.f32 %v1280, %v163
    %v1358 = vmul.f32 %v1280, %v167
    %v1359 = vmul.f32 %v1280, %v171
    %v1360 = vmul.f32 %v1285, %v159
    %v1361 = vmul.f32 %v1285, %v163
    %v1362 = vmul.f32 %v1285, %v167
    %v1363 = vmul.f32 %v1285, %v171
    %v1364 = vmul.f32 %v1290, %v159
    %v1365 = vmul.f32 %v1290, %v163
    %v1366 = vmul.f32 %v1290, %v167
    %v1367 = vmul.f32 %v1290, %v171
    %v1368 = vmul.f32 %v1295, %v159
    %v1369 = vmul.f32 %v1295, %v163
    %v1370 = vmul.f32 %v1295, %v167
    %v1371 = vmul.f32 %v1295, %v171
    %v1372 = vmul.f32 %v1300, %v159
    %v1373 = vmul.f32 %v1300, %v163
    %v1374 = vmul.f32 %v1300, %v167
    %v1375 = vmul.f32 %v1300, %v171
    %v1376 = vmul.f32 %v1305, %v159
    %v1377 = vmul.f32 %v1305, %v163
    %v1378 = vmul.f32 %v1305, %v167
    %v1379 = vmul.f32 %v1305, %v171
    %v1380 = vmul.f32 %v1310, %v159
    %v1381 = vmul.f32 %v1310, %v163
    %v1382 = vmul.f32 %v1310, %v167
    %v1383 = vmul.f32 %v1310, %v171
    %v1384 = vmul.f32 %v1315, %v159
    %v1385 = vmul.f32 %v1315, %v163
    %v1386 = vmul.f32 %v1315, %v167
    %v1387 = vmul.f32 %v1315, %v171
    %v1388 = vmul.f32 %v1320, %v159
    %v1389 = vmul.f32 %v1320, %v163
    %v1390 = vmul.f32 %v1320, %v167
    %v1391 = vmul.f32 %v1320, %v171
    %v1392 = vmul.f32 %v1325, %v159
    %v1393 = vmul.f32 %v1325, %v163
    %v1394 = vmul.f32 %v1325, %v167
    %v1395 = vmul.f32 %v1325, %v171
    %v1396 = vmul.f32 %v1330, %v159
    %v1397 = vmul.f32 %v1330, %v163
    %v1398 = vmul.f32 %v1330, %v167
    %v1399 = vmul.f32 %v1330, %v171
    %v1400 = vmul.f32 %v1335, %v159
    %v1401 = vmul.f32 %v1335, %v163
    %v1402 = vmul.f32 %v1335, %v167
    %v1403 = vmul.f32 %v1335, %v171
    %v1404 = vmul.f32 %v1340, %v159
    %v1405 = vmul.f32 %v1340, %v163
    %v1406 = vmul.f32 %v1340, %v167
    %v1407 = vmul.f32 %v1340, %v171
    %v1408 = vmul.f32 %v1345, %v159
    %v1409 = vmul.f32 %v1345, %v163
    %v1410 = vmul.f32 %v1345, %v167
    %v1411 = vmul.f32 %v1345, %v171
    %v1412 = vmul.f32 %v1350, %v159
    %v1413 = vmul.f32 %v1350, %v163
    %v1414 = vmul.f32 %v1350, %v167
    %v1415 = vmul.f32 %v1350, %v171
    %v1416 = vadd.f32 %v1352, %v244
    %v1417 = vadd.f32 %v1353, %v248
    %v1418 = vadd.f32 %v1354, %v252
    %v1419 = vadd.f32 %v1355, %v256
    %v1420 = vadd.f32 %v1356, %v244
    %v1421 = vadd.f32 %v1357, %v248
    %v1422 = vadd.f32 %v1358, %v252
    %v1423 = vadd.f32 %v1359, %v256
    %v1424 = vadd.f32 %v1360, %v244
    %v1425 = vadd.f32 %v1361, %v248
    %v1426 = vadd.f32 %v1362, %v252
    %v1427 = vadd.f32 %v1363, %v256
    %v1428 = vadd.f32 %v1364, %v244
    %v1429 = vadd.f32 %v1365, %v248
    %v1430 = vadd.f32 %v1366, %v252
    %v1431 = vadd.f32 %v1367, %v256
    %v1432 = vadd.f32 %v1368, %v244
    %v1433 = vadd.f32 %v1369, %v248
    %v1434 = vadd.f32 %v1370, %v252
    %v1435 = vadd.f32 %v1371, %v256
    %v1436 = vadd.f32 %v1372, %v244
    %v1437 = vadd.f32 %v1373, %v248
    %v1438 = vadd.f32 %v1374, %v252
    %v1439 = vadd.f32 %v1375, %v256
    %v1440 = vadd.f32 %v1376, %v244
    %v1441 = vadd.f32 %v1377, %v248
    %v1442 = vadd.f32 %v1378, %v252
    %v1443 = vadd.f32 %v1379, %v256
    %v1444 = vadd.f32 %v1380, %v244
    %v1445 = vadd.f32 %v1381, %v248
    %v1446 = vadd.f32 %v1382, %v252
    %v1447 = vadd.f32 %v1383, %v256
    %v1448 = vadd.f32 %v1384, %v244
    %v1449 = vadd.f32 %v1385, %v248
    %v1450 = vadd.f32 %v1386, %v252
    %v1451 = vadd.f32 %v1387, %v256
    %v1452 = vadd.f32 %v1388, %v244
    %v1453 = vadd.f32 %v1389, %v248
    %v1454 = vadd.f32 %v1390, %v252
    %v1455 = vadd.f32 %v1391, %v256
    %v1456 = vadd.f32 %v1392, %v244
    %v1457 = vadd.f32 %v1393, %v248
    %v1458 = vadd.f32 %v1394, %v252
    %v1459 = vadd.f32 %v1395, %v256
    %v1460 = vadd.f32 %v1396, %v244
    %v1461 = vadd.f32 %v1397, %v248
    %v1462 = vadd.f32 %v1398, %v252
    %v1463 = vadd.f32 %v1399, %v256
    %v1464 = vadd.f32 %v1400, %v244
    %v1465 = vadd.f32 %v1401, %v248
    %v1466 = vadd.f32 %v1402, %v252
    %v1467 = vadd.f32 %v1403, %v256
    %v1468 = vadd.f32 %v1404, %v244
    %v1469 = vadd.f32 %v1405, %v248
    %v1470 = vadd.f32 %v1406, %v252
    %v1471 = vadd.f32 %v1407, %v256
    %v1472 = vadd.f32 %v1408, %v244
    %v1473 = vadd.f32 %v1409, %v248
    %v1474 = vadd.f32 %v1410, %v252
    %v1475 = vadd.f32 %v1411, %v256
    %v1476 = vadd.f32 %v1412, %v244
    %v1477 = vadd.f32 %v1413, %v248
    %v1478 = vadd.f32 %v1414, %v252
    %v1479 = vadd.f32 %v1415, %v256
    %s1480 = scalar_lea.vmem [#allocation2], 2048
    %1481 = vst [vmem:[%s1480] sm:$0xff] %v1416
    %1482 = vst [vmem:[%s1480 + $0x8] sm:$0xff] %v1417
    %1483 = vst [vmem:[%s1480 + $0x10] sm:$0xff] %v1418
    %1484 = vst [vmem:[%s1480 + $0x18] sm:$0xff] %v1419
    %1485 = vst [vmem:[%s1480 + $0x20] sm:$0xff] %v1420
    %1486 = vst [vmem:[%s1480 + $0x28] sm:$0xff] %v1421
    %1487 = vst [vmem:[%s1480 + $0x30] sm:$0xff] %v1422
    %1488 = vst [vmem:[%s1480 + $0x38] sm:$0xff] %v1423
    %1489 = vst [vmem:[%s1480 + $0x40] sm:$0xff] %v1424
    %1490 = vst [vmem:[%s1480 + $0x48] sm:$0xff] %v1425
    %1491 = vst [vmem:[%s1480 + $0x50] sm:$0xff] %v1426
    %1492 = vst [vmem:[%s1480 + $0x58] sm:$0xff] %v1427
    %1493 = vst [vmem:[%s1480 + $0x60] sm:$0xff] %v1428
    %1494 = vst [vmem:[%s1480 + $0x68] sm:$0xff] %v1429
    %1495 = vst [vmem:[%s1480 + $0x70] sm:$0xff] %v1430
    %1496 = vst [vmem:[%s1480 + $0x78] sm:$0xff] %v1431
    %1497 = vst [vmem:[%s1480 + $0x80] sm:$0xff] %v1432
    %1498 = vst [vmem:[%s1480 + $0x88] sm:$0xff] %v1433
    %1499 = vst [vmem:[%s1480 + $0x90] sm:$0xff] %v1434
    %1500 = vst [vmem:[%s1480 + $0x98] sm:$0xff] %v1435
    %1501 = vst [vmem:[%s1480 + $0xa0] sm:$0xff] %v1436
    %1502 = vst [vmem:[%s1480 + $0xa8] sm:$0xff] %v1437
    %1503 = vst [vmem:[%s1480 + $0xb0] sm:$0xff] %v1438
    %1504 = vst [vmem:[%s1480 + $0xb8] sm:$0xff] %v1439
    %1505 = vst [vmem:[%s1480 + $0xc0] sm:$0xff] %v1440
    %1506 = vst [vmem:[%s1480 + $0xc8] sm:$0xff] %v1441
    %1507 = vst [vmem:[%s1480 + $0xd0] sm:$0xff] %v1442
    %1508 = vst [vmem:[%s1480 + $0xd8] sm:$0xff] %v1443
    %1509 = vst [vmem:[%s1480 + $0xe0] sm:$0xff] %v1444
    %1510 = vst [vmem:[%s1480 + $0xe8] sm:$0xff] %v1445
    %1511 = vst [vmem:[%s1480 + $0xf0] sm:$0xff] %v1446
    %1512 = vst [vmem:[%s1480 + $0xf8] sm:$0xff] %v1447
    %1513 = vst [vmem:[%s1480 + $0x100] sm:$0xff] %v1448
    %1514 = vst [vmem:[%s1480 + $0x108] sm:$0xff] %v1449
    %1515 = vst [vmem:[%s1480 + $0x110] sm:$0xff] %v1450
    %1516 = vst [vmem:[%s1480 + $0x118] sm:$0xff] %v1451
    %1517 = vst [vmem:[%s1480 + $0x120] sm:$0xff] %v1452
    %1518 = vst [vmem:[%s1480 + $0x128] sm:$0xff] %v1453
    %1519 = vst [vmem:[%s1480 + $0x130] sm:$0xff] %v1454
    %1520 = vst [vmem:[%s1480 + $0x138] sm:$0xff] %v1455
    %1521 = vst [vmem:[%s1480 + $0x140] sm:$0xff] %v1456
    %1522 = vst [vmem:[%s1480 + $0x148] sm:$0xff] %v1457
    %1523 = vst [vmem:[%s1480 + $0x150] sm:$0xff] %v1458
    %1524 = vst [vmem:[%s1480 + $0x158] sm:$0xff] %v1459
    %1525 = vst [vmem:[%s1480 + $0x160] sm:$0xff] %v1460
    %1526 = vst [vmem:[%s1480 + $0x168] sm:$0xff] %v1461
    %1527 = vst [vmem:[%s1480 + $0x170] sm:$0xff] %v1462
    %1528 = vst [vmem:[%s1480 + $0x178] sm:$0xff] %v1463
    %1529 = vst [vmem:[%s1480 + $0x180] sm:$0xff] %v1464
    %1530 = vst [vmem:[%s1480 + $0x188] sm:$0xff] %v1465
    %1531 = vst [vmem:[%s1480 + $0x190] sm:$0xff] %v1466
    %1532 = vst [vmem:[%s1480 + $0x198] sm:$0xff] %v1467
    %1533 = vst [vmem:[%s1480 + $0x1a0] sm:$0xff] %v1468
    %1534 = vst [vmem:[%s1480 + $0x1a8] sm:$0xff] %v1469
    %1535 = vst [vmem:[%s1480 + $0x1b0] sm:$0xff] %v1470
    %1536 = vst [vmem:[%s1480 + $0x1b8] sm:$0xff] %v1471
    %1537 = vst [vmem:[%s1480 + $0x1c0] sm:$0xff] %v1472
    %1538 = vst [vmem:[%s1480 + $0x1c8] sm:$0xff] %v1473
    %1539 = vst [vmem:[%s1480 + $0x1d0] sm:$0xff] %v1474
    %1540 = vst [vmem:[%s1480 + $0x1d8] sm:$0xff] %v1475
    %1541 = vst [vmem:[%s1480 + $0x1e0] sm:$0xff] %v1476
    %1542 = vst [vmem:[%s1480 + $0x1e8] sm:$0xff] %v1477
    %1543 = vst [vmem:[%s1480 + $0x1f0] sm:$0xff] %v1478
    %1544 = vst [vmem:[%s1480 + $0x1f8] sm:$0xff] %v1479
    %v1545 = vld [vmem:[%s0] sm:$0xff]
    %v1546 = vld [vmem:[%s0 + $0x8] sm:$0xff]
    %v1547 = vld [vmem:[%s0 + $0x10] sm:$0xff]
    %v1548 = vld [vmem:[%s0 + $0x18] sm:$0xff]
    %v1549 = vld [vmem:[%s0 + $0x20] sm:$0xff]
    %v1550 = vld [vmem:[%s0 + $0x28] sm:$0xff]
    %v1551 = vld [vmem:[%s0 + $0x30] sm:$0xff]
    %v1552 = vld [vmem:[%s0 + $0x38] sm:$0xff]
    %v1553 = vld [vmem:[%s0 + $0x40] sm:$0xff]
    %v1554 = vld [vmem:[%s0 + $0x48] sm:$0xff]
    %v1555 = vld [vmem:[%s0 + $0x50] sm:$0xff]
    %v1556 = vld [vmem:[%s0 + $0x58] sm:$0xff]
    %v1557 = vld [vmem:[%s0 + $0x60] sm:$0xff]
    %v1558 = vld [vmem:[%s0 + $0x68] sm:$0xff]
    %v1559 = vld [vmem:[%s0 + $0x70] sm:$0xff]
    %v1560 = vld [vmem:[%s0 + $0x78] sm:$0xff]
    %1562 = vset.pattern.permute.xlu0 5
    %1563 = vperm.xlu0 %1562, %v1545
    %v1564 = vpop.permute.xlu0 %1563
    %1567 = vset.pattern.permute.xlu0 5
    %1568 = vperm.xlu0 %1567, %v1546
    %v1569 = vpop.permute.xlu0 %1568
    %1572 = vset.pattern.permute.xlu0 5
    %1573 = vperm.xlu0 %1572, %v1547
    %v1574 = vpop.permute.xlu0 %1573
    %1577 = vset.pattern.permute.xlu0 5
    %1578 = vperm.xlu0 %1577, %v1548
    %v1579 = vpop.permute.xlu0 %1578
    %1582 = vset.pattern.permute.xlu0 5
    %1583 = vperm.xlu0 %1582, %v1549
    %v1584 = vpop.permute.xlu0 %1583
    %1587 = vset.pattern.permute.xlu0 5
    %1588 = vperm.xlu0 %1587, %v1550
    %v1589 = vpop.permute.xlu0 %1588
    %1592 = vset.pattern.permute.xlu0 5
    %1593 = vperm.xlu0 %1592, %v1551
    %v1594 = vpop.permute.xlu0 %1593
    %1597 = vset.pattern.permute.xlu0 5
    %1598 = vperm.xlu0 %1597, %v1552
    %v1599 = vpop.permute.xlu0 %1598
    %1602 = vset.pattern.permute.xlu0 5
    %1603 = vperm.xlu0 %1602, %v1553
    %v1604 = vpop.permute.xlu0 %1603
    %1607 = vset.pattern.permute.xlu0 5
    %1608 = vperm.xlu0 %1607, %v1554
    %v1609 = vpop.permute.xlu0 %1608
    %1612 = vset.pattern.permute.xlu0 5
    %1613 = vperm.xlu0 %1612, %v1555
    %v1614 = vpop.permute.xlu0 %1613
    %1617 = vset.pattern.permute.xlu0 5
    %1618 = vperm.xlu0 %1617, %v1556
    %v1619 = vpop.permute.xlu0 %1618
    %1622 = vset.pattern.permute.xlu0 5
    %1623 = vperm.xlu0 %1622, %v1557
    %v1624 = vpop.permute.xlu0 %1623
    %1627 = vset.pattern.permute.xlu0 5
    %1628 = vperm.xlu0 %1627, %v1558
    %v1629 = vpop.permute.xlu0 %1628
    %1632 = vset.pattern.permute.xlu0 5
    %1633 = vperm.xlu0 %1632, %v1559
    %v1634 = vpop.permute.xlu0 %1633
    %1637 = vset.pattern.permute.xlu0 5
    %1638 = vperm.xlu0 %1637, %v1560
    %v1639 = vpop.permute.xlu0 %1638
    %v1641 = vmul.f32 %v1564, %v159
    %v1642 = vmul.f32 %v1564, %v163
    %v1643 = vmul.f32 %v1564, %v167
    %v1644 = vmul.f32 %v1564, %v171
    %v1645 = vmul.f32 %v1569, %v159
    %v1646 = vmul.f32 %v1569, %v163
    %v1647 = vmul.f32 %v1569, %v167
    %v1648 = vmul.f32 %v1569, %v171
    %v1649 = vmul.f32 %v1574, %v159
    %v1650 = vmul.f32 %v1574, %v163
    %v1651 = vmul.f32 %v1574, %v167
    %v1652 = vmul.f32 %v1574, %v171
    %v1653 = vmul.f32 %v1579, %v159
    %v1654 = vmul.f32 %v1579, %v163
    %v1655 = vmul.f32 %v1579, %v167
    %v1656 = vmul.f32 %v1579, %v171
    %v1657 = vmul.f32 %v1584, %v159
    %v1658 = vmul.f32 %v1584, %v163
    %v1659 = vmul.f32 %v1584, %v167
    %v1660 = vmul.f32 %v1584, %v171
    %v1661 = vmul.f32 %v1589, %v159
    %v1662 = vmul.f32 %v1589, %v163
    %v1663 = vmul.f32 %v1589, %v167
    %v1664 = vmul.f32 %v1589, %v171
    %v1665 = vmul.f32 %v1594, %v159
    %v1666 = vmul.f32 %v1594, %v163
    %v1667 = vmul.f32 %v1594, %v167
    %v1668 = vmul.f32 %v1594, %v171
    %v1669 = vmul.f32 %v1599, %v159
    %v1670 = vmul.f32 %v1599, %v163
    %v1671 = vmul.f32 %v1599, %v167
    %v1672 = vmul.f32 %v1599, %v171
    %v1673 = vmul.f32 %v1604, %v159
    %v1674 = vmul.f32 %v1604, %v163
    %v1675 = vmul.f32 %v1604, %v167
    %v1676 = vmul.f32 %v1604, %v171
    %v1677 = vmul.f32 %v1609, %v159
    %v1678 = vmul.f32 %v1609, %v163
    %v1679 = vmul.f32 %v1609, %v167
    %v1680 = vmul.f32 %v1609, %v171
    %v1681 = vmul.f32 %v1614, %v159
    %v1682 = vmul.f32 %v1614, %v163
    %v1683 = vmul.f32 %v1614, %v167
    %v1684 = vmul.f32 %v1614, %v171
    %v1685 = vmul.f32 %v1619, %v159
    %v1686 = vmul.f32 %v1619, %v163
    %v1687 = vmul.f32 %v1619, %v167
    %v1688 = vmul.f32 %v1619, %v171
    %v1689 = vmul.f32 %v1624, %v159
    %v1690 = vmul.f32 %v1624, %v163
    %v1691 = vmul.f32 %v1624, %v167
    %v1692 = vmul.f32 %v1624, %v171
    %v1693 = vmul.f32 %v1629, %v159
    %v1694 = vmul.f32 %v1629, %v163
    %v1695 = vmul.f32 %v1629, %v167
    %v1696 = vmul.f32 %v1629, %v171
    %v1697 = vmul.f32 %v1634, %v159
    %v1698 = vmul.f32 %v1634, %v163
    %v1699 = vmul.f32 %v1634, %v167
    %v1700 = vmul.f32 %v1634, %v171
    %v1701 = vmul.f32 %v1639, %v159
    %v1702 = vmul.f32 %v1639, %v163
    %v1703 = vmul.f32 %v1639, %v167
    %v1704 = vmul.f32 %v1639, %v171
    %v1705 = vadd.f32 %v1641, %v244
    %v1706 = vadd.f32 %v1642, %v248
    %v1707 = vadd.f32 %v1643, %v252
    %v1708 = vadd.f32 %v1644, %v256
    %v1709 = vadd.f32 %v1645, %v244
    %v1710 = vadd.f32 %v1646, %v248
    %v1711 = vadd.f32 %v1647, %v252
    %v1712 = vadd.f32 %v1648, %v256
    %v1713 = vadd.f32 %v1649, %v244
    %v1714 = vadd.f32 %v1650, %v248
    %v1715 = vadd.f32 %v1651, %v252
    %v1716 = vadd.f32 %v1652, %v256
    %v1717 = vadd.f32 %v1653, %v244
    %v1718 = vadd.f32 %v1654, %v248
    %v1719 = vadd.f32 %v1655, %v252
    %v1720 = vadd.f32 %v1656, %v256
    %v1721 = vadd.f32 %v1657, %v244
    %v1722 = vadd.f32 %v1658, %v248
    %v1723 = vadd.f32 %v1659, %v252
    %v1724 = vadd.f32 %v1660, %v256
    %v1725 = vadd.f32 %v1661, %v244
    %v1726 = vadd.f32 %v1662, %v248
    %v1727 = vadd.f32 %v1663, %v252
    %v1728 = vadd.f32 %v1664, %v256
    %v1729 = vadd.f32 %v1665, %v244
    %v1730 = vadd.f32 %v1666, %v248
    %v1731 = vadd.f32 %v1667, %v252
    %v1732 = vadd.f32 %v1668, %v256
    %v1733 = vadd.f32 %v1669, %v244
    %v1734 = vadd.f32 %v1670, %v248
    %v1735 = vadd.f32 %v1671, %v252
    %v1736 = vadd.f32 %v1672, %v256
    %v1737 = vadd.f32 %v1673, %v244
    %v1738 = vadd.f32 %v1674, %v248
    %v1739 = vadd.f32 %v1675, %v252
    %v1740 = vadd.f32 %v1676, %v256
    %v1741 = vadd.f32 %v1677, %v244
    %v1742 = vadd.f32 %v1678, %v248
    %v1743 = vadd.f32 %v1679, %v252
    %v1744 = vadd.f32 %v1680, %v256
    %v1745 = vadd.f32 %v1681, %v244
    %v1746 = vadd.f32 %v1682, %v248
    %v1747 = vadd.f32 %v1683, %v252
    %v1748 = vadd.f32 %v1684, %v256
    %v1749 = vadd.f32 %v1685, %v244
    %v1750 = vadd.f32 %v1686, %v248
    %v1751 = vadd.f32 %v1687, %v252
    %v1752 = vadd.f32 %v1688, %v256
    %v1753 = vadd.f32 %v1689, %v244
    %v1754 = vadd.f32 %v1690, %v248
    %v1755 = vadd.f32 %v1691, %v252
    %v1756 = vadd.f32 %v1692, %v256
    %v1757 = vadd.f32 %v1693, %v244
    %v1758 = vadd.f32 %v1694, %v248
    %v1759 = vadd.f32 %v1695, %v252
    %v1760 = vadd.f32 %v1696, %v256
    %v1761 = vadd.f32 %v1697, %v244
    %v1762 = vadd.f32 %v1698, %v248
    %v1763 = vadd.f32 %v1699, %v252
    %v1764 = vadd.f32 %v1700, %v256
    %v1765 = vadd.f32 %v1701, %v244
    %v1766 = vadd.f32 %v1702, %v248
    %v1767 = vadd.f32 %v1703, %v252
    %v1768 = vadd.f32 %v1704, %v256
    %s1769 = scalar_lea.vmem [#allocation2], 2560
    %1770 = vst [vmem:[%s1769] sm:$0xff] %v1705
    %1771 = vst [vmem:[%s1769 + $0x8] sm:$0xff] %v1706
    %1772 = vst [vmem:[%s1769 + $0x10] sm:$0xff] %v1707
    %1773 = vst [vmem:[%s1769 + $0x18] sm:$0xff] %v1708
    %1774 = vst [vmem:[%s1769 + $0x20] sm:$0xff] %v1709
    %1775 = vst [vmem:[%s1769 + $0x28] sm:$0xff] %v1710
    %1776 = vst [vmem:[%s1769 + $0x30] sm:$0xff] %v1711
    %1777 = vst [vmem:[%s1769 + $0x38] sm:$0xff] %v1712
    %1778 = vst [vmem:[%s1769 + $0x40] sm:$0xff] %v1713
    %1779 = vst [vmem:[%s1769 + $0x48] sm:$0xff] %v1714
    %1780 = vst [vmem:[%s1769 + $0x50] sm:$0xff] %v1715
    %1781 = vst [vmem:[%s1769 + $0x58] sm:$0xff] %v1716
    %1782 = vst [vmem:[%s1769 + $0x60] sm:$0xff] %v1717
    %1783 = vst [vmem:[%s1769 + $0x68] sm:$0xff] %v1718
    %1784 = vst [vmem:[%s1769 + $0x70] sm:$0xff] %v1719
    %1785 = vst [vmem:[%s1769 + $0x78] sm:$0xff] %v1720
    %1786 = vst [vmem:[%s1769 + $0x80] sm:$0xff] %v1721
    %1787 = vst [vmem:[%s1769 + $0x88] sm:$0xff] %v1722
    %1788 = vst [vmem:[%s1769 + $0x90] sm:$0xff] %v1723
    %1789 = vst [vmem:[%s1769 + $0x98] sm:$0xff] %v1724
    %1790 = vst [vmem:[%s1769 + $0xa0] sm:$0xff] %v1725
    %1791 = vst [vmem:[%s1769 + $0xa8] sm:$0xff] %v1726
    %1792 = vst [vmem:[%s1769 + $0xb0] sm:$0xff] %v1727
    %1793 = vst [vmem:[%s1769 + $0xb8] sm:$0xff] %v1728
    %1794 = vst [vmem:[%s1769 + $0xc0] sm:$0xff] %v1729
    %1795 = vst [vmem:[%s1769 + $0xc8] sm:$0xff] %v1730
    %1796 = vst [vmem:[%s1769 + $0xd0] sm:$0xff] %v1731
    %1797 = vst [vmem:[%s1769 + $0xd8] sm:$0xff] %v1732
    %1798 = vst [vmem:[%s1769 + $0xe0] sm:$0xff] %v1733
    %1799 = vst [vmem:[%s1769 + $0xe8] sm:$0xff] %v1734
    %1800 = vst [vmem:[%s1769 + $0xf0] sm:$0xff] %v1735
    %1801 = vst [vmem:[%s1769 + $0xf8] sm:$0xff] %v1736
    %1802 = vst [vmem:[%s1769 + $0x100] sm:$0xff] %v1737
    %1803 = vst [vmem:[%s1769 + $0x108] sm:$0xff] %v1738
    %1804 = vst [vmem:[%s1769 + $0x110] sm:$0xff] %v1739
    %1805 = vst [vmem:[%s1769 + $0x118] sm:$0xff] %v1740
    %1806 = vst [vmem:[%s1769 + $0x120] sm:$0xff] %v1741
    %1807 = vst [vmem:[%s1769 + $0x128] sm:$0xff] %v1742
    %1808 = vst [vmem:[%s1769 + $0x130] sm:$0xff] %v1743
    %1809 = vst [vmem:[%s1769 + $0x138] sm:$0xff] %v1744
    %1810 = vst [vmem:[%s1769 + $0x140] sm:$0xff] %v1745
    %1811 = vst [vmem:[%s1769 + $0x148] sm:$0xff] %v1746
    %1812 = vst [vmem:[%s1769 + $0x150] sm:$0xff] %v1747
    %1813 = vst [vmem:[%s1769 + $0x158] sm:$0xff] %v1748
    %1814 = vst [vmem:[%s1769 + $0x160] sm:$0xff] %v1749
    %1815 = vst [vmem:[%s1769 + $0x168] sm:$0xff] %v1750
    %1816 = vst [vmem:[%s1769 + $0x170] sm:$0xff] %v1751
    %1817 = vst [vmem:[%s1769 + $0x178] sm:$0xff] %v1752
    %1818 = vst [vmem:[%s1769 + $0x180] sm:$0xff] %v1753
    %1819 = vst [vmem:[%s1769 + $0x188] sm:$0xff] %v1754
    %1820 = vst [vmem:[%s1769 + $0x190] sm:$0xff] %v1755
    %1821 = vst [vmem:[%s1769 + $0x198] sm:$0xff] %v1756
    %1822 = vst [vmem:[%s1769 + $0x1a0] sm:$0xff] %v1757
    %1823 = vst [vmem:[%s1769 + $0x1a8] sm:$0xff] %v1758
    %1824 = vst [vmem:[%s1769 + $0x1b0] sm:$0xff] %v1759
    %1825 = vst [vmem:[%s1769 + $0x1b8] sm:$0xff] %v1760
    %1826 = vst [vmem:[%s1769 + $0x1c0] sm:$0xff] %v1761
    %1827 = vst [vmem:[%s1769 + $0x1c8] sm:$0xff] %v1762
    %1828 = vst [vmem:[%s1769 + $0x1d0] sm:$0xff] %v1763
    %1829 = vst [vmem:[%s1769 + $0x1d8] sm:$0xff] %v1764
    %1830 = vst [vmem:[%s1769 + $0x1e0] sm:$0xff] %v1765
    %1831 = vst [vmem:[%s1769 + $0x1e8] sm:$0xff] %v1766
    %1832 = vst [vmem:[%s1769 + $0x1f0] sm:$0xff] %v1767
    %1833 = vst [vmem:[%s1769 + $0x1f8] sm:$0xff] %v1768
    %v1834 = vld [vmem:[%s0] sm:$0xff]
    %v1835 = vld [vmem:[%s0 + $0x8] sm:$0xff]
    %v1836 = vld [vmem:[%s0 + $0x10] sm:$0xff]
    %v1837 = vld [vmem:[%s0 + $0x18] sm:$0xff]
    %v1838 = vld [vmem:[%s0 + $0x20] sm:$0xff]
    %v1839 = vld [vmem:[%s0 + $0x28] sm:$0xff]
    %v1840 = vld [vmem:[%s0 + $0x30] sm:$0xff]
    %v1841 = vld [vmem:[%s0 + $0x38] sm:$0xff]
    %v1842 = vld [vmem:[%s0 + $0x40] sm:$0xff]
    %v1843 = vld [vmem:[%s0 + $0x48] sm:$0xff]
    %v1844 = vld [vmem:[%s0 + $0x50] sm:$0xff]
    %v1845 = vld [vmem:[%s0 + $0x58] sm:$0xff]
    %v1846 = vld [vmem:[%s0 + $0x60] sm:$0xff]
    %v1847 = vld [vmem:[%s0 + $0x68] sm:$0xff]
    %v1848 = vld [vmem:[%s0 + $0x70] sm:$0xff]
    %v1849 = vld [vmem:[%s0 + $0x78] sm:$0xff]
    %1851 = vset.pattern.permute.xlu0 6
    %1852 = vperm.xlu0 %1851, %v1834
    %v1853 = vpop.permute.xlu0 %1852
    %1856 = vset.pattern.permute.xlu0 6
    %1857 = vperm.xlu0 %1856, %v1835
    %v1858 = vpop.permute.xlu0 %1857
    %1861 = vset.pattern.permute.xlu0 6
    %1862 = vperm.xlu0 %1861, %v1836
    %v1863 = vpop.permute.xlu0 %1862
    %1866 = vset.pattern.permute.xlu0 6
    %1867 = vperm.xlu0 %1866, %v1837
    %v1868 = vpop.permute.xlu0 %1867
    %1871 = vset.pattern.permute.xlu0 6
    %1872 = vperm.xlu0 %1871, %v1838
    %v1873 = vpop.permute.xlu0 %1872
    %1876 = vset.pattern.permute.xlu0 6
    %1877 = vperm.xlu0 %1876, %v1839
    %v1878 = vpop.permute.xlu0 %1877
    %1881 = vset.pattern.permute.xlu0 6
    %1882 = vperm.xlu0 %1881, %v1840
    %v1883 = vpop.permute.xlu0 %1882
    %1886 = vset.pattern.permute.xlu0 6
    %1887 = vperm.xlu0 %1886, %v1841
    %v1888 = vpop.permute.xlu0 %1887
    %1891 = vset.pattern.permute.xlu0 6
    %1892 = vperm.xlu0 %1891, %v1842
    %v1893 = vpop.permute.xlu0 %1892
    %1896 = vset.pattern.permute.xlu0 6
    %1897 = vperm.xlu0 %1896, %v1843
    %v1898 = vpop.permute.xlu0 %1897
    %1901 = vset.pattern.permute.xlu0 6
    %1902 = vperm.xlu0 %1901, %v1844
    %v1903 = vpop.permute.xlu0 %1902
    %1906 = vset.pattern.permute.xlu0 6
    %1907 = vperm.xlu0 %1906, %v1845
    %v1908 = vpop.permute.xlu0 %1907
    %1911 = vset.pattern.permute.xlu0 6
    %1912 = vperm.xlu0 %1911, %v1846
    %v1913 = vpop.permute.xlu0 %1912
    %1916 = vset.pattern.permute.xlu0 6
    %1917 = vperm.xlu0 %1916, %v1847
    %v1918 = vpop.permute.xlu0 %1917
    %1921 = vset.pattern.permute.xlu0 6
    %1922 = vperm.xlu0 %1921, %v1848
    %v1923 = vpop.permute.xlu0 %1922
    %1926 = vset.pattern.permute.xlu0 6
    %1927 = vperm.xlu0 %1926, %v1849
    %v1928 = vpop.permute.xlu0 %1927
    %v1930 = vmul.f32 %v1853, %v159
    %v1931 = vmul.f32 %v1853, %v163
    %v1932 = vmul.f32 %v1853, %v167
    %v1933 = vmul.f32 %v1853, %v171
    %v1934 = vmul.f32 %v1858, %v159
    %v1935 = vmul.f32 %v1858, %v163
    %v1936 = vmul.f32 %v1858, %v167
    %v1937 = vmul.f32 %v1858, %v171
    %v1938 = vmul.f32 %v1863, %v159
    %v1939 = vmul.f32 %v1863, %v163
    %v1940 = vmul.f32 %v1863, %v167
    %v1941 = vmul.f32 %v1863, %v171
    %v1942 = vmul.f32 %v1868, %v159
    %v1943 = vmul.f32 %v1868, %v163
    %v1944 = vmul.f32 %v1868, %v167
    %v1945 = vmul.f32 %v1868, %v171
    %v1946 = vmul.f32 %v1873, %v159
    %v1947 = vmul.f32 %v1873, %v163
    %v1948 = vmul.f32 %v1873, %v167
    %v1949 = vmul.f32 %v1873, %v171
    %v1950 = vmul.f32 %v1878, %v159
    %v1951 = vmul.f32 %v1878, %v163
    %v1952 = vmul.f32 %v1878, %v167
    %v1953 = vmul.f32 %v1878, %v171
    %v1954 = vmul.f32 %v1883, %v159
    %v1955 = vmul.f32 %v1883, %v163
    %v1956 = vmul.f32 %v1883, %v167
    %v1957 = vmul.f32 %v1883, %v171
    %v1958 = vmul.f32 %v1888, %v159
    %v1959 = vmul.f32 %v1888, %v163
    %v1960 = vmul.f32 %v1888, %v167
    %v1961 = vmul.f32 %v1888, %v171
    %v1962 = vmul.f32 %v1893, %v159
    %v1963 = vmul.f32 %v1893, %v163
    %v1964 = vmul.f32 %v1893, %v167
    %v1965 = vmul.f32 %v1893, %v171
    %v1966 = vmul.f32 %v1898, %v159
    %v1967 = vmul.f32 %v1898, %v163
    %v1968 = vmul.f32 %v1898, %v167
    %v1969 = vmul.f32 %v1898, %v171
    %v1970 = vmul.f32 %v1903, %v159
    %v1971 = vmul.f32 %v1903, %v163
    %v1972 = vmul.f32 %v1903, %v167
    %v1973 = vmul.f32 %v1903, %v171
    %v1974 = vmul.f32 %v1908, %v159
    %v1975 = vmul.f32 %v1908, %v163
    %v1976 = vmul.f32 %v1908, %v167
    %v1977 = vmul.f32 %v1908, %v171
    %v1978 = vmul.f32 %v1913, %v159
    %v1979 = vmul.f32 %v1913, %v163
    %v1980 = vmul.f32 %v1913, %v167
    %v1981 = vmul.f32 %v1913, %v171
    %v1982 = vmul.f32 %v1918, %v159
    %v1983 = vmul.f32 %v1918, %v163
    %v1984 = vmul.f32 %v1918, %v167
    %v1985 = vmul.f32 %v1918, %v171
    %v1986 = vmul.f32 %v1923, %v159
    %v1987 = vmul.f32 %v1923, %v163
    %v1988 = vmul.f32 %v1923, %v167
    %v1989 = vmul.f32 %v1923, %v171
    %v1990 = vmul.f32 %v1928, %v159
    %v1991 = vmul.f32 %v1928, %v163
    %v1992 = vmul.f32 %v1928, %v167
    %v1993 = vmul.f32 %v1928, %v171
    %v1994 = vadd.f32 %v1930, %v244
    %v1995 = vadd.f32 %v1931, %v248
    %v1996 = vadd.f32 %v1932, %v252
    %v1997 = vadd.f32 %v1933, %v256
    %v1998 = vadd.f32 %v1934, %v244
    %v1999 = vadd.f32 %v1935, %v248
    %v2000 = vadd.f32 %v1936, %v252
    %v2001 = vadd.f32 %v1937, %v256
    %v2002 = vadd.f32 %v1938, %v244
    %v2003 = vadd.f32 %v1939, %v248
    %v2004 = vadd.f32 %v1940, %v252
    %v2005 = vadd.f32 %v1941, %v256
    %v2006 = vadd.f32 %v1942, %v244
    %v2007 = vadd.f32 %v1943, %v248
    %v2008 = vadd.f32 %v1944, %v252
    %v2009 = vadd.f32 %v1945, %v256
    %v2010 = vadd.f32 %v1946, %v244
    %v2011 = vadd.f32 %v1947, %v248
    %v2012 = vadd.f32 %v1948, %v252
    %v2013 = vadd.f32 %v1949, %v256
    %v2014 = vadd.f32 %v1950, %v244
    %v2015 = vadd.f32 %v1951, %v248
    %v2016 = vadd.f32 %v1952, %v252
    %v2017 = vadd.f32 %v1953, %v256
    %v2018 = vadd.f32 %v1954, %v244
    %v2019 = vadd.f32 %v1955, %v248
    %v2020 = vadd.f32 %v1956, %v252
    %v2021 = vadd.f32 %v1957, %v256
    %v2022 = vadd.f32 %v1958, %v244
    %v2023 = vadd.f32 %v1959, %v248
    %v2024 = vadd.f32 %v1960, %v252
    %v2025 = vadd.f32 %v1961, %v256
    %v2026 = vadd.f32 %v1962, %v244
    %v2027 = vadd.f32 %v1963, %v248
    %v2028 = vadd.f32 %v1964, %v252
    %v2029 = vadd.f32 %v1965, %v256
    %v2030 = vadd.f32 %v1966, %v244
    %v2031 = vadd.f32 %v1967, %v248
    %v2032 = vadd.f32 %v1968, %v252
    %v2033 = vadd.f32 %v1969, %v256
    %v2034 = vadd.f32 %v1970, %v244
    %v2035 = vadd.f32 %v1971, %v248
    %v2036 = vadd.f32 %v1972, %v252
    %v2037 = vadd.f32 %v1973, %v256
    %v2038 = vadd.f32 %v1974, %v244
    %v2039 = vadd.f32 %v1975, %v248
    %v2040 = vadd.f32 %v1976, %v252
    %v2041 = vadd.f32 %v1977, %v256
    %v2042 = vadd.f32 %v1978, %v244
    %v2043 = vadd.f32 %v1979, %v248
    %v2044 = vadd.f32 %v1980, %v252
    %v2045 = vadd.f32 %v1981, %v256
    %v2046 = vadd.f32 %v1982, %v244
    %v2047 = vadd.f32 %v1983, %v248
    %v2048 = vadd.f32 %v1984, %v252
    %v2049 = vadd.f32 %v1985, %v256
    %v2050 = vadd.f32 %v1986, %v244
    %v2051 = vadd.f32 %v1987, %v248
    %v2052 = vadd.f32 %v1988, %v252
    %v2053 = vadd.f32 %v1989, %v256
    %v2054 = vadd.f32 %v1990, %v244
    %v2055 = vadd.f32 %v1991, %v248
    %v2056 = vadd.f32 %v1992, %v252
    %v2057 = vadd.f32 %v1993, %v256
    %s2058 = scalar_lea.vmem [#allocation2], 3072
    %2059 = vst [vmem:[%s2058] sm:$0xff] %v1994
    %2060 = vst [vmem:[%s2058 + $0x8] sm:$0xff] %v1995
    %2061 = vst [vmem:[%s2058 + $0x10] sm:$0xff] %v1996
    %2062 = vst [vmem:[%s2058 + $0x18] sm:$0xff] %v1997
    %2063 = vst [vmem:[%s2058 + $0x20] sm:$0xff] %v1998
    %2064 = vst [vmem:[%s2058 + $0x28] sm:$0xff] %v1999
    %2065 = vst [vmem:[%s2058 + $0x30] sm:$0xff] %v2000
    %2066 = vst [vmem:[%s2058 + $0x38] sm:$0xff] %v2001
    %2067 = vst [vmem:[%s2058 + $0x40] sm:$0xff] %v2002
    %2068 = vst [vmem:[%s2058 + $0x48] sm:$0xff] %v2003
    %2069 = vst [vmem:[%s2058 + $0x50] sm:$0xff] %v2004
    %2070 = vst [vmem:[%s2058 + $0x58] sm:$0xff] %v2005
    %2071 = vst [vmem:[%s2058 + $0x60] sm:$0xff] %v2006
    %2072 = vst [vmem:[%s2058 + $0x68] sm:$0xff] %v2007
    %2073 = vst [vmem:[%s2058 + $0x70] sm:$0xff] %v2008
    %2074 = vst [vmem:[%s2058 + $0x78] sm:$0xff] %v2009
    %2075 = vst [vmem:[%s2058 + $0x80] sm:$0xff] %v2010
    %2076 = vst [vmem:[%s2058 + $0x88] sm:$0xff] %v2011
    %2077 = vst [vmem:[%s2058 + $0x90] sm:$0xff] %v2012
    %2078 = vst [vmem:[%s2058 + $0x98] sm:$0xff] %v2013
    %2079 = vst [vmem:[%s2058 + $0xa0] sm:$0xff] %v2014
    %2080 = vst [vmem:[%s2058 + $0xa8] sm:$0xff] %v2015
    %2081 = vst [vmem:[%s2058 + $0xb0] sm:$0xff] %v2016
    %2082 = vst [vmem:[%s2058 + $0xb8] sm:$0xff] %v2017
    %2083 = vst [vmem:[%s2058 + $0xc0] sm:$0xff] %v2018
    %2084 = vst [vmem:[%s2058 + $0xc8] sm:$0xff] %v2019
    %2085 = vst [vmem:[%s2058 + $0xd0] sm:$0xff] %v2020
    %2086 = vst [vmem:[%s2058 + $0xd8] sm:$0xff] %v2021
    %2087 = vst [vmem:[%s2058 + $0xe0] sm:$0xff] %v2022
    %2088 = vst [vmem:[%s2058 + $0xe8] sm:$0xff] %v2023
    %2089 = vst [vmem:[%s2058 + $0xf0] sm:$0xff] %v2024
    %2090 = vst [vmem:[%s2058 + $0xf8] sm:$0xff] %v2025
    %2091 = vst [vmem:[%s2058 + $0x100] sm:$0xff] %v2026
    %2092 = vst [vmem:[%s2058 + $0x108] sm:$0xff] %v2027
    %2093 = vst [vmem:[%s2058 + $0x110] sm:$0xff] %v2028
    %2094 = vst [vmem:[%s2058 + $0x118] sm:$0xff] %v2029
    %2095 = vst [vmem:[%s2058 + $0x120] sm:$0xff] %v2030
    %2096 = vst [vmem:[%s2058 + $0x128] sm:$0xff] %v2031
    %2097 = vst [vmem:[%s2058 + $0x130] sm:$0xff] %v2032
    %2098 = vst [vmem:[%s2058 + $0x138] sm:$0xff] %v2033
    %2099 = vst [vmem:[%s2058 + $0x140] sm:$0xff] %v2034
    %2100 = vst [vmem:[%s2058 + $0x148] sm:$0xff] %v2035
    %2101 = vst [vmem:[%s2058 + $0x150] sm:$0xff] %v2036
    %2102 = vst [vmem:[%s2058 + $0x158] sm:$0xff] %v2037
    %2103 = vst [vmem:[%s2058 + $0x160] sm:$0xff] %v2038
    %2104 = vst [vmem:[%s2058 + $0x168] sm:$0xff] %v2039
    %2105 = vst [vmem:[%s2058 + $0x170] sm:$0xff] %v2040
    %2106 = vst [vmem:[%s2058 + $0x178] sm:$0xff] %v2041
    %2107 = vst [vmem:[%s2058 + $0x180] sm:$0xff] %v2042
    %2108 = vst [vmem:[%s2058 + $0x188] sm:$0xff] %v2043
    %2109 = vst [vmem:[%s2058 + $0x190] sm:$0xff] %v2044
    %2110 = vst [vmem:[%s2058 + $0x198] sm:$0xff] %v2045
    %2111 = vst [vmem:[%s2058 + $0x1a0] sm:$0xff] %v2046
    %2112 = vst [vmem:[%s2058 + $0x1a8] sm:$0xff] %v2047
    %2113 = vst [vmem:[%s2058 + $0x1b0] sm:$0xff] %v2048
    %2114 = vst [vmem:[%s2058 + $0x1b8] sm:$0xff] %v2049
    %2115 = vst [vmem:[%s2058 + $0x1c0] sm:$0xff] %v2050
    %2116 = vst [vmem:[%s2058 + $0x1c8] sm:$0xff] %v2051
    %2117 = vst [vmem:[%s2058 + $0x1d0] sm:$0xff] %v2052
    %2118 = vst [vmem:[%s2058 + $0x1d8] sm:$0xff] %v2053
    %2119 = vst [vmem:[%s2058 + $0x1e0] sm:$0xff] %v2054
    %2120 = vst [vmem:[%s2058 + $0x1e8] sm:$0xff] %v2055
    %2121 = vst [vmem:[%s2058 + $0x1f0] sm:$0xff] %v2056
    %2122 = vst [vmem:[%s2058 + $0x1f8] sm:$0xff] %v2057
    %v2123 = vld [vmem:[%s0] sm:$0xff]
    %v2124 = vld [vmem:[%s0 + $0x8] sm:$0xff]
    %v2125 = vld [vmem:[%s0 + $0x10] sm:$0xff]
    %v2126 = vld [vmem:[%s0 + $0x18] sm:$0xff]
    %v2127 = vld [vmem:[%s0 + $0x20] sm:$0xff]
    %v2128 = vld [vmem:[%s0 + $0x28] sm:$0xff]
    %v2129 = vld [vmem:[%s0 + $0x30] sm:$0xff]
    %v2130 = vld [vmem:[%s0 + $0x38] sm:$0xff]
    %v2131 = vld [vmem:[%s0 + $0x40] sm:$0xff]
    %v2132 = vld [vmem:[%s0 + $0x48] sm:$0xff]
    %v2133 = vld [vmem:[%s0 + $0x50] sm:$0xff]
    %v2134 = vld [vmem:[%s0 + $0x58] sm:$0xff]
    %v2135 = vld [vmem:[%s0 + $0x60] sm:$0xff]
    %v2136 = vld [vmem:[%s0 + $0x68] sm:$0xff]
    %v2137 = vld [vmem:[%s0 + $0x70] sm:$0xff]
    %v2138 = vld [vmem:[%s0 + $0x78] sm:$0xff]
    %2140 = vset.pattern.permute.xlu0 7
    %2141 = vperm.xlu0 %2140, %v2123
    %v2142 = vpop.permute.xlu0 %2141
    %2145 = vset.pattern.permute.xlu0 7
    %2146 = vperm.xlu0 %2145, %v2124
    %v2147 = vpop.permute.xlu0 %2146
    %2150 = vset.pattern.permute.xlu0 7
    %2151 = vperm.xlu0 %2150, %v2125
    %v2152 = vpop.permute.xlu0 %2151
    %2155 = vset.pattern.permute.xlu0 7
    %2156 = vperm.xlu0 %2155, %v2126
    %v2157 = vpop.permute.xlu0 %2156
    %2160 = vset.pattern.permute.xlu0 7
    %2161 = vperm.xlu0 %2160, %v2127
    %v2162 = vpop.permute.xlu0 %2161
    %2165 = vset.pattern.permute.xlu0 7
    %2166 = vperm.xlu0 %2165, %v2128
    %v2167 = vpop.permute.xlu0 %2166
    %2170 = vset.pattern.permute.xlu0 7
    %2171 = vperm.xlu0 %2170, %v2129
    %v2172 = vpop.permute.xlu0 %2171
    %2175 = vset.pattern.permute.xlu0 7
    %2176 = vperm.xlu0 %2175, %v2130
    %v2177 = vpop.permute.xlu0 %2176
    %2180 = vset.pattern.permute.xlu0 7
    %2181 = vperm.xlu0 %2180, %v2131
    %v2182 = vpop.permute.xlu0 %2181
    %2185 = vset.pattern.permute.xlu0 7
    %2186 = vperm.xlu0 %2185, %v2132
    %v2187 = vpop.permute.xlu0 %2186
    %2190 = vset.pattern.permute.xlu0 7
    %2191 = vperm.xlu0 %2190, %v2133
    %v2192 = vpop.permute.xlu0 %2191
    %2195 = vset.pattern.permute.xlu0 7
    %2196 = vperm.xlu0 %2195, %v2134
    %v2197 = vpop.permute.xlu0 %2196
    %2200 = vset.pattern.permute.xlu0 7
    %2201 = vperm.xlu0 %2200, %v2135
    %v2202 = vpop.permute.xlu0 %2201
    %2205 = vset.pattern.permute.xlu0 7
    %2206 = vperm.xlu0 %2205, %v2136
    %v2207 = vpop.permute.xlu0 %2206
    %2210 = vset.pattern.permute.xlu0 7
    %2211 = vperm.xlu0 %2210, %v2137
    %v2212 = vpop.permute.xlu0 %2211
    %2215 = vset.pattern.permute.xlu0 7
    %2216 = vperm.xlu0 %2215, %v2138
    %v2217 = vpop.permute.xlu0 %2216
    %v2219 = vmul.f32 %v2142, %v159
    %v2220 = vmul.f32 %v2142, %v163
    %v2221 = vmul.f32 %v2142, %v167
    %v2222 = vmul.f32 %v2142, %v171
    %v2223 = vmul.f32 %v2147, %v159
    %v2224 = vmul.f32 %v2147, %v163
    %v2225 = vmul.f32 %v2147, %v167
    %v2226 = vmul.f32 %v2147, %v171
    %v2227 = vmul.f32 %v2152, %v159
    %v2228 = vmul.f32 %v2152, %v163
    %v2229 = vmul.f32 %v2152, %v167
    %v2230 = vmul.f32 %v2152, %v171
    %v2231 = vmul.f32 %v2157, %v159
    %v2232 = vmul.f32 %v2157, %v163
    %v2233 = vmul.f32 %v2157, %v167
    %v2234 = vmul.f32 %v2157, %v171
    %v2235 = vmul.f32 %v2162, %v159
    %v2236 = vmul.f32 %v2162, %v163
    %v2237 = vmul.f32 %v2162, %v167
    %v2238 = vmul.f32 %v2162, %v171
    %v2239 = vmul.f32 %v2167, %v159
    %v2240 = vmul.f32 %v2167, %v163
    %v2241 = vmul.f32 %v2167, %v167
    %v2242 = vmul.f32 %v2167, %v171
    %v2243 = vmul.f32 %v2172, %v159
    %v2244 = vmul.f32 %v2172, %v163
    %v2245 = vmul.f32 %v2172, %v167
    %v2246 = vmul.f32 %v2172, %v171
    %v2247 = vmul.f32 %v2177, %v159
    %v2248 = vmul.f32 %v2177, %v163
    %v2249 = vmul.f32 %v2177, %v167
    %v2250 = vmul.f32 %v2177, %v171
    %v2251 = vmul.f32 %v2182, %v159
    %v2252 = vmul.f32 %v2182, %v163
    %v2253 = vmul.f32 %v2182, %v167
    %v2254 = vmul.f32 %v2182, %v171
    %v2255 = vmul.f32 %v2187, %v159
    %v2256 = vmul.f32 %v2187, %v163
    %v2257 = vmul.f32 %v2187, %v167
    %v2258 = vmul.f32 %v2187, %v171
    %v2259 = vmul.f32 %v2192, %v159
    %v2260 = vmul.f32 %v2192, %v163
    %v2261 = vmul.f32 %v2192, %v167
    %v2262 = vmul.f32 %v2192, %v171
    %v2263 = vmul.f32 %v2197, %v159
    %v2264 = vmul.f32 %v2197, %v163
    %v2265 = vmul.f32 %v2197, %v167
    %v2266 = vmul.f32 %v2197, %v171
    %v2267 = vmul.f32 %v2202, %v159
    %v2268 = vmul.f32 %v2202, %v163
    %v2269 = vmul.f32 %v2202, %v167
    %v2270 = vmul.f32 %v2202, %v171
    %v2271 = vmul.f32 %v2207, %v159
    %v2272 = vmul.f32 %v2207, %v163
    %v2273 = vmul.f32 %v2207, %v167
    %v2274 = vmul.f32 %v2207, %v171
    %v2275 = vmul.f32 %v2212, %v159
    %v2276 = vmul.f32 %v2212, %v163
    %v2277 = vmul.f32 %v2212, %v167
    %v2278 = vmul.f32 %v2212, %v171
    %v2279 = vmul.f32 %v2217, %v159
    %v2280 = vmul.f32 %v2217, %v163
    %v2281 = vmul.f32 %v2217, %v167
    %v2282 = vmul.f32 %v2217, %v171
    %v2283 = vadd.f32 %v2219, %v244
    %v2284 = vadd.f32 %v2220, %v248
    %v2285 = vadd.f32 %v2221, %v252
    %v2286 = vadd.f32 %v2222, %v256
    %v2287 = vadd.f32 %v2223, %v244
    %v2288 = vadd.f32 %v2224, %v248
    %v2289 = vadd.f32 %v2225, %v252
    %v2290 = vadd.f32 %v2226, %v256
    %v2291 = vadd.f32 %v2227, %v244
    %v2292 = vadd.f32 %v2228, %v248
    %v2293 = vadd.f32 %v2229, %v252
    %v2294 = vadd.f32 %v2230, %v256
    %v2295 = vadd.f32 %v2231, %v244
    %v2296 = vadd.f32 %v2232, %v248
    %v2297 = vadd.f32 %v2233, %v252
    %v2298 = vadd.f32 %v2234, %v256
    %v2299 = vadd.f32 %v2235, %v244
    %v2300 = vadd.f32 %v2236, %v248
    %v2301 = vadd.f32 %v2237, %v252
    %v2302 = vadd.f32 %v2238, %v256
    %v2303 = vadd.f32 %v2239, %v244
    %v2304 = vadd.f32 %v2240, %v248
    %v2305 = vadd.f32 %v2241, %v252
    %v2306 = vadd.f32 %v2242, %v256
    %v2307 = vadd.f32 %v2243, %v244
    %v2308 = vadd.f32 %v2244, %v248
    %v2309 = vadd.f32 %v2245, %v252
    %v2310 = vadd.f32 %v2246, %v256
    %v2311 = vadd.f32 %v2247, %v244
    %v2312 = vadd.f32 %v2248, %v248
    %v2313 = vadd.f32 %v2249, %v252
    %v2314 = vadd.f32 %v2250, %v256
    %v2315 = vadd.f32 %v2251, %v244
    %v2316 = vadd.f32 %v2252, %v248
    %v2317 = vadd.f32 %v2253, %v252
    %v2318 = vadd.f32 %v2254, %v256
    %v2319 = vadd.f32 %v2255, %v244
    %v2320 = vadd.f32 %v2256, %v248
    %v2321 = vadd.f32 %v2257, %v252
    %v2322 = vadd.f32 %v2258, %v256
    %v2323 = vadd.f32 %v2259, %v244
    %v2324 = vadd.f32 %v2260, %v248
    %v2325 = vadd.f32 %v2261, %v252
    %v2326 = vadd.f32 %v2262, %v256
    %v2327 = vadd.f32 %v2263, %v244
    %v2328 = vadd.f32 %v2264, %v248
    %v2329 = vadd.f32 %v2265, %v252
    %v2330 = vadd.f32 %v2266, %v256
    %v2331 = vadd.f32 %v2267, %v244
    %v2332 = vadd.f32 %v2268, %v248
    %v2333 = vadd.f32 %v2269, %v252
    %v2334 = vadd.f32 %v2270, %v256
    %v2335 = vadd.f32 %v2271, %v244
    %v2336 = vadd.f32 %v2272, %v248
    %v2337 = vadd.f32 %v2273, %v252
    %v2338 = vadd.f32 %v2274, %v256
    %v2339 = vadd.f32 %v2275, %v244
    %v2340 = vadd.f32 %v2276, %v248
    %v2341 = vadd.f32 %v2277, %v252
    %v2342 = vadd.f32 %v2278, %v256
    %v2343 = vadd.f32 %v2279, %v244
    %v2344 = vadd.f32 %v2280, %v248
    %v2345 = vadd.f32 %v2281, %v252
    %v2346 = vadd.f32 %v2282, %v256
    %s2347 = scalar_lea.vmem [#allocation2], 3584
    %2348 = vst [vmem:[%s2347] sm:$0xff] %v2283
    %2349 = vst [vmem:[%s2347 + $0x8] sm:$0xff] %v2284
    %2350 = vst [vmem:[%s2347 + $0x10] sm:$0xff] %v2285
    %2351 = vst [vmem:[%s2347 + $0x18] sm:$0xff] %v2286
    %2352 = vst [vmem:[%s2347 + $0x20] sm:$0xff] %v2287
    %2353 = vst [vmem:[%s2347 + $0x28] sm:$0xff] %v2288
    %2354 = vst [vmem:[%s2347 + $0x30] sm:$0xff] %v2289
    %2355 = vst [vmem:[%s2347 + $0x38] sm:$0xff] %v2290
    %2356 = vst [vmem:[%s2347 + $0x40] sm:$0xff] %v2291
    %2357 = vst [vmem:[%s2347 + $0x48] sm:$0xff] %v2292
    %2358 = vst [vmem:[%s2347 + $0x50] sm:$0xff] %v2293
    %2359 = vst [vmem:[%s2347 + $0x58] sm:$0xff] %v2294
    %2360 = vst [vmem:[%s2347 + $0x60] sm:$0xff] %v2295
    %2361 = vst [vmem:[%s2347 + $0x68] sm:$0xff] %v2296
    %2362 = vst [vmem:[%s2347 + $0x70] sm:$0xff] %v2297
    %2363 = vst [vmem:[%s2347 + $0x78] sm:$0xff] %v2298
    %2364 = vst [vmem:[%s2347 + $0x80] sm:$0xff] %v2299
    %2365 = vst [vmem:[%s2347 + $0x88] sm:$0xff] %v2300
    %2366 = vst [vmem:[%s2347 + $0x90] sm:$0xff] %v2301
    %2367 = vst [vmem:[%s2347 + $0x98] sm:$0xff] %v2302
    %2368 = vst [vmem:[%s2347 + $0xa0] sm:$0xff] %v2303
    %2369 = vst [vmem:[%s2347 + $0xa8] sm:$0xff] %v2304
    %2370 = vst [vmem:[%s2347 + $0xb0] sm:$0xff] %v2305
    %2371 = vst [vmem:[%s2347 + $0xb8] sm:$0xff] %v2306
    %2372 = vst [vmem:[%s2347 + $0xc0] sm:$0xff] %v2307
    %2373 = vst [vmem:[%s2347 + $0xc8] sm:$0xff] %v2308
    %2374 = vst [vmem:[%s2347 + $0xd0] sm:$0xff] %v2309
    %2375 = vst [vmem:[%s2347 + $0xd8] sm:$0xff] %v2310
    %2376 = vst [vmem:[%s2347 + $0xe0] sm:$0xff] %v2311
    %2377 = vst [vmem:[%s2347 + $0xe8] sm:$0xff] %v2312
    %2378 = vst [vmem:[%s2347 + $0xf0] sm:$0xff] %v2313
    %2379 = vst [vmem:[%s2347 + $0xf8] sm:$0xff] %v2314
    %2380 = vst [vmem:[%s2347 + $0x100] sm:$0xff] %v2315
    %2381 = vst [vmem:[%s2347 + $0x108] sm:$0xff] %v2316
    %2382 = vst [vmem:[%s2347 + $0x110] sm:$0xff] %v2317
    %2383 = vst [vmem:[%s2347 + $0x118] sm:$0xff] %v2318
    %2384 = vst [vmem:[%s2347 + $0x120] sm:$0xff] %v2319
    %2385 = vst [vmem:[%s2347 + $0x128] sm:$0xff] %v2320
    %2386 = vst [vmem:[%s2347 + $0x130] sm:$0xff] %v2321
    %2387 = vst [vmem:[%s2347 + $0x138] sm:$0xff] %v2322
    %2388 = vst [vmem:[%s2347 + $0x140] sm:$0xff] %v2323
    %2389 = vst [vmem:[%s2347 + $0x148] sm:$0xff] %v2324
    %2390 = vst [vmem:[%s2347 + $0x150] sm:$0xff] %v2325
    %2391 = vst [vmem:[%s2347 + $0x158] sm:$0xff] %v2326
    %2392 = vst [vmem:[%s2347 + $0x160] sm:$0xff] %v2327
    %2393 = vst [vmem:[%s2347 + $0x168] sm:$0xff] %v2328
    %2394 = vst [vmem:[%s2347 + $0x170] sm:$0xff] %v2329
    %2395 = vst [vmem:[%s2347 + $0x178] sm:$0xff] %v2330
    %2396 = vst [vmem:[%s2347 + $0x180] sm:$0xff] %v2331
    %2397 = vst [vmem:[%s2347 + $0x188] sm:$0xff] %v2332
    %2398 = vst [vmem:[%s2347 + $0x190] sm:$0xff] %v2333
    %2399 = vst [vmem:[%s2347 + $0x198] sm:$0xff] %v2334
    %2400 = vst [vmem:[%s2347 + $0x1a0] sm:$0xff] %v2335
    %2401 = vst [vmem:[%s2347 + $0x1a8] sm:$0xff] %v2336
    %2402 = vst [vmem:[%s2347 + $0x1b0] sm:$0xff] %v2337
    %2403 = vst [vmem:[%s2347 + $0x1b8] sm:$0xff] %v2338
    %2404 = vst [vmem:[%s2347 + $0x1c0] sm:$0xff] %v2339
    %2405 = vst [vmem:[%s2347 + $0x1c8] sm:$0xff] %v2340
    %2406 = vst [vmem:[%s2347 + $0x1d0] sm:$0xff] %v2341
    %2407 = vst [vmem:[%s2347 + $0x1d8] sm:$0xff] %v2342
    %2408 = vst [vmem:[%s2347 + $0x1e0] sm:$0xff] %v2343
    %2409 = vst [vmem:[%s2347 + $0x1e8] sm:$0xff] %v2344
    %2410 = vst [vmem:[%s2347 + $0x1f0] sm:$0xff] %v2345
    %2411 = vst [vmem:[%s2347 + $0x1f8] sm:$0xff] %v2346
    %v2412 = vld [vmem:[#allocation5] sm:$0xff]
    %v2413 = vld [vmem:[#allocation5 + $0x8] sm:$0xff]
    %v2414 = vld [vmem:[#allocation5 + $0x10] sm:$0xff]
    %v2415 = vld [vmem:[#allocation5 + $0x18] sm:$0xff]
    %v2416 = vld [vmem:[#allocation5 + $0x20] sm:$0xff]
    %v2417 = vld [vmem:[#allocation5 + $0x28] sm:$0xff]
    %v2418 = vld [vmem:[#allocation5 + $0x30] sm:$0xff]
    %v2419 = vld [vmem:[#allocation5 + $0x38] sm:$0xff]
    %v2420 = vld [vmem:[#allocation5 + $0x40] sm:$0xff]
    %v2421 = vld [vmem:[#allocation5 + $0x48] sm:$0xff]
    %v2422 = vld [vmem:[#allocation5 + $0x50] sm:$0xff]
    %v2423 = vld [vmem:[#allocation5 + $0x58] sm:$0xff]
    %v2424 = vld [vmem:[#allocation5 + $0x60] sm:$0xff]
    %v2425 = vld [vmem:[#allocation5 + $0x68] sm:$0xff]
    %v2426 = vld [vmem:[#allocation5 + $0x70] sm:$0xff]
    %v2427 = vld [vmem:[#allocation5 + $0x78] sm:$0xff]
    %v2428 = vld [vmem:[#allocation5 + $0x80] sm:$0xff]
    %v2429 = vld [vmem:[#allocation5 + $0x88] sm:$0xff]
    %v2430 = vld [vmem:[#allocation5 + $0x90] sm:$0xff]
    %v2431 = vld [vmem:[#allocation5 + $0x98] sm:$0xff]
    %v2432 = vld [vmem:[#allocation5 + $0xa0] sm:$0xff]
    %v2433 = vld [vmem:[#allocation5 + $0xa8] sm:$0xff]
    %v2434 = vld [vmem:[#allocation5 + $0xb0] sm:$0xff]
    %v2435 = vld [vmem:[#allocation5 + $0xb8] sm:$0xff]
    %v2436 = vld [vmem:[#allocation5 + $0xc0] sm:$0xff]
    %v2437 = vld [vmem:[#allocation5 + $0xc8] sm:$0xff]
    %v2438 = vld [vmem:[#allocation5 + $0xd0] sm:$0xff]
    %v2439 = vld [vmem:[#allocation5 + $0xd8] sm:$0xff]
    %v2440 = vld [vmem:[#allocation5 + $0xe0] sm:$0xff]
    %v2441 = vld [vmem:[#allocation5 + $0xe8] sm:$0xff]
    %v2442 = vld [vmem:[#allocation5 + $0xf0] sm:$0xff]
    %v2443 = vld [vmem:[#allocation5 + $0xf8] sm:$0xff]
    %v2444 = vld [vmem:[#allocation5 + $0x100] sm:$0xff]
    %v2445 = vld [vmem:[#allocation5 + $0x108] sm:$0xff]
    %v2446 = vld [vmem:[#allocation5 + $0x110] sm:$0xff]
    %v2447 = vld [vmem:[#allocation5 + $0x118] sm:$0xff]
    %v2448 = vld [vmem:[#allocation5 + $0x120] sm:$0xff]
    %v2449 = vld [vmem:[#allocation5 + $0x128] sm:$0xff]
    %v2450 = vld [vmem:[#allocation5 + $0x130] sm:$0xff]
    %v2451 = vld [vmem:[#allocation5 + $0x138] sm:$0xff]
    %v2452 = vld [vmem:[#allocation5 + $0x140] sm:$0xff]
    %v2453 = vld [vmem:[#allocation5 + $0x148] sm:$0xff]
    %v2454 = vld [vmem:[#allocation5 + $0x150] sm:$0xff]
    %v2455 = vld [vmem:[#allocation5 + $0x158] sm:$0xff]
    %v2456 = vld [vmem:[#allocation5 + $0x160] sm:$0xff]
    %v2457 = vld [vmem:[#allocation5 + $0x168] sm:$0xff]
    %v2458 = vld [vmem:[#allocation5 + $0x170] sm:$0xff]
    %v2459 = vld [vmem:[#allocation5 + $0x178] sm:$0xff]
    %v2460 = vld [vmem:[#allocation5 + $0x180] sm:$0xff]
    %v2461 = vld [vmem:[#allocation5 + $0x188] sm:$0xff]
    %v2462 = vld [vmem:[#allocation5 + $0x190] sm:$0xff]
    %v2463 = vld [vmem:[#allocation5 + $0x198] sm:$0xff]
    %v2464 = vld [vmem:[#allocation5 + $0x1a0] sm:$0xff]
    %v2465 = vld [vmem:[#allocation5 + $0x1a8] sm:$0xff]
    %v2466 = vld [vmem:[#allocation5 + $0x1b0] sm:$0xff]
    %v2467 = vld [vmem:[#allocation5 + $0x1b8] sm:$0xff]
    %v2468 = vld [vmem:[#allocation5 + $0x1c0] sm:$0xff]
    %v2469 = vld [vmem:[#allocation5 + $0x1c8] sm:$0xff]
    %v2470 = vld [vmem:[#allocation5 + $0x1d0] sm:$0xff]
    %v2471 = vld [vmem:[#allocation5 + $0x1d8] sm:$0xff]
    %v2472 = vld [vmem:[#allocation5 + $0x1e0] sm:$0xff]
    %v2473 = vld [vmem:[#allocation5 + $0x1e8] sm:$0xff]
    %v2474 = vld [vmem:[#allocation5 + $0x1f0] sm:$0xff]
    %v2475 = vld [vmem:[#allocation5 + $0x1f8] sm:$0xff]
    %v2476 = vpack.c.bf16 %v2416, %v2412
    %v2477 = vpack.c.bf16 %v2417, %v2413
    %v2478 = vpack.c.bf16 %v2418, %v2414
    %v2479 = vpack.c.bf16 %v2419, %v2415
    %v2480 = vpack.c.bf16 %v2424, %v2420
    %v2481 = vpack.c.bf16 %v2425, %v2421
    %v2482 = vpack.c.bf16 %v2426, %v2422
    %v2483 = vpack.c.bf16 %v2427, %v2423
    %v2484 = vpack.c.bf16 %v2432, %v2428
    %v2485 = vpack.c.bf16 %v2433, %v2429
    %v2486 = vpack.c.bf16 %v2434, %v2430
    %v2487 = vpack.c.bf16 %v2435, %v2431
    %v2488 = vpack.c.bf16 %v2440, %v2436
    %v2489 = vpack.c.bf16 %v2441, %v2437
    %v2490 = vpack.c.bf16 %v2442, %v2438
    %v2491 = vpack.c.bf16 %v2443, %v2439
    %v2492 = vpack.c.bf16 %v2448, %v2444
    %v2493 = vpack.c.bf16 %v2449, %v2445
    %v2494 = vpack.c.bf16 %v2450, %v2446
    %v2495 = vpack.c.bf16 %v2451, %v2447
    %v2496 = vpack.c.bf16 %v2456, %v2452
    %v2497 = vpack.c.bf16 %v2457, %v2453
    %v2498 = vpack.c.bf16 %v2458, %v2454
    %v2499 = vpack.c.bf16 %v2459, %v2455
    %v2500 = vpack.c.bf16 %v2464, %v2460
    %v2501 = vpack.c.bf16 %v2465, %v2461
    %v2502 = vpack.c.bf16 %v2466, %v2462
    %v2503 = vpack.c.bf16 %v2467, %v2463
    %v2504 = vpack.c.bf16 %v2472, %v2468
    %v2505 = vpack.c.bf16 %v2473, %v2469
    %v2506 = vpack.c.bf16 %v2474, %v2470
    %v2507 = vpack.c.bf16 %v2475, %v2471
    %v2508 = vld [vmem:[#allocation2] sm:$0xff]
    %v2509 = vld [vmem:[#allocation2 + $0x8] sm:$0xff]
    %v2510 = vld [vmem:[#allocation2 + $0x10] sm:$0xff]
    %v2511 = vld [vmem:[#allocation2 + $0x18] sm:$0xff]
    %v2512 = vld [vmem:[#allocation2 + $0x20] sm:$0xff]
    %v2513 = vld [vmem:[#allocation2 + $0x28] sm:$0xff]
    %v2514 = vld [vmem:[#allocation2 + $0x30] sm:$0xff]
    %v2515 = vld [vmem:[#allocation2 + $0x38] sm:$0xff]
    %v2516 = vld [vmem:[#allocation2 + $0x40] sm:$0xff]
    %v2517 = vld [vmem:[#allocation2 + $0x48] sm:$0xff]
    %v2518 = vld [vmem:[#allocation2 + $0x50] sm:$0xff]
    %v2519 = vld [vmem:[#allocation2 + $0x58] sm:$0xff]
    %v2520 = vld [vmem:[#allocation2 + $0x60] sm:$0xff]
    %v2521 = vld [vmem:[#allocation2 + $0x68] sm:$0xff]
    %v2522 = vld [vmem:[#allocation2 + $0x70] sm:$0xff]
    %v2523 = vld [vmem:[#allocation2 + $0x78] sm:$0xff]
    %v2524 = vld [vmem:[#allocation2 + $0x80] sm:$0xff]
    %v2525 = vld [vmem:[#allocation2 + $0x88] sm:$0xff]
    %v2526 = vld [vmem:[#allocation2 + $0x90] sm:$0xff]
    %v2527 = vld [vmem:[#allocation2 + $0x98] sm:$0xff]
    %v2528 = vld [vmem:[#allocation2 + $0xa0] sm:$0xff]
    %v2529 = vld [vmem:[#allocation2 + $0xa8] sm:$0xff]
    %v2530 = vld [vmem:[#allocation2 + $0xb0] sm:$0xff]
    %v2531 = vld [vmem:[#allocation2 + $0xb8] sm:$0xff]
    %v2532 = vld [vmem:[#allocation2 + $0xc0] sm:$0xff]
    %v2533 = vld [vmem:[#allocation2 + $0xc8] sm:$0xff]
    %v2534 = vld [vmem:[#allocation2 + $0xd0] sm:$0xff]
    %v2535 = vld [vmem:[#allocation2 + $0xd8] sm:$0xff]
    %v2536 = vld [vmem:[#allocation2 + $0xe0] sm:$0xff]
    %v2537 = vld [vmem:[#allocation2 + $0xe8] sm:$0xff]
    %v2538 = vld [vmem:[#allocation2 + $0xf0] sm:$0xff]
    %v2539 = vld [vmem:[#allocation2 + $0xf8] sm:$0xff]
    %v2540 = vld [vmem:[#allocation2 + $0x100] sm:$0xff]
    %v2541 = vld [vmem:[#allocation2 + $0x108] sm:$0xff]
    %v2542 = vld [vmem:[#allocation2 + $0x110] sm:$0xff]
    %v2543 = vld [vmem:[#allocation2 + $0x118] sm:$0xff]
    %v2544 = vld [vmem:[#allocation2 + $0x120] sm:$0xff]
    %v2545 = vld [vmem:[#allocation2 + $0x128] sm:$0xff]
    %v2546 = vld [vmem:[#allocation2 + $0x130] sm:$0xff]
    %v2547 = vld [vmem:[#allocation2 + $0x138] sm:$0xff]
    %v2548 = vld [vmem:[#allocation2 + $0x140] sm:$0xff]
    %v2549 = vld [vmem:[#allocation2 + $0x148] sm:$0xff]
    %v2550 = vld [vmem:[#allocation2 + $0x150] sm:$0xff]
    %v2551 = vld [vmem:[#allocation2 + $0x158] sm:$0xff]
    %v2552 = vld [vmem:[#allocation2 + $0x160] sm:$0xff]
    %v2553 = vld [vmem:[#allocation2 + $0x168] sm:$0xff]
    %v2554 = vld [vmem:[#allocation2 + $0x170] sm:$0xff]
    %v2555 = vld [vmem:[#allocation2 + $0x178] sm:$0xff]
    %v2556 = vld [vmem:[#allocation2 + $0x180] sm:$0xff]
    %v2557 = vld [vmem:[#allocation2 + $0x188] sm:$0xff]
    %v2558 = vld [vmem:[#allocation2 + $0x190] sm:$0xff]
    %v2559 = vld [vmem:[#allocation2 + $0x198] sm:$0xff]
    %v2560 = vld [vmem:[#allocation2 + $0x1a0] sm:$0xff]
    %v2561 = vld [vmem:[#allocation2 + $0x1a8] sm:$0xff]
    %v2562 = vld [vmem:[#allocation2 + $0x1b0] sm:$0xff]
    %v2563 = vld [vmem:[#allocation2 + $0x1b8] sm:$0xff]
    %v2564 = vld [vmem:[#allocation2 + $0x1c0] sm:$0xff]
    %v2565 = vld [vmem:[#allocation2 + $0x1c8] sm:$0xff]
    %v2566 = vld [vmem:[#allocation2 + $0x1d0] sm:$0xff]
    %v2567 = vld [vmem:[#allocation2 + $0x1d8] sm:$0xff]
    %v2568 = vld [vmem:[#allocation2 + $0x1e0] sm:$0xff]
    %v2569 = vld [vmem:[#allocation2 + $0x1e8] sm:$0xff]
    %v2570 = vld [vmem:[#allocation2 + $0x1f0] sm:$0xff]
    %v2571 = vld [vmem:[#allocation2 + $0x1f8] sm:$0xff]
    %2572 = vmatprep.subr.bf16.mxu0 %v2477
    %2573 = vmatpush1.bf16.msra.mxu0 %v2476
    %2574 = vmatprep.subr.bf16.mxu0 %v2481
    %2575 = vmatpush1.bf16.msra.mxu0 %v2480
    %2576 = vmatprep.subr.bf16.mxu0 %v2485
    %2577 = vmatpush1.bf16.msra.mxu0 %v2484
    %2578 = vmatprep.subr.bf16.mxu0 %v2489
    %2579 = vmatpush1.bf16.msra.mxu0 %v2488
    %2580 = vmatprep.subr.bf16.mxu0 %v2493
    %2581 = vmatpush1.bf16.msra.mxu0 %v2492
    %2582 = vmatprep.subr.bf16.mxu0 %v2497
    %2583 = vmatpush1.bf16.msra.mxu0 %v2496
    %2584 = vmatprep.subr.bf16.mxu0 %v2501
    %2585 = vmatpush1.bf16.msra.mxu0 %v2500
    %2586 = vmatprep.subr.bf16.mxu0 %v2505
    %2587 = vmatpush1.bf16.msra.mxu0 %v2504
    %2588 = vmatprep.subr.bf16.mxu0 0
    %2589 = vmatpush1.bf16.msra.mxu0 0
    %2590 = vmatprep.subr.bf16.mxu0 0
    %2591 = vmatpush1.bf16.msra.mxu0 0
    %2592 = vmatprep.subr.bf16.mxu0 0
    %2593 = vmatpush1.bf16.msra.mxu0 0
    %2594 = vmatprep.subr.bf16.mxu0 0
    %2595 = vmatpush1.bf16.msra.mxu0 0
    %2596 = vmatprep.subr.bf16.mxu0 0
    %2597 = vmatpush1.bf16.msra.mxu0 0
    %2598 = vmatprep.subr.bf16.mxu0 0
    %2599 = vmatpush1.bf16.msra.mxu0 0
    %2600 = vmatprep.subr.bf16.mxu0 0
    %2601 = vmatpush1.bf16.msra.mxu0 0
    %2602 = vmatprep.subr.bf16.mxu0 0
    %2603 = vmatpush1.bf16.msra.mxu0 0
    %2604 = vmatprep.mubr.bf16.mxu0 0
    %2605 = vmatmul.mubr.bf16.gmra.mrb[0].mxu0 0
    %v2606 = vpop.f32.mrb[0].mxu0
    %v2607 = vadd.f32 0.0, %v2606
    %v2608 = vpop.f32.mrb[0].mxu0
    %v2609 = vadd.f32 0.0, %v2608
    %v2610 = vpop.f32.mrb[0].mxu0
    %v2611 = vadd.f32 0.0, %v2610
    %v2612 = vpop.f32.mrb[0].mxu0
    %v2613 = vadd.f32 0.0, %v2612
    %2614 = vmatprep.mubr.bf16.mxu0 0
    %2615 = vmatmul.mubr.bf16.gmra.mrb[0].mxu0 0
    %v2616 = vpop.f32.mrb[0].mxu0
    %v2617 = vadd.f32 0.0, %v2616
    %v2618 = vpop.f32.mrb[0].mxu0
    %v2619 = vadd.f32 0.0, %v2618
    %v2620 = vpop.f32.mrb[0].mxu0
    %v2621 = vadd.f32 0.0, %v2620
    %v2622 = vpop.f32.mrb[0].mxu0
    %v2623 = vadd.f32 0.0, %v2622
    %2624 = vmatprep.mubr.bf16.mxu0 0
    %2625 = vmatmul.mubr.bf16.gmra.mrb[0].mxu0 0
    %v2626 = vpop.f32.mrb[0].mxu0
    %v2627 = vadd.f32 0.0, %v2626
    %v2628 = vpop.f32.mrb[0].mxu0
    %v2629 = vadd.f32 0.0, %v2628
    %v2630 = vpop.f32.mrb[0].mxu0
    %v2631 = vadd.f32 0.0, %v2630
    %v2632 = vpop.f32.mrb[0].mxu0
    %v2633 = vadd.f32 0.0, %v2632
    %2634 = vmatprep.mubr.bf16.mxu0 0
    %2635 = vmatmul.mubr.bf16.gmra.mrb[0].mxu0 0
    %v2636 = vpop.f32.mrb[0].mxu0
    %v2637 = vadd.f32 0.0, %v2636
    %v2638 = vpop.f32.mrb[0].mxu0
    %v2639 = vadd.f32 0.0, %v2638
    %v2640 = vpop.f32.mrb[0].mxu0
    %v2641 = vadd.f32 0.0, %v2640
    %v2642 = vpop.f32.mrb[0].mxu0
    %v2643 = vadd.f32 0.0, %v2642
    %2644 = vmatprep.mubr.bf16.mxu0 0
    %2645 = vmatmul.mubr.bf16.gmra.mrb[0].mxu0 0
    %v2646 = vpop.f32.mrb[0].mxu0
    %v2647 = vadd.f32 0.0, %v2646
    %v2648 = vpop.f32.mrb[0].mxu0
    %v2649 = vadd.f32 0.0, %v2648
    %v2650 = vpop.f32.mrb[0].mxu0
    %v2651 = vadd.f32 0.0, %v2650
    %v2652 = vpop.f32.mrb[0].mxu0
    %v2653 = vadd.f32 0.0, %v2652
    %2654 = vmatprep.mubr.bf16.mxu0 0
    %2655 = vmatmul.mubr.bf16.gmra.mrb[0].mxu0 0
    %v2656 = vpop.f32.mrb[0].mxu0
    %v2657 = vadd.f32 0.0, %v2656
    %v2658 = vpop.f32.mrb[0].mxu0
    %v2659 = vadd.f32 0.0, %v2658
    %v2660 = vpop.f32.mrb[0].mxu0
    %v2661 = vadd.f32 0.0, %v2660
    %v2662 = vpop.f32.mrb[0].mxu0
    %v2663 = vadd.f32 0.0, %v2662
    %2664 = vmatprep.mubr.bf16.mxu0 0
    %2665 = vmatmul.mubr.bf16.gmra.mrb[0].mxu0 0
    %v2666 = vpop.f32.mrb[0].mxu0
    %v2667 = vadd.f32 0.0, %v2666
    %v2668 = vpop.f32.mrb[0].mxu0
    %v2669 = vadd.f32 0.0, %v2668
    %v2670 = vpop.f32.mrb[0].mxu0
    %v2671 = vadd.f32 0.0, %v2670
    %v2672 = vpop.f32.mrb[0].mxu0
    %v2673 = vadd.f32 0.0, %v2672
    %2674 = vmatprep.mubr.bf16.mxu0 0
    %2675 = vmatmul.mubr.bf16.gmra.mrb[0].mxu0 0
    %v2676 = vpop.f32.mrb[0].mxu0
    %v2677 = vadd.f32 0.0, %v2676
    %v2678 = vpop.f32.mrb[0].mxu0
    %v2679 = vadd.f32 0.0, %v2678
    %v2680 = vpop.f32.mrb[0].mxu0
    %v2681 = vadd.f32 0.0, %v2680
    %v2682 = vpop.f32.mrb[0].mxu0
    %v2683 = vadd.f32 0.0, %v2682
    %2684 = vdwg.mxu0
    %2685 = vmatprep.subr.bf16.mxu0 %v2479
    %2686 = vmatpush1.bf16.msra.mxu0 %v2478
    %2687 = vmatprep.subr.bf16.mxu0 %v2483
    %2688 = vmatpush1.bf16.msra.mxu0 %v2482
    %2689 = vmatprep.subr.bf16.mxu0 %v2487
    %2690 = vmatpush1.bf16.msra.mxu0 %v2486
    %2691 = vmatprep.subr.bf16.mxu0 %v2491
    %2692 = vmatpush1.bf16.msra.mxu0 %v2490
    %2693 = vmatprep.subr.bf16.mxu0 %v2495
    %2694 = vmatpush1.bf16.msra.mxu0 %v2494
    %2695 = vmatprep.subr.bf16.mxu0 %v2499
    %2696 = vmatpush1.bf16.msra.mxu0 %v2498
    %2697 = vmatprep.subr.bf16.mxu0 %v2503
    %2698 = vmatpush1.bf16.msra.mxu0 %v2502
    %2699 = vmatprep.subr.bf16.mxu0 %v2507
    %2700 = vmatpush1.bf16.msra.mxu0 %v2506
    %2701 = vmatprep.subr.bf16.mxu0 0
    %2702 = vmatpush1.bf16.msra.mxu0 0
    %2703 = vmatprep.subr.bf16.mxu0 0
    %2704 = vmatpush1.bf16.msra.mxu0 0
    %2705 = vmatprep.subr.bf16.mxu0 0
    %2706 = vmatpush1.bf16.msra.mxu0 0
    %2707 = vmatprep.subr.bf16.mxu0 0
    %2708 = vmatpush1.bf16.msra.mxu0 0
    %2709 = vmatprep.subr.bf16.mxu0 0
    %2710 = vmatpush1.bf16.msra.mxu0 0
    %2711 = vmatprep.subr.bf16.mxu0 0
    %2712 = vmatpush1.bf16.msra.mxu0 0
    %2713 = vmatprep.subr.bf16.mxu0 0
    %2714 = vmatpush1.bf16.msra.mxu0 0
    %2715 = vmatprep.subr.bf16.mxu0 0
    %2716 = vmatpush1.bf16.msra.mxu0 0
    %2717 = vmatprep.mubr.bf16.mxu0 0
    %2718 = vmatmul.mubr.bf16.gmra.mrb[0].mxu0 0
    %v2719 = vpop.f32.mrb[0].mxu0
    %v2720 = vadd.f32 0.0, %v2719
    %v2721 = vpop.f32.mrb[0].mxu0
    %v2722 = vadd.f32 0.0, %v2721
    %v2723 = vpop.f32.mrb[0].mxu0
    %v2724 = vadd.f32 0.0, %v2723
    %v2725 = vpop.f32.mrb[0].mxu0
    %v2726 = vadd.f32 0.0, %v2725
    %2727 = vmatprep.mubr.bf16.mxu0 0
    %2728 = vmatmul.mubr.bf16.gmra.mrb[0].mxu0 0
    %v2729 = vpop.f32.mrb[0].mxu0
    %v2730 = vadd.f32 0.0, %v2729
    %v2731 = vpop.f32.mrb[0].mxu0
    %v2732 = vadd.f32 0.0, %v2731
    %v2733 = vpop.f32.mrb[0].mxu0
    %v2734 = vadd.f32 0.0, %v2733
    %v2735 = vpop.f32.mrb[0].mxu0
    %v2736 = vadd.f32 0.0, %v2735
    %2737 = vmatprep.mubr.bf16.mxu0 0
    %2738 = vmatmul.mubr.bf16.gmra.mrb[0].mxu0 0
    %v2739 = vpop.f32.mrb[0].mxu0
    %v2740 = vadd.f32 0.0, %v2739
    %v2741 = vpop.f32.mrb[0].mxu0
    %v2742 = vadd.f32 0.0, %v2741
    %v2743 = vpop.f32.mrb[0].mxu0
    %v2744 = vadd.f32 0.0, %v2743
    %v2745 = vpop.f32.mrb[0].mxu0
    %v2746 = vadd.f32 0.0, %v2745
    %2747 = vmatprep.mubr.bf16.mxu0 0
    %2748 = vmatmul.mubr.bf16.gmra.mrb[0].mxu0 0
    %v2749 = vpop.f32.mrb[0].mxu0
    %v2750 = vadd.f32 0.0, %v2749
    %v2751 = vpop.f32.mrb[0].mxu0
    %v2752 = vadd.f32 0.0, %v2751
    %v2753 = vpop.f32.mrb[0].mxu0
    %v2754 = vadd.f32 0.0, %v2753
    %v2755 = vpop.f32.mrb[0].mxu0
    %v2756 = vadd.f32 0.0, %v2755
    %2757 = vmatprep.mubr.bf16.mxu0 0
    %2758 = vmatmul.mubr.bf16.gmra.mrb[0].mxu0 0
    %v2759 = vpop.f32.mrb[0].mxu0
    %v2760 = vadd.f32 0.0, %v2759
    %v2761 = vpop.f32.mrb[0].mxu0
    %v2762 = vadd.f32 0.0, %v2761
    %v2763 = vpop.f32.mrb[0].mxu0
    %v2764 = vadd.f32 0.0, %v2763
    %v2765 = vpop.f32.mrb[0].mxu0
    %v2766 = vadd.f32 0.0, %v2765
    %2767 = vmatprep.mubr.bf16.mxu0 0
    %2768 = vmatmul.mubr.bf16.gmra.mrb[0].mxu0 0
    %v2769 = vpop.f32.mrb[0].mxu0
    %v2770 = vadd.f32 0.0, %v2769
    %v2771 = vpop.f32.mrb[0].mxu0
    %v2772 = vadd.f32 0.0, %v2771
    %v2773 = vpop.f32.mrb[0].mxu0
    %v2774 = vadd.f32 0.0, %v2773
    %v2775 = vpop.f32.mrb[0].mxu0
    %v2776 = vadd.f32 0.0, %v2775
    %2777 = vmatprep.mubr.bf16.mxu0 0
    %2778 = vmatmul.mubr.bf16.gmra.mrb[0].mxu0 0
    %v2779 = vpop.f32.mrb[0].mxu0
    %v2780 = vadd.f32 0.0, %v2779
    %v2781 = vpop.f32.mrb[0].mxu0
    %v2782 = vadd.f32 0.0, %v2781
    %v2783 = vpop.f32.mrb[0].mxu0
    %v2784 = vadd.f32 0.0, %v2783
    %v2785 = vpop.f32.mrb[0].mxu0
    %v2786 = vadd.f32 0.0, %v2785
    %2787 = vmatprep.mubr.bf16.mxu0 0
    %2788 = vmatmul.mubr.bf16.gmra.mrb[0].mxu0 0
    %v2789 = vpop.f32.mrb[0].mxu0
    %v2790 = vadd.f32 0.0, %v2789
    %v2791 = vpop.f32.mrb[0].mxu0
    %v2792 = vadd.f32 0.0, %v2791
    %v2793 = vpop.f32.mrb[0].mxu0
    %v2794 = vadd.f32 0.0, %v2793
    %v2795 = vpop.f32.mrb[0].mxu0
    %v2796 = vadd.f32 0.0, %v2795
    %2797 = vdwg.mxu0
    %v2798 = vadd.f32 %v2508, %v2607
    %v2799 = vadd.f32 %v2509, %v2609
    %v2800 = vadd.f32 %v2510, %v2720
    %v2801 = vadd.f32 %v2511, %v2722
    %v2802 = vadd.f32 %v2512, %v2611
    %v2803 = vadd.f32 %v2513, %v2613
    %v2804 = vadd.f32 %v2514, %v2724
    %v2805 = vadd.f32 %v2515, %v2726
    %v2806 = vadd.f32 %v2516, %v2617
    %v2807 = vadd.f32 %v2517, %v2619
    %v2808 = vadd.f32 %v2518, %v2730
    %v2809 = vadd.f32 %v2519, %v2732
    %v2810 = vadd.f32 %v2520, %v2621
    %v2811 = vadd.f32 %v2521, %v2623
    %v2812 = vadd.f32 %v2522, %v2734
    %v2813 = vadd.f32 %v2523, %v2736
    %v2814 = vadd.f32 %v2524, %v2627
    %v2815 = vadd.f32 %v2525, %v2629
    %v2816 = vadd.f32 %v2526, %v2740
    %v2817 = vadd.f32 %v2527, %v2742
    %v2818 = vadd.f32 %v2528, %v2631
    %v2819 = vadd.f32 %v2529, %v2633
    %v2820 = vadd.f32 %v2530, %v2744
    %v2821 = vadd.f32 %v2531, %v2746
    %v2822 = vadd.f32 %v2532, %v2637
    %v2823 = vadd.f32 %v2533, %v2639
    %v2824 = vadd.f32 %v2534, %v2750
    %v2825 = vadd.f32 %v2535, %v2752
    %v2826 = vadd.f32 %v2536, %v2641
    %v2827 = vadd.f32 %v2537, %v2643
    %v2828 = vadd.f32 %v2538, %v2754
    %v2829 = vadd.f32 %v2539, %v2756
    %v2830 = vadd.f32 %v2540, %v2647
    %v2831 = vadd.f32 %v2541, %v2649
    %v2832 = vadd.f32 %v2542, %v2760
    %v2833 = vadd.f32 %v2543, %v2762
    %v2834 = vadd.f32 %v2544, %v2651
    %v2835 = vadd.f32 %v2545, %v2653
    %v2836 = vadd.f32 %v2546, %v2764
    %v2837 = vadd.f32 %v2547, %v2766
    %v2838 = vadd.f32 %v2548, %v2657
    %v2839 = vadd.f32 %v2549, %v2659
    %v2840 = vadd.f32 %v2550, %v2770
    %v2841 = vadd.f32 %v2551, %v2772
    %v2842 = vadd.f32 %v2552, %v2661
    %v2843 = vadd.f32 %v2553, %v2663
    %v2844 = vadd.f32 %v2554, %v2774
    %v2845 = vadd.f32 %v2555, %v2776
    %v2846 = vadd.f32 %v2556, %v2667
    %v2847 = vadd.f32 %v2557, %v2669
    %v2848 = vadd.f32 %v2558, %v2780
    %v2849 = vadd.f32 %v2559, %v2782
    %v2850 = vadd.f32 %v2560, %v2671
    %v2851 = vadd.f32 %v2561, %v2673
    %v2852 = vadd.f32 %v2562, %v2784
    %v2853 = vadd.f32 %v2563, %v2786
    %v2854 = vadd.f32 %v2564, %v2677
    %v2855 = vadd.f32 %v2565, %v2679
    %v2856 = vadd.f32 %v2566, %v2790
    %v2857 = vadd.f32 %v2567, %v2792
    %v2858 = vadd.f32 %v2568, %v2681
    %v2859 = vadd.f32 %v2569, %v2683
    %v2860 = vadd.f32 %v2570, %v2794
    %v2861 = vadd.f32 %v2571, %v2796
    %v2862 = vxor.u32 %v2798, 2147483648
    %v2863 = vxor.u32 %v2802, 2147483648
    %v2864 = vxor.u32 %v2806, 2147483648
    %v2865 = vxor.u32 %v2810, 2147483648
    %v2866 = vxor.u32 %v2814, 2147483648
    %v2867 = vxor.u32 %v2818, 2147483648
    %v2868 = vxor.u32 %v2822, 2147483648
    %v2869 = vxor.u32 %v2826, 2147483648
    %v2870 = vxor.u32 %v2830, 2147483648
    %v2871 = vxor.u32 %v2834, 2147483648
    %v2872 = vxor.u32 %v2838, 2147483648
    %v2873 = vxor.u32 %v2842, 2147483648
    %v2874 = vxor.u32 %v2846, 2147483648
    %v2875 = vxor.u32 %v2850, 2147483648
    %v2876 = vxor.u32 %v2854, 2147483648
    %v2877 = vxor.u32 %v2858, 2147483648
    %v2878 = vmul.f32 %v2862, 1.442695
    %v2879 = vpow.pop %v2878
    %v2880 = vmul.f32 %v2863, 1.442695
    %v2881 = vpow.pop %v2880
    %v2882 = vmul.f32 %v2864, 1.442695
    %v2883 = vpow.pop %v2882
    %v2884 = vmul.f32 %v2865, 1.442695
    %v2885 = vpow.pop %v2884
    %v2886 = vmul.f32 %v2866, 1.442695
    %v2887 = vpow.pop %v2886
    %v2888 = vmul.f32 %v2867, 1.442695
    %v2889 = vpow.pop %v2888
    %v2890 = vmul.f32 %v2868, 1.442695
    %v2891 = vpow.pop %v2890
    %v2892 = vmul.f32 %v2869, 1.442695
    %v2893 = vpow.pop %v2892
    %v2894 = vmul.f32 %v2870, 1.442695
    %v2895 = vpow.pop %v2894
    %v2896 = vmul.f32 %v2871, 1.442695
    %v2897 = vpow.pop %v2896
    %v2898 = vmul.f32 %v2872, 1.442695
    %v2899 = vpow.pop %v2898
    %v2900 = vmul.f32 %v2873, 1.442695
    %v2901 = vpow.pop %v2900
    %v2902 = vmul.f32 %v2874, 1.442695
    %v2903 = vpow.pop %v2902
    %v2904 = vmul.f32 %v2875, 1.442695
    %v2905 = vpow.pop %v2904
    %v2906 = vmul.f32 %v2876, 1.442695
    %v2907 = vpow.pop %v2906
    %v2908 = vmul.f32 %v2877, 1.442695
    %v2909 = vpow.pop %v2908
    %v2910 = vadd.f32 %v2879, 1.0
    %v2911 = vadd.f32 %v2881, 1.0
    %v2912 = vadd.f32 %v2883, 1.0
    %v2913 = vadd.f32 %v2885, 1.0
    %v2914 = vadd.f32 %v2887, 1.0
    %v2915 = vadd.f32 %v2889, 1.0
    %v2916 = vadd.f32 %v2891, 1.0
    %v2917 = vadd.f32 %v2893, 1.0
    %v2918 = vadd.f32 %v2895, 1.0
    %v2919 = vadd.f32 %v2897, 1.0
    %v2920 = vadd.f32 %v2899, 1.0
    %v2921 = vadd.f32 %v2901, 1.0
    %v2922 = vadd.f32 %v2903, 1.0
    %v2923 = vadd.f32 %v2905, 1.0
    %v2924 = vadd.f32 %v2907, 1.0
    %v2925 = vadd.f32 %v2909, 1.0
    %v2926 = vrcp.pop %v2910
    %v2927 = vmul.f32 1.0, %v2926
    %v2928 = vrcp.pop %v2911
    %v2929 = vmul.f32 1.0, %v2928
    %v2930 = vrcp.pop %v2912
    %v2931 = vmul.f32 1.0, %v2930
    %v2932 = vrcp.pop %v2913
    %v2933 = vmul.f32 1.0, %v2932
    %v2934 = vrcp.pop %v2914
    %v2935 = vmul.f32 1.0, %v2934
    %v2936 = vrcp.pop %v2915
    %v2937 = vmul.f32 1.0, %v2936
    %v2938 = vrcp.pop %v2916
    %v2939 = vmul.f32 1.0, %v2938
    %v2940 = vrcp.pop %v2917
    %v2941 = vmul.f32 1.0, %v2940
    %v2942 = vrcp.pop %v2918
    %v2943 = vmul.f32 1.0, %v2942
    %v2944 = vrcp.pop %v2919
    %v2945 = vmul.f32 1.0, %v2944
    %v2946 = vrcp.pop %v2920
    %v2947 = vmul.f32 1.0, %v2946
    %v2948 = vrcp.pop %v2921
    %v2949 = vmul.f32 1.0, %v2948
    %v2950 = vrcp.pop %v2922
    %v2951 = vmul.f32 1.0, %v2950
    %v2952 = vrcp.pop %v2923
    %v2953 = vmul.f32 1.0, %v2952
    %v2954 = vrcp.pop %v2924
    %v2955 = vmul.f32 1.0, %v2954
    %v2956 = vrcp.pop %v2925
    %v2957 = vmul.f32 1.0, %v2956
    %v2958 = vxor.u32 %v2799, 2147483648
    %v2959 = vxor.u32 %v2803, 2147483648
    %v2960 = vxor.u32 %v2807, 2147483648
    %v2961 = vxor.u32 %v2811, 2147483648
    %v2962 = vxor.u32 %v2815, 2147483648
    %v2963 = vxor.u32 %v2819, 2147483648
    %v2964 = vxor.u32 %v2823, 2147483648
    %v2965 = vxor.u32 %v2827, 2147483648
    %v2966 = vxor.u32 %v2831, 2147483648
    %v2967 = vxor.u32 %v2835, 2147483648
    %v2968 = vxor.u32 %v2839, 2147483648
    %v2969 = vxor.u32 %v2843, 2147483648
    %v2970 = vxor.u32 %v2847, 2147483648
    %v2971 = vxor.u32 %v2851, 2147483648
    %v2972 = vxor.u32 %v2855, 2147483648
    %v2973 = vxor.u32 %v2859, 2147483648
    %v2974 = vmul.f32 %v2958, 1.442695
    %v2975 = vpow.pop %v2974
    %v2976 = vmul.f32 %v2959, 1.442695
    %v2977 = vpow.pop %v2976
    %v2978 = vmul.f32 %v2960, 1.442695
    %v2979 = vpow.pop %v2978
    %v2980 = vmul.f32 %v2961, 1.442695
    %v2981 = vpow.pop %v2980
    %v2982 = vmul.f32 %v2962, 1.442695
    %v2983 = vpow.pop %v2982
    %v2984 = vmul.f32 %v2963, 1.442695
    %v2985 = vpow.pop %v2984
    %v2986 = vmul.f32 %v2964, 1.442695
    %v2987 = vpow.pop %v2986
    %v2988 = vmul.f32 %v2965, 1.442695
    %v2989 = vpow.pop %v2988
    %v2990 = vmul.f32 %v2966, 1.442695
    %v2991 = vpow.pop %v2990
    %v2992 = vmul.f32 %v2967, 1.442695
    %v2993 = vpow.pop %v2992
    %v2994 = vmul.f32 %v2968, 1.442695
    %v2995 = vpow.pop %v2994
    %v2996 = vmul.f32 %v2969, 1.442695
    %v2997 = vpow.pop %v2996
    %v2998 = vmul.f32 %v2970, 1.442695
    %v2999 = vpow.pop %v2998
    %v3000 = vmul.f32 %v2971, 1.442695
    %v3001 = vpow.pop %v3000
    %v3002 = vmul.f32 %v2972, 1.442695
    %v3003 = vpow.pop %v3002
    %v3004 = vmul.f32 %v2973, 1.442695
    %v3005 = vpow.pop %v3004
    %v3006 = vadd.f32 %v2975, 1.0
    %v3007 = vadd.f32 %v2977, 1.0
    %v3008 = vadd.f32 %v2979, 1.0
    %v3009 = vadd.f32 %v2981, 1.0
    %v3010 = vadd.f32 %v2983, 1.0
    %v3011 = vadd.f32 %v2985, 1.0
    %v3012 = vadd.f32 %v2987, 1.0
    %v3013 = vadd.f32 %v2989, 1.0
    %v3014 = vadd.f32 %v2991, 1.0
    %v3015 = vadd.f32 %v2993, 1.0
    %v3016 = vadd.f32 %v2995, 1.0
    %v3017 = vadd.f32 %v2997, 1.0
    %v3018 = vadd.f32 %v2999, 1.0
    %v3019 = vadd.f32 %v3001, 1.0
    %v3020 = vadd.f32 %v3003, 1.0
    %v3021 = vadd.f32 %v3005, 1.0
    %v3022 = vrcp.pop %v3006
    %v3023 = vmul.f32 1.0, %v3022
    %v3024 = vrcp.pop %v3007
    %v3025 = vmul.f32 1.0, %v3024
    %v3026 = vrcp.pop %v3008
    %v3027 = vmul.f32 1.0, %v3026
    %v3028 = vrcp.pop %v3009
    %v3029 = vmul.f32 1.0, %v3028
    %v3030 = vrcp.pop %v3010
    %v3031 = vmul.f32 1.0, %v3030
    %v3032 = vrcp.pop %v3011
    %v3033 = vmul.f32 1.0, %v3032
    %v3034 = vrcp.pop %v3012
    %v3035 = vmul.f32 1.0, %v3034
    %v3036 = vrcp.pop %v3013
    %v3037 = vmul.f32 1.0, %v3036
    %v3038 = vrcp.pop %v3014
    %v3039 = vmul.f32 1.0, %v3038
    %v3040 = vrcp.pop %v3015
    %v3041 = vmul.f32 1.0, %v3040
    %v3042 = vrcp.pop %v3016
    %v3043 = vmul.f32 1.0, %v3042
    %v3044 = vrcp.pop %v3017
    %v3045 = vmul.f32 1.0, %v3044
    %v3046 = vrcp.pop %v3018
    %v3047 = vmul.f32 1.0, %v3046
    %v3048 = vrcp.pop %v3019
    %v3049 = vmul.f32 1.0, %v3048
    %v3050 = vrcp.pop %v3020
    %v3051 = vmul.f32 1.0, %v3050
    %v3052 = vrcp.pop %v3021
    %v3053 = vmul.f32 1.0, %v3052
    %v3054 = vtanh.pop %v2800
    %v3055 = vtanh.pop %v2804
    %v3056 = vtanh.pop %v2808
    %v3057 = vtanh.pop %v2812
    %v3058 = vtanh.pop %v2816
    %v3059 = vtanh.pop %v2820
    %v3060 = vtanh.pop %v2824
    %v3061 = vtanh.pop %v2828
    %v3062 = vtanh.pop %v2832
    %v3063 = vtanh.pop %v2836
    %v3064 = vtanh.pop %v2840
    %v3065 = vtanh.pop %v2844
    %v3066 = vtanh.pop %v2848
    %v3067 = vtanh.pop %v2852
    %v3068 = vtanh.pop %v2856
    %v3069 = vtanh.pop %v2860
    %v3070 = vxor.u32 %v2801, 2147483648
    %v3071 = vxor.u32 %v2805, 2147483648
    %v3072 = vxor.u32 %v2809, 2147483648
    %v3073 = vxor.u32 %v2813, 2147483648
    %v3074 = vxor.u32 %v2817, 2147483648
    %v3075 = vxor.u32 %v2821, 2147483648
    %v3076 = vxor.u32 %v2825, 2147483648
    %v3077 = vxor.u32 %v2829, 2147483648
    %v3078 = vxor.u32 %v2833, 2147483648
    %v3079 = vxor.u32 %v2837, 2147483648
    %v3080 = vxor.u32 %v2841, 2147483648
    %v3081 = vxor.u32 %v2845, 2147483648
    %v3082 = vxor.u32 %v2849, 2147483648
    %v3083 = vxor.u32 %v2853, 2147483648
    %v3084 = vxor.u32 %v2857, 2147483648
    %v3085 = vxor.u32 %v2861, 2147483648
    %v3086 = vmul.f32 %v3070, 1.442695
    %v3087 = vpow.pop %v3086
    %v3088 = vmul.f32 %v3071, 1.442695
    %v3089 = vpow.pop %v3088
    %v3090 = vmul.f32 %v3072, 1.442695
    %v3091 = vpow.pop %v3090
    %v3092 = vmul.f32 %v3073, 1.442695
    %v3093 = vpow.pop %v3092
    %v3094 = vmul.f32 %v3074, 1.442695
    %v3095 = vpow.pop %v3094
    %v3096 = vmul.f32 %v3075, 1.442695
    %v3097 = vpow.pop %v3096
    %v3098 = vmul.f32 %v3076, 1.442695
    %v3099 = vpow.pop %v3098
    %v3100 = vmul.f32 %v3077, 1.442695
    %v3101 = vpow.pop %v3100
    %v3102 = vmul.f32 %v3078, 1.442695
    %v3103 = vpow.pop %v3102
    %v3104 = vmul.f32 %v3079, 1.442695
    %v3105 = vpow.pop %v3104
    %v3106 = vmul.f32 %v3080, 1.442695
    %v3107 = vpow.pop %v3106
    %v3108 = vmul.f32 %v3081, 1.442695
    %v3109 = vpow.pop %v3108
    %v3110 = vmul.f32 %v3082, 1.442695
    %v3111 = vpow.pop %v3110
    %v3112 = vmul.f32 %v3083, 1.442695
    %v3113 = vpow.pop %v3112
    %v3114 = vmul.f32 %v3084, 1.442695
    %v3115 = vpow.pop %v3114
    %v3116 = vmul.f32 %v3085, 1.442695
    %v3117 = vpow.pop %v3116
    %v3118 = vadd.f32 %v3087, 1.0
    %v3119 = vadd.f32 %v3089, 1.0
    %v3120 = vadd.f32 %v3091, 1.0
    %v3121 = vadd.f32 %v3093, 1.0
    %v3122 = vadd.f32 %v3095, 1.0
    %v3123 = vadd.f32 %v3097, 1.0
    %v3124 = vadd.f32 %v3099, 1.0
    %v3125 = vadd.f32 %v3101, 1.0
    %v3126 = vadd.f32 %v3103, 1.0
    %v3127 = vadd.f32 %v3105, 1.0
    %v3128 = vadd.f32 %v3107, 1.0
    %v3129 = vadd.f32 %v3109, 1.0
    %v3130 = vadd.f32 %v3111, 1.0
    %v3131 = vadd.f32 %v3113, 1.0
    %v3132 = vadd.f32 %v3115, 1.0
    %v3133 = vadd.f32 %v3117, 1.0
    %v3134 = vrcp.pop %v3118
    %v3135 = vmul.f32 1.0, %v3134
    %v3136 = vrcp.pop %v3119
    %v3137 = vmul.f32 1.0, %v3136
    %v3138 = vrcp.pop %v3120
    %v3139 = vmul.f32 1.0, %v3138
    %v3140 = vrcp.pop %v3121
    %v3141 = vmul.f32 1.0, %v3140
    %v3142 = vrcp.pop %v3122
    %v3143 = vmul.f32 1.0, %v3142
    %v3144 = vrcp.pop %v3123
    %v3145 = vmul.f32 1.0, %v3144
    %v3146 = vrcp.pop %v3124
    %v3147 = vmul.f32 1.0, %v3146
    %v3148 = vrcp.pop %v3125
    %v3149 = vmul.f32 1.0, %v3148
    %v3150 = vrcp.pop %v3126
    %v3151 = vmul.f32 1.0, %v3150
    %v3152 = vrcp.pop %v3127
    %v3153 = vmul.f32 1.0, %v3152
    %v3154 = vrcp.pop %v3128
    %v3155 = vmul.f32 1.0, %v3154
    %v3156 = vrcp.pop %v3129
    %v3157 = vmul.f32 1.0, %v3156
    %v3158 = vrcp.pop %v3130
    %v3159 = vmul.f32 1.0, %v3158
    %v3160 = vrcp.pop %v3131
    %v3161 = vmul.f32 1.0, %v3160
    %v3162 = vrcp.pop %v3132
    %v3163 = vmul.f32 1.0, %v3162
    %v3164 = vrcp.pop %v3133
    %v3165 = vmul.f32 1.0, %v3164
    %v3166 = vmul.f32 %v3023, 0.0
    %v3167 = vmul.f32 %v3025, 0.0
    %v3168 = vmul.f32 %v3027, 0.0
    %v3169 = vmul.f32 %v3029, 0.0
    %v3170 = vmul.f32 %v3031, 0.0
    %v3171 = vmul.f32 %v3033, 0.0
    %v3172 = vmul.f32 %v3035, 0.0
    %v3173 = vmul.f32 %v3037, 0.0
    %v3174 = vmul.f32 %v3039, 0.0
    %v3175 = vmul.f32 %v3041, 0.0
    %v3176 = vmul.f32 %v3043, 0.0
    %v3177 = vmul.f32 %v3045, 0.0
    %v3178 = vmul.f32 %v3047, 0.0
    %v3179 = vmul.f32 %v3049, 0.0
    %v3180 = vmul.f32 %v3051, 0.0
    %v3181 = vmul.f32 %v3053, 0.0
    %v3182 = vmul.f32 %v2927, %v3054
    %v3183 = vmul.f32 %v2929, %v3055
    %v3184 = vmul.f32 %v2931, %v3056
    %v3185 = vmul.f32 %v2933, %v3057
    %v3186 = vmul.f32 %v2935, %v3058
    %v3187 = vmul.f32 %v2937, %v3059
    %v3188 = vmul.f32 %v2939, %v3060
    %v3189 = vmul.f32 %v2941, %v3061
    %v3190 = vmul.f32 %v2943, %v3062
    %v3191 = vmul.f32 %v2945, %v3063
    %v3192 = vmul.f32 %v2947, %v3064
    %v3193 = vmul.f32 %v2949, %v3065
    %v3194 = vmul.f32 %v2951, %v3066
    %v3195 = vmul.f32 %v2953, %v3067
    %v3196 = vmul.f32 %v2955, %v3068
    %v3197 = vmul.f32 %v2957, %v3069
    %v3198 = vadd.f32 %v3166, %v3182
    %v3199 = vadd.f32 %v3167, %v3183
    %v3200 = vadd.f32 %v3168, %v3184
    %v3201 = vadd.f32 %v3169, %v3185
    %v3202 = vadd.f32 %v3170, %v3186
    %v3203 = vadd.f32 %v3171, %v3187
    %v3204 = vadd.f32 %v3172, %v3188
    %v3205 = vadd.f32 %v3173, %v3189
    %v3206 = vadd.f32 %v3174, %v3190
    %v3207 = vadd.f32 %v3175, %v3191
    %v3208 = vadd.f32 %v3176, %v3192
    %v3209 = vadd.f32 %v3177, %v3193
    %v3210 = vadd.f32 %v3178, %v3194
    %v3211 = vadd.f32 %v3179, %v3195
    %v3212 = vadd.f32 %v3180, %v3196
    %v3213 = vadd.f32 %v3181, %v3197
    %v3214 = vtanh.pop %v3198
    %v3215 = vtanh.pop %v3199
    %v3216 = vtanh.pop %v3200
    %v3217 = vtanh.pop %v3201
    %v3218 = vtanh.pop %v3202
    %v3219 = vtanh.pop %v3203
    %v3220 = vtanh.pop %v3204
    %v3221 = vtanh.pop %v3205
    %v3222 = vtanh.pop %v3206
    %v3223 = vtanh.pop %v3207
    %v3224 = vtanh.pop %v3208
    %v3225 = vtanh.pop %v3209
    %v3226 = vtanh.pop %v3210
    %v3227 = vtanh.pop %v3211
    %v3228 = vtanh.pop %v3212
    %v3229 = vtanh.pop %v3213
    %v3230 = vmul.f32 %v3135, %v3214
    %v3231 = vmul.f32 %v3137, %v3215
    %v3232 = vmul.f32 %v3139, %v3216
    %v3233 = vmul.f32 %v3141, %v3217
    %v3234 = vmul.f32 %v3143, %v3218
    %v3235 = vmul.f32 %v3145, %v3219
    %v3236 = vmul.f32 %v3147, %v3220
    %v3237 = vmul.f32 %v3149, %v3221
    %v3238 = vmul.f32 %v3151, %v3222
    %v3239 = vmul.f32 %v3153, %v3223
    %v3240 = vmul.f32 %v3155, %v3224
    %v3241 = vmul.f32 %v3157, %v3225
    %v3242 = vmul.f32 %v3159, %v3226
    %v3243 = vmul.f32 %v3161, %v3227
    %v3244 = vmul.f32 %v3163, %v3228
    %v3245 = vmul.f32 %v3165, %v3229
    %v3246 = vld [vmem:[%s613] sm:$0xff]
    %v3247 = vld [vmem:[%s613 + $0x8] sm:$0xff]
    %v3248 = vld [vmem:[%s613 + $0x10] sm:$0xff]
    %v3249 = vld [vmem:[%s613 + $0x18] sm:$0xff]
    %v3250 = vld [vmem:[%s613 + $0x20] sm:$0xff]
    %v3251 = vld [vmem:[%s613 + $0x28] sm:$0xff]
    %v3252 = vld [vmem:[%s613 + $0x30] sm:$0xff]
    %v3253 = vld [vmem:[%s613 + $0x38] sm:$0xff]
    %v3254 = vld [vmem:[%s613 + $0x40] sm:$0xff]
    %v3255 = vld [vmem:[%s613 + $0x48] sm:$0xff]
    %v3256 = vld [vmem:[%s613 + $0x50] sm:$0xff]
    %v3257 = vld [vmem:[%s613 + $0x58] sm:$0xff]
    %v3258 = vld [vmem:[%s613 + $0x60] sm:$0xff]
    %v3259 = vld [vmem:[%s613 + $0x68] sm:$0xff]
    %v3260 = vld [vmem:[%s613 + $0x70] sm:$0xff]
    %v3261 = vld [vmem:[%s613 + $0x78] sm:$0xff]
    %v3262 = vld [vmem:[%s613 + $0x80] sm:$0xff]
    %v3263 = vld [vmem:[%s613 + $0x88] sm:$0xff]
    %v3264 = vld [vmem:[%s613 + $0x90] sm:$0xff]
    %v3265 = vld [vmem:[%s613 + $0x98] sm:$0xff]
    %v3266 = vld [vmem:[%s613 + $0xa0] sm:$0xff]
    %v3267 = vld [vmem:[%s613 + $0xa8] sm:$0xff]
    %v3268 = vld [vmem:[%s613 + $0xb0] sm:$0xff]
    %v3269 = vld [vmem:[%s613 + $0xb8] sm:$0xff]
    %v3270 = vld [vmem:[%s613 + $0xc0] sm:$0xff]
    %v3271 = vld [vmem:[%s613 + $0xc8] sm:$0xff]
    %v3272 = vld [vmem:[%s613 + $0xd0] sm:$0xff]
    %v3273 = vld [vmem:[%s613 + $0xd8] sm:$0xff]
    %v3274 = vld [vmem:[%s613 + $0xe0] sm:$0xff]
    %v3275 = vld [vmem:[%s613 + $0xe8] sm:$0xff]
    %v3276 = vld [vmem:[%s613 + $0xf0] sm:$0xff]
    %v3277 = vld [vmem:[%s613 + $0xf8] sm:$0xff]
    %v3278 = vld [vmem:[%s613 + $0x100] sm:$0xff]
    %v3279 = vld [vmem:[%s613 + $0x108] sm:$0xff]
    %v3280 = vld [vmem:[%s613 + $0x110] sm:$0xff]
    %v3281 = vld [vmem:[%s613 + $0x118] sm:$0xff]
    %v3282 = vld [vmem:[%s613 + $0x120] sm:$0xff]
    %v3283 = vld [vmem:[%s613 + $0x128] sm:$0xff]
    %v3284 = vld [vmem:[%s613 + $0x130] sm:$0xff]
    %v3285 = vld [vmem:[%s613 + $0x138] sm:$0xff]
    %v3286 = vld [vmem:[%s613 + $0x140] sm:$0xff]
    %v3287 = vld [vmem:[%s613 + $0x148] sm:$0xff]
    %v3288 = vld [vmem:[%s613 + $0x150] sm:$0xff]
    %v3289 = vld [vmem:[%s613 + $0x158] sm:$0xff]
    %v3290 = vld [vmem:[%s613 + $0x160] sm:$0xff]
    %v3291 = vld [vmem:[%s613 + $0x168] sm:$0xff]
    %v3292 = vld [vmem:[%s613 + $0x170] sm:$0xff]
    %v3293 = vld [vmem:[%s613 + $0x178] sm:$0xff]
    %v3294 = vld [vmem:[%s613 + $0x180] sm:$0xff]
    %v3295 = vld [vmem:[%s613 + $0x188] sm:$0xff]
    %v3296 = vld [vmem:[%s613 + $0x190] sm:$0xff]
    %v3297 = vld [vmem:[%s613 + $0x198] sm:$0xff]
    %v3298 = vld [vmem:[%s613 + $0x1a0] sm:$0xff]
    %v3299 = vld [vmem:[%s613 + $0x1a8] sm:$0xff]
    %v3300 = vld [vmem:[%s613 + $0x1b0] sm:$0xff]
    %v3301 = vld [vmem:[%s613 + $0x1b8] sm:$0xff]
    %v3302 = vld [vmem:[%s613 + $0x1c0] sm:$0xff]
    %v3303 = vld [vmem:[%s613 + $0x1c8] sm:$0xff]
    %v3304 = vld [vmem:[%s613 + $0x1d0] sm:$0xff]
    %v3305 = vld [vmem:[%s613 + $0x1d8] sm:$0xff]
    %v3306 = vld [vmem:[%s613 + $0x1e0] sm:$0xff]
    %v3307 = vld [vmem:[%s613 + $0x1e8] sm:$0xff]
    %v3308 = vld [vmem:[%s613 + $0x1f0] sm:$0xff]
    %v3309 = vld [vmem:[%s613 + $0x1f8] sm:$0xff]
    %v3310 = vpack.c.bf16 %v3231, %v3230
    %v3311 = vpack.c.bf16 %v3233, %v3232
    %v3312 = vpack.c.bf16 %v3235, %v3234
    %v3313 = vpack.c.bf16 %v3237, %v3236
    %v3314 = vpack.c.bf16 %v3239, %v3238
    %v3315 = vpack.c.bf16 %v3241, %v3240
    %v3316 = vpack.c.bf16 %v3243, %v3242
    %v3317 = vpack.c.bf16 %v3245, %v3244
    %3318 = vmatprep.subr.bf16.mxu0 %v2477
    %3319 = vmatpush1.bf16.msra.mxu0 %v2476
    %3320 = vmatprep.subr.bf16.mxu0 %v2481
    %3321 = vmatpush1.bf16.msra.mxu0 %v2480
    %3322 = vmatprep.subr.bf16.mxu0 %v2485
    %3323 = vmatpush1.bf16.msra.mxu0 %v2484
    %3324 = vmatprep.subr.bf16.mxu0 %v2489
    %3325 = vmatpush1.bf16.msra.mxu0 %v2488
    %3326 = vmatprep.subr.bf16.mxu0 %v2493
    %3327 = vmatpush1.bf16.msra.mxu0 %v2492
    %3328 = vmatprep.subr.bf16.mxu0 %v2497
    %3329 = vmatpush1.bf16.msra.mxu0 %v2496
    %3330 = vmatprep.subr.bf16.mxu0 %v2501
    %3331 = vmatpush1.bf16.msra.mxu0 %v2500
    %3332 = vmatprep.subr.bf16.mxu0 %v2505
    %3333 = vmatpush1.bf16.msra.mxu0 %v2504
    %3334 = vmatprep.subr.bf16.mxu0 0
    %3335 = vmatpush1.bf16.msra.mxu0 0
    %3336 = vmatprep.subr.bf16.mxu0 0
    %3337 = vmatpush1.bf16.msra.mxu0 0
    %3338 = vmatprep.subr.bf16.mxu0 0
    %3339 = vmatpush1.bf16.msra.mxu0 0
    %3340 = vmatprep.subr.bf16.mxu0 0
    %3341 = vmatpush1.bf16.msra.mxu0 0
    %3342 = vmatprep.subr.bf16.mxu0 0
    %3343 = vmatpush1.bf16.msra.mxu0 0
    %3344 = vmatprep.subr.bf16.mxu0 0
    %3345 = vmatpush1.bf16.msra.mxu0 0
    %3346 = vmatprep.subr.bf16.mxu0 0
    %3347 = vmatpush1.bf16.msra.mxu0 0
    %3348 = vmatprep.subr.bf16.mxu0 0
    %3349 = vmatpush1.bf16.msra.mxu0 0
    %3350 = vmatprep.mubr.bf16.mxu0 0
    %3351 = vmatmul.mubr.bf16.gmra.mrb[0].mxu0 %v3310
    %v3352 = vpop.f32.mrb[0].mxu0
    %v3353 = vadd.f32 0.0, %v3352
    %v3354 = vpop.f32.mrb[0].mxu0
    %v3355 = vadd.f32 0.0, %v3354
    %v3356 = vpop.f32.mrb[0].mxu0
    %v3357 = vadd.f32 0.0, %v3356
    %v3358 = vpop.f32.mrb[0].mxu0
    %v3359 = vadd.f32 0.0, %v3358
    %3360 = vmatprep.mubr.bf16.mxu0 0
    %3361 = vmatmul.mubr.bf16.gmra.mrb[0].mxu0 %v3311
    %v3362 = vpop.f32.mrb[0].mxu0
    %v3363 = vadd.f32 0.0, %v3362
    %v3364 = vpop.f32.mrb[0].mxu0
    %v3365 = vadd.f32 0.0, %v3364
    %v3366 = vpop.f32.mrb[0].mxu0
    %v3367 = vadd.f32 0.0, %v3366
    %v3368 = vpop.f32.mrb[0].mxu0
    %v3369 = vadd.f32 0.0, %v3368
    %3370 = vmatprep.mubr.bf16.mxu0 0
    %3371 = vmatmul.mubr.bf16.gmra.mrb[0].mxu0 %v3312
    %v3372 = vpop.f32.mrb[0].mxu0
    %v3373 = vadd.f32 0.0, %v3372
    %v3374 = vpop.f32.mrb[0].mxu0
    %v3375 = vadd.f32 0.0, %v3374
    %v3376 = vpop.f32.mrb[0].mxu0
    %v3377 = vadd.f32 0.0, %v3376
    %v3378 = vpop.f32.mrb[0].mxu0
    %v3379 = vadd.f32 0.0, %v3378
    %3380 = vmatprep.mubr.bf16.mxu0 0
    %3381 = vmatmul.mubr.bf16.gmra.mrb[0].mxu0 %v3313
    %v3382 = vpop.f32.mrb[0].mxu0
    %v3383 = vadd.f32 0.0, %v3382
    %v3384 = vpop.f32.mrb[0].mxu0
    %v3385 = vadd.f32 0.0, %v3384
    %v3386 = vpop.f32.mrb[0].mxu0
    %v3387 = vadd.f32 0.0, %v3386
    %v3388 = vpop.f32.mrb[0].mxu0
    %v3389 = vadd.f32 0.0, %v3388
    %3390 = vmatprep.mubr.bf16.mxu0 0
    %3391 = vmatmul.mubr.bf16.gmra.mrb[0].mxu0 %v3314
    %v3392 = vpop.f32.mrb[0].mxu0
    %v3393 = vadd.f32 0.0, %v3392
    %v3394 = vpop.f32.mrb[0].mxu0
    %v3395 = vadd.f32 0.0, %v3394
    %v3396 = vpop.f32.mrb[0].mxu0
    %v3397 = vadd.f32 0.0, %v3396
    %v3398 = vpop.f32.mrb[0].mxu0
    %v3399 = vadd.f32 0.0, %v3398
    %3400 = vmatprep.mubr.bf16.mxu0 0
    %3401 = vmatmul.mubr.bf16.gmra.mrb[0].mxu0 %v3315
    %v3402 = vpop.f32.mrb[0].mxu0
    %v3403 = vadd.f32 0.0, %v3402
    %v3404 = vpop.f32.mrb[0].mxu0
    %v3405 = vadd.f32 0.0, %v3404
    %v3406 = vpop.f32.mrb[0].mxu0
    %v3407 = vadd.f32 0.0, %v3406
    %v3408 = vpop.f32.mrb[0].mxu0
    %v3409 = vadd.f32 0.0, %v3408
    %3410 = vmatprep.mubr.bf16.mxu0 0
    %3411 = vmatmul.mubr.bf16.gmra.mrb[0].mxu0 %v3316
    %v3412 = vpop.f32.mrb[0].mxu0
    %v3413 = vadd.f32 0.0, %v3412
    %v3414 = vpop.f32.mrb[0].mxu0
    %v3415 = vadd.f32 0.0, %v3414
    %v3416 = vpop.f32.mrb[0].mxu0
    %v3417 = vadd.f32 0.0, %v3416
    %v3418 = vpop.f32.mrb[0].mxu0
    %v3419 = vadd.f32 0.0, %v3418
    %3420 = vmatprep.mubr.bf16.mxu0 0
    %3421 = vmatmul.mubr.bf16.gmra.mrb[0].mxu0 %v3317
    %v3422 = vpop.f32.mrb[0].mxu0
    %v3423 = vadd.f32 0.0, %v3422
    %v3424 = vpop.f32.mrb[0].mxu0
    %v3425 = vadd.f32 0.0, %v3424
    %v3426 = vpop.f32.mrb[0].mxu0
    %v3427 = vadd.f32 0.0, %v3426
    %v3428 = vpop.f32.mrb[0].mxu0
    %v3429 = vadd.f32 0.0, %v3428
    %3430 = vdwg.mxu0
    %3431 = vmatprep.subr.bf16.mxu0 %v2479
    %3432 = vmatpush1.bf16.msra.mxu0 %v2478
    %3433 = vmatprep.subr.bf16.mxu0 %v2483
    %3434 = vmatpush1.bf16.msra.mxu0 %v2482
    %3435 = vmatprep.subr.bf16.mxu0 %v2487
    %3436 = vmatpush1.bf16.msra.mxu0 %v2486
    %3437 = vmatprep.subr.bf16.mxu0 %v2491
    %3438 = vmatpush1.bf16.msra.mxu0 %v2490
    %3439 = vmatprep.subr.bf16.mxu0 %v2495
    %3440 = vmatpush1.bf16.msra.mxu0 %v2494
    %3441 = vmatprep.subr.bf16.mxu0 %v2499
    %3442 = vmatpush1.bf16.msra.mxu0 %v2498
    %3443 = vmatprep.subr.bf16.mxu0 %v2503
    %3444 = vmatpush1.bf16.msra.mxu0 %v2502
    %3445 = vmatprep.subr.bf16.mxu0 %v2507
    %3446 = vmatpush1.bf16.msra.mxu0 %v2506
    %3447 = vmatprep.subr.bf16.mxu0 0
    %3448 = vmatpush1.bf16.msra.mxu0 0
    %3449 = vmatprep.subr.bf16.mxu0 0
    %3450 = vmatpush1.bf16.msra.mxu0 0
    %3451 = vmatprep.subr.bf16.mxu0 0
    %3452 = vmatpush1.bf16.msra.mxu0 0
    %3453 = vmatprep.subr.bf16.mxu0 0
    %3454 = vmatpush1.bf16.msra.mxu0 0
    %3455 = vmatprep.subr.bf16.mxu0 0
    %3456 = vmatpush1.bf16.msra.mxu0 0
    %3457 = vmatprep.subr.bf16.mxu0 0
    %3458 = vmatpush1.bf16.msra.mxu0 0
    %3459 = vmatprep.subr.bf16.mxu0 0
    %3460 = vmatpush1.bf16.msra.mxu0 0
    %3461 = vmatprep.subr.bf16.mxu0 0
    %3462 = vmatpush1.bf16.msra.mxu0 0
    %3463 = vmatprep.mubr.bf16.mxu0 0
    %3464 = vmatmul.mubr.bf16.gmra.mrb[0].mxu0 %v3310
    %v3465 = vpop.f32.mrb[0].mxu0
    %v3466 = vadd.f32 0.0, %v3465
    %v3467 = vpop.f32.mrb[0].mxu0
    %v3468 = vadd.f32 0.0, %v3467
    %v3469 = vpop.f32.mrb[0].mxu0
    %v3470 = vadd.f32 0.0, %v3469
    %v3471 = vpop.f32.mrb[0].mxu0
    %v3472 = vadd.f32 0.0, %v3471
    %3473 = vmatprep.mubr.bf16.mxu0 0
    %3474 = vmatmul.mubr.bf16.gmra.mrb[0].mxu0 %v3311
    %v3475 = vpop.f32.mrb[0].mxu0
    %v3476 = vadd.f32 0.0, %v3475
    %v3477 = vpop.f32.mrb[0].mxu0
    %v3478 = vadd.f32 0.0, %v3477
    %v3479 = vpop.f32.mrb[0].mxu0
    %v3480 = vadd.f32 0.0, %v3479
    %v3481 = vpop.f32.mrb[0].mxu0
    %v3482 = vadd.f32 0.0, %v3481
    %3483 = vmatprep.mubr.bf16.mxu0 0
    %3484 = vmatmul.mubr.bf16.gmra.mrb[0].mxu0 %v3312
    %v3485 = vpop.f32.mrb[0].mxu0
    %v3486 = vadd.f32 0.0, %v3485
    %v3487 = vpop.f32.mrb[0].mxu0
    %v3488 = vadd.f32 0.0, %v3487
    %v3489 = vpop.f32.mrb[0].mxu0
    %v3490 = vadd.f32 0.0, %v3489
    %v3491 = vpop.f32.mrb[0].mxu0
    %v3492 = vadd.f32 0.0, %v3491
    %3493 = vmatprep.mubr.bf16.mxu0 0
    %3494 = vmatmul.mubr.bf16.gmra.mrb[0].mxu0 %v3313
    %v3495 = vpop.f32.mrb[0].mxu0
    %v3496 = vadd.f32 0.0, %v3495
    %v3497 = vpop.f32.mrb[0].mxu0
    %v3498 = vadd.f32 0.0, %v3497
    %v3499 = vpop.f32.mrb[0].mxu0
    %v3500 = vadd.f32 0.0, %v3499
    %v3501 = vpop.f32.mrb[0].mxu0
    %v3502 = vadd.f32 0.0, %v3501
    %3503 = vmatprep.mubr.bf16.mxu0 0
    %3504 = vmatmul.mubr.bf16.gmra.mrb[0].mxu0 %v3314
    %v3505 = vpop.f32.mrb[0].mxu0
    %v3506 = vadd.f32 0.0, %v3505
    %v3507 = vpop.f32.mrb[0].mxu0
    %v3508 = vadd.f32 0.0, %v3507
    %v3509 = vpop.f32.mrb[0].mxu0
    %v3510 = vadd.f32 0.0, %v3509
    %v3511 = vpop.f32.mrb[0].mxu0
    %v3512 = vadd.f32 0.0, %v3511
    %3513 = vmatprep.mubr.bf16.mxu0 0
    %3514 = vmatmul.mubr.bf16.gmra.mrb[0].mxu0 %v3315
    %v3515 = vpop.f32.mrb[0].mxu0
    %v3516 = vadd.f32 0.0, %v3515
    %v3517 = vpop.f32.mrb[0].mxu0
    %v3518 = vadd.f32 0.0, %v3517
    %v3519 = vpop.f32.mrb[0].mxu0
    %v3520 = vadd.f32 0.0, %v3519
    %v3521 = vpop.f32.mrb[0].mxu0
    %v3522 = vadd.f32 0.0, %v3521
    %3523 = vmatprep.mubr.bf16.mxu0 0
    %3524 = vmatmul.mubr.bf16.gmra.mrb[0].mxu0 %v3316
    %v3525 = vpop.f32.mrb[0].mxu0
    %v3526 = vadd.f32 0.0, %v3525
    %v3527 = vpop.f32.mrb[0].mxu0
    %v3528 = vadd.f32 0.0, %v3527
    %v3529 = vpop.f32.mrb[0].mxu0
    %v3530 = vadd.f32 0.0, %v3529
    %v3531 = vpop.f32.mrb[0].mxu0
    %v3532 = vadd.f32 0.0, %v3531
    %3533 = vmatprep.mubr.bf16.mxu0 0
    %3534 = vmatmul.mubr.bf16.gmra.mrb[0].mxu0 %v3317
    %v3535 = vpop.f32.mrb[0].mxu0
    %v3536 = vadd.f32 0.0, %v3535
    %v3537 = vpop.f32.mrb[0].mxu0
    %v3538 = vadd.f32 0.0, %v3537
    %v3539 = vpop.f32.mrb[0].mxu0
    %v3540 = vadd.f32 0.0, %v3539
    %v3541 = vpop.f32.mrb[0].mxu0
    %v3542 = vadd.f32 0.0, %v3541
    %3543 = vdwg.mxu0
    %v3544 = vadd.f32 %v3246, %v3353
    %v3545 = vadd.f32 %v3247, %v3355
    %v3546 = vadd.f32 %v3248, %v3466
    %v3547 = vadd.f32 %v3249, %v3468
    %v3548 = vadd.f32 %v3250, %v3357
    %v3549 = vadd.f32 %v3251, %v3359
    %v3550 = vadd.f32 %v3252, %v3470
    %v3551 = vadd.f32 %v3253, %v3472
    %v3552 = vadd.f32 %v3254, %v3363
    %v3553 = vadd.f32 %v3255, %v3365
    %v3554 = vadd.f32 %v3256, %v3476
    %v3555 = vadd.f32 %v3257, %v3478
    %v3556 = vadd.f32 %v3258, %v3367
    %v3557 = vadd.f32 %v3259, %v3369
    %v3558 = vadd.f32 %v3260, %v3480
    %v3559 = vadd.f32 %v3261, %v3482
    %v3560 = vadd.f32 %v3262, %v3373
    %v3561 = vadd.f32 %v3263, %v3375
    %v3562 = vadd.f32 %v3264, %v3486
    %v3563 = vadd.f32 %v3265, %v3488
    %v3564 = vadd.f32 %v3266, %v3377
    %v3565 = vadd.f32 %v3267, %v3379
    %v3566 = vadd.f32 %v3268, %v3490
    %v3567 = vadd.f32 %v3269, %v3492
    %v3568 = vadd.f32 %v3270, %v3383
    %v3569 = vadd.f32 %v3271, %v3385
    %v3570 = vadd.f32 %v3272, %v3496
    %v3571 = vadd.f32 %v3273, %v3498
    %v3572 = vadd.f32 %v3274, %v3387
    %v3573 = vadd.f32 %v3275, %v3389
    %v3574 = vadd.f32 %v3276, %v3500
    %v3575 = vadd.f32 %v3277, %v3502
    %v3576 = vadd.f32 %v3278, %v3393
    %v3577 = vadd.f32 %v3279, %v3395
    %v3578 = vadd.f32 %v3280, %v3506
    %v3579 = vadd.f32 %v3281, %v3508
    %v3580 = vadd.f32 %v3282, %v3397
    %v3581 = vadd.f32 %v3283, %v3399
    %v3582 = vadd.f32 %v3284, %v3510
    %v3583 = vadd.f32 %v3285, %v3512
    %v3584 = vadd.f32 %v3286, %v3403
    %v3585 = vadd.f32 %v3287, %v3405
    %v3586 = vadd.f32 %v3288, %v3516
    %v3587 = vadd.f32 %v3289, %v3518
    %v3588 = vadd.f32 %v3290, %v3407
    %v3589 = vadd.f32 %v3291, %v3409
    %v3590 = vadd.f32 %v3292, %v3520
    %v3591 = vadd.f32 %v3293, %v3522
    %v3592 = vadd.f32 %v3294, %v3413
    %v3593 = vadd.f32 %v3295, %v3415
    %v3594 = vadd.f32 %v3296, %v3526
    %v3595 = vadd.f32 %v3297, %v3528
    %v3596 = vadd.f32 %v3298, %v3417
    %v3597 = vadd.f32 %v3299, %v3419
    %v3598 = vadd.f32 %v3300, %v3530
    %v3599 = vadd.f32 %v3301, %v3532
    %v3600 = vadd.f32 %v3302, %v3423
    %v3601 = vadd.f32 %v3303, %v3425
    %v3602 = vadd.f32 %v3304, %v3536
    %v3603 = vadd.f32 %v3305, %v3538
    %v3604 = vadd.f32 %v3306, %v3427
    %v3605 = vadd.f32 %v3307, %v3429
    %v3606 = vadd.f32 %v3308, %v3540
    %v3607 = vadd.f32 %v3309, %v3542
    %v3608 = vxor.u32 %v3544, 2147483648
    %v3609 = vxor.u32 %v3548, 2147483648
    %v3610 = vxor.u32 %v3552, 2147483648
    %v3611 = vxor.u32 %v3556, 2147483648
    %v3612 = vxor.u32 %v3560, 2147483648
    %v3613 = vxor.u32 %v3564, 2147483648
    %v3614 = vxor.u32 %v3568, 2147483648
    %v3615 = vxor.u32 %v3572, 2147483648
    %v3616 = vxor.u32 %v3576, 2147483648
    %v3617 = vxor.u32 %v3580, 2147483648
    %v3618 = vxor.u32 %v3584, 2147483648
    %v3619 = vxor.u32 %v3588, 2147483648
    %v3620 = vxor.u32 %v3592, 2147483648
    %v3621 = vxor.u32 %v3596, 2147483648
    %v3622 = vxor.u32 %v3600, 2147483648
    %v3623 = vxor.u32 %v3604, 2147483648
    %v3624 = vmul.f32 %v3608, 1.442695
    %v3625 = vpow.pop %v3624
    %v3626 = vmul.f32 %v3609, 1.442695
    %v3627 = vpow.pop %v3626
    %v3628 = vmul.f32 %v3610, 1.442695
    %v3629 = vpow.pop %v3628
    %v3630 = vmul.f32 %v3611, 1.442695
    %v3631 = vpow.pop %v3630
    %v3632 = vmul.f32 %v3612, 1.442695
    %v3633 = vpow.pop %v3632
    %v3634 = vmul.f32 %v3613, 1.442695
    %v3635 = vpow.pop %v3634
    %v3636 = vmul.f32 %v3614, 1.442695
    %v3637 = vpow.pop %v3636
    %v3638 = vmul.f32 %v3615, 1.442695
    %v3639 = vpow.pop %v3638
    %v3640 = vmul.f32 %v3616, 1.442695
    %v3641 = vpow.pop %v3640
    %v3642 = vmul.f32 %v3617, 1.442695
    %v3643 = vpow.pop %v3642
    %v3644 = vmul.f32 %v3618, 1.442695
    %v3645 = vpow.pop %v3644
    %v3646 = vmul.f32 %v3619, 1.442695
    %v3647 = vpow.pop %v3646
    %v3648 = vmul.f32 %v3620, 1.442695
    %v3649 = vpow.pop %v3648
    %v3650 = vmul.f32 %v3621, 1.442695
    %v3651 = vpow.pop %v3650
    %v3652 = vmul.f32 %v3622, 1.442695
    %v3653 = vpow.pop %v3652
    %v3654 = vmul.f32 %v3623, 1.442695
    %v3655 = vpow.pop %v3654
    %v3656 = vadd.f32 %v3625, 1.0
    %v3657 = vadd.f32 %v3627, 1.0
    %v3658 = vadd.f32 %v3629, 1.0
    %v3659 = vadd.f32 %v3631, 1.0
    %v3660 = vadd.f32 %v3633, 1.0
    %v3661 = vadd.f32 %v3635, 1.0
    %v3662 = vadd.f32 %v3637, 1.0
    %v3663 = vadd.f32 %v3639, 1.0
    %v3664 = vadd.f32 %v3641, 1.0
    %v3665 = vadd.f32 %v3643, 1.0
    %v3666 = vadd.f32 %v3645, 1.0
    %v3667 = vadd.f32 %v3647, 1.0
    %v3668 = vadd.f32 %v3649, 1.0
    %v3669 = vadd.f32 %v3651, 1.0
    %v3670 = vadd.f32 %v3653, 1.0
    %v3671 = vadd.f32 %v3655, 1.0
    %v3672 = vrcp.pop %v3656
    %v3673 = vmul.f32 1.0, %v3672
    %v3674 = vrcp.pop %v3657
    %v3675 = vmul.f32 1.0, %v3674
    %v3676 = vrcp.pop %v3658
    %v3677 = vmul.f32 1.0, %v3676
    %v3678 = vrcp.pop %v3659
    %v3679 = vmul.f32 1.0, %v3678
    %v3680 = vrcp.pop %v3660
    %v3681 = vmul.f32 1.0, %v3680
    %v3682 = vrcp.pop %v3661
    %v3683 = vmul.f32 1.0, %v3682
    %v3684 = vrcp.pop %v3662
    %v3685 = vmul.f32 1.0, %v3684
    %v3686 = vrcp.pop %v3663
    %v3687 = vmul.f32 1.0, %v3686
    %v3688 = vrcp.pop %v3664
    %v3689 = vmul.f32 1.0, %v3688
    %v3690 = vrcp.pop %v3665
    %v3691 = vmul.f32 1.0, %v3690
    %v3692 = vrcp.pop %v3666
    %v3693 = vmul.f32 1.0, %v3692
    %v3694 = vrcp.pop %v3667
    %v3695 = vmul.f32 1.0, %v3694
    %v3696 = vrcp.pop %v3668
    %v3697 = vmul.f32 1.0, %v3696
    %v3698 = vrcp.pop %v3669
    %v3699 = vmul.f32 1.0, %v3698
    %v3700 = vrcp.pop %v3670
    %v3701 = vmul.f32 1.0, %v3700
    %v3702 = vrcp.pop %v3671
    %v3703 = vmul.f32 1.0, %v3702
    %v3704 = vxor.u32 %v3545, 2147483648
    %v3705 = vxor.u32 %v3549, 2147483648
    %v3706 = vxor.u32 %v3553, 2147483648
    %v3707 = vxor.u32 %v3557, 2147483648
    %v3708 = vxor.u32 %v3561, 2147483648
    %v3709 = vxor.u32 %v3565, 2147483648
    %v3710 = vxor.u32 %v3569, 2147483648
    %v3711 = vxor.u32 %v3573, 2147483648
    %v3712 = vxor.u32 %v3577, 2147483648
    %v3713 = vxor.u32 %v3581, 2147483648
    %v3714 = vxor.u32 %v3585, 2147483648
    %v3715 = vxor.u32 %v3589, 2147483648
    %v3716 = vxor.u32 %v3593, 2147483648
    %v3717 = vxor.u32 %v3597, 2147483648
    %v3718 = vxor.u32 %v3601, 2147483648
    %v3719 = vxor.u32 %v3605, 2147483648
    %v3720 = vmul.f32 %v3704, 1.442695
    %v3721 = vpow.pop %v3720
    %v3722 = vmul.f32 %v3705, 1.442695
    %v3723 = vpow.pop %v3722
    %v3724 = vmul.f32 %v3706, 1.442695
    %v3725 = vpow.pop %v3724
    %v3726 = vmul.f32 %v3707, 1.442695
    %v3727 = vpow.pop %v3726
    %v3728 = vmul.f32 %v3708, 1.442695
    %v3729 = vpow.pop %v3728
    %v3730 = vmul.f32 %v3709, 1.442695
    %v3731 = vpow.pop %v3730
    %v3732 = vmul.f32 %v3710, 1.442695
    %v3733 = vpow.pop %v3732
    %v3734 = vmul.f32 %v3711, 1.442695
    %v3735 = vpow.pop %v3734
    %v3736 = vmul.f32 %v3712, 1.442695
    %v3737 = vpow.pop %v3736
    %v3738 = vmul.f32 %v3713, 1.442695
    %v3739 = vpow.pop %v3738
    %v3740 = vmul.f32 %v3714, 1.442695
    %v3741 = vpow.pop %v3740
    %v3742 = vmul.f32 %v3715, 1.442695
    %v3743 = vpow.pop %v3742
    %v3744 = vmul.f32 %v3716, 1.442695
    %v3745 = vpow.pop %v3744
    %v3746 = vmul.f32 %v3717, 1.442695
    %v3747 = vpow.pop %v3746
    %v3748 = vmul.f32 %v3718, 1.442695
    %v3749 = vpow.pop %v3748
    %v3750 = vmul.f32 %v3719, 1.442695
    %v3751 = vpow.pop %v3750
    %v3752 = vadd.f32 %v3721, 1.0
    %v3753 = vadd.f32 %v3723, 1.0
    %v3754 = vadd.f32 %v3725, 1.0
    %v3755 = vadd.f32 %v3727, 1.0
    %v3756 = vadd.f32 %v3729, 1.0
    %v3757 = vadd.f32 %v3731, 1.0
    %v3758 = vadd.f32 %v3733, 1.0
    %v3759 = vadd.f32 %v3735, 1.0
    %v3760 = vadd.f32 %v3737, 1.0
    %v3761 = vadd.f32 %v3739, 1.0
    %v3762 = vadd.f32 %v3741, 1.0
    %v3763 = vadd.f32 %v3743, 1.0
    %v3764 = vadd.f32 %v3745, 1.0
    %v3765 = vadd.f32 %v3747, 1.0
    %v3766 = vadd.f32 %v3749, 1.0
    %v3767 = vadd.f32 %v3751, 1.0
    %v3768 = vrcp.pop %v3752
    %v3769 = vmul.f32 1.0, %v3768
    %v3770 = vrcp.pop %v3753
    %v3771 = vmul.f32 1.0, %v3770
    %v3772 = vrcp.pop %v3754
    %v3773 = vmul.f32 1.0, %v3772
    %v3774 = vrcp.pop %v3755
    %v3775 = vmul.f32 1.0, %v3774
    %v3776 = vrcp.pop %v3756
    %v3777 = vmul.f32 1.0, %v3776
    %v3778 = vrcp.pop %v3757
    %v3779 = vmul.f32 1.0, %v3778
    %v3780 = vrcp.pop %v3758
    %v3781 = vmul.f32 1.0, %v3780
    %v3782 = vrcp.pop %v3759
    %v3783 = vmul.f32 1.0, %v3782
    %v3784 = vrcp.pop %v3760
    %v3785 = vmul.f32 1.0, %v3784
    %v3786 = vrcp.pop %v3761
    %v3787 = vmul.f32 1.0, %v3786
    %v3788 = vrcp.pop %v3762
    %v3789 = vmul.f32 1.0, %v3788
    %v3790 = vrcp.pop %v3763
    %v3791 = vmul.f32 1.0, %v3790
    %v3792 = vrcp.pop %v3764
    %v3793 = vmul.f32 1.0, %v3792
    %v3794 = vrcp.pop %v3765
    %v3795 = vmul.f32 1.0, %v3794
    %v3796 = vrcp.pop %v3766
    %v3797 = vmul.f32 1.0, %v3796
    %v3798 = vrcp.pop %v3767
    %v3799 = vmul.f32 1.0, %v3798
    %v3800 = vtanh.pop %v3546
    %v3801 = vtanh.pop %v3550
    %v3802 = vtanh.pop %v3554
    %v3803 = vtanh.pop %v3558
    %v3804 = vtanh.pop %v3562
    %v3805 = vtanh.pop %v3566
    %v3806 = vtanh.pop %v3570
    %v3807 = vtanh.pop %v3574
    %v3808 = vtanh.pop %v3578
    %v3809 = vtanh.pop %v3582
    %v3810 = vtanh.pop %v3586
    %v3811 = vtanh.pop %v3590
    %v3812 = vtanh.pop %v3594
    %v3813 = vtanh.pop %v3598
    %v3814 = vtanh.pop %v3602
    %v3815 = vtanh.pop %v3606
    %v3816 = vxor.u32 %v3547, 2147483648
    %v3817 = vxor.u32 %v3551, 2147483648
    %v3818 = vxor.u32 %v3555, 2147483648
    %v3819 = vxor.u32 %v3559, 2147483648
    %v3820 = vxor.u32 %v3563, 2147483648
    %v3821 = vxor.u32 %v3567, 2147483648
    %v3822 = vxor.u32 %v3571, 2147483648
    %v3823 = vxor.u32 %v3575, 2147483648
    %v3824 = vxor.u32 %v3579, 2147483648
    %v3825 = vxor.u32 %v3583, 2147483648
    %v3826 = vxor.u32 %v3587, 2147483648
    %v3827 = vxor.u32 %v3591, 2147483648
    %v3828 = vxor.u32 %v3595, 2147483648
    %v3829 = vxor.u32 %v3599, 2147483648
    %v3830 = vxor.u32 %v3603, 2147483648
    %v3831 = vxor.u32 %v3607, 2147483648
    %v3832 = vmul.f32 %v3816, 1.442695
    %v3833 = vpow.pop %v3832
    %v3834 = vmul.f32 %v3817, 1.442695
    %v3835 = vpow.pop %v3834
    %v3836 = vmul.f32 %v3818, 1.442695
    %v3837 = vpow.pop %v3836
    %v3838 = vmul.f32 %v3819, 1.442695
    %v3839 = vpow.pop %v3838
    %v3840 = vmul.f32 %v3820, 1.442695
    %v3841 = vpow.pop %v3840
    %v3842 = vmul.f32 %v3821, 1.442695
    %v3843 = vpow.pop %v3842
    %v3844 = vmul.f32 %v3822, 1.442695
    %v3845 = vpow.pop %v3844
    %v3846 = vmul.f32 %v3823, 1.442695
    %v3847 = vpow.pop %v3846
    %v3848 = vmul.f32 %v3824, 1.442695
    %v3849 = vpow.pop %v3848
    %v3850 = vmul.f32 %v3825, 1.442695
    %v3851 = vpow.pop %v3850
    %v3852 = vmul.f32 %v3826, 1.442695
    %v3853 = vpow.pop %v3852
    %v3854 = vmul.f32 %v3827, 1.442695
    %v3855 = vpow.pop %v3854
    %v3856 = vmul.f32 %v3828, 1.442695
    %v3857 = vpow.pop %v3856
    %v3858 = vmul.f32 %v3829, 1.442695
    %v3859 = vpow.pop %v3858
    %v3860 = vmul.f32 %v3830, 1.442695
    %v3861 = vpow.pop %v3860
    %v3862 = vmul.f32 %v3831, 1.442695
    %v3863 = vpow.pop %v3862
    %v3864 = vadd.f32 %v3833, 1.0
    %v3865 = vadd.f32 %v3835, 1.0
    %v3866 = vadd.f32 %v3837, 1.0
    %v3867 = vadd.f32 %v3839, 1.0
    %v3868 = vadd.f32 %v3841, 1.0
    %v3869 = vadd.f32 %v3843, 1.0
    %v3870 = vadd.f32 %v3845, 1.0
    %v3871 = vadd.f32 %v3847, 1.0
    %v3872 = vadd.f32 %v3849, 1.0
    %v3873 = vadd.f32 %v3851, 1.0
    %v3874 = vadd.f32 %v3853, 1.0
    %v3875 = vadd.f32 %v3855, 1.0
    %v3876 = vadd.f32 %v3857, 1.0
    %v3877 = vadd.f32 %v3859, 1.0
    %v3878 = vadd.f32 %v3861, 1.0
    %v3879 = vadd.f32 %v3863, 1.0
    %v3880 = vrcp.pop %v3864
    %v3881 = vmul.f32 1.0, %v3880
    %v3882 = vrcp.pop %v3865
    %v3883 = vmul.f32 1.0, %v3882
    %v3884 = vrcp.pop %v3866
    %v3885 = vmul.f32 1.0, %v3884
    %v3886 = vrcp.pop %v3867
    %v3887 = vmul.f32 1.0, %v3886
    %v3888 = vrcp.pop %v3868
    %v3889 = vmul.f32 1.0, %v3888
    %v3890 = vrcp.pop %v3869
    %v3891 = vmul.f32 1.0, %v3890
    %v3892 = vrcp.pop %v3870
    %v3893 = vmul.f32 1.0, %v3892
    %v3894 = vrcp.pop %v3871
    %v3895 = vmul.f32 1.0, %v3894
    %v3896 = vrcp.pop %v3872
    %v3897 = vmul.f32 1.0, %v3896
    %v3898 = vrcp.pop %v3873
    %v3899 = vmul.f32 1.0, %v3898
    %v3900 = vrcp.pop %v3874
    %v3901 = vmul.f32 1.0, %v3900
    %v3902 = vrcp.pop %v3875
    %v3903 = vmul.f32 1.0, %v3902
    %v3904 = vrcp.pop %v3876
    %v3905 = vmul.f32 1.0, %v3904
    %v3906 = vrcp.pop %v3877
    %v3907 = vmul.f32 1.0, %v3906
    %v3908 = vrcp.pop %v3878
    %v3909 = vmul.f32 1.0, %v3908
    %v3910 = vrcp.pop %v3879
    %v3911 = vmul.f32 1.0, %v3910
    %v3912 = vmul.f32 %v3769, %v3198
    %v3913 = vmul.f32 %v3771, %v3199
    %v3914 = vmul.f32 %v3773, %v3200
    %v3915 = vmul.f32 %v3775, %v3201
    %v3916 = vmul.f32 %v3777, %v3202
    %v3917 = vmul.f32 %v3779, %v3203
    %v3918 = vmul.f32 %v3781, %v3204
    %v3919 = vmul.f32 %v3783, %v3205
    %v3920 = vmul.f32 %v3785, %v3206
    %v3921 = vmul.f32 %v3787, %v3207
    %v3922 = vmul.f32 %v3789, %v3208
    %v3923 = vmul.f32 %v3791, %v3209
    %v3924 = vmul.f32 %v3793, %v3210
    %v3925 = vmul.f32 %v3795, %v3211
    %v3926 = vmul.f32 %v3797, %v3212
    %v3927 = vmul.f32 %v3799, %v3213
    %v3928 = vmul.f32 %v3673, %v3800
    %v3929 = vmul.f32 %v3675, %v3801
    %v3930 = vmul.f32 %v3677, %v3802
    %v3931 = vmul.f32 %v3679, %v3803
    %v3932 = vmul.f32 %v3681, %v3804
    %v3933 = vmul.f32 %v3683, %v3805
    %v3934 = vmul.f32 %v3685, %v3806
    %v3935 = vmul.f32 %v3687, %v3807
    %v3936 = vmul.f32 %v3689, %v3808
    %v3937 = vmul.f32 %v3691, %v3809
    %v3938 = vmul.f32 %v3693, %v3810
    %v3939 = vmul.f32 %v3695, %v3811
    %v3940 = vmul.f32 %v3697, %v3812
    %v3941 = vmul.f32 %v3699, %v3813
    %v3942 = vmul.f32 %v3701, %v3814
    %v3943 = vmul.f32 %v3703, %v3815
    %v3944 = vadd.f32 %v3912, %v3928
    %v3945 = vadd.f32 %v3913, %v3929
    %v3946 = vadd.f32 %v3914, %v3930
    %v3947 = vadd.f32 %v3915, %v3931
    %v3948 = vadd.f32 %v3916, %v3932
    %v3949 = vadd.f32 %v3917, %v3933
    %v3950 = vadd.f32 %v3918, %v3934
    %v3951 = vadd.f32 %v3919, %v3935
    %v3952 = vadd.f32 %v3920, %v3936
    %v3953 = vadd.f32 %v3921, %v3937
    %v3954 = vadd.f32 %v3922, %v3938
    %v3955 = vadd.f32 %v3923, %v3939
    %v3956 = vadd.f32 %v3924, %v3940
    %v3957 = vadd.f32 %v3925, %v3941
    %v3958 = vadd.f32 %v3926, %v3942
    %v3959 = vadd.f32 %v3927, %v3943
    %v3960 = vtanh.pop %v3944
    %v3961 = vtanh.pop %v3945
    %v3962 = vtanh.pop %v3946
    %v3963 = vtanh.pop %v3947
    %v3964 = vtanh.pop %v3948
    %v3965 = vtanh.pop %v3949
    %v3966 = vtanh.pop %v3950
    %v3967 = vtanh.pop %v3951
    %v3968 = vtanh.pop %v3952
    %v3969 = vtanh.pop %v3953
    %v3970 = vtanh.pop %v3954
    %v3971 = vtanh.pop %v3955
    %v3972 = vtanh.pop %v3956
    %v3973 = vtanh.pop %v3957
    %v3974 = vtanh.pop %v3958
    %v3975 = vtanh.pop %v3959
    %v3976 = vmul.f32 %v3881, %v3960
    %v3977 = vmul.f32 %v3883, %v3961
    %v3978 = vmul.f32 %v3885, %v3962
    %v3979 = vmul.f32 %v3887, %v3963
    %v3980 = vmul.f32 %v3889, %v3964
    %v3981 = vmul.f32 %v3891, %v3965
    %v3982 = vmul.f32 %v3893, %v3966
    %v3983 = vmul.f32 %v3895, %v3967
    %v3984 = vmul.f32 %v3897, %v3968
    %v3985 = vmul.f32 %v3899, %v3969
    %v3986 = vmul.f32 %v3901, %v3970
    %v3987 = vmul.f32 %v3903, %v3971
    %v3988 = vmul.f32 %v3905, %v3972
    %v3989 = vmul.f32 %v3907, %v3973
    %v3990 = vmul.f32 %v3909, %v3974
    %v3991 = vmul.f32 %v3911, %v3975
    %v3992 = vld [vmem:[%s902] sm:$0xff]
    %v3993 = vld [vmem:[%s902 + $0x8] sm:$0xff]
    %v3994 = vld [vmem:[%s902 + $0x10] sm:$0xff]
    %v3995 = vld [vmem:[%s902 + $0x18] sm:$0xff]
    %v3996 = vld [vmem:[%s902 + $0x20] sm:$0xff]
    %v3997 = vld [vmem:[%s902 + $0x28] sm:$0xff]
    %v3998 = vld [vmem:[%s902 + $0x30] sm:$0xff]
    %v3999 = vld [vmem:[%s902 + $0x38] sm:$0xff]
    %v4000 = vld [vmem:[%s902 + $0x40] sm:$0xff]
    %v4001 = vld [vmem:[%s902 + $0x48] sm:$0xff]
    %v4002 = vld [vmem:[%s902 + $0x50] sm:$0xff]
    %v4003 = vld [vmem:[%s902 + $0x58] sm:$0xff]
    %v4004 = vld [vmem:[%s902 + $0x60] sm:$0xff]
    %v4005 = vld [vmem:[%s902 + $0x68] sm:$0xff]
    %v4006 = vld [vmem:[%s902 + $0x70] sm:$0xff]
    %v4007 = vld [vmem:[%s902 + $0x78] sm:$0xff]
    %v4008 = vld [vmem:[%s902 + $0x80] sm:$0xff]
    %v4009 = vld [vmem:[%s902 + $0x88] sm:$0xff]
    %v4010 = vld [vmem:[%s902 + $0x90] sm:$0xff]
    %v4011 = vld [vmem:[%s902 + $0x98] sm:$0xff]
    %v4012 = vld [vmem:[%s902 + $0xa0] sm:$0xff]
    %v4013 = vld [vmem:[%s902 + $0xa8] sm:$0xff]
    %v4014 = vld [vmem:[%s902 + $0xb0] sm:$0xff]
    %v4015 = vld [vmem:[%s902 + $0xb8] sm:$0xff]
    %v4016 = vld [vmem:[%s902 + $0xc0] sm:$0xff]
    %v4017 = vld [vmem:[%s902 + $0xc8] sm:$0xff]
    %v4018 = vld [vmem:[%s902 + $0xd0] sm:$0xff]
    %v4019 = vld [vmem:[%s902 + $0xd8] sm:$0xff]
    %v4020 = vld [vmem:[%s902 + $0xe0] sm:$0xff]
    %v4021 = vld [vmem:[%s902 + $0xe8] sm:$0xff]
    %v4022 = vld [vmem:[%s902 + $0xf0] sm:$0xff]
    %v4023 = vld [vmem:[%s902 + $0xf8] sm:$0xff]
    %v4024 = vld [vmem:[%s902 + $0x100] sm:$0xff]
    %v4025 = vld [vmem:[%s902 + $0x108] sm:$0xff]
    %v4026 = vld [vmem:[%s902 + $0x110] sm:$0xff]
    %v4027 = vld [vmem:[%s902 + $0x118] sm:$0xff]
    %v4028 = vld [vmem:[%s902 + $0x120] sm:$0xff]
    %v4029 = vld [vmem:[%s902 + $0x128] sm:$0xff]
    %v4030 = vld [vmem:[%s902 + $0x130] sm:$0xff]
    %v4031 = vld [vmem:[%s902 + $0x138] sm:$0xff]
    %v4032 = vld [vmem:[%s902 + $0x140] sm:$0xff]
    %v4033 = vld [vmem:[%s902 + $0x148] sm:$0xff]
    %v4034 = vld [vmem:[%s902 + $0x150] sm:$0xff]
    %v4035 = vld [vmem:[%s902 + $0x158] sm:$0xff]
    %v4036 = vld [vmem:[%s902 + $0x160] sm:$0xff]
    %v4037 = vld [vmem:[%s902 + $0x168] sm:$0xff]
    %v4038 = vld [vmem:[%s902 + $0x170] sm:$0xff]
    %v4039 = vld [vmem:[%s902 + $0x178] sm:$0xff]
    %v4040 = vld [vmem:[%s902 + $0x180] sm:$0xff]
    %v4041 = vld [vmem:[%s902 + $0x188] sm:$0xff]
    %v4042 = vld [vmem:[%s902 + $0x190] sm:$0xff]
    %v4043 = vld [vmem:[%s902 + $0x198] sm:$0xff]
    %v4044 = vld [vmem:[%s902 + $0x1a0] sm:$0xff]
    %v4045 = vld [vmem:[%s902 + $0x1a8] sm:$0xff]
    %v4046 = vld [vmem:[%s902 + $0x1b0] sm:$0xff]
    %v4047 = vld [vmem:[%s902 + $0x1b8] sm:$0xff]
    %v4048 = vld [vmem:[%s902 + $0x1c0] sm:$0xff]
    %v4049 = vld [vmem:[%s902 + $0x1c8] sm:$0xff]
    %v4050 = vld [vmem:[%s902 + $0x1d0] sm:$0xff]
    %v4051 = vld [vmem:[%s902 + $0x1d8] sm:$0xff]
    %v4052 = vld [vmem:[%s902 + $0x1e0] sm:$0xff]
    %v4053 = vld [vmem:[%s902 + $0x1e8] sm:$0xff]
    %v4054 = vld [vmem:[%s902 + $0x1f0] sm:$0xff]
    %v4055 = vld [vmem:[%s902 + $0x1f8] sm:$0xff]
    %v4056 = vpack.c.bf16 %v3977, %v3976
    %v4057 = vpack.c.bf16 %v3979, %v3978
    %v4058 = vpack.c.bf16 %v3981, %v3980
    %v4059 = vpack.c.bf16 %v3983, %v3982
    %v4060 = vpack.c.bf16 %v3985, %v3984
    %v4061 = vpack.c.bf16 %v3987, %v3986
    %v4062 = vpack.c.bf16 %v3989, %v3988
    %v4063 = vpack.c.bf16 %v3991, %v3990
    %4064 = vmatprep.subr.bf16.mxu0 %v2477
    %4065 = vmatpush1.bf16.msra.mxu0 %v2476
    %4066 = vmatprep.subr.bf16.mxu0 %v2481
    %4067 = vmatpush1.bf16.msra.mxu0 %v2480
    %4068 = vmatprep.subr.bf16.mxu0 %v2485
    %4069 = vmatpush1.bf16.msra.mxu0 %v2484
    %4070 = vmatprep.subr.bf16.mxu0 %v2489
    %4071 = vmatpush1.bf16.msra.mxu0 %v2488
    %4072 = vmatprep.subr.bf16.mxu0 %v2493
    %4073 = vmatpush1.bf16.msra.mxu0 %v2492
    %4074 = vmatprep.subr.bf16.mxu0 %v2497
    %4075 = vmatpush1.bf16.msra.mxu0 %v2496
    %4076 = vmatprep.subr.bf16.mxu0 %v2501
    %4077 = vmatpush1.bf16.msra.mxu0 %v2500
    %4078 = vmatprep.subr.bf16.mxu0 %v2505
    %4079 = vmatpush1.bf16.msra.mxu0 %v2504
    %4080 = vmatprep.subr.bf16.mxu0 0
    %4081 = vmatpush1.bf16.msra.mxu0 0
    %4082 = vmatprep.subr.bf16.mxu0 0
    %4083 = vmatpush1.bf16.msra.mxu0 0
    %4084 = vmatprep.subr.bf16.mxu0 0
    %4085 = vmatpush1.bf16.msra.mxu0 0
    %4086 = vmatprep.subr.bf16.mxu0 0
    %4087 = vmatpush1.bf16.msra.mxu0 0
    %4088 = vmatprep.subr.bf16.mxu0 0
    %4089 = vmatpush1.bf16.msra.mxu0 0
    %4090 = vmatprep.subr.bf16.mxu0 0
    %4091 = vmatpush1.bf16.msra.mxu0 0
    %4092 = vmatprep.subr.bf16.mxu0 0
    %4093 = vmatpush1.bf16.msra.mxu0 0
    %4094 = vmatprep.subr.bf16.mxu0 0
    %4095 = vmatpush1.bf16.msra.mxu0 0
    %4096 = vmatprep.mubr.bf16.mxu0 0
    %4097 = vmatmul.mubr.bf16.gmra.mrb[0].mxu0 %v4056
    %v4098 = vpop.f32.mrb[0].mxu0
    %v4099 = vadd.f32 0.0, %v4098
    %v4100 = vpop.f32.mrb[0].mxu0
    %v4101 = vadd.f32 0.0, %v4100
    %v4102 = vpop.f32.mrb[0].mxu0
    %v4103 = vadd.f32 0.0, %v4102
    %v4104 = vpop.f32.mrb[0].mxu0
    %v4105 = vadd.f32 0.0, %v4104
    %4106 = vmatprep.mubr.bf16.mxu0 0
    %4107 = vmatmul.mubr.bf16.gmra.mrb[0].mxu0 %v4057
    %v4108 = vpop.f32.mrb[0].mxu0
    %v4109 = vadd.f32 0.0, %v4108
    %v4110 = vpop.f32.mrb[0].mxu0
    %v4111 = vadd.f32 0.0, %v4110
    %v4112 = vpop.f32.mrb[0].mxu0
    %v4113 = vadd.f32 0.0, %v4112
    %v4114 = vpop.f32.mrb[0].mxu0
    %v4115 = vadd.f32 0.0, %v4114
    %4116 = vmatprep.mubr.bf16.mxu0 0
    %4117 = vmatmul.mubr.bf16.gmra.mrb[0].mxu0 %v4058
    %v4118 = vpop.f32.mrb[0].mxu0
    %v4119 = vadd.f32 0.0, %v4118
    %v4120 = vpop.f32.mrb[0].mxu0
    %v4121 = vadd.f32 0.0, %v4120
    %v4122 = vpop.f32.mrb[0].mxu0
    %v4123 = vadd.f32 0.0, %v4122
    %v4124 = vpop.f32.mrb[0].mxu0
    %v4125 = vadd.f32 0.0, %v4124
    %4126 = vmatprep.mubr.bf16.mxu0 0
    %4127 = vmatmul.mubr.bf16.gmra.mrb[0].mxu0 %v4059
    %v4128 = vpop.f32.mrb[0].mxu0
    %v4129 = vadd.f32 0.0, %v4128
    %v4130 = vpop.f32.mrb[0].mxu0
    %v4131 = vadd.f32 0.0, %v4130
    %v4132 = vpop.f32.mrb[0].mxu0
    %v4133 = vadd.f32 0.0, %v4132
    %v4134 = vpop.f32.mrb[0].mxu0
    %v4135 = vadd.f32 0.0, %v4134
    %4136 = vmatprep.mubr.bf16.mxu0 0
    %4137 = vmatmul.mubr.bf16.gmra.mrb[0].mxu0 %v4060
    %v4138 = vpop.f32.mrb[0].mxu0
    %v4139 = vadd.f32 0.0, %v4138
    %v4140 = vpop.f32.mrb[0].mxu0
    %v4141 = vadd.f32 0.0, %v4140
    %v4142 = vpop.f32.mrb[0].mxu0
    %v4143 = vadd.f32 0.0, %v4142
    %v4144 = vpop.f32.mrb[0].mxu0
    %v4145 = vadd.f32 0.0, %v4144
    %4146 = vmatprep.mubr.bf16.mxu0 0
    %4147 = vmatmul.mubr.bf16.gmra.mrb[0].mxu0 %v4061
    %v4148 = vpop.f32.mrb[0].mxu0
    %v4149 = vadd.f32 0.0, %v4148
    %v4150 = vpop.f32.mrb[0].mxu0
    %v4151 = vadd.f32 0.0, %v4150
    %v4152 = vpop.f32.mrb[0].mxu0
    %v4153 = vadd.f32 0.0, %v4152
    %v4154 = vpop.f32.mrb[0].mxu0
    %v4155 = vadd.f32 0.0, %v4154
    %4156 = vmatprep.mubr.bf16.mxu0 0
    %4157 = vmatmul.mubr.bf16.gmra.mrb[0].mxu0 %v4062
    %v4158 = vpop.f32.mrb[0].mxu0
    %v4159 = vadd.f32 0.0, %v4158
    %v4160 = vpop.f32.mrb[0].mxu0
    %v4161 = vadd.f32 0.0, %v4160
    %v4162 = vpop.f32.mrb[0].mxu0
    %v4163 = vadd.f32 0.0, %v4162
    %v4164 = vpop.f32.mrb[0].mxu0
    %v4165 = vadd.f32 0.0, %v4164
    %4166 = vmatprep.mubr.bf16.mxu0 0
    %4167 = vmatmul.mubr.bf16.gmra.mrb[0].mxu0 %v4063
    %v4168 = vpop.f32.mrb[0].mxu0
    %v4169 = vadd.f32 0.0, %v4168
    %v4170 = vpop.f32.mrb[0].mxu0
    %v4171 = vadd.f32 0.0, %v4170
    %v4172 = vpop.f32.mrb[0].mxu0
    %v4173 = vadd.f32 0.0, %v4172
    %v4174 = vpop.f32.mrb[0].mxu0
    %v4175 = vadd.f32 0.0, %v4174
    %4176 = vdwg.mxu0
    %4177 = vmatprep.subr.bf16.mxu0 %v2479
    %4178 = vmatpush1.bf16.msra.mxu0 %v2478
    %4179 = vmatprep.subr.bf16.mxu0 %v2483
    %4180 = vmatpush1.bf16.msra.mxu0 %v2482
    %4181 = vmatprep.subr.bf16.mxu0 %v2487
    %4182 = vmatpush1.bf16.msra.mxu0 %v2486
    %4183 = vmatprep.subr.bf16.mxu0 %v2491
    %4184 = vmatpush1.bf16.msra.mxu0 %v2490
    %4185 = vmatprep.subr.bf16.mxu0 %v2495
    %4186 = vmatpush1.bf16.msra.mxu0 %v2494
    %4187 = vmatprep.subr.bf16.mxu0 %v2499
    %4188 = vmatpush1.bf16.msra.mxu0 %v2498
    %4189 = vmatprep.subr.bf16.mxu0 %v2503
    %4190 = vmatpush1.bf16.msra.mxu0 %v2502
    %4191 = vmatprep.subr.bf16.mxu0 %v2507
    %4192 = vmatpush1.bf16.msra.mxu0 %v2506
    %4193 = vmatprep.subr.bf16.mxu0 0
    %4194 = vmatpush1.bf16.msra.mxu0 0
    %4195 = vmatprep.subr.bf16.mxu0 0
    %4196 = vmatpush1.bf16.msra.mxu0 0
    %4197 = vmatprep.subr.bf16.mxu0 0
    %4198 = vmatpush1.bf16.msra.mxu0 0
    %4199 = vmatprep.subr.bf16.mxu0 0
    %4200 = vmatpush1.bf16.msra.mxu0 0
    %4201 = vmatprep.subr.bf16.mxu0 0
    %4202 = vmatpush1.bf16.msra.mxu0 0
    %4203 = vmatprep.subr.bf16.mxu0 0
    %4204 = vmatpush1.bf16.msra.mxu0 0
    %4205 = vmatprep.subr.bf16.mxu0 0
    %4206 = vmatpush1.bf16.msra.mxu0 0
    %4207 = vmatprep.subr.bf16.mxu0 0
    %4208 = vmatpush1.bf16.msra.mxu0 0
    %4209 = vmatprep.mubr.bf16.mxu0 0
    %4210 = vmatmul.mubr.bf16.gmra.mrb[0].mxu0 %v4056
    %v4211 = vpop.f32.mrb[0].mxu0
    %v4212 = vadd.f32 0.0, %v4211
    %v4213 = vpop.f32.mrb[0].mxu0
    %v4214 = vadd.f32 0.0, %v4213
    %v4215 = vpop.f32.mrb[0].mxu0
    %v4216 = vadd.f32 0.0, %v4215
    %v4217 = vpop.f32.mrb[0].mxu0
    %v4218 = vadd.f32 0.0, %v4217
    %4219 = vmatprep.mubr.bf16.mxu0 0
    %4220 = vmatmul.mubr.bf16.gmra.mrb[0].mxu0 %v4057
    %v4221 = vpop.f32.mrb[0].mxu0
    %v4222 = vadd.f32 0.0, %v4221
    %v4223 = vpop.f32.mrb[0].mxu0
    %v4224 = vadd.f32 0.0, %v4223
    %v4225 = vpop.f32.mrb[0].mxu0
    %v4226 = vadd.f32 0.0, %v4225
    %v4227 = vpop.f32.mrb[0].mxu0
    %v4228 = vadd.f32 0.0, %v4227
    %4229 = vmatprep.mubr.bf16.mxu0 0
    %4230 = vmatmul.mubr.bf16.gmra.mrb[0].mxu0 %v4058
    %v4231 = vpop.f32.mrb[0].mxu0
    %v4232 = vadd.f32 0.0, %v4231
    %v4233 = vpop.f32.mrb[0].mxu0
    %v4234 = vadd.f32 0.0, %v4233
    %v4235 = vpop.f32.mrb[0].mxu0
    %v4236 = vadd.f32 0.0, %v4235
    %v4237 = vpop.f32.mrb[0].mxu0
    %v4238 = vadd.f32 0.0, %v4237
    %4239 = vmatprep.mubr.bf16.mxu0 0
    %4240 = vmatmul.mubr.bf16.gmra.mrb[0].mxu0 %v4059
    %v4241 = vpop.f32.mrb[0].mxu0
    %v4242 = vadd.f32 0.0, %v4241
    %v4243 = vpop.f32.mrb[0].mxu0
    %v4244 = vadd.f32 0.0, %v4243
    %v4245 = vpop.f32.mrb[0].mxu0
    %v4246 = vadd.f32 0.0, %v4245
    %v4247 = vpop.f32.mrb[0].mxu0
    %v4248 = vadd.f32 0.0, %v4247
    %4249 = vmatprep.mubr.bf16.mxu0 0
    %4250 = vmatmul.mubr.bf16.gmra.mrb[0].mxu0 %v4060
    %v4251 = vpop.f32.mrb[0].mxu0
    %v4252 = vadd.f32 0.0, %v4251
    %v4253 = vpop.f32.mrb[0].mxu0
    %v4254 = vadd.f32 0.0, %v4253
    %v4255 = vpop.f32.mrb[0].mxu0
    %v4256 = vadd.f32 0.0, %v4255
    %v4257 = vpop.f32.mrb[0].mxu0
    %v4258 = vadd.f32 0.0, %v4257
    %4259 = vmatprep.mubr.bf16.mxu0 0
    %4260 = vmatmul.mubr.bf16.gmra.mrb[0].mxu0 %v4061
    %v4261 = vpop.f32.mrb[0].mxu0
    %v4262 = vadd.f32 0.0, %v4261
    %v4263 = vpop.f32.mrb[0].mxu0
    %v4264 = vadd.f32 0.0, %v4263
    %v4265 = vpop.f32.mrb[0].mxu0
    %v4266 = vadd.f32 0.0, %v4265
    %v4267 = vpop.f32.mrb[0].mxu0
    %v4268 = vadd.f32 0.0, %v4267
    %4269 = vmatprep.mubr.bf16.mxu0 0
    %4270 = vmatmul.mubr.bf16.gmra.mrb[0].mxu0 %v4062
    %v4271 = vpop.f32.mrb[0].mxu0
    %v4272 = vadd.f32 0.0, %v4271
    %v4273 = vpop.f32.mrb[0].mxu0
    %v4274 = vadd.f32 0.0, %v4273
    %v4275 = vpop.f32.mrb[0].mxu0
    %v4276 = vadd.f32 0.0, %v4275
    %v4277 = vpop.f32.mrb[0].mxu0
    %v4278 = vadd.f32 0.0, %v4277
    %4279 = vmatprep.mubr.bf16.mxu0 0
    %4280 = vmatmul.mubr.bf16.gmra.mrb[0].mxu0 %v4063
    %v4281 = vpop.f32.mrb[0].mxu0
    %v4282 = vadd.f32 0.0, %v4281
    %v4283 = vpop.f32.mrb[0].mxu0
    %v4284 = vadd.f32 0.0, %v4283
    %v4285 = vpop.f32.mrb[0].mxu0
    %v4286 = vadd.f32 0.0, %v4285
    %v4287 = vpop.f32.mrb[0].mxu0
    %v4288 = vadd.f32 0.0, %v4287
    %4289 = vdwg.mxu0
    %v4290 = vadd.f32 %v3992, %v4099
    %v4291 = vadd.f32 %v3993, %v4101
    %v4292 = vadd.f32 %v3994, %v4212
    %v4293 = vadd.f32 %v3995, %v4214
    %v4294 = vadd.f32 %v3996, %v4103
    %v4295 = vadd.f32 %v3997, %v4105
    %v4296 = vadd.f32 %v3998, %v4216
    %v4297 = vadd.f32 %v3999, %v4218
    %v4298 = vadd.f32 %v4000, %v4109
    %v4299 = vadd.f32 %v4001, %v4111
    %v4300 = vadd.f32 %v4002, %v4222
    %v4301 = vadd.f32 %v4003, %v4224
    %v4302 = vadd.f32 %v4004, %v4113
    %v4303 = vadd.f32 %v4005, %v4115
    %v4304 = vadd.f32 %v4006, %v4226
    %v4305 = vadd.f32 %v4007, %v4228
    %v4306 = vadd.f32 %v4008, %v4119
    %v4307 = vadd.f32 %v4009, %v4121
    %v4308 = vadd.f32 %v4010, %v4232
    %v4309 = vadd.f32 %v4011, %v4234
    %v4310 = vadd.f32 %v4012, %v4123
    %v4311 = vadd.f32 %v4013, %v4125
    %v4312 = vadd.f32 %v4014, %v4236
    %v4313 = vadd.f32 %v4015, %v4238
    %v4314 = vadd.f32 %v4016, %v4129
    %v4315 = vadd.f32 %v4017, %v4131
    %v4316 = vadd.f32 %v4018, %v4242
    %v4317 = vadd.f32 %v4019, %v4244
    %v4318 = vadd.f32 %v4020, %v4133
    %v4319 = vadd.f32 %v4021, %v4135
    %v4320 = vadd.f32 %v4022, %v4246
    %v4321 = vadd.f32 %v4023, %v4248
    %v4322 = vadd.f32 %v4024, %v4139
    %v4323 = vadd.f32 %v4025, %v4141
    %v4324 = vadd.f32 %v4026, %v4252
    %v4325 = vadd.f32 %v4027, %v4254
    %v4326 = vadd.f32 %v4028, %v4143
    %v4327 = vadd.f32 %v4029, %v4145
    %v4328 = vadd.f32 %v4030, %v4256
    %v4329 = vadd.f32 %v4031, %v4258
    %v4330 = vadd.f32 %v4032, %v4149
    %v4331 = vadd.f32 %v4033, %v4151
    %v4332 = vadd.f32 %v4034, %v4262
    %v4333 = vadd.f32 %v4035, %v4264
    %v4334 = vadd.f32 %v4036, %v4153
    %v4335 = vadd.f32 %v4037, %v4155
    %v4336 = vadd.f32 %v4038, %v4266
    %v4337 = vadd.f32 %v4039, %v4268
    %v4338 = vadd.f32 %v4040, %v4159
    %v4339 = vadd.f32 %v4041, %v4161
    %v4340 = vadd.f32 %v4042, %v4272
    %v4341 = vadd.f32 %v4043, %v4274
    %v4342 = vadd.f32 %v4044, %v4163
    %v4343 = vadd.f32 %v4045, %v4165
    %v4344 = vadd.f32 %v4046, %v4276
    %v4345 = vadd.f32 %v4047, %v4278
    %v4346 = vadd.f32 %v4048, %v4169
    %v4347 = vadd.f32 %v4049, %v4171
    %v4348 = vadd.f32 %v4050, %v4282
    %v4349 = vadd.f32 %v4051, %v4284
    %v4350 = vadd.f32 %v4052, %v4173
    %v4351 = vadd.f32 %v4053, %v4175
    %v4352 = vadd.f32 %v4054, %v4286
    %v4353 = vadd.f32 %v4055, %v4288
    %v4354 = vxor.u32 %v4290, 2147483648
    %v4355 = vxor.u32 %v4294, 2147483648
    %v4356 = vxor.u32 %v4298, 2147483648
    %v4357 = vxor.u32 %v4302, 2147483648
    %v4358 = vxor.u32 %v4306, 2147483648
    %v4359 = vxor.u32 %v4310, 2147483648
    %v4360 = vxor.u32 %v4314, 2147483648
    %v4361 = vxor.u32 %v4318, 2147483648
    %v4362 = vxor.u32 %v4322, 2147483648
    %v4363 = vxor.u32 %v4326, 2147483648
    %v4364 = vxor.u32 %v4330, 2147483648
    %v4365 = vxor.u32 %v4334, 2147483648
    %v4366 = vxor.u32 %v4338, 2147483648
    %v4367 = vxor.u32 %v4342, 2147483648
    %v4368 = vxor.u32 %v4346, 2147483648
    %v4369 = vxor.u32 %v4350, 2147483648
    %v4370 = vmul.f32 %v4354, 1.442695
    %v4371 = vpow.pop %v4370
    %v4372 = vmul.f32 %v4355, 1.442695
    %v4373 = vpow.pop %v4372
    %v4374 = vmul.f32 %v4356, 1.442695
    %v4375 = vpow.pop %v4374
    %v4376 = vmul.f32 %v4357, 1.442695
    %v4377 = vpow.pop %v4376
    %v4378 = vmul.f32 %v4358, 1.442695
    %v4379 = vpow.pop %v4378
    %v4380 = vmul.f32 %v4359, 1.442695
    %v4381 = vpow.pop %v4380
    %v4382 = vmul.f32 %v4360, 1.442695
    %v4383 = vpow.pop %v4382
    %v4384 = vmul.f32 %v4361, 1.442695
    %v4385 = vpow.pop %v4384
    %v4386 = vmul.f32 %v4362, 1.442695
    %v4387 = vpow.pop %v4386
    %v4388 = vmul.f32 %v4363, 1.442695
    %v4389 = vpow.pop %v4388
    %v4390 = vmul.f32 %v4364, 1.442695
    %v4391 = vpow.pop %v4390
    %v4392 = vmul.f32 %v4365, 1.442695
    %v4393 = vpow.pop %v4392
    %v4394 = vmul.f32 %v4366, 1.442695
    %v4395 = vpow.pop %v4394
    %v4396 = vmul.f32 %v4367, 1.442695
    %v4397 = vpow.pop %v4396
    %v4398 = vmul.f32 %v4368, 1.442695
    %v4399 = vpow.pop %v4398
    %v4400 = vmul.f32 %v4369, 1.442695
    %v4401 = vpow.pop %v4400
    %v4402 = vadd.f32 %v4371, 1.0
    %v4403 = vadd.f32 %v4373, 1.0
    %v4404 = vadd.f32 %v4375, 1.0
    %v4405 = vadd.f32 %v4377, 1.0
    %v4406 = vadd.f32 %v4379, 1.0
    %v4407 = vadd.f32 %v4381, 1.0
    %v4408 = vadd.f32 %v4383, 1.0
    %v4409 = vadd.f32 %v4385, 1.0
    %v4410 = vadd.f32 %v4387, 1.0
    %v4411 = vadd.f32 %v4389, 1.0
    %v4412 = vadd.f32 %v4391, 1.0
    %v4413 = vadd.f32 %v4393, 1.0
    %v4414 = vadd.f32 %v4395, 1.0
    %v4415 = vadd.f32 %v4397, 1.0
    %v4416 = vadd.f32 %v4399, 1.0
    %v4417 = vadd.f32 %v4401, 1.0
    %v4418 = vrcp.pop %v4402
    %v4419 = vmul.f32 1.0, %v4418
    %v4420 = vrcp.pop %v4403
    %v4421 = vmul.f32 1.0, %v4420
    %v4422 = vrcp.pop %v4404
    %v4423 = vmul.f32 1.0, %v4422
    %v4424 = vrcp.pop %v4405
    %v4425 = vmul.f32 1.0, %v4424
    %v4426 = vrcp.pop %v4406
    %v4427 = vmul.f32 1.0, %v4426
    %v4428 = vrcp.pop %v4407
    %v4429 = vmul.f32 1.0, %v4428
    %v4430 = vrcp.pop %v4408
    %v4431 = vmul.f32 1.0, %v4430
    %v4432 = vrcp.pop %v4409
    %v4433 = vmul.f32 1.0, %v4432
    %v4434 = vrcp.pop %v4410
    %v4435 = vmul.f32 1.0, %v4434
    %v4436 = vrcp.pop %v4411
    %v4437 = vmul.f32 1.0, %v4436
    %v4438 = vrcp.pop %v4412
    %v4439 = vmul.f32 1.0, %v4438
    %v4440 = vrcp.pop %v4413
    %v4441 = vmul.f32 1.0, %v4440
    %v4442 = vrcp.pop %v4414
    %v4443 = vmul.f32 1.0, %v4442
    %v4444 = vrcp.pop %v4415
    %v4445 = vmul.f32 1.0, %v4444
    %v4446 = vrcp.pop %v4416
    %v4447 = vmul.f32 1.0, %v4446
    %v4448 = vrcp.pop %v4417
    %v4449 = vmul.f32 1.0, %v4448
    %v4450 = vxor.u32 %v4291, 2147483648
    %v4451 = vxor.u32 %v4295, 2147483648
    %v4452 = vxor.u32 %v4299, 2147483648
    %v4453 = vxor.u32 %v4303, 2147483648
    %v4454 = vxor.u32 %v4307, 2147483648
    %v4455 = vxor.u32 %v4311, 2147483648
    %v4456 = vxor.u32 %v4315, 2147483648
    %v4457 = vxor.u32 %v4319, 2147483648
    %v4458 = vxor.u32 %v4323, 2147483648
    %v4459 = vxor.u32 %v4327, 2147483648
    %v4460 = vxor.u32 %v4331, 2147483648
    %v4461 = vxor.u32 %v4335, 2147483648
    %v4462 = vxor.u32 %v4339, 2147483648
    %v4463 = vxor.u32 %v4343, 2147483648
    %v4464 = vxor.u32 %v4347, 2147483648
    %v4465 = vxor.u32 %v4351, 2147483648
    %v4466 = vmul.f32 %v4450, 1.442695
    %v4467 = vpow.pop %v4466
    %v4468 = vmul.f32 %v4451, 1.442695
    %v4469 = vpow.pop %v4468
    %v4470 = vmul.f32 %v4452, 1.442695
    %v4471 = vpow.pop %v4470
    %v4472 = vmul.f32 %v4453, 1.442695
    %v4473 = vpow.pop %v4472
    %v4474 = vmul.f32 %v4454, 1.442695
    %v4475 = vpow.pop %v4474
    %v4476 = vmul.f32 %v4455, 1.442695
    %v4477 = vpow.pop %v4476
    %v4478 = vmul.f32 %v4456, 1.442695
    %v4479 = vpow.pop %v4478
    %v4480 = vmul.f32 %v4457, 1.442695
    %v4481 = vpow.pop %v4480
    %v4482 = vmul.f32 %v4458, 1.442695
    %v4483 = vpow.pop %v4482
    %v4484 = vmul.f32 %v4459, 1.442695
    %v4485 = vpow.pop %v4484
    %v4486 = vmul.f32 %v4460, 1.442695
    %v4487 = vpow.pop %v4486
    %v4488 = vmul.f32 %v4461, 1.442695
    %v4489 = vpow.pop %v4488
    %v4490 = vmul.f32 %v4462, 1.442695
    %v4491 = vpow.pop %v4490
    %v4492 = vmul.f32 %v4463, 1.442695
    %v4493 = vpow.pop %v4492
    %v4494 = vmul.f32 %v4464, 1.442695
    %v4495 = vpow.pop %v4494
    %v4496 = vmul.f32 %v4465, 1.442695
    %v4497 = vpow.pop %v4496
    %v4498 = vadd.f32 %v4467, 1.0
    %v4499 = vadd.f32 %v4469, 1.0
    %v4500 = vadd.f32 %v4471, 1.0
    %v4501 = vadd.f32 %v4473, 1.0
    %v4502 = vadd.f32 %v4475, 1.0
    %v4503 = vadd.f32 %v4477, 1.0
    %v4504 = vadd.f32 %v4479, 1.0
    %v4505 = vadd.f32 %v4481, 1.0
    %v4506 = vadd.f32 %v4483, 1.0
    %v4507 = vadd.f32 %v4485, 1.0
    %v4508 = vadd.f32 %v4487, 1.0
    %v4509 = vadd.f32 %v4489, 1.0
    %v4510 = vadd.f32 %v4491, 1.0
    %v4511 = vadd.f32 %v4493, 1.0
    %v4512 = vadd.f32 %v4495, 1.0
    %v4513 = vadd.f32 %v4497, 1.0
    %v4514 = vrcp.pop %v4498
    %v4515 = vmul.f32 1.0, %v4514
    %v4516 = vrcp.pop %v4499
    %v4517 = vmul.f32 1.0, %v4516
    %v4518 = vrcp.pop %v4500
    %v4519 = vmul.f32 1.0, %v4518
    %v4520 = vrcp.pop %v4501
    %v4521 = vmul.f32 1.0, %v4520
    %v4522 = vrcp.pop %v4502
    %v4523 = vmul.f32 1.0, %v4522
    %v4524 = vrcp.pop %v4503
    %v4525 = vmul.f32 1.0, %v4524
    %v4526 = vrcp.pop %v4504
    %v4527 = vmul.f32 1.0, %v4526
    %v4528 = vrcp.pop %v4505
    %v4529 = vmul.f32 1.0, %v4528
    %v4530 = vrcp.pop %v4506
    %v4531 = vmul.f32 1.0, %v4530
    %v4532 = vrcp.pop %v4507
    %v4533 = vmul.f32 1.0, %v4532
    %v4534 = vrcp.pop %v4508
    %v4535 = vmul.f32 1.0, %v4534
    %v4536 = vrcp.pop %v4509
    %v4537 = vmul.f32 1.0, %v4536
    %v4538 = vrcp.pop %v4510
    %v4539 = vmul.f32 1.0, %v4538
    %v4540 = vrcp.pop %v4511
    %v4541 = vmul.f32 1.0, %v4540
    %v4542 = vrcp.pop %v4512
    %v4543 = vmul.f32 1.0, %v4542
    %v4544 = vrcp.pop %v4513
    %v4545 = vmul.f32 1.0, %v4544
    %v4546 = vtanh.pop %v4292
    %v4547 = vtanh.pop %v4296
    %v4548 = vtanh.pop %v4300
    %v4549 = vtanh.pop %v4304
    %v4550 = vtanh.pop %v4308
    %v4551 = vtanh.pop %v4312
    %v4552 = vtanh.pop %v4316
    %v4553 = vtanh.pop %v4320
    %v4554 = vtanh.pop %v4324
    %v4555 = vtanh.pop %v4328
    %v4556 = vtanh.pop %v4332
    %v4557 = vtanh.pop %v4336
    %v4558 = vtanh.pop %v4340
    %v4559 = vtanh.pop %v4344
    %v4560 = vtanh.pop %v4348
    %v4561 = vtanh.pop %v4352
    %v4562 = vxor.u32 %v4293, 2147483648
    %v4563 = vxor.u32 %v4297, 2147483648
    %v4564 = vxor.u32 %v4301, 2147483648
    %v4565 = vxor.u32 %v4305, 2147483648
    %v4566 = vxor.u32 %v4309, 2147483648
    %v4567 = vxor.u32 %v4313, 2147483648
    %v4568 = vxor.u32 %v4317, 2147483648
    %v4569 = vxor.u32 %v4321, 2147483648
    %v4570 = vxor.u32 %v4325, 2147483648
    %v4571 = vxor.u32 %v4329, 2147483648
    %v4572 = vxor.u32 %v4333, 2147483648
    %v4573 = vxor.u32 %v4337, 2147483648
    %v4574 = vxor.u32 %v4341, 2147483648
    %v4575 = vxor.u32 %v4345, 2147483648
    %v4576 = vxor.u32 %v4349, 2147483648
    %v4577 = vxor.u32 %v4353, 2147483648
    %v4578 = vmul.f32 %v4562, 1.442695
    %v4579 = vpow.pop %v4578
    %v4580 = vmul.f32 %v4563, 1.442695
    %v4581 = vpow.pop %v4580
    %v4582 = vmul.f32 %v4564, 1.442695
    %v4583 = vpow.pop %v4582
    %v4584 = vmul.f32 %v4565, 1.442695
    %v4585 = vpow.pop %v4584
    %v4586 = vmul.f32 %v4566, 1.442695
    %v4587 = vpow.pop %v4586
    %v4588 = vmul.f32 %v4567, 1.442695
    %v4589 = vpow.pop %v4588
    %v4590 = vmul.f32 %v4568, 1.442695
    %v4591 = vpow.pop %v4590
    %v4592 = vmul.f32 %v4569, 1.442695
    %v4593 = vpow.pop %v4592
    %v4594 = vmul.f32 %v4570, 1.442695
    %v4595 = vpow.pop %v4594
    %v4596 = vmul.f32 %v4571, 1.442695
    %v4597 = vpow.pop %v4596
    %v4598 = vmul.f32 %v4572, 1.442695
    %v4599 = vpow.pop %v4598
    %v4600 = vmul.f32 %v4573, 1.442695
    %v4601 = vpow.pop %v4600
    %v4602 = vmul.f32 %v4574, 1.442695
    %v4603 = vpow.pop %v4602
    %v4604 = vmul.f32 %v4575, 1.442695
    %v4605 = vpow.pop %v4604
    %v4606 = vmul.f32 %v4576, 1.442695
    %v4607 = vpow.pop %v4606
    %v4608 = vmul.f32 %v4577, 1.442695
    %v4609 = vpow.pop %v4608
    %v4610 = vadd.f32 %v4579, 1.0
    %v4611 = vadd.f32 %v4581, 1.0
    %v4612 = vadd.f32 %v4583, 1.0
    %v4613 = vadd.f32 %v4585, 1.0
    %v4614 = vadd.f32 %v4587, 1.0
    %v4615 = vadd.f32 %v4589, 1.0
    %v4616 = vadd.f32 %v4591, 1.0
    %v4617 = vadd.f32 %v4593, 1.0
    %v4618 = vadd.f32 %v4595, 1.0
    %v4619 = vadd.f32 %v4597, 1.0
    %v4620 = vadd.f32 %v4599, 1.0
    %v4621 = vadd.f32 %v4601, 1.0
    %v4622 = vadd.f32 %v4603, 1.0
    %v4623 = vadd.f32 %v4605, 1.0
    %v4624 = vadd.f32 %v4607, 1.0
    %v4625 = vadd.f32 %v4609, 1.0
    %v4626 = vrcp.pop %v4610
    %v4627 = vmul.f32 1.0, %v4626
    %v4628 = vrcp.pop %v4611
    %v4629 = vmul.f32 1.0, %v4628
    %v4630 = vrcp.pop %v4612
    %v4631 = vmul.f32 1.0, %v4630
    %v4632 = vrcp.pop %v4613
    %v4633 = vmul.f32 1.0, %v4632
    %v4634 = vrcp.pop %v4614
    %v4635 = vmul.f32 1.0, %v4634
    %v4636 = vrcp.pop %v4615
    %v4637 = vmul.f32 1.0, %v4636
    %v4638 = vrcp.pop %v4616
    %v4639 = vmul.f32 1.0, %v4638
    %v4640 = vrcp.pop %v4617
    %v4641 = vmul.f32 1.0, %v4640
    %v4642 = vrcp.pop %v4618
    %v4643 = vmul.f32 1.0, %v4642
    %v4644 = vrcp.pop %v4619
    %v4645 = vmul.f32 1.0, %v4644
    %v4646 = vrcp.pop %v4620
    %v4647 = vmul.f32 1.0, %v4646
    %v4648 = vrcp.pop %v4621
    %v4649 = vmul.f32 1.0, %v4648
    %v4650 = vrcp.pop %v4622
    %v4651 = vmul.f32 1.0, %v4650
    %v4652 = vrcp.pop %v4623
    %v4653 = vmul.f32 1.0, %v4652
    %v4654 = vrcp.pop %v4624
    %v4655 = vmul.f32 1.0, %v4654
    %v4656 = vrcp.pop %v4625
    %v4657 = vmul.f32 1.0, %v4656
    %v4658 = vmul.f32 %v4515, %v3944
    %v4659 = vmul.f32 %v4517, %v3945
    %v4660 = vmul.f32 %v4519, %v3946
    %v4661 = vmul.f32 %v4521, %v3947
    %v4662 = vmul.f32 %v4523, %v3948
    %v4663 = vmul.f32 %v4525, %v3949
    %v4664 = vmul.f32 %v4527, %v3950
    %v4665 = vmul.f32 %v4529, %v3951
    %v4666 = vmul.f32 %v4531, %v3952
    %v4667 = vmul.f32 %v4533, %v3953
    %v4668 = vmul.f32 %v4535, %v3954
    %v4669 = vmul.f32 %v4537, %v3955
    %v4670 = vmul.f32 %v4539, %v3956
    %v4671 = vmul.f32 %v4541, %v3957
    %v4672 = vmul.f32 %v4543, %v3958
    %v4673 = vmul.f32 %v4545, %v3959
    %v4674 = vmul.f32 %v4419, %v4546
    %v4675 = vmul.f32 %v4421, %v4547
    %v4676 = vmul.f32 %v4423, %v4548
    %v4677 = vmul.f32 %v4425, %v4549
    %v4678 = vmul.f32 %v4427, %v4550
    %v4679 = vmul.f32 %v4429, %v4551
    %v4680 = vmul.f32 %v4431, %v4552
    %v4681 = vmul.f32 %v4433, %v4553
    %v4682 = vmul.f32 %v4435, %v4554
    %v4683 = vmul.f32 %v4437, %v4555
    %v4684 = vmul.f32 %v4439, %v4556
    %v4685 = vmul.f32 %v4441, %v4557
    %v4686 = vmul.f32 %v4443, %v4558
    %v4687 = vmul.f32 %v4445, %v4559
    %v4688 = vmul.f32 %v4447, %v4560
    %v4689 = vmul.f32 %v4449, %v4561
    %v4690 = vadd.f32 %v4658, %v4674
    %v4691 = vadd.f32 %v4659, %v4675
    %v4692 = vadd.f32 %v4660, %v4676
    %v4693 = vadd.f32 %v4661, %v4677
    %v4694 = vadd.f32 %v4662, %v4678
    %v4695 = vadd.f32 %v4663, %v4679
    %v4696 = vadd.f32 %v4664, %v4680
    %v4697 = vadd.f32 %v4665, %v4681
    %v4698 = vadd.f32 %v4666, %v4682
    %v4699 = vadd.f32 %v4667, %v4683
    %v4700 = vadd.f32 %v4668, %v4684
    %v4701 = vadd.f32 %v4669, %v4685
    %v4702 = vadd.f32 %v4670, %v4686
    %v4703 = vadd.f32 %v4671, %v4687
    %v4704 = vadd.f32 %v4672, %v4688
    %v4705 = vadd.f32 %v4673, %v4689
    %v4706 = vtanh.pop %v4690
    %v4707 = vtanh.pop %v4691
    %v4708 = vtanh.pop %v4692
    %v4709 = vtanh.pop %v4693
    %v4710 = vtanh.pop %v4694
    %v4711 = vtanh.pop %v4695
    %v4712 = vtanh.pop %v4696
    %v4713 = vtanh.pop %v4697
    %v4714 = vtanh.pop %v4698
    %v4715 = vtanh.pop %v4699
    %v4716 = vtanh.pop %v4700
    %v4717 = vtanh.pop %v4701
    %v4718 = vtanh.pop %v4702
    %v4719 = vtanh.pop %v4703
    %v4720 = vtanh.pop %v4704
    %v4721 = vtanh.pop %v4705
    %v4722 = vmul.f32 %v4627, %v4706
    %v4723 = vmul.f32 %v4629, %v4707
    %v4724 = vmul.f32 %v4631, %v4708
    %v4725 = vmul.f32 %v4633, %v4709
    %v4726 = vmul.f32 %v4635, %v4710
    %v4727 = vmul.f32 %v4637, %v4711
    %v4728 = vmul.f32 %v4639, %v4712
    %v4729 = vmul.f32 %v4641, %v4713
    %v4730 = vmul.f32 %v4643, %v4714
    %v4731 = vmul.f32 %v4645, %v4715
    %v4732 = vmul.f32 %v4647, %v4716
    %v4733 = vmul.f32 %v4649, %v4717
    %v4734 = vmul.f32 %v4651, %v4718
    %v4735 = vmul.f32 %v4653, %v4719
    %v4736 = vmul.f32 %v4655, %v4720
    %v4737 = vmul.f32 %v4657, %v4721
    %v4738 = vld [vmem:[%s1191] sm:$0xff]
    %v4739 = vld [vmem:[%s1191 + $0x8] sm:$0xff]
    %v4740 = vld [vmem:[%s1191 + $0x10] sm:$0xff]
    %v4741 = vld [vmem:[%s1191 + $0x18] sm:$0xff]
    %v4742 = vld [vmem:[%s1191 + $0x20] sm:$0xff]
    %v4743 = vld [vmem:[%s1191 + $0x28] sm:$0xff]
    %v4744 = vld [vmem:[%s1191 + $0x30] sm:$0xff]
    %v4745 = vld [vmem:[%s1191 + $0x38] sm:$0xff]
    %v4746 = vld [vmem:[%s1191 + $0x40] sm:$0xff]
    %v4747 = vld [vmem:[%s1191 + $0x48] sm:$0xff]
    %v4748 = vld [vmem:[%s1191 + $0x50] sm:$0xff]
    %v4749 = vld [vmem:[%s1191 + $0x58] sm:$0xff]
    %v4750 = vld [vmem:[%s1191 + $0x60] sm:$0xff]
    %v4751 = vld [vmem:[%s1191 + $0x68] sm:$0xff]
    %v4752 = vld [vmem:[%s1191 + $0x70] sm:$0xff]
    %v4753 = vld [vmem:[%s1191 + $0x78] sm:$0xff]
    %v4754 = vld [vmem:[%s1191 + $0x80] sm:$0xff]
    %v4755 = vld [vmem:[%s1191 + $0x88] sm:$0xff]
    %v4756 = vld [vmem:[%s1191 + $0x90] sm:$0xff]
    %v4757 = vld [vmem:[%s1191 + $0x98] sm:$0xff]
    %v4758 = vld [vmem:[%s1191 + $0xa0] sm:$0xff]
    %v4759 = vld [vmem:[%s1191 + $0xa8] sm:$0xff]
    %v4760 = vld [vmem:[%s1191 + $0xb0] sm:$0xff]
    %v4761 = vld [vmem:[%s1191 + $0xb8] sm:$0xff]
    %v4762 = vld [vmem:[%s1191 + $0xc0] sm:$0xff]
    %v4763 = vld [vmem:[%s1191 + $0xc8] sm:$0xff]
    %v4764 = vld [vmem:[%s1191 + $0xd0] sm:$0xff]
    %v4765 = vld [vmem:[%s1191 + $0xd8] sm:$0xff]
    %v4766 = vld [vmem:[%s1191 + $0xe0] sm:$0xff]
    %v4767 = vld [vmem:[%s1191 + $0xe8] sm:$0xff]
    %v4768 = vld [vmem:[%s1191 + $0xf0] sm:$0xff]
    %v4769 = vld [vmem:[%s1191 + $0xf8] sm:$0xff]
    %v4770 = vld [vmem:[%s1191 + $0x100] sm:$0xff]
    %v4771 = vld [vmem:[%s1191 + $0x108] sm:$0xff]
    %v4772 = vld [vmem:[%s1191 + $0x110] sm:$0xff]
    %v4773 = vld [vmem:[%s1191 + $0x118] sm:$0xff]
    %v4774 = vld [vmem:[%s1191 + $0x120] sm:$0xff]
    %v4775 = vld [vmem:[%s1191 + $0x128] sm:$0xff]
    %v4776 = vld [vmem:[%s1191 + $0x130] sm:$0xff]
    %v4777 = vld [vmem:[%s1191 + $0x138] sm:$0xff]
    %v4778 = vld [vmem:[%s1191 + $0x140] sm:$0xff]
    %v4779 = vld [vmem:[%s1191 + $0x148] sm:$0xff]
    %v4780 = vld [vmem:[%s1191 + $0x150] sm:$0xff]
    %v4781 = vld [vmem:[%s1191 + $0x158] sm:$0xff]
    %v4782 = vld [vmem:[%s1191 + $0x160] sm:$0xff]
    %v4783 = vld [vmem:[%s1191 + $0x168] sm:$0xff]
    %v4784 = vld [vmem:[%s1191 + $0x170] sm:$0xff]
    %v4785 = vld [vmem:[%s1191 + $0x178] sm:$0xff]
    %v4786 = vld [vmem:[%s1191 + $0x180] sm:$0xff]
    %v4787 = vld [vmem:[%s1191 + $0x188] sm:$0xff]
    %v4788 = vld [vmem:[%s1191 + $0x190] sm:$0xff]
    %v4789 = vld [vmem:[%s1191 + $0x198] sm:$0xff]
    %v4790 = vld [vmem:[%s1191 + $0x1a0] sm:$0xff]
    %v4791 = vld [vmem:[%s1191 + $0x1a8] sm:$0xff]
    %v4792 = vld [vmem:[%s1191 + $0x1b0] sm:$0xff]
    %v4793 = vld [vmem:[%s1191 + $0x1b8] sm:$0xff]
    %v4794 = vld [vmem:[%s1191 + $0x1c0] sm:$0xff]
    %v4795 = vld [vmem:[%s1191 + $0x1c8] sm:$0xff]
    %v4796 = vld [vmem:[%s1191 + $0x1d0] sm:$0xff]
    %v4797 = vld [vmem:[%s1191 + $0x1d8] sm:$0xff]
    %v4798 = vld [vmem:[%s1191 + $0x1e0] sm:$0xff]
    %v4799 = vld [vmem:[%s1191 + $0x1e8] sm:$0xff]
    %v4800 = vld [vmem:[%s1191 + $0x1f0] sm:$0xff]
    %v4801 = vld [vmem:[%s1191 + $0x1f8] sm:$0xff]
    %v4802 = vpack.c.bf16 %v4723, %v4722
    %v4803 = vpack.c.bf16 %v4725, %v4724
    %v4804 = vpack.c.bf16 %v4727, %v4726
    %v4805 = vpack.c.bf16 %v4729, %v4728
    %v4806 = vpack.c.bf16 %v4731, %v4730
    %v4807 = vpack.c.bf16 %v4733, %v4732
    %v4808 = vpack.c.bf16 %v4735, %v4734
    %v4809 = vpack.c.bf16 %v4737, %v4736
    %4810 = vmatprep.subr.bf16.mxu0 %v2477
    %4811 = vmatpush1.bf16.msra.mxu0 %v2476
    %4812 = vmatprep.subr.bf16.mxu0 %v2481
    %4813 = vmatpush1.bf16.msra.mxu0 %v2480
    %4814 = vmatprep.subr.bf16.mxu0 %v2485
    %4815 = vmatpush1.bf16.msra.mxu0 %v2484
    %4816 = vmatprep.subr.bf16.mxu0 %v2489
    %4817 = vmatpush1.bf16.msra.mxu0 %v2488
    %4818 = vmatprep.subr.bf16.mxu0 %v2493
    %4819 = vmatpush1.bf16.msra.mxu0 %v2492
    %4820 = vmatprep.subr.bf16.mxu0 %v2497
    %4821 = vmatpush1.bf16.msra.mxu0 %v2496
    %4822 = vmatprep.subr.bf16.mxu0 %v2501
    %4823 = vmatpush1.bf16.msra.mxu0 %v2500
    %4824 = vmatprep.subr.bf16.mxu0 %v2505
    %4825 = vmatpush1.bf16.msra.mxu0 %v2504
    %4826 = vmatprep.subr.bf16.mxu0 0
    %4827 = vmatpush1.bf16.msra.mxu0 0
    %4828 = vmatprep.subr.bf16.mxu0 0
    %4829 = vmatpush1.bf16.msra.mxu0 0
    %4830 = vmatprep.subr.bf16.mxu0 0
    %4831 = vmatpush1.bf16.msra.mxu0 0
    %4832 = vmatprep.subr.bf16.mxu0 0
    %4833 = vmatpush1.bf16.msra.mxu0 0
    %4834 = vmatprep.subr.bf16.mxu0 0
    %4835 = vmatpush1.bf16.msra.mxu0 0
    %4836 = vmatprep.subr.bf16.mxu0 0
    %4837 = vmatpush1.bf16.msra.mxu0 0
    %4838 = vmatprep.subr.bf16.mxu0 0
    %4839 = vmatpush1.bf16.msra.mxu0 0
    %4840 = vmatprep.subr.bf16.mxu0 0
    %4841 = vmatpush1.bf16.msra.mxu0 0
    %4842 = vmatprep.mubr.bf16.mxu0 0
    %4843 = vmatmul.mubr.bf16.gmra.mrb[0].mxu0 %v4802
    %v4844 = vpop.f32.mrb[0].mxu0
    %v4845 = vadd.f32 0.0, %v4844
    %v4846 = vpop.f32.mrb[0].mxu0
    %v4847 = vadd.f32 0.0, %v4846
    %v4848 = vpop.f32.mrb[0].mxu0
    %v4849 = vadd.f32 0.0, %v4848
    %v4850 = vpop.f32.mrb[0].mxu0
    %v4851 = vadd.f32 0.0, %v4850
    %4852 = vmatprep.mubr.bf16.mxu0 0
    %4853 = vmatmul.mubr.bf16.gmra.mrb[0].mxu0 %v4803
    %v4854 = vpop.f32.mrb[0].mxu0
    %v4855 = vadd.f32 0.0, %v4854
    %v4856 = vpop.f32.mrb[0].mxu0
    %v4857 = vadd.f32 0.0, %v4856
    %v4858 = vpop.f32.mrb[0].mxu0
    %v4859 = vadd.f32 0.0, %v4858
    %v4860 = vpop.f32.mrb[0].mxu0
    %v4861 = vadd.f32 0.0, %v4860
    %4862 = vmatprep.mubr.bf16.mxu0 0
    %4863 = vmatmul.mubr.bf16.gmra.mrb[0].mxu0 %v4804
    %v4864 = vpop.f32.mrb[0].mxu0
    %v4865 = vadd.f32 0.0, %v4864
    %v4866 = vpop.f32.mrb[0].mxu0
    %v4867 = vadd.f32 0.0, %v4866
    %v4868 = vpop.f32.mrb[0].mxu0
    %v4869 = vadd.f32 0.0, %v4868
    %v4870 = vpop.f32.mrb[0].mxu0
    %v4871 = vadd.f32 0.0, %v4870
    %4872 = vmatprep.mubr.bf16.mxu0 0
    %4873 = vmatmul.mubr.bf16.gmra.mrb[0].mxu0 %v4805
    %v4874 = vpop.f32.mrb[0].mxu0
    %v4875 = vadd.f32 0.0, %v4874
    %v4876 = vpop.f32.mrb[0].mxu0
    %v4877 = vadd.f32 0.0, %v4876
    %v4878 = vpop.f32.mrb[0].mxu0
    %v4879 = vadd.f32 0.0, %v4878
    %v4880 = vpop.f32.mrb[0].mxu0
    %v4881 = vadd.f32 0.0, %v4880
    %4882 = vmatprep.mubr.bf16.mxu0 0
    %4883 = vmatmul.mubr.bf16.gmra.mrb[0].mxu0 %v4806
    %v4884 = vpop.f32.mrb[0].mxu0
    %v4885 = vadd.f32 0.0, %v4884
    %v4886 = vpop.f32.mrb[0].mxu0
    %v4887 = vadd.f32 0.0, %v4886
    %v4888 = vpop.f32.mrb[0].mxu0
    %v4889 = vadd.f32 0.0, %v4888
    %v4890 = vpop.f32.mrb[0].mxu0
    %v4891 = vadd.f32 0.0, %v4890
    %4892 = vmatprep.mubr.bf16.mxu0 0
    %4893 = vmatmul.mubr.bf16.gmra.mrb[0].mxu0 %v4807
    %v4894 = vpop.f32.mrb[0].mxu0
    %v4895 = vadd.f32 0.0, %v4894
    %v4896 = vpop.f32.mrb[0].mxu0
    %v4897 = vadd.f32 0.0, %v4896
    %v4898 = vpop.f32.mrb[0].mxu0
    %v4899 = vadd.f32 0.0, %v4898
    %v4900 = vpop.f32.mrb[0].mxu0
    %v4901 = vadd.f32 0.0, %v4900
    %4902 = vmatprep.mubr.bf16.mxu0 0
    %4903 = vmatmul.mubr.bf16.gmra.mrb[0].mxu0 %v4808
    %v4904 = vpop.f32.mrb[0].mxu0
    %v4905 = vadd.f32 0.0, %v4904
    %v4906 = vpop.f32.mrb[0].mxu0
    %v4907 = vadd.f32 0.0, %v4906
    %v4908 = vpop.f32.mrb[0].mxu0
    %v4909 = vadd.f32 0.0, %v4908
    %v4910 = vpop.f32.mrb[0].mxu0
    %v4911 = vadd.f32 0.0, %v4910
    %4912 = vmatprep.mubr.bf16.mxu0 0
    %4913 = vmatmul.mubr.bf16.gmra.mrb[0].mxu0 %v4809
    %v4914 = vpop.f32.mrb[0].mxu0
    %v4915 = vadd.f32 0.0, %v4914
    %v4916 = vpop.f32.mrb[0].mxu0
    %v4917 = vadd.f32 0.0, %v4916
    %v4918 = vpop.f32.mrb[0].mxu0
    %v4919 = vadd.f32 0.0, %v4918
    %v4920 = vpop.f32.mrb[0].mxu0
    %v4921 = vadd.f32 0.0, %v4920
    %4922 = vdwg.mxu0
    %4923 = vmatprep.subr.bf16.mxu0 %v2479
    %4924 = vmatpush1.bf16.msra.mxu0 %v2478
    %4925 = vmatprep.subr.bf16.mxu0 %v2483
    %4926 = vmatpush1.bf16.msra.mxu0 %v2482
    %4927 = vmatprep.subr.bf16.mxu0 %v2487
    %4928 = vmatpush1.bf16.msra.mxu0 %v2486
    %4929 = vmatprep.subr.bf16.mxu0 %v2491
    %4930 = vmatpush1.bf16.msra.mxu0 %v2490
    %4931 = vmatprep.subr.bf16.mxu0 %v2495
    %4932 = vmatpush1.bf16.msra.mxu0 %v2494
    %4933 = vmatprep.subr.bf16.mxu0 %v2499
    %4934 = vmatpush1.bf16.msra.mxu0 %v2498
    %4935 = vmatprep.subr.bf16.mxu0 %v2503
    %4936 = vmatpush1.bf16.msra.mxu0 %v2502
    %4937 = vmatprep.subr.bf16.mxu0 %v2507
    %4938 = vmatpush1.bf16.msra.mxu0 %v2506
    %4939 = vmatprep.subr.bf16.mxu0 0
    %4940 = vmatpush1.bf16.msra.mxu0 0
    %4941 = vmatprep.subr.bf16.mxu0 0
    %4942 = vmatpush1.bf16.msra.mxu0 0
    %4943 = vmatprep.subr.bf16.mxu0 0
    %4944 = vmatpush1.bf16.msra.mxu0 0
    %4945 = vmatprep.subr.bf16.mxu0 0
    %4946 = vmatpush1.bf16.msra.mxu0 0
    %4947 = vmatprep.subr.bf16.mxu0 0
    %4948 = vmatpush1.bf16.msra.mxu0 0
    %4949 = vmatprep.subr.bf16.mxu0 0
    %4950 = vmatpush1.bf16.msra.mxu0 0
    %4951 = vmatprep.subr.bf16.mxu0 0
    %4952 = vmatpush1.bf16.msra.mxu0 0
    %4953 = vmatprep.subr.bf16.mxu0 0
    %4954 = vmatpush1.bf16.msra.mxu0 0
    %4955 = vmatprep.mubr.bf16.mxu0 0
    %4956 = vmatmul.mubr.bf16.gmra.mrb[0].mxu0 %v4802
    %v4957 = vpop.f32.mrb[0].mxu0
    %v4958 = vadd.f32 0.0, %v4957
    %v4959 = vpop.f32.mrb[0].mxu0
    %v4960 = vadd.f32 0.0, %v4959
    %v4961 = vpop.f32.mrb[0].mxu0
    %v4962 = vadd.f32 0.0, %v4961
    %v4963 = vpop.f32.mrb[0].mxu0
    %v4964 = vadd.f32 0.0, %v4963
    %4965 = vmatprep.mubr.bf16.mxu0 0
    %4966 = vmatmul.mubr.bf16.gmra.mrb[0].mxu0 %v4803
    %v4967 = vpop.f32.mrb[0].mxu0
    %v4968 = vadd.f32 0.0, %v4967
    %v4969 = vpop.f32.mrb[0].mxu0
    %v4970 = vadd.f32 0.0, %v4969
    %v4971 = vpop.f32.mrb[0].mxu0
    %v4972 = vadd.f32 0.0, %v4971
    %v4973 = vpop.f32.mrb[0].mxu0
    %v4974 = vadd.f32 0.0, %v4973
    %4975 = vmatprep.mubr.bf16.mxu0 0
    %4976 = vmatmul.mubr.bf16.gmra.mrb[0].mxu0 %v4804
    %v4977 = vpop.f32.mrb[0].mxu0
    %v4978 = vadd.f32 0.0, %v4977
    %v4979 = vpop.f32.mrb[0].mxu0
    %v4980 = vadd.f32 0.0, %v4979
    %v4981 = vpop.f32.mrb[0].mxu0
    %v4982 = vadd.f32 0.0, %v4981
    %v4983 = vpop.f32.mrb[0].mxu0
    %v4984 = vadd.f32 0.0, %v4983
    %4985 = vmatprep.mubr.bf16.mxu0 0
    %4986 = vmatmul.mubr.bf16.gmra.mrb[0].mxu0 %v4805
    %v4987 = vpop.f32.mrb[0].mxu0
    %v4988 = vadd.f32 0.0, %v4987
    %v4989 = vpop.f32.mrb[0].mxu0
    %v4990 = vadd.f32 0.0, %v4989
    %v4991 = vpop.f32.mrb[0].mxu0
    %v4992 = vadd.f32 0.0, %v4991
    %v4993 = vpop.f32.mrb[0].mxu0
    %v4994 = vadd.f32 0.0, %v4993
    %4995 = vmatprep.mubr.bf16.mxu0 0
    %4996 = vmatmul.mubr.bf16.gmra.mrb[0].mxu0 %v4806
    %v4997 = vpop.f32.mrb[0].mxu0
    %v4998 = vadd.f32 0.0, %v4997
    %v4999 = vpop.f32.mrb[0].mxu0
    %v5000 = vadd.f32 0.0, %v4999
    %v5001 = vpop.f32.mrb[0].mxu0
    %v5002 = vadd.f32 0.0, %v5001
    %v5003 = vpop.f32.mrb[0].mxu0
    %v5004 = vadd.f32 0.0, %v5003
    %5005 = vmatprep.mubr.bf16.mxu0 0
    %5006 = vmatmul.mubr.bf16.gmra.mrb[0].mxu0 %v4807
    %v5007 = vpop.f32.mrb[0].mxu0
    %v5008 = vadd.f32 0.0, %v5007
    %v5009 = vpop.f32.mrb[0].mxu0
    %v5010 = vadd.f32 0.0, %v5009
    %v5011 = vpop.f32.mrb[0].mxu0
    %v5012 = vadd.f32 0.0, %v5011
    %v5013 = vpop.f32.mrb[0].mxu0
    %v5014 = vadd.f32 0.0, %v5013
    %5015 = vmatprep.mubr.bf16.mxu0 0
    %5016 = vmatmul.mubr.bf16.gmra.mrb[0].mxu0 %v4808
    %v5017 = vpop.f32.mrb[0].mxu0
    %v5018 = vadd.f32 0.0, %v5017
    %v5019 = vpop.f32.mrb[0].mxu0
    %v5020 = vadd.f32 0.0, %v5019
    %v5021 = vpop.f32.mrb[0].mxu0
    %v5022 = vadd.f32 0.0, %v5021
    %v5023 = vpop.f32.mrb[0].mxu0
    %v5024 = vadd.f32 0.0, %v5023
    %5025 = vmatprep.mubr.bf16.mxu0 0
    %5026 = vmatmul.mubr.bf16.gmra.mrb[0].mxu0 %v4809
    %v5027 = vpop.f32.mrb[0].mxu0
    %v5028 = vadd.f32 0.0, %v5027
    %v5029 = vpop.f32.mrb[0].mxu0
    %v5030 = vadd.f32 0.0, %v5029
    %v5031 = vpop.f32.mrb[0].mxu0
    %v5032 = vadd.f32 0.0, %v5031
    %v5033 = vpop.f32.mrb[0].mxu0
    %v5034 = vadd.f32 0.0, %v5033
    %5035 = vdwg.mxu0
    %v5036 = vadd.f32 %v4738, %v4845
    %v5037 = vadd.f32 %v4739, %v4847
    %v5038 = vadd.f32 %v4740, %v4958
    %v5039 = vadd.f32 %v4741, %v4960
    %v5040 = vadd.f32 %v4742, %v4849
    %v5041 = vadd.f32 %v4743, %v4851
    %v5042 = vadd.f32 %v4744, %v4962
    %v5043 = vadd.f32 %v4745, %v4964
    %v5044 = vadd.f32 %v4746, %v4855
    %v5045 = vadd.f32 %v4747, %v4857
    %v5046 = vadd.f32 %v4748, %v4968
    %v5047 = vadd.f32 %v4749, %v4970
    %v5048 = vadd.f32 %v4750, %v4859
    %v5049 = vadd.f32 %v4751, %v4861
    %v5050 = vadd.f32 %v4752, %v4972
    %v5051 = vadd.f32 %v4753, %v4974
    %v5052 = vadd.f32 %v4754, %v4865
    %v5053 = vadd.f32 %v4755, %v4867
    %v5054 = vadd.f32 %v4756, %v4978
    %v5055 = vadd.f32 %v4757, %v4980
    %v5056 = vadd.f32 %v4758, %v4869
    %v5057 = vadd.f32 %v4759, %v4871
    %v5058 = vadd.f32 %v4760, %v4982
    %v5059 = vadd.f32 %v4761, %v4984
    %v5060 = vadd.f32 %v4762, %v4875
    %v5061 = vadd.f32 %v4763, %v4877
    %v5062 = vadd.f32 %v4764, %v4988
    %v5063 = vadd.f32 %v4765, %v4990
    %v5064 = vadd.f32 %v4766, %v4879
    %v5065 = vadd.f32 %v4767, %v4881
    %v5066 = vadd.f32 %v4768, %v4992
    %v5067 = vadd.f32 %v4769, %v4994
    %v5068 = vadd.f32 %v4770, %v4885
    %v5069 = vadd.f32 %v4771, %v4887
    %v5070 = vadd.f32 %v4772, %v4998
    %v5071 = vadd.f32 %v4773, %v5000
    %v5072 = vadd.f32 %v4774, %v4889
    %v5073 = vadd.f32 %v4775, %v4891
    %v5074 = vadd.f32 %v4776, %v5002
    %v5075 = vadd.f32 %v4777, %v5004
    %v5076 = vadd.f32 %v4778, %v4895
    %v5077 = vadd.f32 %v4779, %v4897
    %v5078 = vadd.f32 %v4780, %v5008
    %v5079 = vadd.f32 %v4781, %v5010
    %v5080 = vadd.f32 %v4782, %v4899
    %v5081 = vadd.f32 %v4783, %v4901
    %v5082 = vadd.f32 %v4784, %v5012
    %v5083 = vadd.f32 %v4785, %v5014
    %v5084 = vadd.f32 %v4786, %v4905
    %v5085 = vadd.f32 %v4787, %v4907
    %v5086 = vadd.f32 %v4788, %v5018
    %v5087 = vadd.f32 %v4789, %v5020
    %v5088 = vadd.f32 %v4790, %v4909
    %v5089 = vadd.f32 %v4791, %v4911
    %v5090 = vadd.f32 %v4792, %v5022
    %v5091 = vadd.f32 %v4793, %v5024
    %v5092 = vadd.f32 %v4794, %v4915
    %v5093 = vadd.f32 %v4795, %v4917
    %v5094 = vadd.f32 %v4796, %v5028
    %v5095 = vadd.f32 %v4797, %v5030
    %v5096 = vadd.f32 %v4798, %v4919
    %v5097 = vadd.f32 %v4799, %v4921
    %v5098 = vadd.f32 %v4800, %v5032
    %v5099 = vadd.f32 %v4801, %v5034
    %v5100 = vxor.u32 %v5036, 2147483648
    %v5101 = vxor.u32 %v5040, 2147483648
    %v5102 = vxor.u32 %v5044, 2147483648
    %v5103 = vxor.u32 %v5048, 2147483648
    %v5104 = vxor.u32 %v5052, 2147483648
    %v5105 = vxor.u32 %v5056, 2147483648
    %v5106 = vxor.u32 %v5060, 2147483648
    %v5107 = vxor.u32 %v5064, 2147483648
    %v5108 = vxor.u32 %v5068, 2147483648
    %v5109 = vxor.u32 %v5072, 2147483648
    %v5110 = vxor.u32 %v5076, 2147483648
    %v5111 = vxor.u32 %v5080, 2147483648
    %v5112 = vxor.u32 %v5084, 2147483648
    %v5113 = vxor.u32 %v5088, 2147483648
    %v5114 = vxor.u32 %v5092, 2147483648
    %v5115 = vxor.u32 %v5096, 2147483648
    %v5116 = vmul.f32 %v5100, 1.442695
    %v5117 = vpow.pop %v5116
    %v5118 = vmul.f32 %v5101, 1.442695
    %v5119 = vpow.pop %v5118
    %v5120 = vmul.f32 %v5102, 1.442695
    %v5121 = vpow.pop %v5120
    %v5122 = vmul.f32 %v5103, 1.442695
    %v5123 = vpow.pop %v5122
    %v5124 = vmul.f32 %v5104, 1.442695
    %v5125 = vpow.pop %v5124
    %v5126 = vmul.f32 %v5105, 1.442695
    %v5127 = vpow.pop %v5126
    %v5128 = vmul.f32 %v5106, 1.442695
    %v5129 = vpow.pop %v5128
    %v5130 = vmul.f32 %v5107, 1.442695
    %v5131 = vpow.pop %v5130
    %v5132 = vmul.f32 %v5108, 1.442695
    %v5133 = vpow.pop %v5132
    %v5134 = vmul.f32 %v5109, 1.442695
    %v5135 = vpow.pop %v5134
    %v5136 = vmul.f32 %v5110, 1.442695
    %v5137 = vpow.pop %v5136
    %v5138 = vmul.f32 %v5111, 1.442695
    %v5139 = vpow.pop %v5138
    %v5140 = vmul.f32 %v5112, 1.442695
    %v5141 = vpow.pop %v5140
    %v5142 = vmul.f32 %v5113, 1.442695
    %v5143 = vpow.pop %v5142
    %v5144 = vmul.f32 %v5114, 1.442695
    %v5145 = vpow.pop %v5144
    %v5146 = vmul.f32 %v5115, 1.442695
    %v5147 = vpow.pop %v5146
    %v5148 = vadd.f32 %v5117, 1.0
    %v5149 = vadd.f32 %v5119, 1.0
    %v5150 = vadd.f32 %v5121, 1.0
    %v5151 = vadd.f32 %v5123, 1.0
    %v5152 = vadd.f32 %v5125, 1.0
    %v5153 = vadd.f32 %v5127, 1.0
    %v5154 = vadd.f32 %v5129, 1.0
    %v5155 = vadd.f32 %v5131, 1.0
    %v5156 = vadd.f32 %v5133, 1.0
    %v5157 = vadd.f32 %v5135, 1.0
    %v5158 = vadd.f32 %v5137, 1.0
    %v5159 = vadd.f32 %v5139, 1.0
    %v5160 = vadd.f32 %v5141, 1.0
    %v5161 = vadd.f32 %v5143, 1.0
    %v5162 = vadd.f32 %v5145, 1.0
    %v5163 = vadd.f32 %v5147, 1.0
    %v5164 = vrcp.pop %v5148
    %v5165 = vmul.f32 1.0, %v5164
    %v5166 = vrcp.pop %v5149
    %v5167 = vmul.f32 1.0, %v5166
    %v5168 = vrcp.pop %v5150
    %v5169 = vmul.f32 1.0, %v5168
    %v5170 = vrcp.pop %v5151
    %v5171 = vmul.f32 1.0, %v5170
    %v5172 = vrcp.pop %v5152
    %v5173 = vmul.f32 1.0, %v5172
    %v5174 = vrcp.pop %v5153
    %v5175 = vmul.f32 1.0, %v5174
    %v5176 = vrcp.pop %v5154
    %v5177 = vmul.f32 1.0, %v5176
    %v5178 = vrcp.pop %v5155
    %v5179 = vmul.f32 1.0, %v5178
    %v5180 = vrcp.pop %v5156
    %v5181 = vmul.f32 1.0, %v5180
    %v5182 = vrcp.pop %v5157
    %v5183 = vmul.f32 1.0, %v5182
    %v5184 = vrcp.pop %v5158
    %v5185 = vmul.f32 1.0, %v5184
    %v5186 = vrcp.pop %v5159
    %v5187 = vmul.f32 1.0, %v5186
    %v5188 = vrcp.pop %v5160
    %v5189 = vmul.f32 1.0, %v5188
    %v5190 = vrcp.pop %v5161
    %v5191 = vmul.f32 1.0, %v5190
    %v5192 = vrcp.pop %v5162
    %v5193 = vmul.f32 1.0, %v5192
    %v5194 = vrcp.pop %v5163
    %v5195 = vmul.f32 1.0, %v5194
    %v5196 = vxor.u32 %v5037, 2147483648
    %v5197 = vxor.u32 %v5041, 2147483648
    %v5198 = vxor.u32 %v5045, 2147483648
    %v5199 = vxor.u32 %v5049, 2147483648
    %v5200 = vxor.u32 %v5053, 2147483648
    %v5201 = vxor.u32 %v5057, 2147483648
    %v5202 = vxor.u32 %v5061, 2147483648
    %v5203 = vxor.u32 %v5065, 2147483648
    %v5204 = vxor.u32 %v5069, 2147483648
    %v5205 = vxor.u32 %v5073, 2147483648
    %v5206 = vxor.u32 %v5077, 2147483648
    %v5207 = vxor.u32 %v5081, 2147483648
    %v5208 = vxor.u32 %v5085, 2147483648
    %v5209 = vxor.u32 %v5089, 2147483648
    %v5210 = vxor.u32 %v5093, 2147483648
    %v5211 = vxor.u32 %v5097, 2147483648
    %v5212 = vmul.f32 %v5196, 1.442695
    %v5213 = vpow.pop %v5212
    %v5214 = vmul.f32 %v5197, 1.442695
    %v5215 = vpow.pop %v5214
    %v5216 = vmul.f32 %v5198, 1.442695
    %v5217 = vpow.pop %v5216
    %v5218 = vmul.f32 %v5199, 1.442695
    %v5219 = vpow.pop %v5218
    %v5220 = vmul.f32 %v5200, 1.442695
    %v5221 = vpow.pop %v5220
    %v5222 = vmul.f32 %v5201, 1.442695
    %v5223 = vpow.pop %v5222
    %v5224 = vmul.f32 %v5202, 1.442695
    %v5225 = vpow.pop %v5224
    %v5226 = vmul.f32 %v5203, 1.442695
    %v5227 = vpow.pop %v5226
    %v5228 = vmul.f32 %v5204, 1.442695
    %v5229 = vpow.pop %v5228
    %v5230 = vmul.f32 %v5205, 1.442695
    %v5231 = vpow.pop %v5230
    %v5232 = vmul.f32 %v5206, 1.442695
    %v5233 = vpow.pop %v5232
    %v5234 = vmul.f32 %v5207, 1.442695
    %v5235 = vpow.pop %v5234
    %v5236 = vmul.f32 %v5208, 1.442695
    %v5237 = vpow.pop %v5236
    %v5238 = vmul.f32 %v5209, 1.442695
    %v5239 = vpow.pop %v5238
    %v5240 = vmul.f32 %v5210, 1.442695
    %v5241 = vpow.pop %v5240
    %v5242 = vmul.f32 %v5211, 1.442695
    %v5243 = vpow.pop %v5242
    %v5244 = vadd.f32 %v5213, 1.0
    %v5245 = vadd.f32 %v5215, 1.0
    %v5246 = vadd.f32 %v5217, 1.0
    %v5247 = vadd.f32 %v5219, 1.0
    %v5248 = vadd.f32 %v5221, 1.0
    %v5249 = vadd.f32 %v5223, 1.0
    %v5250 = vadd.f32 %v5225, 1.0
    %v5251 = vadd.f32 %v5227, 1.0
    %v5252 = vadd.f32 %v5229, 1.0
    %v5253 = vadd.f32 %v5231, 1.0
    %v5254 = vadd.f32 %v5233, 1.0
    %v5255 = vadd.f32 %v5235, 1.0
    %v5256 = vadd.f32 %v5237, 1.0
    %v5257 = vadd.f32 %v5239, 1.0
    %v5258 = vadd.f32 %v5241, 1.0
    %v5259 = vadd.f32 %v5243, 1.0
    %v5260 = vrcp.pop %v5244
    %v5261 = vmul.f32 1.0, %v5260
    %v5262 = vrcp.pop %v5245
    %v5263 = vmul.f32 1.0, %v5262
    %v5264 = vrcp.pop %v5246
    %v5265 = vmul.f32 1.0, %v5264
    %v5266 = vrcp.pop %v5247
    %v5267 = vmul.f32 1.0, %v5266
    %v5268 = vrcp.pop %v5248
    %v5269 = vmul.f32 1.0, %v5268
    %v5270 = vrcp.pop %v5249
    %v5271 = vmul.f32 1.0, %v5270
    %v5272 = vrcp.pop %v5250
    %v5273 = vmul.f32 1.0, %v5272
    %v5274 = vrcp.pop %v5251
    %v5275 = vmul.f32 1.0, %v5274
    %v5276 = vrcp.pop %v5252
    %v5277 = vmul.f32 1.0, %v5276
    %v5278 = vrcp.pop %v5253
    %v5279 = vmul.f32 1.0, %v5278
    %v5280 = vrcp.pop %v5254
    %v5281 = vmul.f32 1.0, %v5280
    %v5282 = vrcp.pop %v5255
    %v5283 = vmul.f32 1.0, %v5282
    %v5284 = vrcp.pop %v5256
    %v5285 = vmul.f32 1.0, %v5284
    %v5286 = vrcp.pop %v5257
    %v5287 = vmul.f32 1.0, %v5286
    %v5288 = vrcp.pop %v5258
    %v5289 = vmul.f32 1.0, %v5288
    %v5290 = vrcp.pop %v5259
    %v5291 = vmul.f32 1.0, %v5290
    %v5292 = vtanh.pop %v5038
    %v5293 = vtanh.pop %v5042
    %v5294 = vtanh.pop %v5046
    %v5295 = vtanh.pop %v5050
    %v5296 = vtanh.pop %v5054
    %v5297 = vtanh.pop %v5058
    %v5298 = vtanh.pop %v5062
    %v5299 = vtanh.pop %v5066
    %v5300 = vtanh.pop %v5070
    %v5301 = vtanh.pop %v5074
    %v5302 = vtanh.pop %v5078
    %v5303 = vtanh.pop %v5082
    %v5304 = vtanh.pop %v5086
    %v5305 = vtanh.pop %v5090
    %v5306 = vtanh.pop %v5094
    %v5307 = vtanh.pop %v5098
    %v5308 = vxor.u32 %v5039, 2147483648
    %v5309 = vxor.u32 %v5043, 2147483648
    %v5310 = vxor.u32 %v5047, 2147483648
    %v5311 = vxor.u32 %v5051, 2147483648
    %v5312 = vxor.u32 %v5055, 2147483648
    %v5313 = vxor.u32 %v5059, 2147483648
    %v5314 = vxor.u32 %v5063, 2147483648
    %v5315 = vxor.u32 %v5067, 2147483648
    %v5316 = vxor.u32 %v5071, 2147483648
    %v5317 = vxor.u32 %v5075, 2147483648
    %v5318 = vxor.u32 %v5079, 2147483648
    %v5319 = vxor.u32 %v5083, 2147483648
    %v5320 = vxor.u32 %v5087, 2147483648
    %v5321 = vxor.u32 %v5091, 2147483648
    %v5322 = vxor.u32 %v5095, 2147483648
    %v5323 = vxor.u32 %v5099, 2147483648
    %v5324 = vmul.f32 %v5308, 1.442695
    %v5325 = vpow.pop %v5324
    %v5326 = vmul.f32 %v5309, 1.442695
    %v5327 = vpow.pop %v5326
    %v5328 = vmul.f32 %v5310, 1.442695
    %v5329 = vpow.pop %v5328
    %v5330 = vmul.f32 %v5311, 1.442695
    %v5331 = vpow.pop %v5330
    %v5332 = vmul.f32 %v5312, 1.442695
    %v5333 = vpow.pop %v5332
    %v5334 = vmul.f32 %v5313, 1.442695
    %v5335 = vpow.pop %v5334
    %v5336 = vmul.f32 %v5314, 1.442695
    %v5337 = vpow.pop %v5336
    %v5338 = vmul.f32 %v5315, 1.442695
    %v5339 = vpow.pop %v5338
    %v5340 = vmul.f32 %v5316, 1.442695
    %v5341 = vpow.pop %v5340
    %v5342 = vmul.f32 %v5317, 1.442695
    %v5343 = vpow.pop %v5342
    %v5344 = vmul.f32 %v5318, 1.442695
    %v5345 = vpow.pop %v5344
    %v5346 = vmul.f32 %v5319, 1.442695
    %v5347 = vpow.pop %v5346
    %v5348 = vmul.f32 %v5320, 1.442695
    %v5349 = vpow.pop %v5348
    %v5350 = vmul.f32 %v5321, 1.442695
    %v5351 = vpow.pop %v5350
    %v5352 = vmul.f32 %v5322, 1.442695
    %v5353 = vpow.pop %v5352
    %v5354 = vmul.f32 %v5323, 1.442695
    %v5355 = vpow.pop %v5354
    %v5356 = vadd.f32 %v5325, 1.0
    %v5357 = vadd.f32 %v5327, 1.0
    %v5358 = vadd.f32 %v5329, 1.0
    %v5359 = vadd.f32 %v5331, 1.0
    %v5360 = vadd.f32 %v5333, 1.0
    %v5361 = vadd.f32 %v5335, 1.0
    %v5362 = vadd.f32 %v5337, 1.0
    %v5363 = vadd.f32 %v5339, 1.0
    %v5364 = vadd.f32 %v5341, 1.0
    %v5365 = vadd.f32 %v5343, 1.0
    %v5366 = vadd.f32 %v5345, 1.0
    %v5367 = vadd.f32 %v5347, 1.0
    %v5368 = vadd.f32 %v5349, 1.0
    %v5369 = vadd.f32 %v5351, 1.0
    %v5370 = vadd.f32 %v5353, 1.0
    %v5371 = vadd.f32 %v5355, 1.0
    %v5372 = vrcp.pop %v5356
    %v5373 = vmul.f32 1.0, %v5372
    %v5374 = vrcp.pop %v5357
    %v5375 = vmul.f32 1.0, %v5374
    %v5376 = vrcp.pop %v5358
    %v5377 = vmul.f32 1.0, %v5376
    %v5378 = vrcp.pop %v5359
    %v5379 = vmul.f32 1.0, %v5378
    %v5380 = vrcp.pop %v5360
    %v5381 = vmul.f32 1.0, %v5380
    %v5382 = vrcp.pop %v5361
    %v5383 = vmul.f32 1.0, %v5382
    %v5384 = vrcp.pop %v5362
    %v5385 = vmul.f32 1.0, %v5384
    %v5386 = vrcp.pop %v5363
    %v5387 = vmul.f32 1.0, %v5386
    %v5388 = vrcp.pop %v5364
    %v5389 = vmul.f32 1.0, %v5388
    %v5390 = vrcp.pop %v5365
    %v5391 = vmul.f32 1.0, %v5390
    %v5392 = vrcp.pop %v5366
    %v5393 = vmul.f32 1.0, %v5392
    %v5394 = vrcp.pop %v5367
    %v5395 = vmul.f32 1.0, %v5394
    %v5396 = vrcp.pop %v5368
    %v5397 = vmul.f32 1.0, %v5396
    %v5398 = vrcp.pop %v5369
    %v5399 = vmul.f32 1.0, %v5398
    %v5400 = vrcp.pop %v5370
    %v5401 = vmul.f32 1.0, %v5400
    %v5402 = vrcp.pop %v5371
    %v5403 = vmul.f32 1.0, %v5402
    %v5404 = vmul.f32 %v5261, %v4690
    %v5405 = vmul.f32 %v5263, %v4691
    %v5406 = vmul.f32 %v5265, %v4692
    %v5407 = vmul.f32 %v5267, %v4693
    %v5408 = vmul.f32 %v5269, %v4694
    %v5409 = vmul.f32 %v5271, %v4695
    %v5410 = vmul.f32 %v5273, %v4696
    %v5411 = vmul.f32 %v5275, %v4697
    %v5412 = vmul.f32 %v5277, %v4698
    %v5413 = vmul.f32 %v5279, %v4699
    %v5414 = vmul.f32 %v5281, %v4700
    %v5415 = vmul.f32 %v5283, %v4701
    %v5416 = vmul.f32 %v5285, %v4702
    %v5417 = vmul.f32 %v5287, %v4703
    %v5418 = vmul.f32 %v5289, %v4704
    %v5419 = vmul.f32 %v5291, %v4705
    %v5420 = vmul.f32 %v5165, %v5292
    %v5421 = vmul.f32 %v5167, %v5293
    %v5422 = vmul.f32 %v5169, %v5294
    %v5423 = vmul.f32 %v5171, %v5295
    %v5424 = vmul.f32 %v5173, %v5296
    %v5425 = vmul.f32 %v5175, %v5297
    %v5426 = vmul.f32 %v5177, %v5298
    %v5427 = vmul.f32 %v5179, %v5299
    %v5428 = vmul.f32 %v5181, %v5300
    %v5429 = vmul.f32 %v5183, %v5301
    %v5430 = vmul.f32 %v5185, %v5302
    %v5431 = vmul.f32 %v5187, %v5303
    %v5432 = vmul.f32 %v5189, %v5304
    %v5433 = vmul.f32 %v5191, %v5305
    %v5434 = vmul.f32 %v5193, %v5306
    %v5435 = vmul.f32 %v5195, %v5307
    %v5436 = vadd.f32 %v5404, %v5420
    %v5437 = vadd.f32 %v5405, %v5421
    %v5438 = vadd.f32 %v5406, %v5422
    %v5439 = vadd.f32 %v5407, %v5423
    %v5440 = vadd.f32 %v5408, %v5424
    %v5441 = vadd.f32 %v5409, %v5425
    %v5442 = vadd.f32 %v5410, %v5426
    %v5443 = vadd.f32 %v5411, %v5427
    %v5444 = vadd.f32 %v5412, %v5428
    %v5445 = vadd.f32 %v5413, %v5429
    %v5446 = vadd.f32 %v5414, %v5430
    %v5447 = vadd.f32 %v5415, %v5431
    %v5448 = vadd.f32 %v5416, %v5432
    %v5449 = vadd.f32 %v5417, %v5433
    %v5450 = vadd.f32 %v5418, %v5434
    %v5451 = vadd.f32 %v5419, %v5435
    %v5452 = vtanh.pop %v5436
    %v5453 = vtanh.pop %v5437
    %v5454 = vtanh.pop %v5438
    %v5455 = vtanh.pop %v5439
    %v5456 = vtanh.pop %v5440
    %v5457 = vtanh.pop %v5441
    %v5458 = vtanh.pop %v5442
    %v5459 = vtanh.pop %v5443
    %v5460 = vtanh.pop %v5444
    %v5461 = vtanh.pop %v5445
    %v5462 = vtanh.pop %v5446
    %v5463 = vtanh.pop %v5447
    %v5464 = vtanh.pop %v5448
    %v5465 = vtanh.pop %v5449
    %v5466 = vtanh.pop %v5450
    %v5467 = vtanh.pop %v5451
    %v5468 = vmul.f32 %v5373, %v5452
    %v5469 = vmul.f32 %v5375, %v5453
    %v5470 = vmul.f32 %v5377, %v5454
    %v5471 = vmul.f32 %v5379, %v5455
    %v5472 = vmul.f32 %v5381, %v5456
    %v5473 = vmul.f32 %v5383, %v5457
    %v5474 = vmul.f32 %v5385, %v5458
    %v5475 = vmul.f32 %v5387, %v5459
    %v5476 = vmul.f32 %v5389, %v5460
    %v5477 = vmul.f32 %v5391, %v5461
    %v5478 = vmul.f32 %v5393, %v5462
    %v5479 = vmul.f32 %v5395, %v5463
    %v5480 = vmul.f32 %v5397, %v5464
    %v5481 = vmul.f32 %v5399, %v5465
    %v5482 = vmul.f32 %v5401, %v5466
    %v5483 = vmul.f32 %v5403, %v5467
    %v5484 = vld [vmem:[%s1480] sm:$0xff]
    %v5485 = vld [vmem:[%s1480 + $0x8] sm:$0xff]
    %v5486 = vld [vmem:[%s1480 + $0x10] sm:$0xff]
    %v5487 = vld [vmem:[%s1480 + $0x18] sm:$0xff]
    %v5488 = vld [vmem:[%s1480 + $0x20] sm:$0xff]
    %v5489 = vld [vmem:[%s1480 + $0x28] sm:$0xff]
    %v5490 = vld [vmem:[%s1480 + $0x30] sm:$0xff]
    %v5491 = vld [vmem:[%s1480 + $0x38] sm:$0xff]
    %v5492 = vld [vmem:[%s1480 + $0x40] sm:$0xff]
    %v5493 = vld [vmem:[%s1480 + $0x48] sm:$0xff]
    %v5494 = vld [vmem:[%s1480 + $0x50] sm:$0xff]
    %v5495 = vld [vmem:[%s1480 + $0x58] sm:$0xff]
    %v5496 = vld [vmem:[%s1480 + $0x60] sm:$0xff]
    %v5497 = vld [vmem:[%s1480 + $0x68] sm:$0xff]
    %v5498 = vld [vmem:[%s1480 + $0x70] sm:$0xff]
    %v5499 = vld [vmem:[%s1480 + $0x78] sm:$0xff]
    %v5500 = vld [vmem:[%s1480 + $0x80] sm:$0xff]
    %v5501 = vld [vmem:[%s1480 + $0x88] sm:$0xff]
    %v5502 = vld [vmem:[%s1480 + $0x90] sm:$0xff]
    %v5503 = vld [vmem:[%s1480 + $0x98] sm:$0xff]
    %v5504 = vld [vmem:[%s1480 + $0xa0] sm:$0xff]
    %v5505 = vld [vmem:[%s1480 + $0xa8] sm:$0xff]
    %v5506 = vld [vmem:[%s1480 + $0xb0] sm:$0xff]
    %v5507 = vld [vmem:[%s1480 + $0xb8] sm:$0xff]
    %v5508 = vld [vmem:[%s1480 + $0xc0] sm:$0xff]
    %v5509 = vld [vmem:[%s1480 + $0xc8] sm:$0xff]
    %v5510 = vld [vmem:[%s1480 + $0xd0] sm:$0xff]
    %v5511 = vld [vmem:[%s1480 + $0xd8] sm:$0xff]
    %v5512 = vld [vmem:[%s1480 + $0xe0] sm:$0xff]
    %v5513 = vld [vmem:[%s1480 + $0xe8] sm:$0xff]
    %v5514 = vld [vmem:[%s1480 + $0xf0] sm:$0xff]
    %v5515 = vld [vmem:[%s1480 + $0xf8] sm:$0xff]
    %v5516 = vld [vmem:[%s1480 + $0x100] sm:$0xff]
    %v5517 = vld [vmem:[%s1480 + $0x108] sm:$0xff]
    %v5518 = vld [vmem:[%s1480 + $0x110] sm:$0xff]
    %v5519 = vld [vmem:[%s1480 + $0x118] sm:$0xff]
    %v5520 = vld [vmem:[%s1480 + $0x120] sm:$0xff]
    %v5521 = vld [vmem:[%s1480 + $0x128] sm:$0xff]
    %v5522 = vld [vmem:[%s1480 + $0x130] sm:$0xff]
    %v5523 = vld [vmem:[%s1480 + $0x138] sm:$0xff]
    %v5524 = vld [vmem:[%s1480 + $0x140] sm:$0xff]
    %v5525 = vld [vmem:[%s1480 + $0x148] sm:$0xff]
    %v5526 = vld [vmem:[%s1480 + $0x150] sm:$0xff]
    %v5527 = vld [vmem:[%s1480 + $0x158] sm:$0xff]
    %v5528 = vld [vmem:[%s1480 + $0x160] sm:$0xff]
    %v5529 = vld [vmem:[%s1480 + $0x168] sm:$0xff]
    %v5530 = vld [vmem:[%s1480 + $0x170] sm:$0xff]
    %v5531 = vld [vmem:[%s1480 + $0x178] sm:$0xff]
    %v5532 = vld [vmem:[%s1480 + $0x180] sm:$0xff]
    %v5533 = vld [vmem:[%s1480 + $0x188] sm:$0xff]
    %v5534 = vld [vmem:[%s1480 + $0x190] sm:$0xff]
    %v5535 = vld [vmem:[%s1480 + $0x198] sm:$0xff]
    %v5536 = vld [vmem:[%s1480 + $0x1a0] sm:$0xff]
    %v5537 = vld [vmem:[%s1480 + $0x1a8] sm:$0xff]
    %v5538 = vld [vmem:[%s1480 + $0x1b0] sm:$0xff]
    %v5539 = vld [vmem:[%s1480 + $0x1b8] sm:$0xff]
    %v5540 = vld [vmem:[%s1480 + $0x1c0] sm:$0xff]
    %v5541 = vld [vmem:[%s1480 + $0x1c8] sm:$0xff]
    %v5542 = vld [vmem:[%s1480 + $0x1d0] sm:$0xff]
    %v5543 = vld [vmem:[%s1480 + $0x1d8] sm:$0xff]
    %v5544 = vld [vmem:[%s1480 + $0x1e0] sm:$0xff]
    %v5545 = vld [vmem:[%s1480 + $0x1e8] sm:$0xff]
    %v5546 = vld [vmem:[%s1480 + $0x1f0] sm:$0xff]
    %v5547 = vld [vmem:[%s1480 + $0x1f8] sm:$0xff]
    %v5548 = vpack.c.bf16 %v5469, %v5468
    %v5549 = vpack.c.bf16 %v5471, %v5470
    %v5550 = vpack.c.bf16 %v5473, %v5472
    %v5551 = vpack.c.bf16 %v5475, %v5474
    %v5552 = vpack.c.bf16 %v5477, %v5476
    %v5553 = vpack.c.bf16 %v5479, %v5478
    %v5554 = vpack.c.bf16 %v5481, %v5480
    %v5555 = vpack.c.bf16 %v5483, %v5482
    %5556 = vmatprep.subr.bf16.mxu0 %v2477
    %5557 = vmatpush1.bf16.msra.mxu0 %v2476
    %5558 = vmatprep.subr.bf16.mxu0 %v2481
    %5559 = vmatpush1.bf16.msra.mxu0 %v2480
    %5560 = vmatprep.subr.bf16.mxu0 %v2485
    %5561 = vmatpush1.bf16.msra.mxu0 %v2484
    %5562 = vmatprep.subr.bf16.mxu0 %v2489
    %5563 = vmatpush1.bf16.msra.mxu0 %v2488
    %5564 = vmatprep.subr.bf16.mxu0 %v2493
    %5565 = vmatpush1.bf16.msra.mxu0 %v2492
    %5566 = vmatprep.subr.bf16.mxu0 %v2497
    %5567 = vmatpush1.bf16.msra.mxu0 %v2496
    %5568 = vmatprep.subr.bf16.mxu0 %v2501
    %5569 = vmatpush1.bf16.msra.mxu0 %v2500
    %5570 = vmatprep.subr.bf16.mxu0 %v2505
    %5571 = vmatpush1.bf16.msra.mxu0 %v2504
    %5572 = vmatprep.subr.bf16.mxu0 0
    %5573 = vmatpush1.bf16.msra.mxu0 0
    %5574 = vmatprep.subr.bf16.mxu0 0
    %5575 = vmatpush1.bf16.msra.mxu0 0
    %5576 = vmatprep.subr.bf16.mxu0 0
    %5577 = vmatpush1.bf16.msra.mxu0 0
    %5578 = vmatprep.subr.bf16.mxu0 0
    %5579 = vmatpush1.bf16.msra.mxu0 0
    %5580 = vmatprep.subr.bf16.mxu0 0
    %5581 = vmatpush1.bf16.msra.mxu0 0
    %5582 = vmatprep.subr.bf16.mxu0 0
    %5583 = vmatpush1.bf16.msra.mxu0 0
    %5584 = vmatprep.subr.bf16.mxu0 0
    %5585 = vmatpush1.bf16.msra.mxu0 0
    %5586 = vmatprep.subr.bf16.mxu0 0
    %5587 = vmatpush1.bf16.msra.mxu0 0
    %5588 = vmatprep.mubr.bf16.mxu0 0
    %5589 = vmatmul.mubr.bf16.gmra.mrb[0].mxu0 %v5548
    %v5590 = vpop.f32.mrb[0].mxu0
    %v5591 = vadd.f32 0.0, %v5590
    %v5592 = vpop.f32.mrb[0].mxu0
    %v5593 = vadd.f32 0.0, %v5592
    %v5594 = vpop.f32.mrb[0].mxu0
    %v5595 = vadd.f32 0.0, %v5594
    %v5596 = vpop.f32.mrb[0].mxu0
    %v5597 = vadd.f32 0.0, %v5596
    %5598 = vmatprep.mubr.bf16.mxu0 0
    %5599 = vmatmul.mubr.bf16.gmra.mrb[0].mxu0 %v5549
    %v5600 = vpop.f32.mrb[0].mxu0
    %v5601 = vadd.f32 0.0, %v5600
    %v5602 = vpop.f32.mrb[0].mxu0
    %v5603 = vadd.f32 0.0, %v5602
    %v5604 = vpop.f32.mrb[0].mxu0
    %v5605 = vadd.f32 0.0, %v5604
    %v5606 = vpop.f32.mrb[0].mxu0
    %v5607 = vadd.f32 0.0, %v5606
    %5608 = vmatprep.mubr.bf16.mxu0 0
    %5609 = vmatmul.mubr.bf16.gmra.mrb[0].mxu0 %v5550
    %v5610 = vpop.f32.mrb[0].mxu0
    %v5611 = vadd.f32 0.0, %v5610
    %v5612 = vpop.f32.mrb[0].mxu0
    %v5613 = vadd.f32 0.0, %v5612
    %v5614 = vpop.f32.mrb[0].mxu0
    %v5615 = vadd.f32 0.0, %v5614
    %v5616 = vpop.f32.mrb[0].mxu0
    %v5617 = vadd.f32 0.0, %v5616
    %5618 = vmatprep.mubr.bf16.mxu0 0
    %5619 = vmatmul.mubr.bf16.gmra.mrb[0].mxu0 %v5551
    %v5620 = vpop.f32.mrb[0].mxu0
    %v5621 = vadd.f32 0.0, %v5620
    %v5622 = vpop.f32.mrb[0].mxu0
    %v5623 = vadd.f32 0.0, %v5622
    %v5624 = vpop.f32.mrb[0].mxu0
    %v5625 = vadd.f32 0.0, %v5624
    %v5626 = vpop.f32.mrb[0].mxu0
    %v5627 = vadd.f32 0.0, %v5626
    %5628 = vmatprep.mubr.bf16.mxu0 0
    %5629 = vmatmul.mubr.bf16.gmra.mrb[0].mxu0 %v5552
    %v5630 = vpop.f32.mrb[0].mxu0
    %v5631 = vadd.f32 0.0, %v5630
    %v5632 = vpop.f32.mrb[0].mxu0
    %v5633 = vadd.f32 0.0, %v5632
    %v5634 = vpop.f32.mrb[0].mxu0
    %v5635 = vadd.f32 0.0, %v5634
    %v5636 = vpop.f32.mrb[0].mxu0
    %v5637 = vadd.f32 0.0, %v5636
    %5638 = vmatprep.mubr.bf16.mxu0 0
    %5639 = vmatmul.mubr.bf16.gmra.mrb[0].mxu0 %v5553
    %v5640 = vpop.f32.mrb[0].mxu0
    %v5641 = vadd.f32 0.0, %v5640
    %v5642 = vpop.f32.mrb[0].mxu0
    %v5643 = vadd.f32 0.0, %v5642
    %v5644 = vpop.f32.mrb[0].mxu0
    %v5645 = vadd.f32 0.0, %v5644
    %v5646 = vpop.f32.mrb[0].mxu0
    %v5647 = vadd.f32 0.0, %v5646
    %5648 = vmatprep.mubr.bf16.mxu0 0
    %5649 = vmatmul.mubr.bf16.gmra.mrb[0].mxu0 %v5554
    %v5650 = vpop.f32.mrb[0].mxu0
    %v5651 = vadd.f32 0.0, %v5650
    %v5652 = vpop.f32.mrb[0].mxu0
    %v5653 = vadd.f32 0.0, %v5652
    %v5654 = vpop.f32.mrb[0].mxu0
    %v5655 = vadd.f32 0.0, %v5654
    %v5656 = vpop.f32.mrb[0].mxu0
    %v5657 = vadd.f32 0.0, %v5656
    %5658 = vmatprep.mubr.bf16.mxu0 0
    %5659 = vmatmul.mubr.bf16.gmra.mrb[0].mxu0 %v5555
    %v5660 = vpop.f32.mrb[0].mxu0
    %v5661 = vadd.f32 0.0, %v5660
    %v5662 = vpop.f32.mrb[0].mxu0
    %v5663 = vadd.f32 0.0, %v5662
    %v5664 = vpop.f32.mrb[0].mxu0
    %v5665 = vadd.f32 0.0, %v5664
    %v5666 = vpop.f32.mrb[0].mxu0
    %v5667 = vadd.f32 0.0, %v5666
    %5668 = vdwg.mxu0
    %5669 = vmatprep.subr.bf16.mxu0 %v2479
    %5670 = vmatpush1.bf16.msra.mxu0 %v2478
    %5671 = vmatprep.subr.bf16.mxu0 %v2483
    %5672 = vmatpush1.bf16.msra.mxu0 %v2482
    %5673 = vmatprep.subr.bf16.mxu0 %v2487
    %5674 = vmatpush1.bf16.msra.mxu0 %v2486
    %5675 = vmatprep.subr.bf16.mxu0 %v2491
    %5676 = vmatpush1.bf16.msra.mxu0 %v2490
    %5677 = vmatprep.subr.bf16.mxu0 %v2495
    %5678 = vmatpush1.bf16.msra.mxu0 %v2494
    %5679 = vmatprep.subr.bf16.mxu0 %v2499
    %5680 = vmatpush1.bf16.msra.mxu0 %v2498
    %5681 = vmatprep.subr.bf16.mxu0 %v2503
    %5682 = vmatpush1.bf16.msra.mxu0 %v2502
    %5683 = vmatprep.subr.bf16.mxu0 %v2507
    %5684 = vmatpush1.bf16.msra.mxu0 %v2506
    %5685 = vmatprep.subr.bf16.mxu0 0
    %5686 = vmatpush1.bf16.msra.mxu0 0
    %5687 = vmatprep.subr.bf16.mxu0 0
    %5688 = vmatpush1.bf16.msra.mxu0 0
    %5689 = vmatprep.subr.bf16.mxu0 0
    %5690 = vmatpush1.bf16.msra.mxu0 0
    %5691 = vmatprep.subr.bf16.mxu0 0
    %5692 = vmatpush1.bf16.msra.mxu0 0
    %5693 = vmatprep.subr.bf16.mxu0 0
    %5694 = vmatpush1.bf16.msra.mxu0 0
    %5695 = vmatprep.subr.bf16.mxu0 0
    %5696 = vmatpush1.bf16.msra.mxu0 0
    %5697 = vmatprep.subr.bf16.mxu0 0
    %5698 = vmatpush1.bf16.msra.mxu0 0
    %5699 = vmatprep.subr.bf16.mxu0 0
    %5700 = vmatpush1.bf16.msra.mxu0 0
    %5701 = vmatprep.mubr.bf16.mxu0 0
    %5702 = vmatmul.mubr.bf16.gmra.mrb[0].mxu0 %v5548
    %v5703 = vpop.f32.mrb[0].mxu0
    %v5704 = vadd.f32 0.0, %v5703
    %v5705 = vpop.f32.mrb[0].mxu0
    %v5706 = vadd.f32 0.0, %v5705
    %v5707 = vpop.f32.mrb[0].mxu0
    %v5708 = vadd.f32 0.0, %v5707
    %v5709 = vpop.f32.mrb[0].mxu0
    %v5710 = vadd.f32 0.0, %v5709
    %5711 = vmatprep.mubr.bf16.mxu0 0
    %5712 = vmatmul.mubr.bf16.gmra.mrb[0].mxu0 %v5549
    %v5713 = vpop.f32.mrb[0].mxu0
    %v5714 = vadd.f32 0.0, %v5713
    %v5715 = vpop.f32.mrb[0].mxu0
    %v5716 = vadd.f32 0.0, %v5715
    %v5717 = vpop.f32.mrb[0].mxu0
    %v5718 = vadd.f32 0.0, %v5717
    %v5719 = vpop.f32.mrb[0].mxu0
    %v5720 = vadd.f32 0.0, %v5719
    %5721 = vmatprep.mubr.bf16.mxu0 0
    %5722 = vmatmul.mubr.bf16.gmra.mrb[0].mxu0 %v5550
    %v5723 = vpop.f32.mrb[0].mxu0
    %v5724 = vadd.f32 0.0, %v5723
    %v5725 = vpop.f32.mrb[0].mxu0
    %v5726 = vadd.f32 0.0, %v5725
    %v5727 = vpop.f32.mrb[0].mxu0
    %v5728 = vadd.f32 0.0, %v5727
    %v5729 = vpop.f32.mrb[0].mxu0
    %v5730 = vadd.f32 0.0, %v5729
    %5731 = vmatprep.mubr.bf16.mxu0 0
    %5732 = vmatmul.mubr.bf16.gmra.mrb[0].mxu0 %v5551
    %v5733 = vpop.f32.mrb[0].mxu0
    %v5734 = vadd.f32 0.0, %v5733
    %v5735 = vpop.f32.mrb[0].mxu0
    %v5736 = vadd.f32 0.0, %v5735
    %v5737 = vpop.f32.mrb[0].mxu0
    %v5738 = vadd.f32 0.0, %v5737
    %v5739 = vpop.f32.mrb[0].mxu0
    %v5740 = vadd.f32 0.0, %v5739
    %5741 = vmatprep.mubr.bf16.mxu0 0
    %5742 = vmatmul.mubr.bf16.gmra.mrb[0].mxu0 %v5552
    %v5743 = vpop.f32.mrb[0].mxu0
    %v5744 = vadd.f32 0.0, %v5743
    %v5745 = vpop.f32.mrb[0].mxu0
    %v5746 = vadd.f32 0.0, %v5745
    %v5747 = vpop.f32.mrb[0].mxu0
    %v5748 = vadd.f32 0.0, %v5747
    %v5749 = vpop.f32.mrb[0].mxu0
    %v5750 = vadd.f32 0.0, %v5749
    %5751 = vmatprep.mubr.bf16.mxu0 0
    %5752 = vmatmul.mubr.bf16.gmra.mrb[0].mxu0 %v5553
    %v5753 = vpop.f32.mrb[0].mxu0
    %v5754 = vadd.f32 0.0, %v5753
    %v5755 = vpop.f32.mrb[0].mxu0
    %v5756 = vadd.f32 0.0, %v5755
    %v5757 = vpop.f32.mrb[0].mxu0
    %v5758 = vadd.f32 0.0, %v5757
    %v5759 = vpop.f32.mrb[0].mxu0
    %v5760 = vadd.f32 0.0, %v5759
    %5761 = vmatprep.mubr.bf16.mxu0 0
    %5762 = vmatmul.mubr.bf16.gmra.mrb[0].mxu0 %v5554
    %v5763 = vpop.f32.mrb[0].mxu0
    %v5764 = vadd.f32 0.0, %v5763
    %v5765 = vpop.f32.mrb[0].mxu0
    %v5766 = vadd.f32 0.0, %v5765
    %v5767 = vpop.f32.mrb[0].mxu0
    %v5768 = vadd.f32 0.0, %v5767
    %v5769 = vpop.f32.mrb[0].mxu0
    %v5770 = vadd.f32 0.0, %v5769
    %5771 = vmatprep.mubr.bf16.mxu0 0
    %5772 = vmatmul.mubr.bf16.gmra.mrb[0].mxu0 %v5555
    %v5773 = vpop.f32.mrb[0].mxu0
    %v5774 = vadd.f32 0.0, %v5773
    %v5775 = vpop.f32.mrb[0].mxu0
    %v5776 = vadd.f32 0.0, %v5775
    %v5777 = vpop.f32.mrb[0].mxu0
    %v5778 = vadd.f32 0.0, %v5777
    %v5779 = vpop.f32.mrb[0].mxu0
    %v5780 = vadd.f32 0.0, %v5779
    %5781 = vdwg.mxu0
    %v5782 = vadd.f32 %v5484, %v5591
    %v5783 = vadd.f32 %v5485, %v5593
    %v5784 = vadd.f32 %v5486, %v5704
    %v5785 = vadd.f32 %v5487, %v5706
    %v5786 = vadd.f32 %v5488, %v5595
    %v5787 = vadd.f32 %v5489, %v5597
    %v5788 = vadd.f32 %v5490, %v5708
    %v5789 = vadd.f32 %v5491, %v5710
    %v5790 = vadd.f32 %v5492, %v5601
    %v5791 = vadd.f32 %v5493, %v5603
    %v5792 = vadd.f32 %v5494, %v5714
    %v5793 = vadd.f32 %v5495, %v5716
    %v5794 = vadd.f32 %v5496, %v5605
    %v5795 = vadd.f32 %v5497, %v5607
    %v5796 = vadd.f32 %v5498, %v5718
    %v5797 = vadd.f32 %v5499, %v5720
    %v5798 = vadd.f32 %v5500, %v5611
    %v5799 = vadd.f32 %v5501, %v5613
    %v5800 = vadd.f32 %v5502, %v5724
    %v5801 = vadd.f32 %v5503, %v5726
    %v5802 = vadd.f32 %v5504, %v5615
    %v5803 = vadd.f32 %v5505, %v5617
    %v5804 = vadd.f32 %v5506, %v5728
    %v5805 = vadd.f32 %v5507, %v5730
    %v5806 = vadd.f32 %v5508, %v5621
    %v5807 = vadd.f32 %v5509, %v5623
    %v5808 = vadd.f32 %v5510, %v5734
    %v5809 = vadd.f32 %v5511, %v5736
    %v5810 = vadd.f32 %v5512, %v5625
    %v5811 = vadd.f32 %v5513, %v5627
    %v5812 = vadd.f32 %v5514, %v5738
    %v5813 = vadd.f32 %v5515, %v5740
    %v5814 = vadd.f32 %v5516, %v5631
    %v5815 = vadd.f32 %v5517, %v5633
    %v5816 = vadd.f32 %v5518, %v5744
    %v5817 = vadd.f32 %v5519, %v5746
    %v5818 = vadd.f32 %v5520, %v5635
    %v5819 = vadd.f32 %v5521, %v5637
    %v5820 = vadd.f32 %v5522, %v5748
    %v5821 = vadd.f32 %v5523, %v5750
    %v5822 = vadd.f32 %v5524, %v5641
    %v5823 = vadd.f32 %v5525, %v5643
    %v5824 = vadd.f32 %v5526, %v5754
    %v5825 = vadd.f32 %v5527, %v5756
    %v5826 = vadd.f32 %v5528, %v5645
    %v5827 = vadd.f32 %v5529, %v5647
    %v5828 = vadd.f32 %v5530, %v5758
    %v5829 = vadd.f32 %v5531, %v5760
    %v5830 = vadd.f32 %v5532, %v5651
    %v5831 = vadd.f32 %v5533, %v5653
    %v5832 = vadd.f32 %v5534, %v5764
    %v5833 = vadd.f32 %v5535, %v5766
    %v5834 = vadd.f32 %v5536, %v5655
    %v5835 = vadd.f32 %v5537, %v5657
    %v5836 = vadd.f32 %v5538, %v5768
    %v5837 = vadd.f32 %v5539, %v5770
    %v5838 = vadd.f32 %v5540, %v5661
    %v5839 = vadd.f32 %v5541, %v5663
    %v5840 = vadd.f32 %v5542, %v5774
    %v5841 = vadd.f32 %v5543, %v5776
    %v5842 = vadd.f32 %v5544, %v5665
    %v5843 = vadd.f32 %v5545, %v5667
    %v5844 = vadd.f32 %v5546, %v5778
    %v5845 = vadd.f32 %v5547, %v5780
    %v5846 = vxor.u32 %v5782, 2147483648
    %v5847 = vxor.u32 %v5786, 2147483648
    %v5848 = vxor.u32 %v5790, 2147483648
    %v5849 = vxor.u32 %v5794, 2147483648
    %v5850 = vxor.u32 %v5798, 2147483648
    %v5851 = vxor.u32 %v5802, 2147483648
    %v5852 = vxor.u32 %v5806, 2147483648
    %v5853 = vxor.u32 %v5810, 2147483648
    %v5854 = vxor.u32 %v5814, 2147483648
    %v5855 = vxor.u32 %v5818, 2147483648
    %v5856 = vxor.u32 %v5822, 2147483648
    %v5857 = vxor.u32 %v5826, 2147483648
    %v5858 = vxor.u32 %v5830, 2147483648
    %v5859 = vxor.u32 %v5834, 2147483648
    %v5860 = vxor.u32 %v5838, 2147483648
    %v5861 = vxor.u32 %v5842, 2147483648
    %v5862 = vmul.f32 %v5846, 1.442695
    %v5863 = vpow.pop %v5862
    %v5864 = vmul.f32 %v5847, 1.442695
    %v5865 = vpow.pop %v5864
    %v5866 = vmul.f32 %v5848, 1.442695
    %v5867 = vpow.pop %v5866
    %v5868 = vmul.f32 %v5849, 1.442695
    %v5869 = vpow.pop %v5868
    %v5870 = vmul.f32 %v5850, 1.442695
    %v5871 = vpow.pop %v5870
    %v5872 = vmul.f32 %v5851, 1.442695
    %v5873 = vpow.pop %v5872
    %v5874 = vmul.f32 %v5852, 1.442695
    %v5875 = vpow.pop %v5874
    %v5876 = vmul.f32 %v5853, 1.442695
    %v5877 = vpow.pop %v5876
    %v5878 = vmul.f32 %v5854, 1.442695
    %v5879 = vpow.pop %v5878
    %v5880 = vmul.f32 %v5855, 1.442695
    %v5881 = vpow.pop %v5880
    %v5882 = vmul.f32 %v5856, 1.442695
    %v5883 = vpow.pop %v5882
    %v5884 = vmul.f32 %v5857, 1.442695
    %v5885 = vpow.pop %v5884
    %v5886 = vmul.f32 %v5858, 1.442695
    %v5887 = vpow.pop %v5886
    %v5888 = vmul.f32 %v5859, 1.442695
    %v5889 = vpow.pop %v5888
    %v5890 = vmul.f32 %v5860, 1.442695
    %v5891 = vpow.pop %v5890
    %v5892 = vmul.f32 %v5861, 1.442695
    %v5893 = vpow.pop %v5892
    %v5894 = vadd.f32 %v5863, 1.0
    %v5895 = vadd.f32 %v5865, 1.0
    %v5896 = vadd.f32 %v5867, 1.0
    %v5897 = vadd.f32 %v5869, 1.0
    %v5898 = vadd.f32 %v5871, 1.0
    %v5899 = vadd.f32 %v5873, 1.0
    %v5900 = vadd.f32 %v5875, 1.0
    %v5901 = vadd.f32 %v5877, 1.0
    %v5902 = vadd.f32 %v5879, 1.0
    %v5903 = vadd.f32 %v5881, 1.0
    %v5904 = vadd.f32 %v5883, 1.0
    %v5905 = vadd.f32 %v5885, 1.0
    %v5906 = vadd.f32 %v5887, 1.0
    %v5907 = vadd.f32 %v5889, 1.0
    %v5908 = vadd.f32 %v5891, 1.0
    %v5909 = vadd.f32 %v5893, 1.0
    %v5910 = vrcp.pop %v5894
    %v5911 = vmul.f32 1.0, %v5910
    %v5912 = vrcp.pop %v5895
    %v5913 = vmul.f32 1.0, %v5912
    %v5914 = vrcp.pop %v5896
    %v5915 = vmul.f32 1.0, %v5914
    %v5916 = vrcp.pop %v5897
    %v5917 = vmul.f32 1.0, %v5916
    %v5918 = vrcp.pop %v5898
    %v5919 = vmul.f32 1.0, %v5918
    %v5920 = vrcp.pop %v5899
    %v5921 = vmul.f32 1.0, %v5920
    %v5922 = vrcp.pop %v5900
    %v5923 = vmul.f32 1.0, %v5922
    %v5924 = vrcp.pop %v5901
    %v5925 = vmul.f32 1.0, %v5924
    %v5926 = vrcp.pop %v5902
    %v5927 = vmul.f32 1.0, %v5926
    %v5928 = vrcp.pop %v5903
    %v5929 = vmul.f32 1.0, %v5928
    %v5930 = vrcp.pop %v5904
    %v5931 = vmul.f32 1.0, %v5930
    %v5932 = vrcp.pop %v5905
    %v5933 = vmul.f32 1.0, %v5932
    %v5934 = vrcp.pop %v5906
    %v5935 = vmul.f32 1.0, %v5934
    %v5936 = vrcp.pop %v5907
    %v5937 = vmul.f32 1.0, %v5936
    %v5938 = vrcp.pop %v5908
    %v5939 = vmul.f32 1.0, %v5938
    %v5940 = vrcp.pop %v5909
    %v5941 = vmul.f32 1.0, %v5940
    %v5942 = vxor.u32 %v5783, 2147483648
    %v5943 = vxor.u32 %v5787, 2147483648
    %v5944 = vxor.u32 %v5791, 2147483648
    %v5945 = vxor.u32 %v5795, 2147483648
    %v5946 = vxor.u32 %v5799, 2147483648
    %v5947 = vxor.u32 %v5803, 2147483648
    %v5948 = vxor.u32 %v5807, 2147483648
    %v5949 = vxor.u32 %v5811, 2147483648
    %v5950 = vxor.u32 %v5815, 2147483648
    %v5951 = vxor.u32 %v5819, 2147483648
    %v5952 = vxor.u32 %v5823, 2147483648
    %v5953 = vxor.u32 %v5827, 2147483648
    %v5954 = vxor.u32 %v5831, 2147483648
    %v5955 = vxor.u32 %v5835, 2147483648
    %v5956 = vxor.u32 %v5839, 2147483648
    %v5957 = vxor.u32 %v5843, 2147483648
    %v5958 = vmul.f32 %v5942, 1.442695
    %v5959 = vpow.pop %v5958
    %v5960 = vmul.f32 %v5943, 1.442695
    %v5961 = vpow.pop %v5960
    %v5962 = vmul.f32 %v5944, 1.442695
    %v5963 = vpow.pop %v5962
    %v5964 = vmul.f32 %v5945, 1.442695
    %v5965 = vpow.pop %v5964
    %v5966 = vmul.f32 %v5946, 1.442695
    %v5967 = vpow.pop %v5966
    %v5968 = vmul.f32 %v5947, 1.442695
    %v5969 = vpow.pop %v5968
    %v5970 = vmul.f32 %v5948, 1.442695
    %v5971 = vpow.pop %v5970
    %v5972 = vmul.f32 %v5949, 1.442695
    %v5973 = vpow.pop %v5972
    %v5974 = vmul.f32 %v5950, 1.442695
    %v5975 = vpow.pop %v5974
    %v5976 = vmul.f32 %v5951, 1.442695
    %v5977 = vpow.pop %v5976
    %v5978 = vmul.f32 %v5952, 1.442695
    %v5979 = vpow.pop %v5978
    %v5980 = vmul.f32 %v5953, 1.442695
    %v5981 = vpow.pop %v5980
    %v5982 = vmul.f32 %v5954, 1.442695
    %v5983 = vpow.pop %v5982
    %v5984 = vmul.f32 %v5955, 1.442695
    %v5985 = vpow.pop %v5984
    %v5986 = vmul.f32 %v5956, 1.442695
    %v5987 = vpow.pop %v5986
    %v5988 = vmul.f32 %v5957, 1.442695
    %v5989 = vpow.pop %v5988
    %v5990 = vadd.f32 %v5959, 1.0
    %v5991 = vadd.f32 %v5961, 1.0
    %v5992 = vadd.f32 %v5963, 1.0
    %v5993 = vadd.f32 %v5965, 1.0
    %v5994 = vadd.f32 %v5967, 1.0
    %v5995 = vadd.f32 %v5969, 1.0
    %v5996 = vadd.f32 %v5971, 1.0
    %v5997 = vadd.f32 %v5973, 1.0
    %v5998 = vadd.f32 %v5975, 1.0
    %v5999 = vadd.f32 %v5977, 1.0
    %v6000 = vadd.f32 %v5979, 1.0
    %v6001 = vadd.f32 %v5981, 1.0
    %v6002 = vadd.f32 %v5983, 1.0
    %v6003 = vadd.f32 %v5985, 1.0
    %v6004 = vadd.f32 %v5987, 1.0
    %v6005 = vadd.f32 %v5989, 1.0
    %v6006 = vrcp.pop %v5990
    %v6007 = vmul.f32 1.0, %v6006
    %v6008 = vrcp.pop %v5991
    %v6009 = vmul.f32 1.0, %v6008
    %v6010 = vrcp.pop %v5992
    %v6011 = vmul.f32 1.0, %v6010
    %v6012 = vrcp.pop %v5993
    %v6013 = vmul.f32 1.0, %v6012
    %v6014 = vrcp.pop %v5994
    %v6015 = vmul.f32 1.0, %v6014
    %v6016 = vrcp.pop %v5995
    %v6017 = vmul.f32 1.0, %v6016
    %v6018 = vrcp.pop %v5996
    %v6019 = vmul.f32 1.0, %v6018
    %v6020 = vrcp.pop %v5997
    %v6021 = vmul.f32 1.0, %v6020
    %v6022 = vrcp.pop %v5998
    %v6023 = vmul.f32 1.0, %v6022
    %v6024 = vrcp.pop %v5999
    %v6025 = vmul.f32 1.0, %v6024
    %v6026 = vrcp.pop %v6000
    %v6027 = vmul.f32 1.0, %v6026
    %v6028 = vrcp.pop %v6001
    %v6029 = vmul.f32 1.0, %v6028
    %v6030 = vrcp.pop %v6002
    %v6031 = vmul.f32 1.0, %v6030
    %v6032 = vrcp.pop %v6003
    %v6033 = vmul.f32 1.0, %v6032
    %v6034 = vrcp.pop %v6004
    %v6035 = vmul.f32 1.0, %v6034
    %v6036 = vrcp.pop %v6005
    %v6037 = vmul.f32 1.0, %v6036
    %v6038 = vtanh.pop %v5784
    %v6039 = vtanh.pop %v5788
    %v6040 = vtanh.pop %v5792
    %v6041 = vtanh.pop %v5796
    %v6042 = vtanh.pop %v5800
    %v6043 = vtanh.pop %v5804
    %v6044 = vtanh.pop %v5808
    %v6045 = vtanh.pop %v5812
    %v6046 = vtanh.pop %v5816
    %v6047 = vtanh.pop %v5820
    %v6048 = vtanh.pop %v5824
    %v6049 = vtanh.pop %v5828
    %v6050 = vtanh.pop %v5832
    %v6051 = vtanh.pop %v5836
    %v6052 = vtanh.pop %v5840
    %v6053 = vtanh.pop %v5844
    %v6054 = vxor.u32 %v5785, 2147483648
    %v6055 = vxor.u32 %v5789, 2147483648
    %v6056 = vxor.u32 %v5793, 2147483648
    %v6057 = vxor.u32 %v5797, 2147483648
    %v6058 = vxor.u32 %v5801, 2147483648
    %v6059 = vxor.u32 %v5805, 2147483648
    %v6060 = vxor.u32 %v5809, 2147483648
    %v6061 = vxor.u32 %v5813, 2147483648
    %v6062 = vxor.u32 %v5817, 2147483648
    %v6063 = vxor.u32 %v5821, 2147483648
    %v6064 = vxor.u32 %v5825, 2147483648
    %v6065 = vxor.u32 %v5829, 2147483648
    %v6066 = vxor.u32 %v5833, 2147483648
    %v6067 = vxor.u32 %v5837, 2147483648
    %v6068 = vxor.u32 %v5841, 2147483648
    %v6069 = vxor.u32 %v5845, 2147483648
    %v6070 = vmul.f32 %v6054, 1.442695
    %v6071 = vpow.pop %v6070
    %v6072 = vmul.f32 %v6055, 1.442695
    %v6073 = vpow.pop %v6072
    %v6074 = vmul.f32 %v6056, 1.442695
    %v6075 = vpow.pop %v6074
    %v6076 = vmul.f32 %v6057, 1.442695
    %v6077 = vpow.pop %v6076
    %v6078 = vmul.f32 %v6058, 1.442695
    %v6079 = vpow.pop %v6078
    %v6080 = vmul.f32 %v6059, 1.442695
    %v6081 = vpow.pop %v6080
    %v6082 = vmul.f32 %v6060, 1.442695
    %v6083 = vpow.pop %v6082
    %v6084 = vmul.f32 %v6061, 1.442695
    %v6085 = vpow.pop %v6084
    %v6086 = vmul.f32 %v6062, 1.442695
    %v6087 = vpow.pop %v6086
    %v6088 = vmul.f32 %v6063, 1.442695
    %v6089 = vpow.pop %v6088
    %v6090 = vmul.f32 %v6064, 1.442695
    %v6091 = vpow.pop %v6090
    %v6092 = vmul.f32 %v6065, 1.442695
    %v6093 = vpow.pop %v6092
    %v6094 = vmul.f32 %v6066, 1.442695
    %v6095 = vpow.pop %v6094
    %v6096 = vmul.f32 %v6067, 1.442695
    %v6097 = vpow.pop %v6096
    %v6098 = vmul.f32 %v6068, 1.442695
    %v6099 = vpow.pop %v6098
    %v6100 = vmul.f32 %v6069, 1.442695
    %v6101 = vpow.pop %v6100
    %v6102 = vadd.f32 %v6071, 1.0
    %v6103 = vadd.f32 %v6073, 1.0
    %v6104 = vadd.f32 %v6075, 1.0
    %v6105 = vadd.f32 %v6077, 1.0
    %v6106 = vadd.f32 %v6079, 1.0
    %v6107 = vadd.f32 %v6081, 1.0
    %v6108 = vadd.f32 %v6083, 1.0
    %v6109 = vadd.f32 %v6085, 1.0
    %v6110 = vadd.f32 %v6087, 1.0
    %v6111 = vadd.f32 %v6089, 1.0
    %v6112 = vadd.f32 %v6091, 1.0
    %v6113 = vadd.f32 %v6093, 1.0
    %v6114 = vadd.f32 %v6095, 1.0
    %v6115 = vadd.f32 %v6097, 1.0
    %v6116 = vadd.f32 %v6099, 1.0
    %v6117 = vadd.f32 %v6101, 1.0
    %v6118 = vrcp.pop %v6102
    %v6119 = vmul.f32 1.0, %v6118
    %v6120 = vrcp.pop %v6103
    %v6121 = vmul.f32 1.0, %v6120
    %v6122 = vrcp.pop %v6104
    %v6123 = vmul.f32 1.0, %v6122
    %v6124 = vrcp.pop %v6105
    %v6125 = vmul.f32 1.0, %v6124
    %v6126 = vrcp.pop %v6106
    %v6127 = vmul.f32 1.0, %v6126
    %v6128 = vrcp.pop %v6107
    %v6129 = vmul.f32 1.0, %v6128
    %v6130 = vrcp.pop %v6108
    %v6131 = vmul.f32 1.0, %v6130
    %v6132 = vrcp.pop %v6109
    %v6133 = vmul.f32 1.0, %v6132
    %v6134 = vrcp.pop %v6110
    %v6135 = vmul.f32 1.0, %v6134
    %v6136 = vrcp.pop %v6111
    %v6137 = vmul.f32 1.0, %v6136
    %v6138 = vrcp.pop %v6112
    %v6139 = vmul.f32 1.0, %v6138
    %v6140 = vrcp.pop %v6113
    %v6141 = vmul.f32 1.0, %v6140
    %v6142 = vrcp.pop %v6114
    %v6143 = vmul.f32 1.0, %v6142
    %v6144 = vrcp.pop %v6115
    %v6145 = vmul.f32 1.0, %v6144
    %v6146 = vrcp.pop %v6116
    %v6147 = vmul.f32 1.0, %v6146
    %v6148 = vrcp.pop %v6117
    %v6149 = vmul.f32 1.0, %v6148
    %v6150 = vmul.f32 %v6007, %v5436
    %v6151 = vmul.f32 %v6009, %v5437
    %v6152 = vmul.f32 %v6011, %v5438
    %v6153 = vmul.f32 %v6013, %v5439
    %v6154 = vmul.f32 %v6015, %v5440
    %v6155 = vmul.f32 %v6017, %v5441
    %v6156 = vmul.f32 %v6019, %v5442
    %v6157 = vmul.f32 %v6021, %v5443
    %v6158 = vmul.f32 %v6023, %v5444
    %v6159 = vmul.f32 %v6025, %v5445
    %v6160 = vmul.f32 %v6027, %v5446
    %v6161 = vmul.f32 %v6029, %v5447
    %v6162 = vmul.f32 %v6031, %v5448
    %v6163 = vmul.f32 %v6033, %v5449
    %v6164 = vmul.f32 %v6035, %v5450
    %v6165 = vmul.f32 %v6037, %v5451
    %v6166 = vmul.f32 %v5911, %v6038
    %v6167 = vmul.f32 %v5913, %v6039
    %v6168 = vmul.f32 %v5915, %v6040
    %v6169 = vmul.f32 %v5917, %v6041
    %v6170 = vmul.f32 %v5919, %v6042
    %v6171 = vmul.f32 %v5921, %v6043
    %v6172 = vmul.f32 %v5923, %v6044
    %v6173 = vmul.f32 %v5925, %v6045
    %v6174 = vmul.f32 %v5927, %v6046
    %v6175 = vmul.f32 %v5929, %v6047
    %v6176 = vmul.f32 %v5931, %v6048
    %v6177 = vmul.f32 %v5933, %v6049
    %v6178 = vmul.f32 %v5935, %v6050
    %v6179 = vmul.f32 %v5937, %v6051
    %v6180 = vmul.f32 %v5939, %v6052
    %v6181 = vmul.f32 %v5941, %v6053
    %v6182 = vadd.f32 %v6150, %v6166
    %v6183 = vadd.f32 %v6151, %v6167
    %v6184 = vadd.f32 %v6152, %v6168
    %v6185 = vadd.f32 %v6153, %v6169
    %v6186 = vadd.f32 %v6154, %v6170
    %v6187 = vadd.f32 %v6155, %v6171
    %v6188 = vadd.f32 %v6156, %v6172
    %v6189 = vadd.f32 %v6157, %v6173
    %v6190 = vadd.f32 %v6158, %v6174
    %v6191 = vadd.f32 %v6159, %v6175
    %v6192 = vadd.f32 %v6160, %v6176
    %v6193 = vadd.f32 %v6161, %v6177
    %v6194 = vadd.f32 %v6162, %v6178
    %v6195 = vadd.f32 %v6163, %v6179
    %v6196 = vadd.f32 %v6164, %v6180
    %v6197 = vadd.f32 %v6165, %v6181
    %v6198 = vtanh.pop %v6182
    %v6199 = vtanh.pop %v6183
    %v6200 = vtanh.pop %v6184
    %v6201 = vtanh.pop %v6185
    %v6202 = vtanh.pop %v6186
    %v6203 = vtanh.pop %v6187
    %v6204 = vtanh.pop %v6188
    %v6205 = vtanh.pop %v6189
    %v6206 = vtanh.pop %v6190
    %v6207 = vtanh.pop %v6191
    %v6208 = vtanh.pop %v6192
    %v6209 = vtanh.pop %v6193
    %v6210 = vtanh.pop %v6194
    %v6211 = vtanh.pop %v6195
    %v6212 = vtanh.pop %v6196
    %v6213 = vtanh.pop %v6197
    %v6214 = vmul.f32 %v6119, %v6198
    %v6215 = vmul.f32 %v6121, %v6199
    %v6216 = vmul.f32 %v6123, %v6200
    %v6217 = vmul.f32 %v6125, %v6201
    %v6218 = vmul.f32 %v6127, %v6202
    %v6219 = vmul.f32 %v6129, %v6203
    %v6220 = vmul.f32 %v6131, %v6204
    %v6221 = vmul.f32 %v6133, %v6205
    %v6222 = vmul.f32 %v6135, %v6206
    %v6223 = vmul.f32 %v6137, %v6207
    %v6224 = vmul.f32 %v6139, %v6208
    %v6225 = vmul.f32 %v6141, %v6209
    %v6226 = vmul.f32 %v6143, %v6210
    %v6227 = vmul.f32 %v6145, %v6211
    %v6228 = vmul.f32 %v6147, %v6212
    %v6229 = vmul.f32 %v6149, %v6213
    %v6230 = vld [vmem:[%s1769] sm:$0xff]
    %v6231 = vld [vmem:[%s1769 + $0x8] sm:$0xff]
    %v6232 = vld [vmem:[%s1769 + $0x10] sm:$0xff]
    %v6233 = vld [vmem:[%s1769 + $0x18] sm:$0xff]
    %v6234 = vld [vmem:[%s1769 + $0x20] sm:$0xff]
    %v6235 = vld [vmem:[%s1769 + $0x28] sm:$0xff]
    %v6236 = vld [vmem:[%s1769 + $0x30] sm:$0xff]
    %v6237 = vld [vmem:[%s1769 + $0x38] sm:$0xff]
    %v6238 = vld [vmem:[%s1769 + $0x40] sm:$0xff]
    %v6239 = vld [vmem:[%s1769 + $0x48] sm:$0xff]
    %v6240 = vld [vmem:[%s1769 + $0x50] sm:$0xff]
    %v6241 = vld [vmem:[%s1769 + $0x58] sm:$0xff]
    %v6242 = vld [vmem:[%s1769 + $0x60] sm:$0xff]
    %v6243 = vld [vmem:[%s1769 + $0x68] sm:$0xff]
    %v6244 = vld [vmem:[%s1769 + $0x70] sm:$0xff]
    %v6245 = vld [vmem:[%s1769 + $0x78] sm:$0xff]
    %v6246 = vld [vmem:[%s1769 + $0x80] sm:$0xff]
    %v6247 = vld [vmem:[%s1769 + $0x88] sm:$0xff]
    %v6248 = vld [vmem:[%s1769 + $0x90] sm:$0xff]
    %v6249 = vld [vmem:[%s1769 + $0x98] sm:$0xff]
    %v6250 = vld [vmem:[%s1769 + $0xa0] sm:$0xff]
    %v6251 = vld [vmem:[%s1769 + $0xa8] sm:$0xff]
    %v6252 = vld [vmem:[%s1769 + $0xb0] sm:$0xff]
    %v6253 = vld [vmem:[%s1769 + $0xb8] sm:$0xff]
    %v6254 = vld [vmem:[%s1769 + $0xc0] sm:$0xff]
    %v6255 = vld [vmem:[%s1769 + $0xc8] sm:$0xff]
    %v6256 = vld [vmem:[%s1769 + $0xd0] sm:$0xff]
    %v6257 = vld [vmem:[%s1769 + $0xd8] sm:$0xff]
    %v6258 = vld [vmem:[%s1769 + $0xe0] sm:$0xff]
    %v6259 = vld [vmem:[%s1769 + $0xe8] sm:$0xff]
    %v6260 = vld [vmem:[%s1769 + $0xf0] sm:$0xff]
    %v6261 = vld [vmem:[%s1769 + $0xf8] sm:$0xff]
    %v6262 = vld [vmem:[%s1769 + $0x100] sm:$0xff]
    %v6263 = vld [vmem:[%s1769 + $0x108] sm:$0xff]
    %v6264 = vld [vmem:[%s1769 + $0x110] sm:$0xff]
    %v6265 = vld [vmem:[%s1769 + $0x118] sm:$0xff]
    %v6266 = vld [vmem:[%s1769 + $0x120] sm:$0xff]
    %v6267 = vld [vmem:[%s1769 + $0x128] sm:$0xff]
    %v6268 = vld [vmem:[%s1769 + $0x130] sm:$0xff]
    %v6269 = vld [vmem:[%s1769 + $0x138] sm:$0xff]
    %v6270 = vld [vmem:[%s1769 + $0x140] sm:$0xff]
    %v6271 = vld [vmem:[%s1769 + $0x148] sm:$0xff]
    %v6272 = vld [vmem:[%s1769 + $0x150] sm:$0xff]
    %v6273 = vld [vmem:[%s1769 + $0x158] sm:$0xff]
    %v6274 = vld [vmem:[%s1769 + $0x160] sm:$0xff]
    %v6275 = vld [vmem:[%s1769 + $0x168] sm:$0xff]
    %v6276 = vld [vmem:[%s1769 + $0x170] sm:$0xff]
    %v6277 = vld [vmem:[%s1769 + $0x178] sm:$0xff]
    %v6278 = vld [vmem:[%s1769 + $0x180] sm:$0xff]
    %v6279 = vld [vmem:[%s1769 + $0x188] sm:$0xff]
    %v6280 = vld [vmem:[%s1769 + $0x190] sm:$0xff]
    %v6281 = vld [vmem:[%s1769 + $0x198] sm:$0xff]
    %v6282 = vld [vmem:[%s1769 + $0x1a0] sm:$0xff]
    %v6283 = vld [vmem:[%s1769 + $0x1a8] sm:$0xff]
    %v6284 = vld [vmem:[%s1769 + $0x1b0] sm:$0xff]
    %v6285 = vld [vmem:[%s1769 + $0x1b8] sm:$0xff]
    %v6286 = vld [vmem:[%s1769 + $0x1c0] sm:$0xff]
    %v6287 = vld [vmem:[%s1769 + $0x1c8] sm:$0xff]
    %v6288 = vld [vmem:[%s1769 + $0x1d0] sm:$0xff]
    %v6289 = vld [vmem:[%s1769 + $0x1d8] sm:$0xff]
    %v6290 = vld [vmem:[%s1769 + $0x1e0] sm:$0xff]
    %v6291 = vld [vmem:[%s1769 + $0x1e8] sm:$0xff]
    %v6292 = vld [vmem:[%s1769 + $0x1f0] sm:$0xff]
    %v6293 = vld [vmem:[%s1769 + $0x1f8] sm:$0xff]
    %v6294 = vpack.c.bf16 %v6215, %v6214
    %v6295 = vpack.c.bf16 %v6217, %v6216
    %v6296 = vpack.c.bf16 %v6219, %v6218
    %v6297 = vpack.c.bf16 %v6221, %v6220
    %v6298 = vpack.c.bf16 %v6223, %v6222
    %v6299 = vpack.c.bf16 %v6225, %v6224
    %v6300 = vpack.c.bf16 %v6227, %v6226
    %v6301 = vpack.c.bf16 %v6229, %v6228
    %6302 = vmatprep.subr.bf16.mxu0 %v2477
    %6303 = vmatpush1.bf16.msra.mxu0 %v2476
    %6304 = vmatprep.subr.bf16.mxu0 %v2481
    %6305 = vmatpush1.bf16.msra.mxu0 %v2480
    %6306 = vmatprep.subr.bf16.mxu0 %v2485
    %6307 = vmatpush1.bf16.msra.mxu0 %v2484
    %6308 = vmatprep.subr.bf16.mxu0 %v2489
    %6309 = vmatpush1.bf16.msra.mxu0 %v2488
    %6310 = vmatprep.subr.bf16.mxu0 %v2493
    %6311 = vmatpush1.bf16.msra.mxu0 %v2492
    %6312 = vmatprep.subr.bf16.mxu0 %v2497
    %6313 = vmatpush1.bf16.msra.mxu0 %v2496
    %6314 = vmatprep.subr.bf16.mxu0 %v2501
    %6315 = vmatpush1.bf16.msra.mxu0 %v2500
    %6316 = vmatprep.subr.bf16.mxu0 %v2505
    %6317 = vmatpush1.bf16.msra.mxu0 %v2504
    %6318 = vmatprep.subr.bf16.mxu0 0
    %6319 = vmatpush1.bf16.msra.mxu0 0
    %6320 = vmatprep.subr.bf16.mxu0 0
    %6321 = vmatpush1.bf16.msra.mxu0 0
    %6322 = vmatprep.subr.bf16.mxu0 0
    %6323 = vmatpush1.bf16.msra.mxu0 0
    %6324 = vmatprep.subr.bf16.mxu0 0
    %6325 = vmatpush1.bf16.msra.mxu0 0
    %6326 = vmatprep.subr.bf16.mxu0 0
    %6327 = vmatpush1.bf16.msra.mxu0 0
    %6328 = vmatprep.subr.bf16.mxu0 0
    %6329 = vmatpush1.bf16.msra.mxu0 0
    %6330 = vmatprep.subr.bf16.mxu0 0
    %6331 = vmatpush1.bf16.msra.mxu0 0
    %6332 = vmatprep.subr.bf16.mxu0 0
    %6333 = vmatpush1.bf16.msra.mxu0 0
    %6334 = vmatprep.mubr.bf16.mxu0 0
    %6335 = vmatmul.mubr.bf16.gmra.mrb[0].mxu0 %v6294
    %v6336 = vpop.f32.mrb[0].mxu0
    %v6337 = vadd.f32 0.0, %v6336
    %v6338 = vpop.f32.mrb[0].mxu0
    %v6339 = vadd.f32 0.0, %v6338
    %v6340 = vpop.f32.mrb[0].mxu0
    %v6341 = vadd.f32 0.0, %v6340
    %v6342 = vpop.f32.mrb[0].mxu0
    %v6343 = vadd.f32 0.0, %v6342
    %6344 = vmatprep.mubr.bf16.mxu0 0
    %6345 = vmatmul.mubr.bf16.gmra.mrb[0].mxu0 %v6295
    %v6346 = vpop.f32.mrb[0].mxu0
    %v6347 = vadd.f32 0.0, %v6346
    %v6348 = vpop.f32.mrb[0].mxu0
    %v6349 = vadd.f32 0.0, %v6348
    %v6350 = vpop.f32.mrb[0].mxu0
    %v6351 = vadd.f32 0.0, %v6350
    %v6352 = vpop.f32.mrb[0].mxu0
    %v6353 = vadd.f32 0.0, %v6352
    %6354 = vmatprep.mubr.bf16.mxu0 0
    %6355 = vmatmul.mubr.bf16.gmra.mrb[0].mxu0 %v6296
    %v6356 = vpop.f32.mrb[0].mxu0
    %v6357 = vadd.f32 0.0, %v6356
    %v6358 = vpop.f32.mrb[0].mxu0
    %v6359 = vadd.f32 0.0, %v6358
    %v6360 = vpop.f32.mrb[0].mxu0
    %v6361 = vadd.f32 0.0, %v6360
    %v6362 = vpop.f32.mrb[0].mxu0
    %v6363 = vadd.f32 0.0, %v6362
    %6364 = vmatprep.mubr.bf16.mxu0 0
    %6365 = vmatmul.mubr.bf16.gmra.mrb[0].mxu0 %v6297
    %v6366 = vpop.f32.mrb[0].mxu0
    %v6367 = vadd.f32 0.0, %v6366
    %v6368 = vpop.f32.mrb[0].mxu0
    %v6369 = vadd.f32 0.0, %v6368
    %v6370 = vpop.f32.mrb[0].mxu0
    %v6371 = vadd.f32 0.0, %v6370
    %v6372 = vpop.f32.mrb[0].mxu0
    %v6373 = vadd.f32 0.0, %v6372
    %6374 = vmatprep.mubr.bf16.mxu0 0
    %6375 = vmatmul.mubr.bf16.gmra.mrb[0].mxu0 %v6298
    %v6376 = vpop.f32.mrb[0].mxu0
    %v6377 = vadd.f32 0.0, %v6376
    %v6378 = vpop.f32.mrb[0].mxu0
    %v6379 = vadd.f32 0.0, %v6378
    %v6380 = vpop.f32.mrb[0].mxu0
    %v6381 = vadd.f32 0.0, %v6380
    %v6382 = vpop.f32.mrb[0].mxu0
    %v6383 = vadd.f32 0.0, %v6382
    %6384 = vmatprep.mubr.bf16.mxu0 0
    %6385 = vmatmul.mubr.bf16.gmra.mrb[0].mxu0 %v6299
    %v6386 = vpop.f32.mrb[0].mxu0
    %v6387 = vadd.f32 0.0, %v6386
    %v6388 = vpop.f32.mrb[0].mxu0
    %v6389 = vadd.f32 0.0, %v6388
    %v6390 = vpop.f32.mrb[0].mxu0
    %v6391 = vadd.f32 0.0, %v6390
    %v6392 = vpop.f32.mrb[0].mxu0
    %v6393 = vadd.f32 0.0, %v6392
    %6394 = vmatprep.mubr.bf16.mxu0 0
    %6395 = vmatmul.mubr.bf16.gmra.mrb[0].mxu0 %v6300
    %v6396 = vpop.f32.mrb[0].mxu0
    %v6397 = vadd.f32 0.0, %v6396
    %v6398 = vpop.f32.mrb[0].mxu0
    %v6399 = vadd.f32 0.0, %v6398
    %v6400 = vpop.f32.mrb[0].mxu0
    %v6401 = vadd.f32 0.0, %v6400
    %v6402 = vpop.f32.mrb[0].mxu0
    %v6403 = vadd.f32 0.0, %v6402
    %6404 = vmatprep.mubr.bf16.mxu0 0
    %6405 = vmatmul.mubr.bf16.gmra.mrb[0].mxu0 %v6301
    %v6406 = vpop.f32.mrb[0].mxu0
    %v6407 = vadd.f32 0.0, %v6406
    %v6408 = vpop.f32.mrb[0].mxu0
    %v6409 = vadd.f32 0.0, %v6408
    %v6410 = vpop.f32.mrb[0].mxu0
    %v6411 = vadd.f32 0.0, %v6410
    %v6412 = vpop.f32.mrb[0].mxu0
    %v6413 = vadd.f32 0.0, %v6412
    %6414 = vdwg.mxu0
    %6415 = vmatprep.subr.bf16.mxu0 %v2479
    %6416 = vmatpush1.bf16.msra.mxu0 %v2478
    %6417 = vmatprep.subr.bf16.mxu0 %v2483
    %6418 = vmatpush1.bf16.msra.mxu0 %v2482
    %6419 = vmatprep.subr.bf16.mxu0 %v2487
    %6420 = vmatpush1.bf16.msra.mxu0 %v2486
    %6421 = vmatprep.subr.bf16.mxu0 %v2491
    %6422 = vmatpush1.bf16.msra.mxu0 %v2490
    %6423 = vmatprep.subr.bf16.mxu0 %v2495
    %6424 = vmatpush1.bf16.msra.mxu0 %v2494
    %6425 = vmatprep.subr.bf16.mxu0 %v2499
    %6426 = vmatpush1.bf16.msra.mxu0 %v2498
    %6427 = vmatprep.subr.bf16.mxu0 %v2503
    %6428 = vmatpush1.bf16.msra.mxu0 %v2502
    %6429 = vmatprep.subr.bf16.mxu0 %v2507
    %6430 = vmatpush1.bf16.msra.mxu0 %v2506
    %6431 = vmatprep.subr.bf16.mxu0 0
    %6432 = vmatpush1.bf16.msra.mxu0 0
    %6433 = vmatprep.subr.bf16.mxu0 0
    %6434 = vmatpush1.bf16.msra.mxu0 0
    %6435 = vmatprep.subr.bf16.mxu0 0
    %6436 = vmatpush1.bf16.msra.mxu0 0
    %6437 = vmatprep.subr.bf16.mxu0 0
    %6438 = vmatpush1.bf16.msra.mxu0 0
    %6439 = vmatprep.subr.bf16.mxu0 0
    %6440 = vmatpush1.bf16.msra.mxu0 0
    %6441 = vmatprep.subr.bf16.mxu0 0
    %6442 = vmatpush1.bf16.msra.mxu0 0
    %6443 = vmatprep.subr.bf16.mxu0 0
    %6444 = vmatpush1.bf16.msra.mxu0 0
    %6445 = vmatprep.subr.bf16.mxu0 0
    %6446 = vmatpush1.bf16.msra.mxu0 0
    %6447 = vmatprep.mubr.bf16.mxu0 0
    %6448 = vmatmul.mubr.bf16.gmra.mrb[0].mxu0 %v6294
    %v6449 = vpop.f32.mrb[0].mxu0
    %v6450 = vadd.f32 0.0, %v6449
    %v6451 = vpop.f32.mrb[0].mxu0
    %v6452 = vadd.f32 0.0, %v6451
    %v6453 = vpop.f32.mrb[0].mxu0
    %v6454 = vadd.f32 0.0, %v6453
    %v6455 = vpop.f32.mrb[0].mxu0
    %v6456 = vadd.f32 0.0, %v6455
    %6457 = vmatprep.mubr.bf16.mxu0 0
    %6458 = vmatmul.mubr.bf16.gmra.mrb[0].mxu0 %v6295
    %v6459 = vpop.f32.mrb[0].mxu0
    %v6460 = vadd.f32 0.0, %v6459
    %v6461 = vpop.f32.mrb[0].mxu0
    %v6462 = vadd.f32 0.0, %v6461
    %v6463 = vpop.f32.mrb[0].mxu0
    %v6464 = vadd.f32 0.0, %v6463
    %v6465 = vpop.f32.mrb[0].mxu0
    %v6466 = vadd.f32 0.0, %v6465
    %6467 = vmatprep.mubr.bf16.mxu0 0
    %6468 = vmatmul.mubr.bf16.gmra.mrb[0].mxu0 %v6296
    %v6469 = vpop.f32.mrb[0].mxu0
    %v6470 = vadd.f32 0.0, %v6469
    %v6471 = vpop.f32.mrb[0].mxu0
    %v6472 = vadd.f32 0.0, %v6471
    %v6473 = vpop.f32.mrb[0].mxu0
    %v6474 = vadd.f32 0.0, %v6473
    %v6475 = vpop.f32.mrb[0].mxu0
    %v6476 = vadd.f32 0.0, %v6475
    %6477 = vmatprep.mubr.bf16.mxu0 0
    %6478 = vmatmul.mubr.bf16.gmra.mrb[0].mxu0 %v6297
    %v6479 = vpop.f32.mrb[0].mxu0
    %v6480 = vadd.f32 0.0, %v6479
    %v6481 = vpop.f32.mrb[0].mxu0
    %v6482 = vadd.f32 0.0, %v6481
    %v6483 = vpop.f32.mrb[0].mxu0
    %v6484 = vadd.f32 0.0, %v6483
    %v6485 = vpop.f32.mrb[0].mxu0
    %v6486 = vadd.f32 0.0, %v6485
    %6487 = vmatprep.mubr.bf16.mxu0 0
    %6488 = vmatmul.mubr.bf16.gmra.mrb[0].mxu0 %v6298
    %v6489 = vpop.f32.mrb[0].mxu0
    %v6490 = vadd.f32 0.0, %v6489
    %v6491 = vpop.f32.mrb[0].mxu0
    %v6492 = vadd.f32 0.0, %v6491
    %v6493 = vpop.f32.mrb[0].mxu0
    %v6494 = vadd.f32 0.0, %v6493
    %v6495 = vpop.f32.mrb[0].mxu0
    %v6496 = vadd.f32 0.0, %v6495
    %6497 = vmatprep.mubr.bf16.mxu0 0
    %6498 = vmatmul.mubr.bf16.gmra.mrb[0].mxu0 %v6299
    %v6499 = vpop.f32.mrb[0].mxu0
    %v6500 = vadd.f32 0.0, %v6499
    %v6501 = vpop.f32.mrb[0].mxu0
    %v6502 = vadd.f32 0.0, %v6501
    %v6503 = vpop.f32.mrb[0].mxu0
    %v6504 = vadd.f32 0.0, %v6503
    %v6505 = vpop.f32.mrb[0].mxu0
    %v6506 = vadd.f32 0.0, %v6505
    %6507 = vmatprep.mubr.bf16.mxu0 0
    %6508 = vmatmul.mubr.bf16.gmra.mrb[0].mxu0 %v6300
    %v6509 = vpop.f32.mrb[0].mxu0
    %v6510 = vadd.f32 0.0, %v6509
    %v6511 = vpop.f32.mrb[0].mxu0
    %v6512 = vadd.f32 0.0, %v6511
    %v6513 = vpop.f32.mrb[0].mxu0
    %v6514 = vadd.f32 0.0, %v6513
    %v6515 = vpop.f32.mrb[0].mxu0
    %v6516 = vadd.f32 0.0, %v6515
    %6517 = vmatprep.mubr.bf16.mxu0 0
    %6518 = vmatmul.mubr.bf16.gmra.mrb[0].mxu0 %v6301
    %v6519 = vpop.f32.mrb[0].mxu0
    %v6520 = vadd.f32 0.0, %v6519
    %v6521 = vpop.f32.mrb[0].mxu0
    %v6522 = vadd.f32 0.0, %v6521
    %v6523 = vpop.f32.mrb[0].mxu0
    %v6524 = vadd.f32 0.0, %v6523
    %v6525 = vpop.f32.mrb[0].mxu0
    %v6526 = vadd.f32 0.0, %v6525
    %6527 = vdwg.mxu0
    %v6528 = vadd.f32 %v6230, %v6337
    %v6529 = vadd.f32 %v6231, %v6339
    %v6530 = vadd.f32 %v6232, %v6450
    %v6531 = vadd.f32 %v6233, %v6452
    %v6532 = vadd.f32 %v6234, %v6341
    %v6533 = vadd.f32 %v6235, %v6343
    %v6534 = vadd.f32 %v6236, %v6454
    %v6535 = vadd.f32 %v6237, %v6456
    %v6536 = vadd.f32 %v6238, %v6347
    %v6537 = vadd.f32 %v6239, %v6349
    %v6538 = vadd.f32 %v6240, %v6460
    %v6539 = vadd.f32 %v6241, %v6462
    %v6540 = vadd.f32 %v6242, %v6351
    %v6541 = vadd.f32 %v6243, %v6353
    %v6542 = vadd.f32 %v6244, %v6464
    %v6543 = vadd.f32 %v6245, %v6466
    %v6544 = vadd.f32 %v6246, %v6357
    %v6545 = vadd.f32 %v6247, %v6359
    %v6546 = vadd.f32 %v6248, %v6470
    %v6547 = vadd.f32 %v6249, %v6472
    %v6548 = vadd.f32 %v6250, %v6361
    %v6549 = vadd.f32 %v6251, %v6363
    %v6550 = vadd.f32 %v6252, %v6474
    %v6551 = vadd.f32 %v6253, %v6476
    %v6552 = vadd.f32 %v6254, %v6367
    %v6553 = vadd.f32 %v6255, %v6369
    %v6554 = vadd.f32 %v6256, %v6480
    %v6555 = vadd.f32 %v6257, %v6482
    %v6556 = vadd.f32 %v6258, %v6371
    %v6557 = vadd.f32 %v6259, %v6373
    %v6558 = vadd.f32 %v6260, %v6484
    %v6559 = vadd.f32 %v6261, %v6486
    %v6560 = vadd.f32 %v6262, %v6377
    %v6561 = vadd.f32 %v6263, %v6379
    %v6562 = vadd.f32 %v6264, %v6490
    %v6563 = vadd.f32 %v6265, %v6492
    %v6564 = vadd.f32 %v6266, %v6381
    %v6565 = vadd.f32 %v6267, %v6383
    %v6566 = vadd.f32 %v6268, %v6494
    %v6567 = vadd.f32 %v6269, %v6496
    %v6568 = vadd.f32 %v6270, %v6387
    %v6569 = vadd.f32 %v6271, %v6389
    %v6570 = vadd.f32 %v6272, %v6500
    %v6571 = vadd.f32 %v6273, %v6502
    %v6572 = vadd.f32 %v6274, %v6391
    %v6573 = vadd.f32 %v6275, %v6393
    %v6574 = vadd.f32 %v6276, %v6504
    %v6575 = vadd.f32 %v6277, %v6506
    %v6576 = vadd.f32 %v6278, %v6397
    %v6577 = vadd.f32 %v6279, %v6399
    %v6578 = vadd.f32 %v6280, %v6510
    %v6579 = vadd.f32 %v6281, %v6512
    %v6580 = vadd.f32 %v6282, %v6401
    %v6581 = vadd.f32 %v6283, %v6403
    %v6582 = vadd.f32 %v6284, %v6514
    %v6583 = vadd.f32 %v6285, %v6516
    %v6584 = vadd.f32 %v6286, %v6407
    %v6585 = vadd.f32 %v6287, %v6409
    %v6586 = vadd.f32 %v6288, %v6520
    %v6587 = vadd.f32 %v6289, %v6522
    %v6588 = vadd.f32 %v6290, %v6411
    %v6589 = vadd.f32 %v6291, %v6413
    %v6590 = vadd.f32 %v6292, %v6524
    %v6591 = vadd.f32 %v6293, %v6526
    %v6592 = vxor.u32 %v6528, 2147483648
    %v6593 = vxor.u32 %v6532, 2147483648
    %v6594 = vxor.u32 %v6536, 2147483648
    %v6595 = vxor.u32 %v6540, 2147483648
    %v6596 = vxor.u32 %v6544, 2147483648
    %v6597 = vxor.u32 %v6548, 2147483648
    %v6598 = vxor.u32 %v6552, 2147483648
    %v6599 = vxor.u32 %v6556, 2147483648
    %v6600 = vxor.u32 %v6560, 2147483648
    %v6601 = vxor.u32 %v6564, 2147483648
    %v6602 = vxor.u32 %v6568, 2147483648
    %v6603 = vxor.u32 %v6572, 2147483648
    %v6604 = vxor.u32 %v6576, 2147483648
    %v6605 = vxor.u32 %v6580, 2147483648
    %v6606 = vxor.u32 %v6584, 2147483648
    %v6607 = vxor.u32 %v6588, 2147483648
    %v6608 = vmul.f32 %v6592, 1.442695
    %v6609 = vpow.pop %v6608
    %v6610 = vmul.f32 %v6593, 1.442695
    %v6611 = vpow.pop %v6610
    %v6612 = vmul.f32 %v6594, 1.442695
    %v6613 = vpow.pop %v6612
    %v6614 = vmul.f32 %v6595, 1.442695
    %v6615 = vpow.pop %v6614
    %v6616 = vmul.f32 %v6596, 1.442695
    %v6617 = vpow.pop %v6616
    %v6618 = vmul.f32 %v6597, 1.442695
    %v6619 = vpow.pop %v6618
    %v6620 = vmul.f32 %v6598, 1.442695
    %v6621 = vpow.pop %v6620
    %v6622 = vmul.f32 %v6599, 1.442695
    %v6623 = vpow.pop %v6622
    %v6624 = vmul.f32 %v6600, 1.442695
    %v6625 = vpow.pop %v6624
    %v6626 = vmul.f32 %v6601, 1.442695
    %v6627 = vpow.pop %v6626
    %v6628 = vmul.f32 %v6602, 1.442695
    %v6629 = vpow.pop %v6628
    %v6630 = vmul.f32 %v6603, 1.442695
    %v6631 = vpow.pop %v6630
    %v6632 = vmul.f32 %v6604, 1.442695
    %v6633 = vpow.pop %v6632
    %v6634 = vmul.f32 %v6605, 1.442695
    %v6635 = vpow.pop %v6634
    %v6636 = vmul.f32 %v6606, 1.442695
    %v6637 = vpow.pop %v6636
    %v6638 = vmul.f32 %v6607, 1.442695
    %v6639 = vpow.pop %v6638
    %v6640 = vadd.f32 %v6609, 1.0
    %v6641 = vadd.f32 %v6611, 1.0
    %v6642 = vadd.f32 %v6613, 1.0
    %v6643 = vadd.f32 %v6615, 1.0
    %v6644 = vadd.f32 %v6617, 1.0
    %v6645 = vadd.f32 %v6619, 1.0
    %v6646 = vadd.f32 %v6621, 1.0
    %v6647 = vadd.f32 %v6623, 1.0
    %v6648 = vadd.f32 %v6625, 1.0
    %v6649 = vadd.f32 %v6627, 1.0
    %v6650 = vadd.f32 %v6629, 1.0
    %v6651 = vadd.f32 %v6631, 1.0
    %v6652 = vadd.f32 %v6633, 1.0
    %v6653 = vadd.f32 %v6635, 1.0
    %v6654 = vadd.f32 %v6637, 1.0
    %v6655 = vadd.f32 %v6639, 1.0
    %v6656 = vrcp.pop %v6640
    %v6657 = vmul.f32 1.0, %v6656
    %v6658 = vrcp.pop %v6641
    %v6659 = vmul.f32 1.0, %v6658
    %v6660 = vrcp.pop %v6642
    %v6661 = vmul.f32 1.0, %v6660
    %v6662 = vrcp.pop %v6643
    %v6663 = vmul.f32 1.0, %v6662
    %v6664 = vrcp.pop %v6644
    %v6665 = vmul.f32 1.0, %v6664
    %v6666 = vrcp.pop %v6645
    %v6667 = vmul.f32 1.0, %v6666
    %v6668 = vrcp.pop %v6646
    %v6669 = vmul.f32 1.0, %v6668
    %v6670 = vrcp.pop %v6647
    %v6671 = vmul.f32 1.0, %v6670
    %v6672 = vrcp.pop %v6648
    %v6673 = vmul.f32 1.0, %v6672
    %v6674 = vrcp.pop %v6649
    %v6675 = vmul.f32 1.0, %v6674
    %v6676 = vrcp.pop %v6650
    %v6677 = vmul.f32 1.0, %v6676
    %v6678 = vrcp.pop %v6651
    %v6679 = vmul.f32 1.0, %v6678
    %v6680 = vrcp.pop %v6652
    %v6681 = vmul.f32 1.0, %v6680
    %v6682 = vrcp.pop %v6653
    %v6683 = vmul.f32 1.0, %v6682
    %v6684 = vrcp.pop %v6654
    %v6685 = vmul.f32 1.0, %v6684
    %v6686 = vrcp.pop %v6655
    %v6687 = vmul.f32 1.0, %v6686
    %v6688 = vxor.u32 %v6529, 2147483648
    %v6689 = vxor.u32 %v6533, 2147483648
    %v6690 = vxor.u32 %v6537, 2147483648
    %v6691 = vxor.u32 %v6541, 2147483648
    %v6692 = vxor.u32 %v6545, 2147483648
    %v6693 = vxor.u32 %v6549, 2147483648
    %v6694 = vxor.u32 %v6553, 2147483648
    %v6695 = vxor.u32 %v6557, 2147483648
    %v6696 = vxor.u32 %v6561, 2147483648
    %v6697 = vxor.u32 %v6565, 2147483648
    %v6698 = vxor.u32 %v6569, 2147483648
    %v6699 = vxor.u32 %v6573, 2147483648
    %v6700 = vxor.u32 %v6577, 2147483648
    %v6701 = vxor.u32 %v6581, 2147483648
    %v6702 = vxor.u32 %v6585, 2147483648
    %v6703 = vxor.u32 %v6589, 2147483648
    %v6704 = vmul.f32 %v6688, 1.442695
    %v6705 = vpow.pop %v6704
    %v6706 = vmul.f32 %v6689, 1.442695
    %v6707 = vpow.pop %v6706
    %v6708 = vmul.f32 %v6690, 1.442695
    %v6709 = vpow.pop %v6708
    %v6710 = vmul.f32 %v6691, 1.442695
    %v6711 = vpow.pop %v6710
    %v6712 = vmul.f32 %v6692, 1.442695
    %v6713 = vpow.pop %v6712
    %v6714 = vmul.f32 %v6693, 1.442695
    %v6715 = vpow.pop %v6714
    %v6716 = vmul.f32 %v6694, 1.442695
    %v6717 = vpow.pop %v6716
    %v6718 = vmul.f32 %v6695, 1.442695
    %v6719 = vpow.pop %v6718
    %v6720 = vmul.f32 %v6696, 1.442695
    %v6721 = vpow.pop %v6720
    %v6722 = vmul.f32 %v6697, 1.442695
    %v6723 = vpow.pop %v6722
    %v6724 = vmul.f32 %v6698, 1.442695
    %v6725 = vpow.pop %v6724
    %v6726 = vmul.f32 %v6699, 1.442695
    %v6727 = vpow.pop %v6726
    %v6728 = vmul.f32 %v6700, 1.442695
    %v6729 = vpow.pop %v6728
    %v6730 = vmul.f32 %v6701, 1.442695
    %v6731 = vpow.pop %v6730
    %v6732 = vmul.f32 %v6702, 1.442695
    %v6733 = vpow.pop %v6732
    %v6734 = vmul.f32 %v6703, 1.442695
    %v6735 = vpow.pop %v6734
    %v6736 = vadd.f32 %v6705, 1.0
    %v6737 = vadd.f32 %v6707, 1.0
    %v6738 = vadd.f32 %v6709, 1.0
    %v6739 = vadd.f32 %v6711, 1.0
    %v6740 = vadd.f32 %v6713, 1.0
    %v6741 = vadd.f32 %v6715, 1.0
    %v6742 = vadd.f32 %v6717, 1.0
    %v6743 = vadd.f32 %v6719, 1.0
    %v6744 = vadd.f32 %v6721, 1.0
    %v6745 = vadd.f32 %v6723, 1.0
    %v6746 = vadd.f32 %v6725, 1.0
    %v6747 = vadd.f32 %v6727, 1.0
    %v6748 = vadd.f32 %v6729, 1.0
    %v6749 = vadd.f32 %v6731, 1.0
    %v6750 = vadd.f32 %v6733, 1.0
    %v6751 = vadd.f32 %v6735, 1.0
    %v6752 = vrcp.pop %v6736
    %v6753 = vmul.f32 1.0, %v6752
    %v6754 = vrcp.pop %v6737
    %v6755 = vmul.f32 1.0, %v6754
    %v6756 = vrcp.pop %v6738
    %v6757 = vmul.f32 1.0, %v6756
    %v6758 = vrcp.pop %v6739
    %v6759 = vmul.f32 1.0, %v6758
    %v6760 = vrcp.pop %v6740
    %v6761 = vmul.f32 1.0, %v6760
    %v6762 = vrcp.pop %v6741
    %v6763 = vmul.f32 1.0, %v6762
    %v6764 = vrcp.pop %v6742
    %v6765 = vmul.f32 1.0, %v6764
    %v6766 = vrcp.pop %v6743
    %v6767 = vmul.f32 1.0, %v6766
    %v6768 = vrcp.pop %v6744
    %v6769 = vmul.f32 1.0, %v6768
    %v6770 = vrcp.pop %v6745
    %v6771 = vmul.f32 1.0, %v6770
    %v6772 = vrcp.pop %v6746
    %v6773 = vmul.f32 1.0, %v6772
    %v6774 = vrcp.pop %v6747
    %v6775 = vmul.f32 1.0, %v6774
    %v6776 = vrcp.pop %v6748
    %v6777 = vmul.f32 1.0, %v6776
    %v6778 = vrcp.pop %v6749
    %v6779 = vmul.f32 1.0, %v6778
    %v6780 = vrcp.pop %v6750
    %v6781 = vmul.f32 1.0, %v6780
    %v6782 = vrcp.pop %v6751
    %v6783 = vmul.f32 1.0, %v6782
    %v6784 = vtanh.pop %v6530
    %v6785 = vtanh.pop %v6534
    %v6786 = vtanh.pop %v6538
    %v6787 = vtanh.pop %v6542
    %v6788 = vtanh.pop %v6546
    %v6789 = vtanh.pop %v6550
    %v6790 = vtanh.pop %v6554
    %v6791 = vtanh.pop %v6558
    %v6792 = vtanh.pop %v6562
    %v6793 = vtanh.pop %v6566
    %v6794 = vtanh.pop %v6570
    %v6795 = vtanh.pop %v6574
    %v6796 = vtanh.pop %v6578
    %v6797 = vtanh.pop %v6582
    %v6798 = vtanh.pop %v6586
    %v6799 = vtanh.pop %v6590
    %v6800 = vxor.u32 %v6531, 2147483648
    %v6801 = vxor.u32 %v6535, 2147483648
    %v6802 = vxor.u32 %v6539, 2147483648
    %v6803 = vxor.u32 %v6543, 2147483648
    %v6804 = vxor.u32 %v6547, 2147483648
    %v6805 = vxor.u32 %v6551, 2147483648
    %v6806 = vxor.u32 %v6555, 2147483648
    %v6807 = vxor.u32 %v6559, 2147483648
    %v6808 = vxor.u32 %v6563, 2147483648
    %v6809 = vxor.u32 %v6567, 2147483648
    %v6810 = vxor.u32 %v6571, 2147483648
    %v6811 = vxor.u32 %v6575, 2147483648
    %v6812 = vxor.u32 %v6579, 2147483648
    %v6813 = vxor.u32 %v6583, 2147483648
    %v6814 = vxor.u32 %v6587, 2147483648
    %v6815 = vxor.u32 %v6591, 2147483648
    %v6816 = vmul.f32 %v6800, 1.442695
    %v6817 = vpow.pop %v6816
    %v6818 = vmul.f32 %v6801, 1.442695
    %v6819 = vpow.pop %v6818
    %v6820 = vmul.f32 %v6802, 1.442695
    %v6821 = vpow.pop %v6820
    %v6822 = vmul.f32 %v6803, 1.442695
    %v6823 = vpow.pop %v6822
    %v6824 = vmul.f32 %v6804, 1.442695
    %v6825 = vpow.pop %v6824
    %v6826 = vmul.f32 %v6805, 1.442695
    %v6827 = vpow.pop %v6826
    %v6828 = vmul.f32 %v6806, 1.442695
    %v6829 = vpow.pop %v6828
    %v6830 = vmul.f32 %v6807, 1.442695
    %v6831 = vpow.pop %v6830
    %v6832 = vmul.f32 %v6808, 1.442695
    %v6833 = vpow.pop %v6832
    %v6834 = vmul.f32 %v6809, 1.442695
    %v6835 = vpow.pop %v6834
    %v6836 = vmul.f32 %v6810, 1.442695
    %v6837 = vpow.pop %v6836
    %v6838 = vmul.f32 %v6811, 1.442695
    %v6839 = vpow.pop %v6838
    %v6840 = vmul.f32 %v6812, 1.442695
    %v6841 = vpow.pop %v6840
    %v6842 = vmul.f32 %v6813, 1.442695
    %v6843 = vpow.pop %v6842
    %v6844 = vmul.f32 %v6814, 1.442695
    %v6845 = vpow.pop %v6844
    %v6846 = vmul.f32 %v6815, 1.442695
    %v6847 = vpow.pop %v6846
    %v6848 = vadd.f32 %v6817, 1.0
    %v6849 = vadd.f32 %v6819, 1.0
    %v6850 = vadd.f32 %v6821, 1.0
    %v6851 = vadd.f32 %v6823, 1.0
    %v6852 = vadd.f32 %v6825, 1.0
    %v6853 = vadd.f32 %v6827, 1.0
    %v6854 = vadd.f32 %v6829, 1.0
    %v6855 = vadd.f32 %v6831, 1.0
    %v6856 = vadd.f32 %v6833, 1.0
    %v6857 = vadd.f32 %v6835, 1.0
    %v6858 = vadd.f32 %v6837, 1.0
    %v6859 = vadd.f32 %v6839, 1.0
    %v6860 = vadd.f32 %v6841, 1.0
    %v6861 = vadd.f32 %v6843, 1.0
    %v6862 = vadd.f32 %v6845, 1.0
    %v6863 = vadd.f32 %v6847, 1.0
    %v6864 = vrcp.pop %v6848
    %v6865 = vmul.f32 1.0, %v6864
    %v6866 = vrcp.pop %v6849
    %v6867 = vmul.f32 1.0, %v6866
    %v6868 = vrcp.pop %v6850
    %v6869 = vmul.f32 1.0, %v6868
    %v6870 = vrcp.pop %v6851
    %v6871 = vmul.f32 1.0, %v6870
    %v6872 = vrcp.pop %v6852
    %v6873 = vmul.f32 1.0, %v6872
    %v6874 = vrcp.pop %v6853
    %v6875 = vmul.f32 1.0, %v6874
    %v6876 = vrcp.pop %v6854
    %v6877 = vmul.f32 1.0, %v6876
    %v6878 = vrcp.pop %v6855
    %v6879 = vmul.f32 1.0, %v6878
    %v6880 = vrcp.pop %v6856
    %v6881 = vmul.f32 1.0, %v6880
    %v6882 = vrcp.pop %v6857
    %v6883 = vmul.f32 1.0, %v6882
    %v6884 = vrcp.pop %v6858
    %v6885 = vmul.f32 1.0, %v6884
    %v6886 = vrcp.pop %v6859
    %v6887 = vmul.f32 1.0, %v6886
    %v6888 = vrcp.pop %v6860
    %v6889 = vmul.f32 1.0, %v6888
    %v6890 = vrcp.pop %v6861
    %v6891 = vmul.f32 1.0, %v6890
    %v6892 = vrcp.pop %v6862
    %v6893 = vmul.f32 1.0, %v6892
    %v6894 = vrcp.pop %v6863
    %v6895 = vmul.f32 1.0, %v6894
    %v6896 = vmul.f32 %v6753, %v6182
    %v6897 = vmul.f32 %v6755, %v6183
    %v6898 = vmul.f32 %v6757, %v6184
    %v6899 = vmul.f32 %v6759, %v6185
    %v6900 = vmul.f32 %v6761, %v6186
    %v6901 = vmul.f32 %v6763, %v6187
    %v6902 = vmul.f32 %v6765, %v6188
    %v6903 = vmul.f32 %v6767, %v6189
    %v6904 = vmul.f32 %v6769, %v6190
    %v6905 = vmul.f32 %v6771, %v6191
    %v6906 = vmul.f32 %v6773, %v6192
    %v6907 = vmul.f32 %v6775, %v6193
    %v6908 = vmul.f32 %v6777, %v6194
    %v6909 = vmul.f32 %v6779, %v6195
    %v6910 = vmul.f32 %v6781, %v6196
    %v6911 = vmul.f32 %v6783, %v6197
    %v6912 = vmul.f32 %v6657, %v6784
    %v6913 = vmul.f32 %v6659, %v6785
    %v6914 = vmul.f32 %v6661, %v6786
    %v6915 = vmul.f32 %v6663, %v6787
    %v6916 = vmul.f32 %v6665, %v6788
    %v6917 = vmul.f32 %v6667, %v6789
    %v6918 = vmul.f32 %v6669, %v6790
    %v6919 = vmul.f32 %v6671, %v6791
    %v6920 = vmul.f32 %v6673, %v6792
    %v6921 = vmul.f32 %v6675, %v6793
    %v6922 = vmul.f32 %v6677, %v6794
    %v6923 = vmul.f32 %v6679, %v6795
    %v6924 = vmul.f32 %v6681, %v6796
    %v6925 = vmul.f32 %v6683, %v6797
    %v6926 = vmul.f32 %v6685, %v6798
    %v6927 = vmul.f32 %v6687, %v6799
    %v6928 = vadd.f32 %v6896, %v6912
    %v6929 = vadd.f32 %v6897, %v6913
    %v6930 = vadd.f32 %v6898, %v6914
    %v6931 = vadd.f32 %v6899, %v6915
    %v6932 = vadd.f32 %v6900, %v6916
    %v6933 = vadd.f32 %v6901, %v6917
    %v6934 = vadd.f32 %v6902, %v6918
    %v6935 = vadd.f32 %v6903, %v6919
    %v6936 = vadd.f32 %v6904, %v6920
    %v6937 = vadd.f32 %v6905, %v6921
    %v6938 = vadd.f32 %v6906, %v6922
    %v6939 = vadd.f32 %v6907, %v6923
    %v6940 = vadd.f32 %v6908, %v6924
    %v6941 = vadd.f32 %v6909, %v6925
    %v6942 = vadd.f32 %v6910, %v6926
    %v6943 = vadd.f32 %v6911, %v6927
    %v6944 = vtanh.pop %v6928
    %v6945 = vtanh.pop %v6929
    %v6946 = vtanh.pop %v6930
    %v6947 = vtanh.pop %v6931
    %v6948 = vtanh.pop %v6932
    %v6949 = vtanh.pop %v6933
    %v6950 = vtanh.pop %v6934
    %v6951 = vtanh.pop %v6935
    %v6952 = vtanh.pop %v6936
    %v6953 = vtanh.pop %v6937
    %v6954 = vtanh.pop %v6938
    %v6955 = vtanh.pop %v6939
    %v6956 = vtanh.pop %v6940
    %v6957 = vtanh.pop %v6941
    %v6958 = vtanh.pop %v6942
    %v6959 = vtanh.pop %v6943
    %v6960 = vmul.f32 %v6865, %v6944
    %v6961 = vmul.f32 %v6867, %v6945
    %v6962 = vmul.f32 %v6869, %v6946
    %v6963 = vmul.f32 %v6871, %v6947
    %v6964 = vmul.f32 %v6873, %v6948
    %v6965 = vmul.f32 %v6875, %v6949
    %v6966 = vmul.f32 %v6877, %v6950
    %v6967 = vmul.f32 %v6879, %v6951
    %v6968 = vmul.f32 %v6881, %v6952
    %v6969 = vmul.f32 %v6883, %v6953
    %v6970 = vmul.f32 %v6885, %v6954
    %v6971 = vmul.f32 %v6887, %v6955
    %v6972 = vmul.f32 %v6889, %v6956
    %v6973 = vmul.f32 %v6891, %v6957
    %v6974 = vmul.f32 %v6893, %v6958
    %v6975 = vmul.f32 %v6895, %v6959
    %v6976 = vld [vmem:[%s2058] sm:$0xff]
    %v6977 = vld [vmem:[%s2058 + $0x8] sm:$0xff]
    %v6978 = vld [vmem:[%s2058 + $0x10] sm:$0xff]
    %v6979 = vld [vmem:[%s2058 + $0x18] sm:$0xff]
    %v6980 = vld [vmem:[%s2058 + $0x20] sm:$0xff]
    %v6981 = vld [vmem:[%s2058 + $0x28] sm:$0xff]
    %v6982 = vld [vmem:[%s2058 + $0x30] sm:$0xff]
    %v6983 = vld [vmem:[%s2058 + $0x38] sm:$0xff]
    %v6984 = vld [vmem:[%s2058 + $0x40] sm:$0xff]
    %v6985 = vld [vmem:[%s2058 + $0x48] sm:$0xff]
    %v6986 = vld [vmem:[%s2058 + $0x50] sm:$0xff]
    %v6987 = vld [vmem:[%s2058 + $0x58] sm:$0xff]
    %v6988 = vld [vmem:[%s2058 + $0x60] sm:$0xff]
    %v6989 = vld [vmem:[%s2058 + $0x68] sm:$0xff]
    %v6990 = vld [vmem:[%s2058 + $0x70] sm:$0xff]
    %v6991 = vld [vmem:[%s2058 + $0x78] sm:$0xff]
    %v6992 = vld [vmem:[%s2058 + $0x80] sm:$0xff]
    %v6993 = vld [vmem:[%s2058 + $0x88] sm:$0xff]
    %v6994 = vld [vmem:[%s2058 + $0x90] sm:$0xff]
    %v6995 = vld [vmem:[%s2058 + $0x98] sm:$0xff]
    %v6996 = vld [vmem:[%s2058 + $0xa0] sm:$0xff]
    %v6997 = vld [vmem:[%s2058 + $0xa8] sm:$0xff]
    %v6998 = vld [vmem:[%s2058 + $0xb0] sm:$0xff]
    %v6999 = vld [vmem:[%s2058 + $0xb8] sm:$0xff]
    %v7000 = vld [vmem:[%s2058 + $0xc0] sm:$0xff]
    %v7001 = vld [vmem:[%s2058 + $0xc8] sm:$0xff]
    %v7002 = vld [vmem:[%s2058 + $0xd0] sm:$0xff]
    %v7003 = vld [vmem:[%s2058 + $0xd8] sm:$0xff]
    %v7004 = vld [vmem:[%s2058 + $0xe0] sm:$0xff]
    %v7005 = vld [vmem:[%s2058 + $0xe8] sm:$0xff]
    %v7006 = vld [vmem:[%s2058 + $0xf0] sm:$0xff]
    %v7007 = vld [vmem:[%s2058 + $0xf8] sm:$0xff]
    %v7008 = vld [vmem:[%s2058 + $0x100] sm:$0xff]
    %v7009 = vld [vmem:[%s2058 + $0x108] sm:$0xff]
    %v7010 = vld [vmem:[%s2058 + $0x110] sm:$0xff]
    %v7011 = vld [vmem:[%s2058 + $0x118] sm:$0xff]
    %v7012 = vld [vmem:[%s2058 + $0x120] sm:$0xff]
    %v7013 = vld [vmem:[%s2058 + $0x128] sm:$0xff]
    %v7014 = vld [vmem:[%s2058 + $0x130] sm:$0xff]
    %v7015 = vld [vmem:[%s2058 + $0x138] sm:$0xff]
    %v7016 = vld [vmem:[%s2058 + $0x140] sm:$0xff]
    %v7017 = vld [vmem:[%s2058 + $0x148] sm:$0xff]
    %v7018 = vld [vmem:[%s2058 + $0x150] sm:$0xff]
    %v7019 = vld [vmem:[%s2058 + $0x158] sm:$0xff]
    %v7020 = vld [vmem:[%s2058 + $0x160] sm:$0xff]
    %v7021 = vld [vmem:[%s2058 + $0x168] sm:$0xff]
    %v7022 = vld [vmem:[%s2058 + $0x170] sm:$0xff]
    %v7023 = vld [vmem:[%s2058 + $0x178] sm:$0xff]
    %v7024 = vld [vmem:[%s2058 + $0x180] sm:$0xff]
    %v7025 = vld [vmem:[%s2058 + $0x188] sm:$0xff]
    %v7026 = vld [vmem:[%s2058 + $0x190] sm:$0xff]
    %v7027 = vld [vmem:[%s2058 + $0x198] sm:$0xff]
    %v7028 = vld [vmem:[%s2058 + $0x1a0] sm:$0xff]
    %v7029 = vld [vmem:[%s2058 + $0x1a8] sm:$0xff]
    %v7030 = vld [vmem:[%s2058 + $0x1b0] sm:$0xff]
    %v7031 = vld [vmem:[%s2058 + $0x1b8] sm:$0xff]
    %v7032 = vld [vmem:[%s2058 + $0x1c0] sm:$0xff]
    %v7033 = vld [vmem:[%s2058 + $0x1c8] sm:$0xff]
    %v7034 = vld [vmem:[%s2058 + $0x1d0] sm:$0xff]
    %v7035 = vld [vmem:[%s2058 + $0x1d8] sm:$0xff]
    %v7036 = vld [vmem:[%s2058 + $0x1e0] sm:$0xff]
    %v7037 = vld [vmem:[%s2058 + $0x1e8] sm:$0xff]
    %v7038 = vld [vmem:[%s2058 + $0x1f0] sm:$0xff]
    %v7039 = vld [vmem:[%s2058 + $0x1f8] sm:$0xff]
    %v7040 = vpack.c.bf16 %v6961, %v6960
    %v7041 = vpack.c.bf16 %v6963, %v6962
    %v7042 = vpack.c.bf16 %v6965, %v6964
    %v7043 = vpack.c.bf16 %v6967, %v6966
    %v7044 = vpack.c.bf16 %v6969, %v6968
    %v7045 = vpack.c.bf16 %v6971, %v6970
    %v7046 = vpack.c.bf16 %v6973, %v6972
    %v7047 = vpack.c.bf16 %v6975, %v6974
    %7048 = vmatprep.subr.bf16.mxu0 %v2477
    %7049 = vmatpush1.bf16.msra.mxu0 %v2476
    %7050 = vmatprep.subr.bf16.mxu0 %v2481
    %7051 = vmatpush1.bf16.msra.mxu0 %v2480
    %7052 = vmatprep.subr.bf16.mxu0 %v2485
    %7053 = vmatpush1.bf16.msra.mxu0 %v2484
    %7054 = vmatprep.subr.bf16.mxu0 %v2489
    %7055 = vmatpush1.bf16.msra.mxu0 %v2488
    %7056 = vmatprep.subr.bf16.mxu0 %v2493
    %7057 = vmatpush1.bf16.msra.mxu0 %v2492
    %7058 = vmatprep.subr.bf16.mxu0 %v2497
    %7059 = vmatpush1.bf16.msra.mxu0 %v2496
    %7060 = vmatprep.subr.bf16.mxu0 %v2501
    %7061 = vmatpush1.bf16.msra.mxu0 %v2500
    %7062 = vmatprep.subr.bf16.mxu0 %v2505
    %7063 = vmatpush1.bf16.msra.mxu0 %v2504
    %7064 = vmatprep.subr.bf16.mxu0 0
    %7065 = vmatpush1.bf16.msra.mxu0 0
    %7066 = vmatprep.subr.bf16.mxu0 0
    %7067 = vmatpush1.bf16.msra.mxu0 0
    %7068 = vmatprep.subr.bf16.mxu0 0
    %7069 = vmatpush1.bf16.msra.mxu0 0
    %7070 = vmatprep.subr.bf16.mxu0 0
    %7071 = vmatpush1.bf16.msra.mxu0 0
    %7072 = vmatprep.subr.bf16.mxu0 0
    %7073 = vmatpush1.bf16.msra.mxu0 0
    %7074 = vmatprep.subr.bf16.mxu0 0
    %7075 = vmatpush1.bf16.msra.mxu0 0
    %7076 = vmatprep.subr.bf16.mxu0 0
    %7077 = vmatpush1.bf16.msra.mxu0 0
    %7078 = vmatprep.subr.bf16.mxu0 0
    %7079 = vmatpush1.bf16.msra.mxu0 0
    %7080 = vmatprep.mubr.bf16.mxu0 0
    %7081 = vmatmul.mubr.bf16.gmra.mrb[0].mxu0 %v7040
    %v7082 = vpop.f32.mrb[0].mxu0
    %v7083 = vadd.f32 0.0, %v7082
    %v7084 = vpop.f32.mrb[0].mxu0
    %v7085 = vadd.f32 0.0, %v7084
    %v7086 = vpop.f32.mrb[0].mxu0
    %v7087 = vadd.f32 0.0, %v7086
    %v7088 = vpop.f32.mrb[0].mxu0
    %v7089 = vadd.f32 0.0, %v7088
    %7090 = vmatprep.mubr.bf16.mxu0 0
    %7091 = vmatmul.mubr.bf16.gmra.mrb[0].mxu0 %v7041
    %v7092 = vpop.f32.mrb[0].mxu0
    %v7093 = vadd.f32 0.0, %v7092
    %v7094 = vpop.f32.mrb[0].mxu0
    %v7095 = vadd.f32 0.0, %v7094
    %v7096 = vpop.f32.mrb[0].mxu0
    %v7097 = vadd.f32 0.0, %v7096
    %v7098 = vpop.f32.mrb[0].mxu0
    %v7099 = vadd.f32 0.0, %v7098
    %7100 = vmatprep.mubr.bf16.mxu0 0
    %7101 = vmatmul.mubr.bf16.gmra.mrb[0].mxu0 %v7042
    %v7102 = vpop.f32.mrb[0].mxu0
    %v7103 = vadd.f32 0.0, %v7102
    %v7104 = vpop.f32.mrb[0].mxu0
    %v7105 = vadd.f32 0.0, %v7104
    %v7106 = vpop.f32.mrb[0].mxu0
    %v7107 = vadd.f32 0.0, %v7106
    %v7108 = vpop.f32.mrb[0].mxu0
    %v7109 = vadd.f32 0.0, %v7108
    %7110 = vmatprep.mubr.bf16.mxu0 0
    %7111 = vmatmul.mubr.bf16.gmra.mrb[0].mxu0 %v7043
    %v7112 = vpop.f32.mrb[0].mxu0
    %v7113 = vadd.f32 0.0, %v7112
    %v7114 = vpop.f32.mrb[0].mxu0
    %v7115 = vadd.f32 0.0, %v7114
    %v7116 = vpop.f32.mrb[0].mxu0
    %v7117 = vadd.f32 0.0, %v7116
    %v7118 = vpop.f32.mrb[0].mxu0
    %v7119 = vadd.f32 0.0, %v7118
    %7120 = vmatprep.mubr.bf16.mxu0 0
    %7121 = vmatmul.mubr.bf16.gmra.mrb[0].mxu0 %v7044
    %v7122 = vpop.f32.mrb[0].mxu0
    %v7123 = vadd.f32 0.0, %v7122
    %v7124 = vpop.f32.mrb[0].mxu0
    %v7125 = vadd.f32 0.0, %v7124
    %v7126 = vpop.f32.mrb[0].mxu0
    %v7127 = vadd.f32 0.0, %v7126
    %v7128 = vpop.f32.mrb[0].mxu0
    %v7129 = vadd.f32 0.0, %v7128
    %7130 = vmatprep.mubr.bf16.mxu0 0
    %7131 = vmatmul.mubr.bf16.gmra.mrb[0].mxu0 %v7045
    %v7132 = vpop.f32.mrb[0].mxu0
    %v7133 = vadd.f32 0.0, %v7132
    %v7134 = vpop.f32.mrb[0].mxu0
    %v7135 = vadd.f32 0.0, %v7134
    %v7136 = vpop.f32.mrb[0].mxu0
    %v7137 = vadd.f32 0.0, %v7136
    %v7138 = vpop.f32.mrb[0].mxu0
    %v7139 = vadd.f32 0.0, %v7138
    %7140 = vmatprep.mubr.bf16.mxu0 0
    %7141 = vmatmul.mubr.bf16.gmra.mrb[0].mxu0 %v7046
    %v7142 = vpop.f32.mrb[0].mxu0
    %v7143 = vadd.f32 0.0, %v7142
    %v7144 = vpop.f32.mrb[0].mxu0
    %v7145 = vadd.f32 0.0, %v7144
    %v7146 = vpop.f32.mrb[0].mxu0
    %v7147 = vadd.f32 0.0, %v7146
    %v7148 = vpop.f32.mrb[0].mxu0
    %v7149 = vadd.f32 0.0, %v7148
    %7150 = vmatprep.mubr.bf16.mxu0 0
    %7151 = vmatmul.mubr.bf16.gmra.mrb[0].mxu0 %v7047
    %v7152 = vpop.f32.mrb[0].mxu0
    %v7153 = vadd.f32 0.0, %v7152
    %v7154 = vpop.f32.mrb[0].mxu0
    %v7155 = vadd.f32 0.0, %v7154
    %v7156 = vpop.f32.mrb[0].mxu0
    %v7157 = vadd.f32 0.0, %v7156
    %v7158 = vpop.f32.mrb[0].mxu0
    %v7159 = vadd.f32 0.0, %v7158
    %7160 = vdwg.mxu0
    %7161 = vmatprep.subr.bf16.mxu0 %v2479
    %7162 = vmatpush1.bf16.msra.mxu0 %v2478
    %7163 = vmatprep.subr.bf16.mxu0 %v2483
    %7164 = vmatpush1.bf16.msra.mxu0 %v2482
    %7165 = vmatprep.subr.bf16.mxu0 %v2487
    %7166 = vmatpush1.bf16.msra.mxu0 %v2486
    %7167 = vmatprep.subr.bf16.mxu0 %v2491
    %7168 = vmatpush1.bf16.msra.mxu0 %v2490
    %7169 = vmatprep.subr.bf16.mxu0 %v2495
    %7170 = vmatpush1.bf16.msra.mxu0 %v2494
    %7171 = vmatprep.subr.bf16.mxu0 %v2499
    %7172 = vmatpush1.bf16.msra.mxu0 %v2498
    %7173 = vmatprep.subr.bf16.mxu0 %v2503
    %7174 = vmatpush1.bf16.msra.mxu0 %v2502
    %7175 = vmatprep.subr.bf16.mxu0 %v2507
    %7176 = vmatpush1.bf16.msra.mxu0 %v2506
    %7177 = vmatprep.subr.bf16.mxu0 0
    %7178 = vmatpush1.bf16.msra.mxu0 0
    %7179 = vmatprep.subr.bf16.mxu0 0
    %7180 = vmatpush1.bf16.msra.mxu0 0
    %7181 = vmatprep.subr.bf16.mxu0 0
    %7182 = vmatpush1.bf16.msra.mxu0 0
    %7183 = vmatprep.subr.bf16.mxu0 0
    %7184 = vmatpush1.bf16.msra.mxu0 0
    %7185 = vmatprep.subr.bf16.mxu0 0
    %7186 = vmatpush1.bf16.msra.mxu0 0
    %7187 = vmatprep.subr.bf16.mxu0 0
    %7188 = vmatpush1.bf16.msra.mxu0 0
    %7189 = vmatprep.subr.bf16.mxu0 0
    %7190 = vmatpush1.bf16.msra.mxu0 0
    %7191 = vmatprep.subr.bf16.mxu0 0
    %7192 = vmatpush1.bf16.msra.mxu0 0
    %7193 = vmatprep.mubr.bf16.mxu0 0
    %7194 = vmatmul.mubr.bf16.gmra.mrb[0].mxu0 %v7040
    %v7195 = vpop.f32.mrb[0].mxu0
    %v7196 = vadd.f32 0.0, %v7195
    %v7197 = vpop.f32.mrb[0].mxu0
    %v7198 = vadd.f32 0.0, %v7197
    %v7199 = vpop.f32.mrb[0].mxu0
    %v7200 = vadd.f32 0.0, %v7199
    %v7201 = vpop.f32.mrb[0].mxu0
    %v7202 = vadd.f32 0.0, %v7201
    %7203 = vmatprep.mubr.bf16.mxu0 0
    %7204 = vmatmul.mubr.bf16.gmra.mrb[0].mxu0 %v7041
    %v7205 = vpop.f32.mrb[0].mxu0
    %v7206 = vadd.f32 0.0, %v7205
    %v7207 = vpop.f32.mrb[0].mxu0
    %v7208 = vadd.f32 0.0, %v7207
    %v7209 = vpop.f32.mrb[0].mxu0
    %v7210 = vadd.f32 0.0, %v7209
    %v7211 = vpop.f32.mrb[0].mxu0
    %v7212 = vadd.f32 0.0, %v7211
    %7213 = vmatprep.mubr.bf16.mxu0 0
    %7214 = vmatmul.mubr.bf16.gmra.mrb[0].mxu0 %v7042
    %v7215 = vpop.f32.mrb[0].mxu0
    %v7216 = vadd.f32 0.0, %v7215
    %v7217 = vpop.f32.mrb[0].mxu0
    %v7218 = vadd.f32 0.0, %v7217
    %v7219 = vpop.f32.mrb[0].mxu0
    %v7220 = vadd.f32 0.0, %v7219
    %v7221 = vpop.f32.mrb[0].mxu0
    %v7222 = vadd.f32 0.0, %v7221
    %7223 = vmatprep.mubr.bf16.mxu0 0
    %7224 = vmatmul.mubr.bf16.gmra.mrb[0].mxu0 %v7043
    %v7225 = vpop.f32.mrb[0].mxu0
    %v7226 = vadd.f32 0.0, %v7225
    %v7227 = vpop.f32.mrb[0].mxu0
    %v7228 = vadd.f32 0.0, %v7227
    %v7229 = vpop.f32.mrb[0].mxu0
    %v7230 = vadd.f32 0.0, %v7229
    %v7231 = vpop.f32.mrb[0].mxu0
    %v7232 = vadd.f32 0.0, %v7231
    %7233 = vmatprep.mubr.bf16.mxu0 0
    %7234 = vmatmul.mubr.bf16.gmra.mrb[0].mxu0 %v7044
    %v7235 = vpop.f32.mrb[0].mxu0
    %v7236 = vadd.f32 0.0, %v7235
    %v7237 = vpop.f32.mrb[0].mxu0
    %v7238 = vadd.f32 0.0, %v7237
    %v7239 = vpop.f32.mrb[0].mxu0
    %v7240 = vadd.f32 0.0, %v7239
    %v7241 = vpop.f32.mrb[0].mxu0
    %v7242 = vadd.f32 0.0, %v7241
    %7243 = vmatprep.mubr.bf16.mxu0 0
    %7244 = vmatmul.mubr.bf16.gmra.mrb[0].mxu0 %v7045
    %v7245 = vpop.f32.mrb[0].mxu0
    %v7246 = vadd.f32 0.0, %v7245
    %v7247 = vpop.f32.mrb[0].mxu0
    %v7248 = vadd.f32 0.0, %v7247
    %v7249 = vpop.f32.mrb[0].mxu0
    %v7250 = vadd.f32 0.0, %v7249
    %v7251 = vpop.f32.mrb[0].mxu0
    %v7252 = vadd.f32 0.0, %v7251
    %7253 = vmatprep.mubr.bf16.mxu0 0
    %7254 = vmatmul.mubr.bf16.gmra.mrb[0].mxu0 %v7046
    %v7255 = vpop.f32.mrb[0].mxu0
    %v7256 = vadd.f32 0.0, %v7255
    %v7257 = vpop.f32.mrb[0].mxu0
    %v7258 = vadd.f32 0.0, %v7257
    %v7259 = vpop.f32.mrb[0].mxu0
    %v7260 = vadd.f32 0.0, %v7259
    %v7261 = vpop.f32.mrb[0].mxu0
    %v7262 = vadd.f32 0.0, %v7261
    %7263 = vmatprep.mubr.bf16.mxu0 0
    %7264 = vmatmul.mubr.bf16.gmra.mrb[0].mxu0 %v7047
    %v7265 = vpop.f32.mrb[0].mxu0
    %v7266 = vadd.f32 0.0, %v7265
    %v7267 = vpop.f32.mrb[0].mxu0
    %v7268 = vadd.f32 0.0, %v7267
    %v7269 = vpop.f32.mrb[0].mxu0
    %v7270 = vadd.f32 0.0, %v7269
    %v7271 = vpop.f32.mrb[0].mxu0
    %v7272 = vadd.f32 0.0, %v7271
    %7273 = vdwg.mxu0
    %v7274 = vadd.f32 %v6976, %v7083
    %v7275 = vadd.f32 %v6977, %v7085
    %v7276 = vadd.f32 %v6978, %v7196
    %v7277 = vadd.f32 %v6979, %v7198
    %v7278 = vadd.f32 %v6980, %v7087
    %v7279 = vadd.f32 %v6981, %v7089
    %v7280 = vadd.f32 %v6982, %v7200
    %v7281 = vadd.f32 %v6983, %v7202
    %v7282 = vadd.f32 %v6984, %v7093
    %v7283 = vadd.f32 %v6985, %v7095
    %v7284 = vadd.f32 %v6986, %v7206
    %v7285 = vadd.f32 %v6987, %v7208
    %v7286 = vadd.f32 %v6988, %v7097
    %v7287 = vadd.f32 %v6989, %v7099
    %v7288 = vadd.f32 %v6990, %v7210
    %v7289 = vadd.f32 %v6991, %v7212
    %v7290 = vadd.f32 %v6992, %v7103
    %v7291 = vadd.f32 %v6993, %v7105
    %v7292 = vadd.f32 %v6994, %v7216
    %v7293 = vadd.f32 %v6995, %v7218
    %v7294 = vadd.f32 %v6996, %v7107
    %v7295 = vadd.f32 %v6997, %v7109
    %v7296 = vadd.f32 %v6998, %v7220
    %v7297 = vadd.f32 %v6999, %v7222
    %v7298 = vadd.f32 %v7000, %v7113
    %v7299 = vadd.f32 %v7001, %v7115
    %v7300 = vadd.f32 %v7002, %v7226
    %v7301 = vadd.f32 %v7003, %v7228
    %v7302 = vadd.f32 %v7004, %v7117
    %v7303 = vadd.f32 %v7005, %v7119
    %v7304 = vadd.f32 %v7006, %v7230
    %v7305 = vadd.f32 %v7007, %v7232
    %v7306 = vadd.f32 %v7008, %v7123
    %v7307 = vadd.f32 %v7009, %v7125
    %v7308 = vadd.f32 %v7010, %v7236
    %v7309 = vadd.f32 %v7011, %v7238
    %v7310 = vadd.f32 %v7012, %v7127
    %v7311 = vadd.f32 %v7013, %v7129
    %v7312 = vadd.f32 %v7014, %v7240
    %v7313 = vadd.f32 %v7015, %v7242
    %v7314 = vadd.f32 %v7016, %v7133
    %v7315 = vadd.f32 %v7017, %v7135
    %v7316 = vadd.f32 %v7018, %v7246
    %v7317 = vadd.f32 %v7019, %v7248
    %v7318 = vadd.f32 %v7020, %v7137
    %v7319 = vadd.f32 %v7021, %v7139
    %v7320 = vadd.f32 %v7022, %v7250
    %v7321 = vadd.f32 %v7023, %v7252
    %v7322 = vadd.f32 %v7024, %v7143
    %v7323 = vadd.f32 %v7025, %v7145
    %v7324 = vadd.f32 %v7026, %v7256
    %v7325 = vadd.f32 %v7027, %v7258
    %v7326 = vadd.f32 %v7028, %v7147
    %v7327 = vadd.f32 %v7029, %v7149
    %v7328 = vadd.f32 %v7030, %v7260
    %v7329 = vadd.f32 %v7031, %v7262
    %v7330 = vadd.f32 %v7032, %v7153
    %v7331 = vadd.f32 %v7033, %v7155
    %v7332 = vadd.f32 %v7034, %v7266
    %v7333 = vadd.f32 %v7035, %v7268
    %v7334 = vadd.f32 %v7036, %v7157
    %v7335 = vadd.f32 %v7037, %v7159
    %v7336 = vadd.f32 %v7038, %v7270
    %v7337 = vadd.f32 %v7039, %v7272
    %v7338 = vxor.u32 %v7274, 2147483648
    %v7339 = vxor.u32 %v7278, 2147483648
    %v7340 = vxor.u32 %v7282, 2147483648
    %v7341 = vxor.u32 %v7286, 2147483648
    %v7342 = vxor.u32 %v7290, 2147483648
    %v7343 = vxor.u32 %v7294, 2147483648
    %v7344 = vxor.u32 %v7298, 2147483648
    %v7345 = vxor.u32 %v7302, 2147483648
    %v7346 = vxor.u32 %v7306, 2147483648
    %v7347 = vxor.u32 %v7310, 2147483648
    %v7348 = vxor.u32 %v7314, 2147483648
    %v7349 = vxor.u32 %v7318, 2147483648
    %v7350 = vxor.u32 %v7322, 2147483648
    %v7351 = vxor.u32 %v7326, 2147483648
    %v7352 = vxor.u32 %v7330, 2147483648
    %v7353 = vxor.u32 %v7334, 2147483648
    %v7354 = vmul.f32 %v7338, 1.442695
    %v7355 = vpow.pop %v7354
    %v7356 = vmul.f32 %v7339, 1.442695
    %v7357 = vpow.pop %v7356
    %v7358 = vmul.f32 %v7340, 1.442695
    %v7359 = vpow.pop %v7358
    %v7360 = vmul.f32 %v7341, 1.442695
    %v7361 = vpow.pop %v7360
    %v7362 = vmul.f32 %v7342, 1.442695
    %v7363 = vpow.pop %v7362
    %v7364 = vmul.f32 %v7343, 1.442695
    %v7365 = vpow.pop %v7364
    %v7366 = vmul.f32 %v7344, 1.442695
    %v7367 = vpow.pop %v7366
    %v7368 = vmul.f32 %v7345, 1.442695
    %v7369 = vpow.pop %v7368
    %v7370 = vmul.f32 %v7346, 1.442695
    %v7371 = vpow.pop %v7370
    %v7372 = vmul.f32 %v7347, 1.442695
    %v7373 = vpow.pop %v7372
    %v7374 = vmul.f32 %v7348, 1.442695
    %v7375 = vpow.pop %v7374
    %v7376 = vmul.f32 %v7349, 1.442695
    %v7377 = vpow.pop %v7376
    %v7378 = vmul.f32 %v7350, 1.442695
    %v7379 = vpow.pop %v7378
    %v7380 = vmul.f32 %v7351, 1.442695
    %v7381 = vpow.pop %v7380
    %v7382 = vmul.f32 %v7352, 1.442695
    %v7383 = vpow.pop %v7382
    %v7384 = vmul.f32 %v7353, 1.442695
    %v7385 = vpow.pop %v7384
    %v7386 = vadd.f32 %v7355, 1.0
    %v7387 = vadd.f32 %v7357, 1.0
    %v7388 = vadd.f32 %v7359, 1.0
    %v7389 = vadd.f32 %v7361, 1.0
    %v7390 = vadd.f32 %v7363, 1.0
    %v7391 = vadd.f32 %v7365, 1.0
    %v7392 = vadd.f32 %v7367, 1.0
    %v7393 = vadd.f32 %v7369, 1.0
    %v7394 = vadd.f32 %v7371, 1.0
    %v7395 = vadd.f32 %v7373, 1.0
    %v7396 = vadd.f32 %v7375, 1.0
    %v7397 = vadd.f32 %v7377, 1.0
    %v7398 = vadd.f32 %v7379, 1.0
    %v7399 = vadd.f32 %v7381, 1.0
    %v7400 = vadd.f32 %v7383, 1.0
    %v7401 = vadd.f32 %v7385, 1.0
    %v7402 = vrcp.pop %v7386
    %v7403 = vmul.f32 1.0, %v7402
    %v7404 = vrcp.pop %v7387
    %v7405 = vmul.f32 1.0, %v7404
    %v7406 = vrcp.pop %v7388
    %v7407 = vmul.f32 1.0, %v7406
    %v7408 = vrcp.pop %v7389
    %v7409 = vmul.f32 1.0, %v7408
    %v7410 = vrcp.pop %v7390
    %v7411 = vmul.f32 1.0, %v7410
    %v7412 = vrcp.pop %v7391
    %v7413 = vmul.f32 1.0, %v7412
    %v7414 = vrcp.pop %v7392
    %v7415 = vmul.f32 1.0, %v7414
    %v7416 = vrcp.pop %v7393
    %v7417 = vmul.f32 1.0, %v7416
    %v7418 = vrcp.pop %v7394
    %v7419 = vmul.f32 1.0, %v7418
    %v7420 = vrcp.pop %v7395
    %v7421 = vmul.f32 1.0, %v7420
    %v7422 = vrcp.pop %v7396
    %v7423 = vmul.f32 1.0, %v7422
    %v7424 = vrcp.pop %v7397
    %v7425 = vmul.f32 1.0, %v7424
    %v7426 = vrcp.pop %v7398
    %v7427 = vmul.f32 1.0, %v7426
    %v7428 = vrcp.pop %v7399
    %v7429 = vmul.f32 1.0, %v7428
    %v7430 = vrcp.pop %v7400
    %v7431 = vmul.f32 1.0, %v7430
    %v7432 = vrcp.pop %v7401
    %v7433 = vmul.f32 1.0, %v7432
    %v7434 = vxor.u32 %v7275, 2147483648
    %v7435 = vxor.u32 %v7279, 2147483648
    %v7436 = vxor.u32 %v7283, 2147483648
    %v7437 = vxor.u32 %v7287, 2147483648
    %v7438 = vxor.u32 %v7291, 2147483648
    %v7439 = vxor.u32 %v7295, 2147483648
    %v7440 = vxor.u32 %v7299, 2147483648
    %v7441 = vxor.u32 %v7303, 2147483648
    %v7442 = vxor.u32 %v7307, 2147483648
    %v7443 = vxor.u32 %v7311, 2147483648
    %v7444 = vxor.u32 %v7315, 2147483648
    %v7445 = vxor.u32 %v7319, 2147483648
    %v7446 = vxor.u32 %v7323, 2147483648
    %v7447 = vxor.u32 %v7327, 2147483648
    %v7448 = vxor.u32 %v7331, 2147483648
    %v7449 = vxor.u32 %v7335, 2147483648
    %v7450 = vmul.f32 %v7434, 1.442695
    %v7451 = vpow.pop %v7450
    %v7452 = vmul.f32 %v7435, 1.442695
    %v7453 = vpow.pop %v7452
    %v7454 = vmul.f32 %v7436, 1.442695
    %v7455 = vpow.pop %v7454
    %v7456 = vmul.f32 %v7437, 1.442695
    %v7457 = vpow.pop %v7456
    %v7458 = vmul.f32 %v7438, 1.442695
    %v7459 = vpow.pop %v7458
    %v7460 = vmul.f32 %v7439, 1.442695
    %v7461 = vpow.pop %v7460
    %v7462 = vmul.f32 %v7440, 1.442695
    %v7463 = vpow.pop %v7462
    %v7464 = vmul.f32 %v7441, 1.442695
    %v7465 = vpow.pop %v7464
    %v7466 = vmul.f32 %v7442, 1.442695
    %v7467 = vpow.pop %v7466
    %v7468 = vmul.f32 %v7443, 1.442695
    %v7469 = vpow.pop %v7468
    %v7470 = vmul.f32 %v7444, 1.442695
    %v7471 = vpow.pop %v7470
    %v7472 = vmul.f32 %v7445, 1.442695
    %v7473 = vpow.pop %v7472
    %v7474 = vmul.f32 %v7446, 1.442695
    %v7475 = vpow.pop %v7474
    %v7476 = vmul.f32 %v7447, 1.442695
    %v7477 = vpow.pop %v7476
    %v7478 = vmul.f32 %v7448, 1.442695
    %v7479 = vpow.pop %v7478
    %v7480 = vmul.f32 %v7449, 1.442695
    %v7481 = vpow.pop %v7480
    %v7482 = vadd.f32 %v7451, 1.0
    %v7483 = vadd.f32 %v7453, 1.0
    %v7484 = vadd.f32 %v7455, 1.0
    %v7485 = vadd.f32 %v7457, 1.0
    %v7486 = vadd.f32 %v7459, 1.0
    %v7487 = vadd.f32 %v7461, 1.0
    %v7488 = vadd.f32 %v7463, 1.0
    %v7489 = vadd.f32 %v7465, 1.0
    %v7490 = vadd.f32 %v7467, 1.0
    %v7491 = vadd.f32 %v7469, 1.0
    %v7492 = vadd.f32 %v7471, 1.0
    %v7493 = vadd.f32 %v7473, 1.0
    %v7494 = vadd.f32 %v7475, 1.0
    %v7495 = vadd.f32 %v7477, 1.0
    %v7496 = vadd.f32 %v7479, 1.0
    %v7497 = vadd.f32 %v7481, 1.0
    %v7498 = vrcp.pop %v7482
    %v7499 = vmul.f32 1.0, %v7498
    %v7500 = vrcp.pop %v7483
    %v7501 = vmul.f32 1.0, %v7500
    %v7502 = vrcp.pop %v7484
    %v7503 = vmul.f32 1.0, %v7502
    %v7504 = vrcp.pop %v7485
    %v7505 = vmul.f32 1.0, %v7504
    %v7506 = vrcp.pop %v7486
    %v7507 = vmul.f32 1.0, %v7506
    %v7508 = vrcp.pop %v7487
    %v7509 = vmul.f32 1.0, %v7508
    %v7510 = vrcp.pop %v7488
    %v7511 = vmul.f32 1.0, %v7510
    %v7512 = vrcp.pop %v7489
    %v7513 = vmul.f32 1.0, %v7512
    %v7514 = vrcp.pop %v7490
    %v7515 = vmul.f32 1.0, %v7514
    %v7516 = vrcp.pop %v7491
    %v7517 = vmul.f32 1.0, %v7516
    %v7518 = vrcp.pop %v7492
    %v7519 = vmul.f32 1.0, %v7518
    %v7520 = vrcp.pop %v7493
    %v7521 = vmul.f32 1.0, %v7520
    %v7522 = vrcp.pop %v7494
    %v7523 = vmul.f32 1.0, %v7522
    %v7524 = vrcp.pop %v7495
    %v7525 = vmul.f32 1.0, %v7524
    %v7526 = vrcp.pop %v7496
    %v7527 = vmul.f32 1.0, %v7526
    %v7528 = vrcp.pop %v7497
    %v7529 = vmul.f32 1.0, %v7528
    %v7530 = vtanh.pop %v7276
    %v7531 = vtanh.pop %v7280
    %v7532 = vtanh.pop %v7284
    %v7533 = vtanh.pop %v7288
    %v7534 = vtanh.pop %v7292
    %v7535 = vtanh.pop %v7296
    %v7536 = vtanh.pop %v7300
    %v7537 = vtanh.pop %v7304
    %v7538 = vtanh.pop %v7308
    %v7539 = vtanh.pop %v7312
    %v7540 = vtanh.pop %v7316
    %v7541 = vtanh.pop %v7320
    %v7542 = vtanh.pop %v7324
    %v7543 = vtanh.pop %v7328
    %v7544 = vtanh.pop %v7332
    %v7545 = vtanh.pop %v7336
    %v7546 = vxor.u32 %v7277, 2147483648
    %v7547 = vxor.u32 %v7281, 2147483648
    %v7548 = vxor.u32 %v7285, 2147483648
    %v7549 = vxor.u32 %v7289, 2147483648
    %v7550 = vxor.u32 %v7293, 2147483648
    %v7551 = vxor.u32 %v7297, 2147483648
    %v7552 = vxor.u32 %v7301, 2147483648
    %v7553 = vxor.u32 %v7305, 2147483648
    %v7554 = vxor.u32 %v7309, 2147483648
    %v7555 = vxor.u32 %v7313, 2147483648
    %v7556 = vxor.u32 %v7317, 2147483648
    %v7557 = vxor.u32 %v7321, 2147483648
    %v7558 = vxor.u32 %v7325, 2147483648
    %v7559 = vxor.u32 %v7329, 2147483648
    %v7560 = vxor.u32 %v7333, 2147483648
    %v7561 = vxor.u32 %v7337, 2147483648
    %v7562 = vmul.f32 %v7546, 1.442695
    %v7563 = vpow.pop %v7562
    %v7564 = vmul.f32 %v7547, 1.442695
    %v7565 = vpow.pop %v7564
    %v7566 = vmul.f32 %v7548, 1.442695
    %v7567 = vpow.pop %v7566
    %v7568 = vmul.f32 %v7549, 1.442695
    %v7569 = vpow.pop %v7568
    %v7570 = vmul.f32 %v7550, 1.442695
    %v7571 = vpow.pop %v7570
    %v7572 = vmul.f32 %v7551, 1.442695
    %v7573 = vpow.pop %v7572
    %v7574 = vmul.f32 %v7552, 1.442695
    %v7575 = vpow.pop %v7574
    %v7576 = vmul.f32 %v7553, 1.442695
    %v7577 = vpow.pop %v7576
    %v7578 = vmul.f32 %v7554, 1.442695
    %v7579 = vpow.pop %v7578
    %v7580 = vmul.f32 %v7555, 1.442695
    %v7581 = vpow.pop %v7580
    %v7582 = vmul.f32 %v7556, 1.442695
    %v7583 = vpow.pop %v7582
    %v7584 = vmul.f32 %v7557, 1.442695
    %v7585 = vpow.pop %v7584
    %v7586 = vmul.f32 %v7558, 1.442695
    %v7587 = vpow.pop %v7586
    %v7588 = vmul.f32 %v7559, 1.442695
    %v7589 = vpow.pop %v7588
    %v7590 = vmul.f32 %v7560, 1.442695
    %v7591 = vpow.pop %v7590
    %v7592 = vmul.f32 %v7561, 1.442695
    %v7593 = vpow.pop %v7592
    %v7594 = vadd.f32 %v7563, 1.0
    %v7595 = vadd.f32 %v7565, 1.0
    %v7596 = vadd.f32 %v7567, 1.0
    %v7597 = vadd.f32 %v7569, 1.0
    %v7598 = vadd.f32 %v7571, 1.0
    %v7599 = vadd.f32 %v7573, 1.0
    %v7600 = vadd.f32 %v7575, 1.0
    %v7601 = vadd.f32 %v7577, 1.0
    %v7602 = vadd.f32 %v7579, 1.0
    %v7603 = vadd.f32 %v7581, 1.0
    %v7604 = vadd.f32 %v7583, 1.0
    %v7605 = vadd.f32 %v7585, 1.0
    %v7606 = vadd.f32 %v7587, 1.0
    %v7607 = vadd.f32 %v7589, 1.0
    %v7608 = vadd.f32 %v7591, 1.0
    %v7609 = vadd.f32 %v7593, 1.0
    %v7610 = vrcp.pop %v7594
    %v7611 = vmul.f32 1.0, %v7610
    %v7612 = vrcp.pop %v7595
    %v7613 = vmul.f32 1.0, %v7612
    %v7614 = vrcp.pop %v7596
    %v7615 = vmul.f32 1.0, %v7614
    %v7616 = vrcp.pop %v7597
    %v7617 = vmul.f32 1.0, %v7616
    %v7618 = vrcp.pop %v7598
    %v7619 = vmul.f32 1.0, %v7618
    %v7620 = vrcp.pop %v7599
    %v7621 = vmul.f32 1.0, %v7620
    %v7622 = vrcp.pop %v7600
    %v7623 = vmul.f32 1.0, %v7622
    %v7624 = vrcp.pop %v7601
    %v7625 = vmul.f32 1.0, %v7624
    %v7626 = vrcp.pop %v7602
    %v7627 = vmul.f32 1.0, %v7626
    %v7628 = vrcp.pop %v7603
    %v7629 = vmul.f32 1.0, %v7628
    %v7630 = vrcp.pop %v7604
    %v7631 = vmul.f32 1.0, %v7630
    %v7632 = vrcp.pop %v7605
    %v7633 = vmul.f32 1.0, %v7632
    %v7634 = vrcp.pop %v7606
    %v7635 = vmul.f32 1.0, %v7634
    %v7636 = vrcp.pop %v7607
    %v7637 = vmul.f32 1.0, %v7636
    %v7638 = vrcp.pop %v7608
    %v7639 = vmul.f32 1.0, %v7638
    %v7640 = vrcp.pop %v7609
    %v7641 = vmul.f32 1.0, %v7640
    %v7642 = vmul.f32 %v7499, %v6928
    %v7643 = vmul.f32 %v7501, %v6929
    %v7644 = vmul.f32 %v7503, %v6930
    %v7645 = vmul.f32 %v7505, %v6931
    %v7646 = vmul.f32 %v7507, %v6932
    %v7647 = vmul.f32 %v7509, %v6933
    %v7648 = vmul.f32 %v7511, %v6934
    %v7649 = vmul.f32 %v7513, %v6935
    %v7650 = vmul.f32 %v7515, %v6936
    %v7651 = vmul.f32 %v7517, %v6937
    %v7652 = vmul.f32 %v7519, %v6938
    %v7653 = vmul.f32 %v7521, %v6939
    %v7654 = vmul.f32 %v7523, %v6940
    %v7655 = vmul.f32 %v7525, %v6941
    %v7656 = vmul.f32 %v7527, %v6942
    %v7657 = vmul.f32 %v7529, %v6943
    %v7658 = vmul.f32 %v7403, %v7530
    %v7659 = vmul.f32 %v7405, %v7531
    %v7660 = vmul.f32 %v7407, %v7532
    %v7661 = vmul.f32 %v7409, %v7533
    %v7662 = vmul.f32 %v7411, %v7534
    %v7663 = vmul.f32 %v7413, %v7535
    %v7664 = vmul.f32 %v7415, %v7536
    %v7665 = vmul.f32 %v7417, %v7537
    %v7666 = vmul.f32 %v7419, %v7538
    %v7667 = vmul.f32 %v7421, %v7539
    %v7668 = vmul.f32 %v7423, %v7540
    %v7669 = vmul.f32 %v7425, %v7541
    %v7670 = vmul.f32 %v7427, %v7542
    %v7671 = vmul.f32 %v7429, %v7543
    %v7672 = vmul.f32 %v7431, %v7544
    %v7673 = vmul.f32 %v7433, %v7545
    %v7674 = vadd.f32 %v7642, %v7658
    %v7675 = vadd.f32 %v7643, %v7659
    %v7676 = vadd.f32 %v7644, %v7660
    %v7677 = vadd.f32 %v7645, %v7661
    %v7678 = vadd.f32 %v7646, %v7662
    %v7679 = vadd.f32 %v7647, %v7663
    %v7680 = vadd.f32 %v7648, %v7664
    %v7681 = vadd.f32 %v7649, %v7665
    %v7682 = vadd.f32 %v7650, %v7666
    %v7683 = vadd.f32 %v7651, %v7667
    %v7684 = vadd.f32 %v7652, %v7668
    %v7685 = vadd.f32 %v7653, %v7669
    %v7686 = vadd.f32 %v7654, %v7670
    %v7687 = vadd.f32 %v7655, %v7671
    %v7688 = vadd.f32 %v7656, %v7672
    %v7689 = vadd.f32 %v7657, %v7673
    %v7690 = vtanh.pop %v7674
    %v7691 = vtanh.pop %v7675
    %v7692 = vtanh.pop %v7676
    %v7693 = vtanh.pop %v7677
    %v7694 = vtanh.pop %v7678
    %v7695 = vtanh.pop %v7679
    %v7696 = vtanh.pop %v7680
    %v7697 = vtanh.pop %v7681
    %v7698 = vtanh.pop %v7682
    %v7699 = vtanh.pop %v7683
    %v7700 = vtanh.pop %v7684
    %v7701 = vtanh.pop %v7685
    %v7702 = vtanh.pop %v7686
    %v7703 = vtanh.pop %v7687
    %v7704 = vtanh.pop %v7688
    %v7705 = vtanh.pop %v7689
    %v7706 = vmul.f32 %v7611, %v7690
    %v7707 = vmul.f32 %v7613, %v7691
    %v7708 = vmul.f32 %v7615, %v7692
    %v7709 = vmul.f32 %v7617, %v7693
    %v7710 = vmul.f32 %v7619, %v7694
    %v7711 = vmul.f32 %v7621, %v7695
    %v7712 = vmul.f32 %v7623, %v7696
    %v7713 = vmul.f32 %v7625, %v7697
    %v7714 = vmul.f32 %v7627, %v7698
    %v7715 = vmul.f32 %v7629, %v7699
    %v7716 = vmul.f32 %v7631, %v7700
    %v7717 = vmul.f32 %v7633, %v7701
    %v7718 = vmul.f32 %v7635, %v7702
    %v7719 = vmul.f32 %v7637, %v7703
    %v7720 = vmul.f32 %v7639, %v7704
    %v7721 = vmul.f32 %v7641, %v7705
    %v7722 = vld [vmem:[%s2347] sm:$0xff]
    %v7723 = vld [vmem:[%s2347 + $0x8] sm:$0xff]
    %v7724 = vld [vmem:[%s2347 + $0x10] sm:$0xff]
    %v7725 = vld [vmem:[%s2347 + $0x18] sm:$0xff]
    %v7726 = vld [vmem:[%s2347 + $0x20] sm:$0xff]
    %v7727 = vld [vmem:[%s2347 + $0x28] sm:$0xff]
    %v7728 = vld [vmem:[%s2347 + $0x30] sm:$0xff]
    %v7729 = vld [vmem:[%s2347 + $0x38] sm:$0xff]
    %v7730 = vld [vmem:[%s2347 + $0x40] sm:$0xff]
    %v7731 = vld [vmem:[%s2347 + $0x48] sm:$0xff]
    %v7732 = vld [vmem:[%s2347 + $0x50] sm:$0xff]
    %v7733 = vld [vmem:[%s2347 + $0x58] sm:$0xff]
    %v7734 = vld [vmem:[%s2347 + $0x60] sm:$0xff]
    %v7735 = vld [vmem:[%s2347 + $0x68] sm:$0xff]
    %v7736 = vld [vmem:[%s2347 + $0x70] sm:$0xff]
    %v7737 = vld [vmem:[%s2347 + $0x78] sm:$0xff]
    %v7738 = vld [vmem:[%s2347 + $0x80] sm:$0xff]
    %v7739 = vld [vmem:[%s2347 + $0x88] sm:$0xff]
    %v7740 = vld [vmem:[%s2347 + $0x90] sm:$0xff]
    %v7741 = vld [vmem:[%s2347 + $0x98] sm:$0xff]
    %v7742 = vld [vmem:[%s2347 + $0xa0] sm:$0xff]
    %v7743 = vld [vmem:[%s2347 + $0xa8] sm:$0xff]
    %v7744 = vld [vmem:[%s2347 + $0xb0] sm:$0xff]
    %v7745 = vld [vmem:[%s2347 + $0xb8] sm:$0xff]
    %v7746 = vld [vmem:[%s2347 + $0xc0] sm:$0xff]
    %v7747 = vld [vmem:[%s2347 + $0xc8] sm:$0xff]
    %v7748 = vld [vmem:[%s2347 + $0xd0] sm:$0xff]
    %v7749 = vld [vmem:[%s2347 + $0xd8] sm:$0xff]
    %v7750 = vld [vmem:[%s2347 + $0xe0] sm:$0xff]
    %v7751 = vld [vmem:[%s2347 + $0xe8] sm:$0xff]
    %v7752 = vld [vmem:[%s2347 + $0xf0] sm:$0xff]
    %v7753 = vld [vmem:[%s2347 + $0xf8] sm:$0xff]
    %v7754 = vld [vmem:[%s2347 + $0x100] sm:$0xff]
    %v7755 = vld [vmem:[%s2347 + $0x108] sm:$0xff]
    %v7756 = vld [vmem:[%s2347 + $0x110] sm:$0xff]
    %v7757 = vld [vmem:[%s2347 + $0x118] sm:$0xff]
    %v7758 = vld [vmem:[%s2347 + $0x120] sm:$0xff]
    %v7759 = vld [vmem:[%s2347 + $0x128] sm:$0xff]
    %v7760 = vld [vmem:[%s2347 + $0x130] sm:$0xff]
    %v7761 = vld [vmem:[%s2347 + $0x138] sm:$0xff]
    %v7762 = vld [vmem:[%s2347 + $0x140] sm:$0xff]
    %v7763 = vld [vmem:[%s2347 + $0x148] sm:$0xff]
    %v7764 = vld [vmem:[%s2347 + $0x150] sm:$0xff]
    %v7765 = vld [vmem:[%s2347 + $0x158] sm:$0xff]
    %v7766 = vld [vmem:[%s2347 + $0x160] sm:$0xff]
    %v7767 = vld [vmem:[%s2347 + $0x168] sm:$0xff]
    %v7768 = vld [vmem:[%s2347 + $0x170] sm:$0xff]
    %v7769 = vld [vmem:[%s2347 + $0x178] sm:$0xff]
    %v7770 = vld [vmem:[%s2347 + $0x180] sm:$0xff]
    %v7771 = vld [vmem:[%s2347 + $0x188] sm:$0xff]
    %v7772 = vld [vmem:[%s2347 + $0x190] sm:$0xff]
    %v7773 = vld [vmem:[%s2347 + $0x198] sm:$0xff]
    %v7774 = vld [vmem:[%s2347 + $0x1a0] sm:$0xff]
    %v7775 = vld [vmem:[%s2347 + $0x1a8] sm:$0xff]
    %v7776 = vld [vmem:[%s2347 + $0x1b0] sm:$0xff]
    %v7777 = vld [vmem:[%s2347 + $0x1b8] sm:$0xff]
    %v7778 = vld [vmem:[%s2347 + $0x1c0] sm:$0xff]
    %v7779 = vld [vmem:[%s2347 + $0x1c8] sm:$0xff]
    %v7780 = vld [vmem:[%s2347 + $0x1d0] sm:$0xff]
    %v7781 = vld [vmem:[%s2347 + $0x1d8] sm:$0xff]
    %v7782 = vld [vmem:[%s2347 + $0x1e0] sm:$0xff]
    %v7783 = vld [vmem:[%s2347 + $0x1e8] sm:$0xff]
    %v7784 = vld [vmem:[%s2347 + $0x1f0] sm:$0xff]
    %v7785 = vld [vmem:[%s2347 + $0x1f8] sm:$0xff]
    %v7786 = vpack.c.bf16 %v7707, %v7706
    %v7787 = vpack.c.bf16 %v7709, %v7708
    %v7788 = vpack.c.bf16 %v7711, %v7710
    %v7789 = vpack.c.bf16 %v7713, %v7712
    %v7790 = vpack.c.bf16 %v7715, %v7714
    %v7791 = vpack.c.bf16 %v7717, %v7716
    %v7792 = vpack.c.bf16 %v7719, %v7718
    %v7793 = vpack.c.bf16 %v7721, %v7720
    %7794 = vmatprep.subr.bf16.mxu0 %v2477
    %7795 = vmatpush1.bf16.msra.mxu0 %v2476
    %7796 = vmatprep.subr.bf16.mxu0 %v2481
    %7797 = vmatpush1.bf16.msra.mxu0 %v2480
    %7798 = vmatprep.subr.bf16.mxu0 %v2485
    %7799 = vmatpush1.bf16.msra.mxu0 %v2484
    %7800 = vmatprep.subr.bf16.mxu0 %v2489
    %7801 = vmatpush1.bf16.msra.mxu0 %v2488
    %7802 = vmatprep.subr.bf16.mxu0 %v2493
    %7803 = vmatpush1.bf16.msra.mxu0 %v2492
    %7804 = vmatprep.subr.bf16.mxu0 %v2497
    %7805 = vmatpush1.bf16.msra.mxu0 %v2496
    %7806 = vmatprep.subr.bf16.mxu0 %v2501
    %7807 = vmatpush1.bf16.msra.mxu0 %v2500
    %7808 = vmatprep.subr.bf16.mxu0 %v2505
    %7809 = vmatpush1.bf16.msra.mxu0 %v2504
    %7810 = vmatprep.subr.bf16.mxu0 0
    %7811 = vmatpush1.bf16.msra.mxu0 0
    %7812 = vmatprep.subr.bf16.mxu0 0
    %7813 = vmatpush1.bf16.msra.mxu0 0
    %7814 = vmatprep.subr.bf16.mxu0 0
    %7815 = vmatpush1.bf16.msra.mxu0 0
    %7816 = vmatprep.subr.bf16.mxu0 0
    %7817 = vmatpush1.bf16.msra.mxu0 0
    %7818 = vmatprep.subr.bf16.mxu0 0
    %7819 = vmatpush1.bf16.msra.mxu0 0
    %7820 = vmatprep.subr.bf16.mxu0 0
    %7821 = vmatpush1.bf16.msra.mxu0 0
    %7822 = vmatprep.subr.bf16.mxu0 0
    %7823 = vmatpush1.bf16.msra.mxu0 0
    %7824 = vmatprep.subr.bf16.mxu0 0
    %7825 = vmatpush1.bf16.msra.mxu0 0
    %7826 = vmatprep.mubr.bf16.mxu0 0
    %7827 = vmatmul.mubr.bf16.gmra.mrb[0].mxu0 %v7786
    %v7828 = vpop.f32.mrb[0].mxu0
    %v7829 = vadd.f32 0.0, %v7828
    %v7830 = vpop.f32.mrb[0].mxu0
    %v7831 = vadd.f32 0.0, %v7830
    %v7832 = vpop.f32.mrb[0].mxu0
    %v7833 = vadd.f32 0.0, %v7832
    %v7834 = vpop.f32.mrb[0].mxu0
    %v7835 = vadd.f32 0.0, %v7834
    %7836 = vmatprep.mubr.bf16.mxu0 0
    %7837 = vmatmul.mubr.bf16.gmra.mrb[0].mxu0 %v7787
    %v7838 = vpop.f32.mrb[0].mxu0
    %v7839 = vadd.f32 0.0, %v7838
    %v7840 = vpop.f32.mrb[0].mxu0
    %v7841 = vadd.f32 0.0, %v7840
    %v7842 = vpop.f32.mrb[0].mxu0
    %v7843 = vadd.f32 0.0, %v7842
    %v7844 = vpop.f32.mrb[0].mxu0
    %v7845 = vadd.f32 0.0, %v7844
    %7846 = vmatprep.mubr.bf16.mxu0 0
    %7847 = vmatmul.mubr.bf16.gmra.mrb[0].mxu0 %v7788
    %v7848 = vpop.f32.mrb[0].mxu0
    %v7849 = vadd.f32 0.0, %v7848
    %v7850 = vpop.f32.mrb[0].mxu0
    %v7851 = vadd.f32 0.0, %v7850
    %v7852 = vpop.f32.mrb[0].mxu0
    %v7853 = vadd.f32 0.0, %v7852
    %v7854 = vpop.f32.mrb[0].mxu0
    %v7855 = vadd.f32 0.0, %v7854
    %7856 = vmatprep.mubr.bf16.mxu0 0
    %7857 = vmatmul.mubr.bf16.gmra.mrb[0].mxu0 %v7789
    %v7858 = vpop.f32.mrb[0].mxu0
    %v7859 = vadd.f32 0.0, %v7858
    %v7860 = vpop.f32.mrb[0].mxu0
    %v7861 = vadd.f32 0.0, %v7860
    %v7862 = vpop.f32.mrb[0].mxu0
    %v7863 = vadd.f32 0.0, %v7862
    %v7864 = vpop.f32.mrb[0].mxu0
    %v7865 = vadd.f32 0.0, %v7864
    %7866 = vmatprep.mubr.bf16.mxu0 0
    %7867 = vmatmul.mubr.bf16.gmra.mrb[0].mxu0 %v7790
    %v7868 = vpop.f32.mrb[0].mxu0
    %v7869 = vadd.f32 0.0, %v7868
    %v7870 = vpop.f32.mrb[0].mxu0
    %v7871 = vadd.f32 0.0, %v7870
    %v7872 = vpop.f32.mrb[0].mxu0
    %v7873 = vadd.f32 0.0, %v7872
    %v7874 = vpop.f32.mrb[0].mxu0
    %v7875 = vadd.f32 0.0, %v7874
    %7876 = vmatprep.mubr.bf16.mxu0 0
    %7877 = vmatmul.mubr.bf16.gmra.mrb[0].mxu0 %v7791
    %v7878 = vpop.f32.mrb[0].mxu0
    %v7879 = vadd.f32 0.0, %v7878
    %v7880 = vpop.f32.mrb[0].mxu0
    %v7881 = vadd.f32 0.0, %v7880
    %v7882 = vpop.f32.mrb[0].mxu0
    %v7883 = vadd.f32 0.0, %v7882
    %v7884 = vpop.f32.mrb[0].mxu0
    %v7885 = vadd.f32 0.0, %v7884
    %7886 = vmatprep.mubr.bf16.mxu0 0
    %7887 = vmatmul.mubr.bf16.gmra.mrb[0].mxu0 %v7792
    %v7888 = vpop.f32.mrb[0].mxu0
    %v7889 = vadd.f32 0.0, %v7888
    %v7890 = vpop.f32.mrb[0].mxu0
    %v7891 = vadd.f32 0.0, %v7890
    %v7892 = vpop.f32.mrb[0].mxu0
    %v7893 = vadd.f32 0.0, %v7892
    %v7894 = vpop.f32.mrb[0].mxu0
    %v7895 = vadd.f32 0.0, %v7894
    %7896 = vmatprep.mubr.bf16.mxu0 0
    %7897 = vmatmul.mubr.bf16.gmra.mrb[0].mxu0 %v7793
    %v7898 = vpop.f32.mrb[0].mxu0
    %v7899 = vadd.f32 0.0, %v7898
    %v7900 = vpop.f32.mrb[0].mxu0
    %v7901 = vadd.f32 0.0, %v7900
    %v7902 = vpop.f32.mrb[0].mxu0
    %v7903 = vadd.f32 0.0, %v7902
    %v7904 = vpop.f32.mrb[0].mxu0
    %v7905 = vadd.f32 0.0, %v7904
    %7906 = vdwg.mxu0
    %7907 = vmatprep.subr.bf16.mxu0 %v2479
    %7908 = vmatpush1.bf16.msra.mxu0 %v2478
    %7909 = vmatprep.subr.bf16.mxu0 %v2483
    %7910 = vmatpush1.bf16.msra.mxu0 %v2482
    %7911 = vmatprep.subr.bf16.mxu0 %v2487
    %7912 = vmatpush1.bf16.msra.mxu0 %v2486
    %7913 = vmatprep.subr.bf16.mxu0 %v2491
    %7914 = vmatpush1.bf16.msra.mxu0 %v2490
    %7915 = vmatprep.subr.bf16.mxu0 %v2495
    %7916 = vmatpush1.bf16.msra.mxu0 %v2494
    %7917 = vmatprep.subr.bf16.mxu0 %v2499
    %7918 = vmatpush1.bf16.msra.mxu0 %v2498
    %7919 = vmatprep.subr.bf16.mxu0 %v2503
    %7920 = vmatpush1.bf16.msra.mxu0 %v2502
    %7921 = vmatprep.subr.bf16.mxu0 %v2507
    %7922 = vmatpush1.bf16.msra.mxu0 %v2506
    %7923 = vmatprep.subr.bf16.mxu0 0
    %7924 = vmatpush1.bf16.msra.mxu0 0
    %7925 = vmatprep.subr.bf16.mxu0 0
    %7926 = vmatpush1.bf16.msra.mxu0 0
    %7927 = vmatprep.subr.bf16.mxu0 0
    %7928 = vmatpush1.bf16.msra.mxu0 0
    %7929 = vmatprep.subr.bf16.mxu0 0
    %7930 = vmatpush1.bf16.msra.mxu0 0
    %7931 = vmatprep.subr.bf16.mxu0 0
    %7932 = vmatpush1.bf16.msra.mxu0 0
    %7933 = vmatprep.subr.bf16.mxu0 0
    %7934 = vmatpush1.bf16.msra.mxu0 0
    %7935 = vmatprep.subr.bf16.mxu0 0
    %7936 = vmatpush1.bf16.msra.mxu0 0
    %7937 = vmatprep.subr.bf16.mxu0 0
    %7938 = vmatpush1.bf16.msra.mxu0 0
    %7939 = vmatprep.mubr.bf16.mxu0 0
    %7940 = vmatmul.mubr.bf16.gmra.mrb[0].mxu0 %v7786
    %v7941 = vpop.f32.mrb[0].mxu0
    %v7942 = vadd.f32 0.0, %v7941
    %v7943 = vpop.f32.mrb[0].mxu0
    %v7944 = vadd.f32 0.0, %v7943
    %v7945 = vpop.f32.mrb[0].mxu0
    %v7946 = vadd.f32 0.0, %v7945
    %v7947 = vpop.f32.mrb[0].mxu0
    %v7948 = vadd.f32 0.0, %v7947
    %7949 = vmatprep.mubr.bf16.mxu0 0
    %7950 = vmatmul.mubr.bf16.gmra.mrb[0].mxu0 %v7787
    %v7951 = vpop.f32.mrb[0].mxu0
    %v7952 = vadd.f32 0.0, %v7951
    %v7953 = vpop.f32.mrb[0].mxu0
    %v7954 = vadd.f32 0.0, %v7953
    %v7955 = vpop.f32.mrb[0].mxu0
    %v7956 = vadd.f32 0.0, %v7955
    %v7957 = vpop.f32.mrb[0].mxu0
    %v7958 = vadd.f32 0.0, %v7957
    %7959 = vmatprep.mubr.bf16.mxu0 0
    %7960 = vmatmul.mubr.bf16.gmra.mrb[0].mxu0 %v7788
    %v7961 = vpop.f32.mrb[0].mxu0
    %v7962 = vadd.f32 0.0, %v7961
    %v7963 = vpop.f32.mrb[0].mxu0
    %v7964 = vadd.f32 0.0, %v7963
    %v7965 = vpop.f32.mrb[0].mxu0
    %v7966 = vadd.f32 0.0, %v7965
    %v7967 = vpop.f32.mrb[0].mxu0
    %v7968 = vadd.f32 0.0, %v7967
    %7969 = vmatprep.mubr.bf16.mxu0 0
    %7970 = vmatmul.mubr.bf16.gmra.mrb[0].mxu0 %v7789
    %v7971 = vpop.f32.mrb[0].mxu0
    %v7972 = vadd.f32 0.0, %v7971
    %v7973 = vpop.f32.mrb[0].mxu0
    %v7974 = vadd.f32 0.0, %v7973
    %v7975 = vpop.f32.mrb[0].mxu0
    %v7976 = vadd.f32 0.0, %v7975
    %v7977 = vpop.f32.mrb[0].mxu0
    %v7978 = vadd.f32 0.0, %v7977
    %7979 = vmatprep.mubr.bf16.mxu0 0
    %7980 = vmatmul.mubr.bf16.gmra.mrb[0].mxu0 %v7790
    %v7981 = vpop.f32.mrb[0].mxu0
    %v7982 = vadd.f32 0.0, %v7981
    %v7983 = vpop.f32.mrb[0].mxu0
    %v7984 = vadd.f32 0.0, %v7983
    %v7985 = vpop.f32.mrb[0].mxu0
    %v7986 = vadd.f32 0.0, %v7985
    %v7987 = vpop.f32.mrb[0].mxu0
    %v7988 = vadd.f32 0.0, %v7987
    %7989 = vmatprep.mubr.bf16.mxu0 0
    %7990 = vmatmul.mubr.bf16.gmra.mrb[0].mxu0 %v7791
    %v7991 = vpop.f32.mrb[0].mxu0
    %v7992 = vadd.f32 0.0, %v7991
    %v7993 = vpop.f32.mrb[0].mxu0
    %v7994 = vadd.f32 0.0, %v7993
    %v7995 = vpop.f32.mrb[0].mxu0
    %v7996 = vadd.f32 0.0, %v7995
    %v7997 = vpop.f32.mrb[0].mxu0
    %v7998 = vadd.f32 0.0, %v7997
    %7999 = vmatprep.mubr.bf16.mxu0 0
    %8000 = vmatmul.mubr.bf16.gmra.mrb[0].mxu0 %v7792
    %v8001 = vpop.f32.mrb[0].mxu0
    %v8002 = vadd.f32 0.0, %v8001
    %v8003 = vpop.f32.mrb[0].mxu0
    %v8004 = vadd.f32 0.0, %v8003
    %v8005 = vpop.f32.mrb[0].mxu0
    %v8006 = vadd.f32 0.0, %v8005
    %v8007 = vpop.f32.mrb[0].mxu0
    %v8008 = vadd.f32 0.0, %v8007
    %8009 = vmatprep.mubr.bf16.mxu0 0
    %8010 = vmatmul.mubr.bf16.gmra.mrb[0].mxu0 %v7793
    %v8011 = vpop.f32.mrb[0].mxu0
    %v8012 = vadd.f32 0.0, %v8011
    %v8013 = vpop.f32.mrb[0].mxu0
    %v8014 = vadd.f32 0.0, %v8013
    %v8015 = vpop.f32.mrb[0].mxu0
    %v8016 = vadd.f32 0.0, %v8015
    %v8017 = vpop.f32.mrb[0].mxu0
    %v8018 = vadd.f32 0.0, %v8017
    %8019 = vdwg.mxu0
    %v8020 = vadd.f32 %v7722, %v7829
    %v8021 = vadd.f32 %v7723, %v7831
    %v8022 = vadd.f32 %v7724, %v7942
    %v8023 = vadd.f32 %v7725, %v7944
    %v8024 = vadd.f32 %v7726, %v7833
    %v8025 = vadd.f32 %v7727, %v7835
    %v8026 = vadd.f32 %v7728, %v7946
    %v8027 = vadd.f32 %v7729, %v7948
    %v8028 = vadd.f32 %v7730, %v7839
    %v8029 = vadd.f32 %v7731, %v7841
    %v8030 = vadd.f32 %v7732, %v7952
    %v8031 = vadd.f32 %v7733, %v7954
    %v8032 = vadd.f32 %v7734, %v7843
    %v8033 = vadd.f32 %v7735, %v7845
    %v8034 = vadd.f32 %v7736, %v7956
    %v8035 = vadd.f32 %v7737, %v7958
    %v8036 = vadd.f32 %v7738, %v7849
    %v8037 = vadd.f32 %v7739, %v7851
    %v8038 = vadd.f32 %v7740, %v7962
    %v8039 = vadd.f32 %v7741, %v7964
    %v8040 = vadd.f32 %v7742, %v7853
    %v8041 = vadd.f32 %v7743, %v7855
    %v8042 = vadd.f32 %v7744, %v7966
    %v8043 = vadd.f32 %v7745, %v7968
    %v8044 = vadd.f32 %v7746, %v7859
    %v8045 = vadd.f32 %v7747, %v7861
    %v8046 = vadd.f32 %v7748, %v7972
    %v8047 = vadd.f32 %v7749, %v7974
    %v8048 = vadd.f32 %v7750, %v7863
    %v8049 = vadd.f32 %v7751, %v7865
    %v8050 = vadd.f32 %v7752, %v7976
    %v8051 = vadd.f32 %v7753, %v7978
    %v8052 = vadd.f32 %v7754, %v7869
    %v8053 = vadd.f32 %v7755, %v7871
    %v8054 = vadd.f32 %v7756, %v7982
    %v8055 = vadd.f32 %v7757, %v7984
    %v8056 = vadd.f32 %v7758, %v7873
    %v8057 = vadd.f32 %v7759, %v7875
    %v8058 = vadd.f32 %v7760, %v7986
    %v8059 = vadd.f32 %v7761, %v7988
    %v8060 = vadd.f32 %v7762, %v7879
    %v8061 = vadd.f32 %v7763, %v7881
    %v8062 = vadd.f32 %v7764, %v7992
    %v8063 = vadd.f32 %v7765, %v7994
    %v8064 = vadd.f32 %v7766, %v7883
    %v8065 = vadd.f32 %v7767, %v7885
    %v8066 = vadd.f32 %v7768, %v7996
    %v8067 = vadd.f32 %v7769, %v7998
    %v8068 = vadd.f32 %v7770, %v7889
    %v8069 = vadd.f32 %v7771, %v7891
    %v8070 = vadd.f32 %v7772, %v8002
    %v8071 = vadd.f32 %v7773, %v8004
    %v8072 = vadd.f32 %v7774, %v7893
    %v8073 = vadd.f32 %v7775, %v7895
    %v8074 = vadd.f32 %v7776, %v8006
    %v8075 = vadd.f32 %v7777, %v8008
    %v8076 = vadd.f32 %v7778, %v7899
    %v8077 = vadd.f32 %v7779, %v7901
    %v8078 = vadd.f32 %v7780, %v8012
    %v8079 = vadd.f32 %v7781, %v8014
    %v8080 = vadd.f32 %v7782, %v7903
    %v8081 = vadd.f32 %v7783, %v7905
    %v8082 = vadd.f32 %v7784, %v8016
    %v8083 = vadd.f32 %v7785, %v8018
    %v8084 = vxor.u32 %v8020, 2147483648
    %v8085 = vxor.u32 %v8024, 2147483648
    %v8086 = vxor.u32 %v8028, 2147483648
    %v8087 = vxor.u32 %v8032, 2147483648
    %v8088 = vxor.u32 %v8036, 2147483648
    %v8089 = vxor.u32 %v8040, 2147483648
    %v8090 = vxor.u32 %v8044, 2147483648
    %v8091 = vxor.u32 %v8048, 2147483648
    %v8092 = vxor.u32 %v8052, 2147483648
    %v8093 = vxor.u32 %v8056, 2147483648
    %v8094 = vxor.u32 %v8060, 2147483648
    %v8095 = vxor.u32 %v8064, 2147483648
    %v8096 = vxor.u32 %v8068, 2147483648
    %v8097 = vxor.u32 %v8072, 2147483648
    %v8098 = vxor.u32 %v8076, 2147483648
    %v8099 = vxor.u32 %v8080, 2147483648
    %v8100 = vmul.f32 %v8084, 1.442695
    %v8101 = vpow.pop %v8100
    %v8102 = vmul.f32 %v8085, 1.442695
    %v8103 = vpow.pop %v8102
    %v8104 = vmul.f32 %v8086, 1.442695
    %v8105 = vpow.pop %v8104
    %v8106 = vmul.f32 %v8087, 1.442695
    %v8107 = vpow.pop %v8106
    %v8108 = vmul.f32 %v8088, 1.442695
    %v8109 = vpow.pop %v8108
    %v8110 = vmul.f32 %v8089, 1.442695
    %v8111 = vpow.pop %v8110
    %v8112 = vmul.f32 %v8090, 1.442695
    %v8113 = vpow.pop %v8112
    %v8114 = vmul.f32 %v8091, 1.442695
    %v8115 = vpow.pop %v8114
    %v8116 = vmul.f32 %v8092, 1.442695
    %v8117 = vpow.pop %v8116
    %v8118 = vmul.f32 %v8093, 1.442695
    %v8119 = vpow.pop %v8118
    %v8120 = vmul.f32 %v8094, 1.442695
    %v8121 = vpow.pop %v8120
    %v8122 = vmul.f32 %v8095, 1.442695
    %v8123 = vpow.pop %v8122
    %v8124 = vmul.f32 %v8096, 1.442695
    %v8125 = vpow.pop %v8124
    %v8126 = vmul.f32 %v8097, 1.442695
    %v8127 = vpow.pop %v8126
    %v8128 = vmul.f32 %v8098, 1.442695
    %v8129 = vpow.pop %v8128
    %v8130 = vmul.f32 %v8099, 1.442695
    %v8131 = vpow.pop %v8130
    %v8132 = vadd.f32 %v8101, 1.0
    %v8133 = vadd.f32 %v8103, 1.0
    %v8134 = vadd.f32 %v8105, 1.0
    %v8135 = vadd.f32 %v8107, 1.0
    %v8136 = vadd.f32 %v8109, 1.0
    %v8137 = vadd.f32 %v8111, 1.0
    %v8138 = vadd.f32 %v8113, 1.0
    %v8139 = vadd.f32 %v8115, 1.0
    %v8140 = vadd.f32 %v8117, 1.0
    %v8141 = vadd.f32 %v8119, 1.0
    %v8142 = vadd.f32 %v8121, 1.0
    %v8143 = vadd.f32 %v8123, 1.0
    %v8144 = vadd.f32 %v8125, 1.0
    %v8145 = vadd.f32 %v8127, 1.0
    %v8146 = vadd.f32 %v8129, 1.0
    %v8147 = vadd.f32 %v8131, 1.0
    %v8148 = vrcp.pop %v8132
    %v8149 = vmul.f32 1.0, %v8148
    %v8150 = vrcp.pop %v8133
    %v8151 = vmul.f32 1.0, %v8150
    %v8152 = vrcp.pop %v8134
    %v8153 = vmul.f32 1.0, %v8152
    %v8154 = vrcp.pop %v8135
    %v8155 = vmul.f32 1.0, %v8154
    %v8156 = vrcp.pop %v8136
    %v8157 = vmul.f32 1.0, %v8156
    %v8158 = vrcp.pop %v8137
    %v8159 = vmul.f32 1.0, %v8158
    %v8160 = vrcp.pop %v8138
    %v8161 = vmul.f32 1.0, %v8160
    %v8162 = vrcp.pop %v8139
    %v8163 = vmul.f32 1.0, %v8162
    %v8164 = vrcp.pop %v8140
    %v8165 = vmul.f32 1.0, %v8164
    %v8166 = vrcp.pop %v8141
    %v8167 = vmul.f32 1.0, %v8166
    %v8168 = vrcp.pop %v8142
    %v8169 = vmul.f32 1.0, %v8168
    %v8170 = vrcp.pop %v8143
    %v8171 = vmul.f32 1.0, %v8170
    %v8172 = vrcp.pop %v8144
    %v8173 = vmul.f32 1.0, %v8172
    %v8174 = vrcp.pop %v8145
    %v8175 = vmul.f32 1.0, %v8174
    %v8176 = vrcp.pop %v8146
    %v8177 = vmul.f32 1.0, %v8176
    %v8178 = vrcp.pop %v8147
    %v8179 = vmul.f32 1.0, %v8178
    %v8180 = vxor.u32 %v8021, 2147483648
    %v8181 = vxor.u32 %v8025, 2147483648
    %v8182 = vxor.u32 %v8029, 2147483648
    %v8183 = vxor.u32 %v8033, 2147483648
    %v8184 = vxor.u32 %v8037, 2147483648
    %v8185 = vxor.u32 %v8041, 2147483648
    %v8186 = vxor.u32 %v8045, 2147483648
    %v8187 = vxor.u32 %v8049, 2147483648
    %v8188 = vxor.u32 %v8053, 2147483648
    %v8189 = vxor.u32 %v8057, 2147483648
    %v8190 = vxor.u32 %v8061, 2147483648
    %v8191 = vxor.u32 %v8065, 2147483648
    %v8192 = vxor.u32 %v8069, 2147483648
    %v8193 = vxor.u32 %v8073, 2147483648
    %v8194 = vxor.u32 %v8077, 2147483648
    %v8195 = vxor.u32 %v8081, 2147483648
    %v8196 = vmul.f32 %v8180, 1.442695
    %v8197 = vpow.pop %v8196
    %v8198 = vmul.f32 %v8181, 1.442695
    %v8199 = vpow.pop %v8198
    %v8200 = vmul.f32 %v8182, 1.442695
    %v8201 = vpow.pop %v8200
    %v8202 = vmul.f32 %v8183, 1.442695
    %v8203 = vpow.pop %v8202
    %v8204 = vmul.f32 %v8184, 1.442695
    %v8205 = vpow.pop %v8204
    %v8206 = vmul.f32 %v8185, 1.442695
    %v8207 = vpow.pop %v8206
    %v8208 = vmul.f32 %v8186, 1.442695
    %v8209 = vpow.pop %v8208
    %v8210 = vmul.f32 %v8187, 1.442695
    %v8211 = vpow.pop %v8210
    %v8212 = vmul.f32 %v8188, 1.442695
    %v8213 = vpow.pop %v8212
    %v8214 = vmul.f32 %v8189, 1.442695
    %v8215 = vpow.pop %v8214
    %v8216 = vmul.f32 %v8190, 1.442695
    %v8217 = vpow.pop %v8216
    %v8218 = vmul.f32 %v8191, 1.442695
    %v8219 = vpow.pop %v8218
    %v8220 = vmul.f32 %v8192, 1.442695
    %v8221 = vpow.pop %v8220
    %v8222 = vmul.f32 %v8193, 1.442695
    %v8223 = vpow.pop %v8222
    %v8224 = vmul.f32 %v8194, 1.442695
    %v8225 = vpow.pop %v8224
    %v8226 = vmul.f32 %v8195, 1.442695
    %v8227 = vpow.pop %v8226
    %v8228 = vadd.f32 %v8197, 1.0
    %v8229 = vadd.f32 %v8199, 1.0
    %v8230 = vadd.f32 %v8201, 1.0
    %v8231 = vadd.f32 %v8203, 1.0
    %v8232 = vadd.f32 %v8205, 1.0
    %v8233 = vadd.f32 %v8207, 1.0
    %v8234 = vadd.f32 %v8209, 1.0
    %v8235 = vadd.f32 %v8211, 1.0
    %v8236 = vadd.f32 %v8213, 1.0
    %v8237 = vadd.f32 %v8215, 1.0
    %v8238 = vadd.f32 %v8217, 1.0
    %v8239 = vadd.f32 %v8219, 1.0
    %v8240 = vadd.f32 %v8221, 1.0
    %v8241 = vadd.f32 %v8223, 1.0
    %v8242 = vadd.f32 %v8225, 1.0
    %v8243 = vadd.f32 %v8227, 1.0
    %v8244 = vrcp.pop %v8228
    %v8245 = vmul.f32 1.0, %v8244
    %v8246 = vrcp.pop %v8229
    %v8247 = vmul.f32 1.0, %v8246
    %v8248 = vrcp.pop %v8230
    %v8249 = vmul.f32 1.0, %v8248
    %v8250 = vrcp.pop %v8231
    %v8251 = vmul.f32 1.0, %v8250
    %v8252 = vrcp.pop %v8232
    %v8253 = vmul.f32 1.0, %v8252
    %v8254 = vrcp.pop %v8233
    %v8255 = vmul.f32 1.0, %v8254
    %v8256 = vrcp.pop %v8234
    %v8257 = vmul.f32 1.0, %v8256
    %v8258 = vrcp.pop %v8235
    %v8259 = vmul.f32 1.0, %v8258
    %v8260 = vrcp.pop %v8236
    %v8261 = vmul.f32 1.0, %v8260
    %v8262 = vrcp.pop %v8237
    %v8263 = vmul.f32 1.0, %v8262
    %v8264 = vrcp.pop %v8238
    %v8265 = vmul.f32 1.0, %v8264
    %v8266 = vrcp.pop %v8239
    %v8267 = vmul.f32 1.0, %v8266
    %v8268 = vrcp.pop %v8240
    %v8269 = vmul.f32 1.0, %v8268
    %v8270 = vrcp.pop %v8241
    %v8271 = vmul.f32 1.0, %v8270
    %v8272 = vrcp.pop %v8242
    %v8273 = vmul.f32 1.0, %v8272
    %v8274 = vrcp.pop %v8243
    %v8275 = vmul.f32 1.0, %v8274
    %v8276 = vtanh.pop %v8022
    %v8277 = vtanh.pop %v8026
    %v8278 = vtanh.pop %v8030
    %v8279 = vtanh.pop %v8034
    %v8280 = vtanh.pop %v8038
    %v8281 = vtanh.pop %v8042
    %v8282 = vtanh.pop %v8046
    %v8283 = vtanh.pop %v8050
    %v8284 = vtanh.pop %v8054
    %v8285 = vtanh.pop %v8058
    %v8286 = vtanh.pop %v8062
    %v8287 = vtanh.pop %v8066
    %v8288 = vtanh.pop %v8070
    %v8289 = vtanh.pop %v8074
    %v8290 = vtanh.pop %v8078
    %v8291 = vtanh.pop %v8082
    %v8292 = vxor.u32 %v8023, 2147483648
    %v8293 = vxor.u32 %v8027, 2147483648
    %v8294 = vxor.u32 %v8031, 2147483648
    %v8295 = vxor.u32 %v8035, 2147483648
    %v8296 = vxor.u32 %v8039, 2147483648
    %v8297 = vxor.u32 %v8043, 2147483648
    %v8298 = vxor.u32 %v8047, 2147483648
    %v8299 = vxor.u32 %v8051, 2147483648
    %v8300 = vxor.u32 %v8055, 2147483648
    %v8301 = vxor.u32 %v8059, 2147483648
    %v8302 = vxor.u32 %v8063, 2147483648
    %v8303 = vxor.u32 %v8067, 2147483648
    %v8304 = vxor.u32 %v8071, 2147483648
    %v8305 = vxor.u32 %v8075, 2147483648
    %v8306 = vxor.u32 %v8079, 2147483648
    %v8307 = vxor.u32 %v8083, 2147483648
    %v8308 = vmul.f32 %v8292, 1.442695
    %v8309 = vpow.pop %v8308
    %v8310 = vmul.f32 %v8293, 1.442695
    %v8311 = vpow.pop %v8310
    %v8312 = vmul.f32 %v8294, 1.442695
    %v8313 = vpow.pop %v8312
    %v8314 = vmul.f32 %v8295, 1.442695
    %v8315 = vpow.pop %v8314
    %v8316 = vmul.f32 %v8296, 1.442695
    %v8317 = vpow.pop %v8316
    %v8318 = vmul.f32 %v8297, 1.442695
    %v8319 = vpow.pop %v8318
    %v8320 = vmul.f32 %v8298, 1.442695
    %v8321 = vpow.pop %v8320
    %v8322 = vmul.f32 %v8299, 1.442695
    %v8323 = vpow.pop %v8322
    %v8324 = vmul.f32 %v8300, 1.442695
    %v8325 = vpow.pop %v8324
    %v8326 = vmul.f32 %v8301, 1.442695
    %v8327 = vpow.pop %v8326
    %v8328 = vmul.f32 %v8302, 1.442695
    %v8329 = vpow.pop %v8328
    %v8330 = vmul.f32 %v8303, 1.442695
    %v8331 = vpow.pop %v8330
    %v8332 = vmul.f32 %v8304, 1.442695
    %v8333 = vpow.pop %v8332
    %v8334 = vmul.f32 %v8305, 1.442695
    %v8335 = vpow.pop %v8334
    %v8336 = vmul.f32 %v8306, 1.442695
    %v8337 = vpow.pop %v8336
    %v8338 = vmul.f32 %v8307, 1.442695
    %v8339 = vpow.pop %v8338
    %v8340 = vadd.f32 %v8309, 1.0
    %v8341 = vadd.f32 %v8311, 1.0
    %v8342 = vadd.f32 %v8313, 1.0
    %v8343 = vadd.f32 %v8315, 1.0
    %v8344 = vadd.f32 %v8317, 1.0
    %v8345 = vadd.f32 %v8319, 1.0
    %v8346 = vadd.f32 %v8321, 1.0
    %v8347 = vadd.f32 %v8323, 1.0
    %v8348 = vadd.f32 %v8325, 1.0
    %v8349 = vadd.f32 %v8327, 1.0
    %v8350 = vadd.f32 %v8329, 1.0
    %v8351 = vadd.f32 %v8331, 1.0
    %v8352 = vadd.f32 %v8333, 1.0
    %v8353 = vadd.f32 %v8335, 1.0
    %v8354 = vadd.f32 %v8337, 1.0
    %v8355 = vadd.f32 %v8339, 1.0
    %v8356 = vrcp.pop %v8340
    %v8357 = vmul.f32 1.0, %v8356
    %v8358 = vrcp.pop %v8341
    %v8359 = vmul.f32 1.0, %v8358
    %v8360 = vrcp.pop %v8342
    %v8361 = vmul.f32 1.0, %v8360
    %v8362 = vrcp.pop %v8343
    %v8363 = vmul.f32 1.0, %v8362
    %v8364 = vrcp.pop %v8344
    %v8365 = vmul.f32 1.0, %v8364
    %v8366 = vrcp.pop %v8345
    %v8367 = vmul.f32 1.0, %v8366
    %v8368 = vrcp.pop %v8346
    %v8369 = vmul.f32 1.0, %v8368
    %v8370 = vrcp.pop %v8347
    %v8371 = vmul.f32 1.0, %v8370
    %v8372 = vrcp.pop %v8348
    %v8373 = vmul.f32 1.0, %v8372
    %v8374 = vrcp.pop %v8349
    %v8375 = vmul.f32 1.0, %v8374
    %v8376 = vrcp.pop %v8350
    %v8377 = vmul.f32 1.0, %v8376
    %v8378 = vrcp.pop %v8351
    %v8379 = vmul.f32 1.0, %v8378
    %v8380 = vrcp.pop %v8352
    %v8381 = vmul.f32 1.0, %v8380
    %v8382 = vrcp.pop %v8353
    %v8383 = vmul.f32 1.0, %v8382
    %v8384 = vrcp.pop %v8354
    %v8385 = vmul.f32 1.0, %v8384
    %v8386 = vrcp.pop %v8355
    %v8387 = vmul.f32 1.0, %v8386
    %v8388 = vmul.f32 %v8245, %v7674
    %v8389 = vmul.f32 %v8247, %v7675
    %v8390 = vmul.f32 %v8249, %v7676
    %v8391 = vmul.f32 %v8251, %v7677
    %v8392 = vmul.f32 %v8253, %v7678
    %v8393 = vmul.f32 %v8255, %v7679
    %v8394 = vmul.f32 %v8257, %v7680
    %v8395 = vmul.f32 %v8259, %v7681
    %v8396 = vmul.f32 %v8261, %v7682
    %v8397 = vmul.f32 %v8263, %v7683
    %v8398 = vmul.f32 %v8265, %v7684
    %v8399 = vmul.f32 %v8267, %v7685
    %v8400 = vmul.f32 %v8269, %v7686
    %v8401 = vmul.f32 %v8271, %v7687
    %v8402 = vmul.f32 %v8273, %v7688
    %v8403 = vmul.f32 %v8275, %v7689
    %v8404 = vmul.f32 %v8149, %v8276
    %v8405 = vmul.f32 %v8151, %v8277
    %v8406 = vmul.f32 %v8153, %v8278
    %v8407 = vmul.f32 %v8155, %v8279
    %v8408 = vmul.f32 %v8157, %v8280
    %v8409 = vmul.f32 %v8159, %v8281
    %v8410 = vmul.f32 %v8161, %v8282
    %v8411 = vmul.f32 %v8163, %v8283
    %v8412 = vmul.f32 %v8165, %v8284
    %v8413 = vmul.f32 %v8167, %v8285
    %v8414 = vmul.f32 %v8169, %v8286
    %v8415 = vmul.f32 %v8171, %v8287
    %v8416 = vmul.f32 %v8173, %v8288
    %v8417 = vmul.f32 %v8175, %v8289
    %v8418 = vmul.f32 %v8177, %v8290
    %v8419 = vmul.f32 %v8179, %v8291
    %v8420 = vadd.f32 %v8388, %v8404
    %v8421 = vadd.f32 %v8389, %v8405
    %v8422 = vadd.f32 %v8390, %v8406
    %v8423 = vadd.f32 %v8391, %v8407
    %v8424 = vadd.f32 %v8392, %v8408
    %v8425 = vadd.f32 %v8393, %v8409
    %v8426 = vadd.f32 %v8394, %v8410
    %v8427 = vadd.f32 %v8395, %v8411
    %v8428 = vadd.f32 %v8396, %v8412
    %v8429 = vadd.f32 %v8397, %v8413
    %v8430 = vadd.f32 %v8398, %v8414
    %v8431 = vadd.f32 %v8399, %v8415
    %v8432 = vadd.f32 %v8400, %v8416
    %v8433 = vadd.f32 %v8401, %v8417
    %v8434 = vadd.f32 %v8402, %v8418
    %v8435 = vadd.f32 %v8403, %v8419
    %v8436 = vtanh.pop %v8420
    %v8437 = vtanh.pop %v8421
    %v8438 = vtanh.pop %v8422
    %v8439 = vtanh.pop %v8423
    %v8440 = vtanh.pop %v8424
    %v8441 = vtanh.pop %v8425
    %v8442 = vtanh.pop %v8426
    %v8443 = vtanh.pop %v8427
    %v8444 = vtanh.pop %v8428
    %v8445 = vtanh.pop %v8429
    %v8446 = vtanh.pop %v8430
    %v8447 = vtanh.pop %v8431
    %v8448 = vtanh.pop %v8432
    %v8449 = vtanh.pop %v8433
    %v8450 = vtanh.pop %v8434
    %v8451 = vtanh.pop %v8435
    %v8452 = vmul.f32 %v8357, %v8436
    %v8453 = vmul.f32 %v8359, %v8437
    %v8454 = vmul.f32 %v8361, %v8438
    %v8455 = vmul.f32 %v8363, %v8439
    %v8456 = vmul.f32 %v8365, %v8440
    %v8457 = vmul.f32 %v8367, %v8441
    %v8458 = vmul.f32 %v8369, %v8442
    %v8459 = vmul.f32 %v8371, %v8443
    %v8460 = vmul.f32 %v8373, %v8444
    %v8461 = vmul.f32 %v8375, %v8445
    %v8462 = vmul.f32 %v8377, %v8446
    %v8463 = vmul.f32 %v8379, %v8447
    %v8464 = vmul.f32 %v8381, %v8448
    %v8465 = vmul.f32 %v8383, %v8449
    %v8466 = vmul.f32 %v8385, %v8450
    %v8467 = vmul.f32 %v8387, %v8451
    %v8468 = vpack.c.bf16 %v8453, %v8452
    %v8469 = vpack.c.bf16 %v8455, %v8454
    %v8470 = vpack.c.bf16 %v8457, %v8456
    %v8471 = vpack.c.bf16 %v8459, %v8458
    %v8472 = vpack.c.bf16 %v8461, %v8460
    %v8473 = vpack.c.bf16 %v8463, %v8462
    %v8474 = vpack.c.bf16 %v8465, %v8464
    %v8475 = vpack.c.bf16 %v8467, %v8466
    %v8476 = vld [vmem:[%s4] sm:$0xff]
    %v8477 = vld [vmem:[%s4 + $0x8] sm:$0xff]
    %v8478 = vld [vmem:[%s4 + $0x10] sm:$0xff]
    %v8479 = vld [vmem:[%s4 + $0x18] sm:$0xff]
    %v8480 = vld [vmem:[%s4 + $0x20] sm:$0xff]
    %v8481 = vld [vmem:[%s4 + $0x28] sm:$0xff]
    %v8482 = vld [vmem:[%s4 + $0x30] sm:$0xff]
    %v8483 = vld [vmem:[%s4 + $0x38] sm:$0xff]
    %v8484 = vld [vmem:[%s4 + $0x40] sm:$0xff]
    %v8485 = vld [vmem:[%s4 + $0x48] sm:$0xff]
    %v8486 = vld [vmem:[%s4 + $0x50] sm:$0xff]
    %v8487 = vld [vmem:[%s4 + $0x58] sm:$0xff]
    %v8488 = vld [vmem:[%s4 + $0x60] sm:$0xff]
    %v8489 = vld [vmem:[%s4 + $0x68] sm:$0xff]
    %v8490 = vld [vmem:[%s4 + $0x70] sm:$0xff]
    %v8491 = vld [vmem:[%s4 + $0x78] sm:$0xff]
    %v8492 = vpack.c.bf16 %v8477, %v8476
    %v8493 = vpack.c.bf16 %v8479, %v8478
    %v8494 = vpack.c.bf16 %v8481, %v8480
    %v8495 = vpack.c.bf16 %v8483, %v8482
    %v8496 = vpack.c.bf16 %v8485, %v8484
    %v8497 = vpack.c.bf16 %v8487, %v8486
    %v8498 = vpack.c.bf16 %v8489, %v8488
    %v8499 = vpack.c.bf16 %v8491, %v8490
    %v8500 = vld [vmem:[%s5] sm:$0x1]
    %v8502 = vlaneseq
    %v8503 = vshrl.u32 %v8502, 7
    %v8504 = vsub.s32 0, %v8503
    %v8505 = vrot.slane %v8500, %v8504
    %8507 = vmatprep.subr.bf16.mxu0 0
    %8508 = vmatpush1.bf16.msra.mxu0 %v8492
    %8509 = vmatprep.subr.bf16.mxu0 0
    %8510 = vmatpush1.bf16.msra.mxu0 %v8493
    %8511 = vmatprep.subr.bf16.mxu0 0
    %8512 = vmatpush1.bf16.msra.mxu0 %v8494
    %8513 = vmatprep.subr.bf16.mxu0 0
    %8514 = vmatpush1.bf16.msra.mxu0 %v8495
    %8515 = vmatprep.subr.bf16.mxu0 0
    %8516 = vmatpush1.bf16.msra.mxu0 %v8496
    %8517 = vmatprep.subr.bf16.mxu0 0
    %8518 = vmatpush1.bf16.msra.mxu0 %v8497
    %8519 = vmatprep.subr.bf16.mxu0 0
    %8520 = vmatpush1.bf16.msra.mxu0 %v8498
    %8521 = vmatprep.subr.bf16.mxu0 0
    %8522 = vmatpush1.bf16.msra.mxu0 %v8499
    %8523 = vmatprep.subr.bf16.mxu0 0
    %8524 = vmatpush1.bf16.msra.mxu0 0
    %8525 = vmatprep.subr.bf16.mxu0 0
    %8526 = vmatpush1.bf16.msra.mxu0 0
    %8527 = vmatprep.subr.bf16.mxu0 0
    %8528 = vmatpush1.bf16.msra.mxu0 0
    %8529 = vmatprep.subr.bf16.mxu0 0
    %8530 = vmatpush1.bf16.msra.mxu0 0
    %8531 = vmatprep.subr.bf16.mxu0 0
    %8532 = vmatpush1.bf16.msra.mxu0 0
    %8533 = vmatprep.subr.bf16.mxu0 0
    %8534 = vmatpush1.bf16.msra.mxu0 0
    %8535 = vmatprep.subr.bf16.mxu0 0
    %8536 = vmatpush1.bf16.msra.mxu0 0
    %8537 = vmatprep.subr.bf16.mxu0 0
    %8538 = vmatpush1.bf16.msra.mxu0 0
    %8539 = vmatprep.mubr.bf16.mxu0 0
    %8540 = vmatmul.mubr.bf16.gmra.mrb[0].mxu0 %v8468
    %v8541 = vpop.f32.mrb[0].mxu0
    %v8542 = vadd.f32 %v8505, %v8541
    %v8543 = vpop.f32.mrb[0].mxu0
    %v8544 = vpop.f32.mrb[0].mxu0
    %v8545 = vadd.f32 %v8505, %v8544
    %v8546 = vpop.f32.mrb[0].mxu0
    %8547 = vmatprep.mubr.bf16.mxu0 0
    %8548 = vmatmul.mubr.bf16.gmra.mrb[0].mxu0 %v8469
    %v8549 = vpop.f32.mrb[0].mxu0
    %v8550 = vadd.f32 %v8505, %v8549
    %v8551 = vpop.f32.mrb[0].mxu0
    %v8552 = vpop.f32.mrb[0].mxu0
    %v8553 = vadd.f32 %v8505, %v8552
    %v8554 = vpop.f32.mrb[0].mxu0
    %8555 = vmatprep.mubr.bf16.mxu0 0
    %8556 = vmatmul.mubr.bf16.gmra.mrb[0].mxu0 %v8470
    %v8557 = vpop.f32.mrb[0].mxu0
    %v8558 = vadd.f32 %v8505, %v8557
    %v8559 = vpop.f32.mrb[0].mxu0
    %v8560 = vpop.f32.mrb[0].mxu0
    %v8561 = vadd.f32 %v8505, %v8560
    %v8562 = vpop.f32.mrb[0].mxu0
    %8563 = vmatprep.mubr.bf16.mxu0 0
    %8564 = vmatmul.mubr.bf16.gmra.mrb[0].mxu0 %v8471
    %v8565 = vpop.f32.mrb[0].mxu0
    %v8566 = vadd.f32 %v8505, %v8565
    %v8567 = vpop.f32.mrb[0].mxu0
    %v8568 = vpop.f32.mrb[0].mxu0
    %v8569 = vadd.f32 %v8505, %v8568
    %v8570 = vpop.f32.mrb[0].mxu0
    %8571 = vmatprep.mubr.bf16.mxu0 0
    %8572 = vmatmul.mubr.bf16.gmra.mrb[0].mxu0 %v8472
    %v8573 = vpop.f32.mrb[0].mxu0
    %v8574 = vadd.f32 %v8505, %v8573
    %v8575 = vpop.f32.mrb[0].mxu0
    %v8576 = vpop.f32.mrb[0].mxu0
    %v8577 = vadd.f32 %v8505, %v8576
    %v8578 = vpop.f32.mrb[0].mxu0
    %8579 = vmatprep.mubr.bf16.mxu0 0
    %8580 = vmatmul.mubr.bf16.gmra.mrb[0].mxu0 %v8473
    %v8581 = vpop.f32.mrb[0].mxu0
    %v8582 = vadd.f32 %v8505, %v8581
    %v8583 = vpop.f32.mrb[0].mxu0
    %v8584 = vpop.f32.mrb[0].mxu0
    %v8585 = vadd.f32 %v8505, %v8584
    %v8586 = vpop.f32.mrb[0].mxu0
    %8587 = vmatprep.mubr.bf16.mxu0 0
    %8588 = vmatmul.mubr.bf16.gmra.mrb[0].mxu0 %v8474
    %v8589 = vpop.f32.mrb[0].mxu0
    %v8590 = vadd.f32 %v8505, %v8589
    %v8591 = vpop.f32.mrb[0].mxu0
    %v8592 = vpop.f32.mrb[0].mxu0
    %v8593 = vadd.f32 %v8505, %v8592
    %v8594 = vpop.f32.mrb[0].mxu0
    %8595 = vmatprep.mubr.bf16.mxu0 0
    %8596 = vmatmul.mubr.bf16.gmra.mrb[0].mxu0 %v8475
    %v8597 = vpop.f32.mrb[0].mxu0
    %v8598 = vadd.f32 %v8505, %v8597
    %v8599 = vpop.f32.mrb[0].mxu0
    %v8600 = vpop.f32.mrb[0].mxu0
    %v8601 = vadd.f32 %v8505, %v8600
    %v8602 = vpop.f32.mrb[0].mxu0
    %8603 = vdwg.mxu0
    %v8604 = vmax.f32 %v8542, 0.0
    %v8605 = vmax.f32 %v8545, 0.0
    %v8606 = vmax.f32 %v8550, 0.0
    %v8607 = vmax.f32 %v8553, 0.0
    %v8608 = vmax.f32 %v8558, 0.0
    %v8609 = vmax.f32 %v8561, 0.0
    %v8610 = vmax.f32 %v8566, 0.0
    %v8611 = vmax.f32 %v8569, 0.0
    %v8612 = vmax.f32 %v8574, 0.0
    %v8613 = vmax.f32 %v8577, 0.0
    %v8614 = vmax.f32 %v8582, 0.0
    %v8615 = vmax.f32 %v8585, 0.0
    %v8616 = vmax.f32 %v8590, 0.0
    %v8617 = vmax.f32 %v8593, 0.0
    %v8618 = vmax.f32 %v8598, 0.0
    %v8619 = vmax.f32 %v8601, 0.0
    %v8620 = vpack.c.bf16 %v8605, %v8604
    %v8621 = vpack.c.bf16 %v8607, %v8606
    %v8622 = vpack.c.bf16 %v8609, %v8608
    %v8623 = vpack.c.bf16 %v8611, %v8610
    %v8624 = vpack.c.bf16 %v8613, %v8612
    %v8625 = vpack.c.bf16 %v8615, %v8614
    %v8626 = vpack.c.bf16 %v8617, %v8616
    %v8627 = vpack.c.bf16 %v8619, %v8618
    %v8628 = vld [vmem:[%s6] sm:$0xff]
    %v8629 = vld [vmem:[%s6 + $0x8] sm:$0xff]
    %v8630 = vld [vmem:[%s6 + $0x10] sm:$0xff]
    %v8631 = vld [vmem:[%s6 + $0x18] sm:$0xff]
    %v8632 = vld [vmem:[%s6 + $0x20] sm:$0xff]
    %v8633 = vld [vmem:[%s6 + $0x28] sm:$0xff]
    %v8634 = vld [vmem:[%s6 + $0x30] sm:$0xff]
    %v8635 = vld [vmem:[%s6 + $0x38] sm:$0xff]
    %v8636 = vpack.c.bf16 %v8629, %v8628
    %v8637 = vpack.c.bf16 %v8631, %v8630
    %v8638 = vpack.c.bf16 %v8633, %v8632
    %v8639 = vpack.c.bf16 %v8635, %v8634
    %v8640 = vld [vmem:[%s7] sm:$0x1]
    %v8642 = vlaneseq
    %v8643 = vshrl.u32 %v8642, 7
    %v8644 = vsub.s32 0, %v8643
    %v8645 = vrot.slane %v8640, %v8644
    %vm8647 = vcmask 523264
    %v8649 = vsel %vm8647, %v8620, 0
    %v8652 = vsel %vm8647, %v8621, 0
    %v8655 = vsel %vm8647, %v8622, 0
    %v8658 = vsel %vm8647, %v8623, 0
    %v8661 = vsel %vm8647, %v8624, 0
    %v8664 = vsel %vm8647, %v8625, 0
    %v8667 = vsel %vm8647, %v8626, 0
    %v8670 = vsel %vm8647, %v8627, 0
    %8672 = vmatprep.subr.bf16.mxu0 0
    %8673 = vmatpush1.bf16.msra.mxu0 %v8636
    %8674 = vmatprep.subr.bf16.mxu0 0
    %8675 = vmatpush1.bf16.msra.mxu0 %v8637
    %8676 = vmatprep.subr.bf16.mxu0 0
    %8677 = vmatpush1.bf16.msra.mxu0 %v8638
    %8678 = vmatprep.subr.bf16.mxu0 0
    %8679 = vmatpush1.bf16.msra.mxu0 %v8639
    %8680 = vmatprep.subr.bf16.mxu0 0
    %8681 = vmatpush1.bf16.msra.mxu0 0
    %8682 = vmatprep.subr.bf16.mxu0 0
    %8683 = vmatpush1.bf16.msra.mxu0 0
    %8684 = vmatprep.subr.bf16.mxu0 0
    %8685 = vmatpush1.bf16.msra.mxu0 0
    %8686 = vmatprep.subr.bf16.mxu0 0
    %8687 = vmatpush1.bf16.msra.mxu0 0
    %8688 = vmatprep.subr.bf16.mxu0 0
    %8689 = vmatpush1.bf16.msra.mxu0 0
    %8690 = vmatprep.subr.bf16.mxu0 0
    %8691 = vmatpush1.bf16.msra.mxu0 0
    %8692 = vmatprep.subr.bf16.mxu0 0
    %8693 = vmatpush1.bf16.msra.mxu0 0
    %8694 = vmatprep.subr.bf16.mxu0 0
    %8695 = vmatpush1.bf16.msra.mxu0 0
    %8696 = vmatprep.subr.bf16.mxu0 0
    %8697 = vmatpush1.bf16.msra.mxu0 0
    %8698 = vmatprep.subr.bf16.mxu0 0
    %8699 = vmatpush1.bf16.msra.mxu0 0
    %8700 = vmatprep.subr.bf16.mxu0 0
    %8701 = vmatpush1.bf16.msra.mxu0 0
    %8702 = vmatprep.subr.bf16.mxu0 0
    %8703 = vmatpush1.bf16.msra.mxu0 0
    %8704 = vmatprep.mubr.bf16.mxu0 0
    %8705 = vmatmul.mubr.bf16.gmra.mrb[0].mxu0 %v8649
    %v8706 = vpop.f32.mrb[0].mxu0
    %v8707 = vadd.f32 %v8645, %v8706
    %v8708 = vpop.f32.mrb[0].mxu0
    %v8709 = vpop.f32.mrb[0].mxu0
    %v8710 = vadd.f32 %v8645, %v8709
    %v8711 = vpop.f32.mrb[0].mxu0
    %8712 = vmatprep.mubr.bf16.mxu0 0
    %8713 = vmatmul.mubr.bf16.gmra.mrb[0].mxu0 %v8652
    %v8714 = vpop.f32.mrb[0].mxu0
    %v8715 = vadd.f32 %v8645, %v8714
    %v8716 = vpop.f32.mrb[0].mxu0
    %v8717 = vpop.f32.mrb[0].mxu0
    %v8718 = vadd.f32 %v8645, %v8717
    %v8719 = vpop.f32.mrb[0].mxu0
    %8720 = vmatprep.mubr.bf16.mxu0 0
    %8721 = vmatmul.mubr.bf16.gmra.mrb[0].mxu0 %v8655
    %v8722 = vpop.f32.mrb[0].mxu0
    %v8723 = vadd.f32 %v8645, %v8722
    %v8724 = vpop.f32.mrb[0].mxu0
    %v8725 = vpop.f32.mrb[0].mxu0
    %v8726 = vadd.f32 %v8645, %v8725
    %v8727 = vpop.f32.mrb[0].mxu0
    %8728 = vmatprep.mubr.bf16.mxu0 0
    %8729 = vmatmul.mubr.bf16.gmra.mrb[0].mxu0 %v8658
    %v8730 = vpop.f32.mrb[0].mxu0
    %v8731 = vadd.f32 %v8645, %v8730
    %v8732 = vpop.f32.mrb[0].mxu0
    %v8733 = vpop.f32.mrb[0].mxu0
    %v8734 = vadd.f32 %v8645, %v8733
    %v8735 = vpop.f32.mrb[0].mxu0
    %8736 = vmatprep.mubr.bf16.mxu0 0
    %8737 = vmatmul.mubr.bf16.gmra.mrb[0].mxu0 %v8661
    %v8738 = vpop.f32.mrb[0].mxu0
    %v8739 = vadd.f32 %v8645, %v8738
    %v8740 = vpop.f32.mrb[0].mxu0
    %v8741 = vpop.f32.mrb[0].mxu0
    %v8742 = vadd.f32 %v8645, %v8741
    %v8743 = vpop.f32.mrb[0].mxu0
    %8744 = vmatprep.mubr.bf16.mxu0 0
    %8745 = vmatmul.mubr.bf16.gmra.mrb[0].mxu0 %v8664
    %v8746 = vpop.f32.mrb[0].mxu0
    %v8747 = vadd.f32 %v8645, %v8746
    %v8748 = vpop.f32.mrb[0].mxu0
    %v8749 = vpop.f32.mrb[0].mxu0
    %v8750 = vadd.f32 %v8645, %v8749
    %v8751 = vpop.f32.mrb[0].mxu0
    %8752 = vmatprep.mubr.bf16.mxu0 0
    %8753 = vmatmul.mubr.bf16.gmra.mrb[0].mxu0 %v8667
    %v8754 = vpop.f32.mrb[0].mxu0
    %v8755 = vadd.f32 %v8645, %v8754
    %v8756 = vpop.f32.mrb[0].mxu0
    %v8757 = vpop.f32.mrb[0].mxu0
    %v8758 = vadd.f32 %v8645, %v8757
    %v8759 = vpop.f32.mrb[0].mxu0
    %8760 = vmatprep.mubr.bf16.mxu0 0
    %8761 = vmatmul.mubr.bf16.gmra.mrb[0].mxu0 %v8670
    %v8762 = vpop.f32.mrb[0].mxu0
    %v8763 = vadd.f32 %v8645, %v8762
    %v8764 = vpop.f32.mrb[0].mxu0
    %v8765 = vpop.f32.mrb[0].mxu0
    %v8766 = vadd.f32 %v8645, %v8765
    %v8767 = vpop.f32.mrb[0].mxu0
    %8768 = vdwg.mxu0
    %v8769 = vmax.f32 %v8707, 0.0
    %v8770 = vmax.f32 %v8710, 0.0
    %v8771 = vmax.f32 %v8715, 0.0
    %v8772 = vmax.f32 %v8718, 0.0
    %v8773 = vmax.f32 %v8723, 0.0
    %v8774 = vmax.f32 %v8726, 0.0
    %v8775 = vmax.f32 %v8731, 0.0
    %v8776 = vmax.f32 %v8734, 0.0
    %v8777 = vmax.f32 %v8739, 0.0
    %v8778 = vmax.f32 %v8742, 0.0
    %v8779 = vmax.f32 %v8747, 0.0
    %v8780 = vmax.f32 %v8750, 0.0
    %v8781 = vmax.f32 %v8755, 0.0
    %v8782 = vmax.f32 %v8758, 0.0
    %v8783 = vmax.f32 %v8763, 0.0
    %v8784 = vmax.f32 %v8766, 0.0
    %v8785 = vld [vmem:[%s8] sm:$0x1]
    %v8787 = vlaneseq
    %v8788 = vshrl.u32 %v8787, 7
    %v8789 = vsub.s32 0, %v8788
    %v8790 = vrot.slane %v8785, %v8789
    %v8792 = vmul.f32 %v8769, %v8790
    %v8793 = vmul.f32 %v8770, %v8790
    %v8794 = vmul.f32 %v8771, %v8790
    %v8795 = vmul.f32 %v8772, %v8790
    %v8796 = vmul.f32 %v8773, %v8790
    %v8797 = vmul.f32 %v8774, %v8790
    %v8798 = vmul.f32 %v8775, %v8790
    %v8799 = vmul.f32 %v8776, %v8790
    %v8800 = vmul.f32 %v8777, %v8790
    %v8801 = vmul.f32 %v8778, %v8790
    %v8802 = vmul.f32 %v8779, %v8790
    %v8803 = vmul.f32 %v8780, %v8790
    %v8804 = vmul.f32 %v8781, %v8790
    %v8805 = vmul.f32 %v8782, %v8790
    %v8806 = vmul.f32 %v8783, %v8790
    %v8807 = vmul.f32 %v8784, %v8790
    %v8808 = vsel %vm8647, %v8792, 0.0
    %8809 = vadd.xlane.f32.xlu0 %v8808
    %v8810 = vpop.xlane.xlu0 %8809
    %v8811 = vsel %vm8647, %v8793, 0.0
    %8812 = vadd.xlane.f32.xlu0 %v8811
    %v8813 = vpop.xlane.xlu0 %8812
    %v8814 = vsel %vm8647, %v8794, 0.0
    %8815 = vadd.xlane.f32.xlu0 %v8814
    %v8816 = vpop.xlane.xlu0 %8815
    %v8817 = vsel %vm8647, %v8795, 0.0
    %8818 = vadd.xlane.f32.xlu0 %v8817
    %v8819 = vpop.xlane.xlu0 %8818
    %v8820 = vsel %vm8647, %v8796, 0.0
    %8821 = vadd.xlane.f32.xlu0 %v8820
    %v8822 = vpop.xlane.xlu0 %8821
    %v8823 = vsel %vm8647, %v8797, 0.0
    %8824 = vadd.xlane.f32.xlu0 %v8823
    %v8825 = vpop.xlane.xlu0 %8824
    %v8826 = vsel %vm8647, %v8798, 0.0
    %8827 = vadd.xlane.f32.xlu0 %v8826
    %v8828 = vpop.xlane.xlu0 %8827
    %v8829 = vsel %vm8647, %v8799, 0.0
    %8830 = vadd.xlane.f32.xlu0 %v8829
    %v8831 = vpop.xlane.xlu0 %8830
    %v8832 = vsel %vm8647, %v8800, 0.0
    %8833 = vadd.xlane.f32.xlu0 %v8832
    %v8834 = vpop.xlane.xlu0 %8833
    %v8835 = vsel %vm8647, %v8801, 0.0
    %8836 = vadd.xlane.f32.xlu0 %v8835
    %v8837 = vpop.xlane.xlu0 %8836
    %v8838 = vsel %vm8647, %v8802, 0.0
    %8839 = vadd.xlane.f32.xlu0 %v8838
    %v8840 = vpop.xlane.xlu0 %8839
    %v8841 = vsel %vm8647, %v8803, 0.0
    %8842 = vadd.xlane.f32.xlu0 %v8841
    %v8843 = vpop.xlane.xlu0 %8842
    %v8844 = vsel %vm8647, %v8804, 0.0
    %8845 = vadd.xlane.f32.xlu0 %v8844
    %v8846 = vpop.xlane.xlu0 %8845
    %v8847 = vsel %vm8647, %v8805, 0.0
    %8848 = vadd.xlane.f32.xlu0 %v8847
    %v8849 = vpop.xlane.xlu0 %8848
    %v8850 = vsel %vm8647, %v8806, 0.0
    %8851 = vadd.xlane.f32.xlu0 %v8850
    %v8852 = vpop.xlane.xlu0 %8851
    %v8853 = vsel %vm8647, %v8807, 0.0
    %8854 = vadd.xlane.f32.xlu0 %v8853
    %v8855 = vpop.xlane.xlu0 %8854
    %v8856 = vld [vmem:[#allocation3] sm:$0x1]
    %v8858 = vlaneseq
    %v8859 = vshrl.u32 %v8858, 7
    %v8860 = vsub.s32 0, %v8859
    %v8861 = vrot.slane %v8856, %v8860
    %v8863 = vadd.f32 %v8810, %v8861
    %v8864 = vadd.f32 %v8813, %v8861
    %v8865 = vadd.f32 %v8816, %v8861
    %v8866 = vadd.f32 %v8819, %v8861
    %v8867 = vadd.f32 %v8822, %v8861
    %v8868 = vadd.f32 %v8825, %v8861
    %v8869 = vadd.f32 %v8828, %v8861
    %v8870 = vadd.f32 %v8831, %v8861
    %v8871 = vadd.f32 %v8834, %v8861
    %v8872 = vadd.f32 %v8837, %v8861
    %v8873 = vadd.f32 %v8840, %v8861
    %v8874 = vadd.f32 %v8843, %v8861
    %v8875 = vadd.f32 %v8846, %v8861
    %v8876 = vadd.f32 %v8849, %v8861
    %v8877 = vadd.f32 %v8852, %v8861
    %v8878 = vadd.f32 %v8855, %v8861
    %v8879 = vld [vmem:[#allocation4] sm:$0x1]
    %v8881 = vlaneseq
    %v8882 = vshrl.u32 %v8881, 7
    %v8883 = vsub.s32 0, %v8882
    %v8884 = vrot.slane %v8879, %v8883
    %v8886 = vadd.f32 %v8863, %v8884
    %v8887 = vadd.f32 %v8864, %v8884
    %v8888 = vadd.f32 %v8865, %v8884
    %v8889 = vadd.f32 %v8866, %v8884
    %v8890 = vadd.f32 %v8867, %v8884
    %v8891 = vadd.f32 %v8868, %v8884
    %v8892 = vadd.f32 %v8869, %v8884
    %v8893 = vadd.f32 %v8870, %v8884
    %v8894 = vadd.f32 %v8871, %v8884
    %v8895 = vadd.f32 %v8872, %v8884
    %v8896 = vadd.f32 %v8873, %v8884
    %v8897 = vadd.f32 %v8874, %v8884
    %v8898 = vadd.f32 %v8875, %v8884
    %v8899 = vadd.f32 %v8876, %v8884
    %v8900 = vadd.f32 %v8877, %v8884
    %v8901 = vadd.f32 %v8878, %v8884
    %vm8902 = vcmask 7168
    %8903 = vst.msk [vmem:[%s11] sm:$0xff] %vm8902, %v8886
    %8904 = vst.msk [vmem:[%s11 + $0x8] sm:$0xff] %vm8902, %v8887
    %8905 = vst.msk [vmem:[%s11 + $0x10] sm:$0xff] %vm8902, %v8888
    %8906 = vst.msk [vmem:[%s11 + $0x18] sm:$0xff] %vm8902, %v8889
    %8907 = vst.msk [vmem:[%s11 + $0x20] sm:$0xff] %vm8902, %v8890
    %8908 = vst.msk [vmem:[%s11 + $0x28] sm:$0xff] %vm8902, %v8891
    %8909 = vst.msk [vmem:[%s11 + $0x30] sm:$0xff] %vm8902, %v8892
    %8910 = vst.msk [vmem:[%s11 + $0x38] sm:$0xff] %vm8902, %v8893
    %8911 = vst.msk [vmem:[%s11 + $0x40] sm:$0xff] %vm8902, %v8894
    %8912 = vst.msk [vmem:[%s11 + $0x48] sm:$0xff] %vm8902, %v8895
    %8913 = vst.msk [vmem:[%s11 + $0x50] sm:$0xff] %vm8902, %v8896
    %8914 = vst.msk [vmem:[%s11 + $0x58] sm:$0xff] %vm8902, %v8897
    %8915 = vst.msk [vmem:[%s11 + $0x60] sm:$0xff] %vm8902, %v8898
    %8916 = vst.msk [vmem:[%s11 + $0x68] sm:$0xff] %vm8902, %v8899
    %8917 = vst.msk [vmem:[%s11 + $0x70] sm:$0xff] %vm8902, %v8900
    %8918 = vst.msk [vmem:[%s11 + $0x78] sm:$0xff] %vm8902, %v8901
    // Predicated region
    $region50: #{tpu_custom_call.1} parent=1 // pred_check
      _
    $region51: #{tpu_custom_call.1} parent=1 // pred_check_branch
      %8920 = sbr.rel (0) target = $region53
    $region52: #{tpu_custom_call.1} parent=1 // pred_region
      _
    $region53: #{tpu_custom_call.1} parent=1 // pred_fallthru
      _
    // Predicated region
    $region54: #{tpu_custom_call.1} parent=1 // pred_check
      _
    $region55: #{tpu_custom_call.1} parent=1 // pred_check_branch
      %8922 = sbr.rel (0) target = $region57
    $region56: #{tpu_custom_call.1} parent=1 // pred_region
      _
    $region57: #{tpu_custom_call.1} parent=1 // pred_fallthru
      _
    %8923 = vsyncpa [#allocation6], 1

</llo_original>
